<compile_context>
chip_gen: v6e
topology: v6e:2x2x1
jax: 0.10.0
libtpu: 0.0.40
codegen_flags: <defaults>
</compile_context>

<pallas_src>
import math
from functools import partial

import numpy as np
import jax
import jax.numpy as jnp
from jax import lax
from jax.experimental import pallas as pl
from jax.experimental.pallas import tpu as pltpu


# ----------------------------- static network config -----------------------

SINC_OUT_REAL, SINC_OUT_PAD = 80, 128        # sinc filters (padded to lanes)
SINC_K, SINC_K_PAD = 251, 256                # sinc taps (padded for the MXU)
SINC_STRIDE, SINC_PAD = 8, 125

# (kernel_size, stride, cin_real, cout_real, cin_pad, cout_pad) per DSConvBlock
BLOCK_CFGS = (
    (25, 2,  80, 160, 128, 256),
    (9,  1, 160, 160, 256, 256),
    (9,  1, 160, 160, 256, 256),
    (9,  1, 160, 160, 256, 256),
    (9,  1, 160, 128, 256, 128),
)
FINAL_CH = BLOCK_CFGS[-1][5]                 # 128 (== real output channels)

_DW_HALO = 16                                # aligned zero halo in VMEM scratch
_DW_MAX_COLS = 256                           # widest (padded) channel count


# ------------------------------- fused kernel ------------------------------

def _sincdsnet_kernel(*refs, block_cfgs):
    n_blk = len(block_cfgs)
    patches_ref, filt_ref, bn1s_ref, bn1b_ref = refs[:4]
    blk_refs = refs[4:4 + 6 * n_blk]
    out_ref = refs[4 + 6 * n_blk]
    xpad_ref = refs[5 + 6 * n_blk]            # VMEM scratch for dwconv staging
    f32 = jnp.float32

    def iota2(shape, dim):
        return lax.broadcasted_iota(jnp.int32, shape, dim)

    def avgpool_matrix(T):
        # (T//2, T): 1/3 at columns {2t-1, 2t, 2t+1}  ==  AvgPool1d(3, 2, 1)
        # with count_include_pad=True (the -1 column is the zero pad).
        d = iota2((T // 2, T), 1) - 2 * iota2((T // 2, T), 0)
        return jnp.where((d >= -1) & (d <= 1), 1.0 / 3.0, 0.0).astype(f32)

    def downsample_matrix(T):
        # (T//2, T): picks even time steps (stride-2 conv == even rows of the
        # stride-1 'same' conv).
        d = iota2((T // 2, T), 1) - 2 * iota2((T // 2, T), 0)
        return (d == 0).astype(f32)

    def dw_same(x, w_ref, ksize):
        # Stride-1 'same' depthwise cross-correlation.  The activation is
        # staged once in VMEM scratch at a sublane-tile-aligned offset with a
        # zeroed halo; every tap is a row-offset VMEM load feeding a VPU FMA.
        T, C = x.shape
        pad = (ksize - 1) // 2                       # <= _DW_HALO
        xpad_ref[0:_DW_HALO, 0:C] = jnp.zeros((_DW_HALO, C), f32)
        xpad_ref[_DW_HALO + T:_DW_HALO + T + _DW_HALO, 0:C] = (
            jnp.zeros((_DW_HALO, C), f32))
        xpad_ref[_DW_HALO:_DW_HALO + T, 0:C] = x
        base = _DW_HALO - pad
        acc = xpad_ref[base:base + T, 0:C] * w_ref[0:1, :]
        for k in range(1, ksize):
            acc = acc + xpad_ref[base + k:base + k + T, 0:C] * w_ref[k:k + 1, :]
        return acc

    # --- SincConv on the MXU with fused log-compression + BN1 epilogue -----
    a = jnp.dot(patches_ref[0], filt_ref[...], preferred_element_type=f32)
    a = jnp.log(jnp.abs(a) + 1.0) * bn1s_ref[...] + bn1b_ref[...]

    # --- five depthwise-separable blocks, fully fused -----------------------
    for i, (ksize, stride, *_unused) in enumerate(block_cfgs):
        dw_ref, pw_ref, s1_ref, b1_ref, s2_ref, b2_ref = (
            blk_refs[6 * i:6 * i + 6])
        u = dw_same(a, dw_ref, ksize)                          # (T, Cin)
        if stride == 2:
            u = jnp.dot(downsample_matrix(u.shape[0]), u,
                        preferred_element_type=f32)            # (T//2, Cin)
        u = u * s1_ref[...] + b1_ref[...]                      # BN1
        h = jnp.dot(u, pw_ref[...], preferred_element_type=f32)  # 1x1 conv
        h = h * s2_ref[...] + b2_ref[...]                      # BN2
        h = jnp.where(h >= 0.0, h, 0.2 * h)                    # LeakyReLU(0.2)
        a = jnp.dot(avgpool_matrix(h.shape[0]), h,
                    preferred_element_type=f32)                # AvgPool(3,2,1)

    # --- AdaptiveAvgPool1d(1): mean over the remaining time steps ----------
    out_ref[0, :, :] = jnp.mean(a, axis=0, keepdims=True)


# ------------------------- parameter construction --------------------------

def _to_mel(hz):
    return 2595.0 * np.log10(1.0 + hz / 700.0)


def _to_hz(mel):
    return 700.0 * (10.0 ** (mel / 2595.0) - 1.0)


def make_sinc_filters(out_channels=80, kernel_size=251, sample_rate=16000,
                      min_low_hz=50.0, min_band_hz=50.0):
    """Deterministic SincConv_fast filters, shape (out_channels, kernel_size)."""
    low_hz0 = 30.0
    high_hz0 = sample_rate / 2 - (min_low_hz + min_band_hz)
    mel = np.linspace(_to_mel(low_hz0), _to_mel(high_hz0), out_channels + 1)
    hz = _to_hz(mel)
    low_hz_ = jnp.asarray(hz[:-1], jnp.float32).reshape(-1, 1)
    band_hz_ = jnp.asarray(np.diff(hz), jnp.float32).reshape(-1, 1)

    n_lin = jnp.linspace(0.0, kernel_size / 2 - 1, int(kernel_size / 2))
    window = 0.54 - 0.46 * jnp.cos(2 * math.pi * n_lin / kernel_size)
    n = (kernel_size - 1) / 2.0
    n_ = (2 * math.pi * jnp.arange(-n, 0.0, dtype=jnp.float32).reshape(1, -1)
          / sample_rate)

    low = min_low_hz + jnp.abs(low_hz_)
    high = jnp.clip(low + min_band_hz + jnp.abs(band_hz_),
                    min_low_hz, sample_rate / 2)
    band = (high - low)[:, 0]

    f_low = low @ n_
    f_high = high @ n_
    bp_left = (jnp.sin(f_high) - jnp.sin(f_low)) / (n_ / 2) * window
    bp_center = 2.0 * band.reshape(-1, 1)
    bp_right = jnp.flip(bp_left, axis=1)
    bp = jnp.concatenate([bp_left, bp_center, bp_right], axis=1)
    bp = bp / (2.0 * band[:, None])
    return bp.astype(jnp.float32)                      # (80, 251)


def _bn_affine(c_real, c_pad, eps=1e-5):
    """Inference-mode BN affine (default init); padded channels get 0 scale/shift."""
    scale = np.zeros((1, c_pad), np.float32)
    scale[0, :c_real] = 1.0 / math.sqrt(1.0 + eps)
    return jnp.asarray(scale), jnp.zeros((1, c_pad), jnp.float32)


def init_params(key):
    params = {}
    filt = make_sinc_filters(SINC_OUT_REAL, SINC_K)            # (80, 251)
    filt_t = jnp.zeros((SINC_K_PAD, SINC_OUT_PAD), jnp.float32)
    params["sinc_filters_t"] = filt_t.at[:SINC_K, :SINC_OUT_REAL].set(filt.T)
    params["bn1_scale"], params["bn1_shift"] = _bn_affine(SINC_OUT_REAL,
                                                          SINC_OUT_PAD)

    blocks = []
    for (k, _stride, cr_in, cr_out, cp_in, cp_out) in BLOCK_CFGS:
        key, k1, k2 = jax.random.split(key, 3)
        dw_bound = 1.0 / math.sqrt(k)       # Conv1d default init: fan_in = k (groups=cin)
        pw_bound = 1.0 / math.sqrt(cr_in)   # pointwise fan_in = cin
        dw = jax.random.uniform(k1, (k, cr_in), jnp.float32, -dw_bound, dw_bound)
        pw = jax.random.uniform(k2, (cr_in, cr_out), jnp.float32,
                                -pw_bound, pw_bound)
        dw_w = jnp.zeros((k, cp_in), jnp.float32).at[:, :cr_in].set(dw)
        pw_w = jnp.zeros((cp_in, cp_out), jnp.float32).at[:cr_in, :cr_out].set(pw)
        s1, b1 = _bn_affine(cr_in, cp_in)
        s2, b2 = _bn_affine(cr_out, cp_out)
        blocks.append(dict(dw_w=dw_w, pw_w=pw_w,
                           bn1_scale=s1, bn1_shift=b1,
                           bn2_scale=s2, bn2_shift=b2))
    params["blocks"] = blocks
    return params


# ------------------------------ forward pass -------------------------------

def sincdsnet_forward(params, x):
    """x: (B, n_samples) float32 waveform -> (B, 128, 1) (PyTorch layout)."""
    B, L = x.shape
    T0 = (L + 2 * SINC_PAD - SINC_K) // SINC_STRIDE + 1
    assert T0 % 64 == 0, "time length must stay even through all stride-2 stages"

    # im2col for the stride-8 sinc conv, built from cheap slices (no gather):
    # patches[b, t, 8j + r] = xpad[b, 8t + 8j + r]; tap columns 251..255 hit
    # zero rows of the padded filter bank so the extra columns are inert.
    # TODO(synk): patch construction stays in the XLA wrapper; building the
    # stride-8 windows fully inside the kernel needs an in-VMEM relayout that
    # is not worth it at this size.
    n8 = T0 + SINC_K_PAD // SINC_STRIDE - 1
    right = n8 * SINC_STRIDE - L - SINC_PAD
    assert right >= 0
    xp = jnp.pad(x, ((0, 0), (SINC_PAD, right)))
    x8 = xp.reshape(B, n8, SINC_STRIDE)
    patches = jnp.concatenate(
        [x8[:, j:j + T0, :] for j in range(SINC_K_PAD // SINC_STRIDE)], axis=2)

    inputs = [patches, params["sinc_filters_t"],
              params["bn1_scale"], params["bn1_shift"]]
    in_specs = [
        pl.BlockSpec((1, T0, SINC_K_PAD), lambda b: (b, 0, 0)),
        pl.BlockSpec((SINC_K_PAD, SINC_OUT_PAD), lambda b: (0, 0)),
        pl.BlockSpec((1, SINC_OUT_PAD), lambda b: (0, 0)),
        pl.BlockSpec((1, SINC_OUT_PAD), lambda b: (0, 0)),
    ]
    for blk in params["blocks"]:
        for name in ("dw_w", "pw_w", "bn1_scale", "bn1_shift",
                     "bn2_scale", "bn2_shift"):
            arr = blk[name]
            inputs.append(arr)
            in_specs.append(pl.BlockSpec(arr.shape, lambda b: (0, 0)))

    kern = partial(_sincdsnet_kernel, block_cfgs=BLOCK_CFGS)
    out = pl.pallas_call(
        kern,
        out_shape=jax.ShapeDtypeStruct((B, 1, FINAL_CH), jnp.float32),
        grid=(B,),
        in_specs=in_specs,
        out_specs=pl.BlockSpec((1, 1, FINAL_CH), lambda b: (b, 0, 0)),
        scratch_shapes=[
            pltpu.VMEM((2 * _DW_HALO + T0, _DW_MAX_COLS), jnp.float32)],
        compiler_params=pltpu.CompilerParams(
            dimension_semantics=("parallel",),
            vmem_limit_bytes=32 * 1024 * 1024),
    )(*inputs)
    return jnp.transpose(out, (0, 2, 1))               # (B, 128, 1)


if __name__ == "__main__":
    key = jax.random.PRNGKey(0)
    pkey, xkey = jax.random.split(key)
    params = init_params(pkey)
    x = jax.random.normal(xkey, (2, 2048), dtype=jnp.float32)  # (batch, n_samples)
    fwd = jax.jit(sincdsnet_forward)
    out = jax.block_until_ready(fwd(params, x))
    assert out.shape == (2, 128, 1), out.shape
    assert bool(jnp.all(jnp.isfinite(out)))
    print("KERNEL_OK")
</pallas_src>

<mosaic_0001>
module attributes {stable_mosaic.version = 11 : i64} {
  func.func @_sincdsnet_kernel(%arg0: i32, %arg1: memref<1x256x256xf32, #tpu.memory_space<vmem>>, %arg2: memref<256x128xf32, #tpu.memory_space<vmem>>, %arg3: memref<1x128xf32, #tpu.memory_space<vmem>>, %arg4: memref<1x128xf32, #tpu.memory_space<vmem>>, %arg5: memref<25x128xf32, #tpu.memory_space<vmem>>, %arg6: memref<128x256xf32, #tpu.memory_space<vmem>>, %arg7: memref<1x128xf32, #tpu.memory_space<vmem>>, %arg8: memref<1x128xf32, #tpu.memory_space<vmem>>, %arg9: memref<1x256xf32, #tpu.memory_space<vmem>>, %arg10: memref<1x256xf32, #tpu.memory_space<vmem>>, %arg11: memref<9x256xf32, #tpu.memory_space<vmem>>, %arg12: memref<256x256xf32, #tpu.memory_space<vmem>>, %arg13: memref<1x256xf32, #tpu.memory_space<vmem>>, %arg14: memref<1x256xf32, #tpu.memory_space<vmem>>, %arg15: memref<1x256xf32, #tpu.memory_space<vmem>>, %arg16: memref<1x256xf32, #tpu.memory_space<vmem>>, %arg17: memref<9x256xf32, #tpu.memory_space<vmem>>, %arg18: memref<256x256xf32, #tpu.memory_space<vmem>>, %arg19: memref<1x256xf32, #tpu.memory_space<vmem>>, %arg20: memref<1x256xf32, #tpu.memory_space<vmem>>, %arg21: memref<1x256xf32, #tpu.memory_space<vmem>>, %arg22: memref<1x256xf32, #tpu.memory_space<vmem>>, %arg23: memref<9x256xf32, #tpu.memory_space<vmem>>, %arg24: memref<256x256xf32, #tpu.memory_space<vmem>>, %arg25: memref<1x256xf32, #tpu.memory_space<vmem>>, %arg26: memref<1x256xf32, #tpu.memory_space<vmem>>, %arg27: memref<1x256xf32, #tpu.memory_space<vmem>>, %arg28: memref<1x256xf32, #tpu.memory_space<vmem>>, %arg29: memref<9x256xf32, #tpu.memory_space<vmem>>, %arg30: memref<256x128xf32, #tpu.memory_space<vmem>>, %arg31: memref<1x256xf32, #tpu.memory_space<vmem>>, %arg32: memref<1x256xf32, #tpu.memory_space<vmem>>, %arg33: memref<1x128xf32, #tpu.memory_space<vmem>>, %arg34: memref<1x128xf32, #tpu.memory_space<vmem>>, %arg35: memref<1x1x128xf32, #tpu.memory_space<vmem>>, %arg36: memref<288x256xf32, #tpu.memory_space<vmem>>) attributes {dimension_semantics = [#tpu.dimension_semantics<parallel>], iteration_bounds = array<i64: 2>, scalar_prefetch = 0 : i64, scratch_operands = 1 : i64, tpu.core_type = #tpu.core_type<tc>, window_params = [{transform_indices = @transform_0, window_bounds = array<i64: 1, 256, 256>}, {pipeline_mode = #tpu.pipeline_mode<synchronous>, transform_indices = @transform_1, window_bounds = array<i64: 256, 128>}, {pipeline_mode = #tpu.pipeline_mode<synchronous>, transform_indices = @transform_2, window_bounds = array<i64: 1, 128>}, {pipeline_mode = #tpu.pipeline_mode<synchronous>, transform_indices = @transform_3, window_bounds = array<i64: 1, 128>}, {pipeline_mode = #tpu.pipeline_mode<synchronous>, transform_indices = @transform_4, window_bounds = array<i64: 25, 128>}, {pipeline_mode = #tpu.pipeline_mode<synchronous>, transform_indices = @transform_5, window_bounds = array<i64: 128, 256>}, {pipeline_mode = #tpu.pipeline_mode<synchronous>, transform_indices = @transform_6, window_bounds = array<i64: 1, 128>}, {pipeline_mode = #tpu.pipeline_mode<synchronous>, transform_indices = @transform_7, window_bounds = array<i64: 1, 128>}, {pipeline_mode = #tpu.pipeline_mode<synchronous>, transform_indices = @transform_8, window_bounds = array<i64: 1, 256>}, {pipeline_mode = #tpu.pipeline_mode<synchronous>, transform_indices = @transform_9, window_bounds = array<i64: 1, 256>}, {pipeline_mode = #tpu.pipeline_mode<synchronous>, transform_indices = @transform_10, window_bounds = array<i64: 9, 256>}, {pipeline_mode = #tpu.pipeline_mode<synchronous>, transform_indices = @transform_11, window_bounds = array<i64: 256, 256>}, {pipeline_mode = #tpu.pipeline_mode<synchronous>, transform_indices = @transform_12, window_bounds = array<i64: 1, 256>}, {pipeline_mode = #tpu.pipeline_mode<synchronous>, transform_indices = @transform_13, window_bounds = array<i64: 1, 256>}, {pipeline_mode = #tpu.pipeline_mode<synchronous>, transform_indices = @transform_14, window_bounds = array<i64: 1, 256>}, {pipeline_mode = #tpu.pipeline_mode<synchronous>, transform_indices = @transform_15, window_bounds = array<i64: 1, 256>}, {pipeline_mode = #tpu.pipeline_mode<synchronous>, transform_indices = @transform_16, window_bounds = array<i64: 9, 256>}, {pipeline_mode = #tpu.pipeline_mode<synchronous>, transform_indices = @transform_17, window_bounds = array<i64: 256, 256>}, {pipeline_mode = #tpu.pipeline_mode<synchronous>, transform_indices = @transform_18, window_bounds = array<i64: 1, 256>}, {pipeline_mode = #tpu.pipeline_mode<synchronous>, transform_indices = @transform_19, window_bounds = array<i64: 1, 256>}, {pipeline_mode = #tpu.pipeline_mode<synchronous>, transform_indices = @transform_20, window_bounds = array<i64: 1, 256>}, {pipeline_mode = #tpu.pipeline_mode<synchronous>, transform_indices = @transform_21, window_bounds = array<i64: 1, 256>}, {pipeline_mode = #tpu.pipeline_mode<synchronous>, transform_indices = @transform_22, window_bounds = array<i64: 9, 256>}, {pipeline_mode = #tpu.pipeline_mode<synchronous>, transform_indices = @transform_23, window_bounds = array<i64: 256, 256>}, {pipeline_mode = #tpu.pipeline_mode<synchronous>, transform_indices = @transform_24, window_bounds = array<i64: 1, 256>}, {pipeline_mode = #tpu.pipeline_mode<synchronous>, transform_indices = @transform_25, window_bounds = array<i64: 1, 256>}, {pipeline_mode = #tpu.pipeline_mode<synchronous>, transform_indices = @transform_26, window_bounds = array<i64: 1, 256>}, {pipeline_mode = #tpu.pipeline_mode<synchronous>, transform_indices = @transform_27, window_bounds = array<i64: 1, 256>}, {pipeline_mode = #tpu.pipeline_mode<synchronous>, transform_indices = @transform_28, window_bounds = array<i64: 9, 256>}, {pipeline_mode = #tpu.pipeline_mode<synchronous>, transform_indices = @transform_29, window_bounds = array<i64: 256, 128>}, {pipeline_mode = #tpu.pipeline_mode<synchronous>, transform_indices = @transform_30, window_bounds = array<i64: 1, 256>}, {pipeline_mode = #tpu.pipeline_mode<synchronous>, transform_indices = @transform_31, window_bounds = array<i64: 1, 256>}, {pipeline_mode = #tpu.pipeline_mode<synchronous>, transform_indices = @transform_32, window_bounds = array<i64: 1, 128>}, {pipeline_mode = #tpu.pipeline_mode<synchronous>, transform_indices = @transform_33, window_bounds = array<i64: 1, 128>}, {transform_indices = @transform_34, window_bounds = array<i64: 1, 1, 128>}]} {
    %c0 = arith.constant 0 : index
    %c0_0 = arith.constant 0 : index
    %c0_1 = arith.constant 0 : index
    %0 = vector.load %arg1[%c0, %c0_0, %c0_1] : memref<1x256x256xf32, #tpu.memory_space<vmem>>, vector<1x256x256xf32>
    %1 = vector.shape_cast %0 : vector<1x256x256xf32> to vector<256x256xf32>
    %c0_2 = arith.constant 0 : index
    %c0_3 = arith.constant 0 : index
    %2 = vector.load %arg2[%c0_2, %c0_3] : memref<256x128xf32, #tpu.memory_space<vmem>>, vector<256x128xf32>
    %cst = arith.constant dense<0.000000e+00> : vector<256x128xf32>
    %3 = tpu.matmul %1, %2, %cst {dimension_numbers = #tpu.dot_dimension_numbers<[1], [0], [0], [1], [0, 0, 1, 1], [], []>} : vector<256x256xf32>, vector<256x128xf32>, vector<256x128xf32> -> vector<256x128xf32>
    %4 = math.absf %3 : vector<256x128xf32>
    %cst_4 = arith.constant 1.000000e+00 : f32
    %5 = vector.broadcast %cst_4 : f32 to vector<256x128xf32>
    %6 = arith.addf %4, %5 : vector<256x128xf32>
    %7 = math.log %6 : vector<256x128xf32>
    %c0_5 = arith.constant 0 : index
    %c0_6 = arith.constant 0 : index
    %8 = vector.load %arg3[%c0_5, %c0_6] : memref<1x128xf32, #tpu.memory_space<vmem>>, vector<1x128xf32>
    %9 = vector.broadcast %8 : vector<1x128xf32> to vector<256x128xf32>
    %10 = arith.mulf %7, %9 : vector<256x128xf32>
    %c0_7 = arith.constant 0 : index
    %c0_8 = arith.constant 0 : index
    %11 = vector.load %arg4[%c0_7, %c0_8] : memref<1x128xf32, #tpu.memory_space<vmem>>, vector<1x128xf32>
    %12 = vector.broadcast %11 : vector<1x128xf32> to vector<256x128xf32>
    %13 = arith.addf %10, %12 : vector<256x128xf32>
    %cst_9 = arith.constant 0.000000e+00 : f32
    %14 = vector.broadcast %cst_9 : f32 to vector<16x128xf32>
    %c0_10 = arith.constant 0 : index
    %c0_11 = arith.constant 0 : index
    %15 = vector.load %arg36[%c0_10, %c0_11] : memref<288x256xf32, #tpu.memory_space<vmem>>, vector<16x128xf32>
    tpu.vector_store %arg36[%c0_10, %c0_11], %14 {strides = array<i32>} : memref<288x256xf32, #tpu.memory_space<vmem>>, vector<16x128xf32>,
    %cst_12 = arith.constant 0.000000e+00 : f32
    %16 = vector.broadcast %cst_12 : f32 to vector<16x128xf32>
    %c272 = arith.constant 272 : index
    %c0_13 = arith.constant 0 : index
    %17 = vector.load %arg36[%c272, %c0_13] : memref<288x256xf32, #tpu.memory_space<vmem>>, vector<16x128xf32>
    tpu.vector_store %arg36[%c272, %c0_13], %16 {strides = array<i32>} : memref<288x256xf32, #tpu.memory_space<vmem>>, vector<16x128xf32>,
    %c16 = arith.constant 16 : index
    %c0_14 = arith.constant 0 : index
    %18 = vector.load %arg36[%c16, %c0_14] : memref<288x256xf32, #tpu.memory_space<vmem>>, vector<256x128xf32>
    tpu.vector_store %arg36[%c16, %c0_14], %13 {strides = array<i32>} : memref<288x256xf32, #tpu.memory_space<vmem>>, vector<256x128xf32>,
    %c4 = arith.constant 4 : index
    %c0_15 = arith.constant 0 : index
    %19 = vector.load %arg36[%c4, %c0_15] : memref<288x256xf32, #tpu.memory_space<vmem>>, vector<256x128xf32>
    %c0_16 = arith.constant 0 : index
    %c0_17 = arith.constant 0 : index
    %20 = vector.load %arg5[%c0_16, %c0_17] : memref<25x128xf32, #tpu.memory_space<vmem>>, vector<1x128xf32>
    %21 = vector.broadcast %20 : vector<1x128xf32> to vector<256x128xf32>
    %22 = arith.mulf %19, %21 : vector<256x128xf32>
    %c5 = arith.constant 5 : index
    %c0_18 = arith.constant 0 : index
    %23 = vector.load %arg36[%c5, %c0_18] : memref<288x256xf32, #tpu.memory_space<vmem>>, vector<256x128xf32>
    %c1 = arith.constant 1 : index
    %c0_19 = arith.constant 0 : index
    %24 = vector.load %arg5[%c1, %c0_19] : memref<25x128xf32, #tpu.memory_space<vmem>>, vector<1x128xf32>
    %25 = vector.broadcast %24 : vector<1x128xf32> to vector<256x128xf32>
    %26 = arith.mulf %23, %25 : vector<256x128xf32>
    %27 = arith.addf %22, %26 : vector<256x128xf32>
    %c6 = arith.constant 6 : index
    %c0_20 = arith.constant 0 : index
    %28 = vector.load %arg36[%c6, %c0_20] : memref<288x256xf32, #tpu.memory_space<vmem>>, vector<256x128xf32>
    %c2 = arith.constant 2 : index
    %c0_21 = arith.constant 0 : index
    %29 = vector.load %arg5[%c2, %c0_21] : memref<25x128xf32, #tpu.memory_space<vmem>>, vector<1x128xf32>
    %30 = vector.broadcast %29 : vector<1x128xf32> to vector<256x128xf32>
    %31 = arith.mulf %28, %30 : vector<256x128xf32>
    %32 = arith.addf %27, %31 : vector<256x128xf32>
    %c7 = arith.constant 7 : index
    %c0_22 = arith.constant 0 : index
    %33 = vector.load %arg36[%c7, %c0_22] : memref<288x256xf32, #tpu.memory_space<vmem>>, vector<256x128xf32>
    %c3 = arith.constant 3 : index
    %c0_23 = arith.constant 0 : index
    %34 = vector.load %arg5[%c3, %c0_23] : memref<25x128xf32, #tpu.memory_space<vmem>>, vector<1x128xf32>
    %35 = vector.broadcast %34 : vector<1x128xf32> to vector<256x128xf32>
    %36 = arith.mulf %33, %35 : vector<256x128xf32>
    %37 = arith.addf %32, %36 : vector<256x128xf32>
    %c8 = arith.constant 8 : index
    %c0_24 = arith.constant 0 : index
    %38 = vector.load %arg36[%c8, %c0_24] : memref<288x256xf32, #tpu.memory_space<vmem>>, vector<256x128xf32>
    %c4_25 = arith.constant 4 : index
    %c0_26 = arith.constant 0 : index
    %39 = vector.load %arg5[%c4_25, %c0_26] : memref<25x128xf32, #tpu.memory_space<vmem>>, vector<1x128xf32>
    %40 = vector.broadcast %39 : vector<1x128xf32> to vector<256x128xf32>
    %41 = arith.mulf %38, %40 : vector<256x128xf32>
    %42 = arith.addf %37, %41 : vector<256x128xf32>
    %c9 = arith.constant 9 : index
    %c0_27 = arith.constant 0 : index
    %43 = vector.load %arg36[%c9, %c0_27] : memref<288x256xf32, #tpu.memory_space<vmem>>, vector<256x128xf32>
    %c5_28 = arith.constant 5 : index
    %c0_29 = arith.constant 0 : index
    %44 = vector.load %arg5[%c5_28, %c0_29] : memref<25x128xf32, #tpu.memory_space<vmem>>, vector<1x128xf32>
    %45 = vector.broadcast %44 : vector<1x128xf32> to vector<256x128xf32>
    %46 = arith.mulf %43, %45 : vector<256x128xf32>
    %47 = arith.addf %42, %46 : vector<256x128xf32>
    %c10 = arith.constant 10 : index
    %c0_30 = arith.constant 0 : index
    %48 = vector.load %arg36[%c10, %c0_30] : memref<288x256xf32, #tpu.memory_space<vmem>>, vector<256x128xf32>
    %c6_31 = arith.constant 6 : index
    %c0_32 = arith.constant 0 : index
    %49 = vector.load %arg5[%c6_31, %c0_32] : memref<25x128xf32, #tpu.memory_space<vmem>>, vector<1x128xf32>
    %50 = vector.broadcast %49 : vector<1x128xf32> to vector<256x128xf32>
    %51 = arith.mulf %48, %50 : vector<256x128xf32>
    %52 = arith.addf %47, %51 : vector<256x128xf32>
    %c11 = arith.constant 11 : index
    %c0_33 = arith.constant 0 : index
    %53 = vector.load %arg36[%c11, %c0_33] : memref<288x256xf32, #tpu.memory_space<vmem>>, vector<256x128xf32>
    %c7_34 = arith.constant 7 : index
    %c0_35 = arith.constant 0 : index
    %54 = vector.load %arg5[%c7_34, %c0_35] : memref<25x128xf32, #tpu.memory_space<vmem>>, vector<1x128xf32>
    %55 = vector.broadcast %54 : vector<1x128xf32> to vector<256x128xf32>
    %56 = arith.mulf %53, %55 : vector<256x128xf32>
    %57 = arith.addf %52, %56 : vector<256x128xf32>
    %c12 = arith.constant 12 : index
    %c0_36 = arith.constant 0 : index
    %58 = vector.load %arg36[%c12, %c0_36] : memref<288x256xf32, #tpu.memory_space<vmem>>, vector<256x128xf32>
    %c8_37 = arith.constant 8 : index
    %c0_38 = arith.constant 0 : index
    %59 = vector.load %arg5[%c8_37, %c0_38] : memref<25x128xf32, #tpu.memory_space<vmem>>, vector<1x128xf32>
    %60 = vector.broadcast %59 : vector<1x128xf32> to vector<256x128xf32>
    %61 = arith.mulf %58, %60 : vector<256x128xf32>
    %62 = arith.addf %57, %61 : vector<256x128xf32>
    %c13 = arith.constant 13 : index
    %c0_39 = arith.constant 0 : index
    %63 = vector.load %arg36[%c13, %c0_39] : memref<288x256xf32, #tpu.memory_space<vmem>>, vector<256x128xf32>
    %c9_40 = arith.constant 9 : index
    %c0_41 = arith.constant 0 : index
    %64 = vector.load %arg5[%c9_40, %c0_41] : memref<25x128xf32, #tpu.memory_space<vmem>>, vector<1x128xf32>
    %65 = vector.broadcast %64 : vector<1x128xf32> to vector<256x128xf32>
    %66 = arith.mulf %63, %65 : vector<256x128xf32>
    %67 = arith.addf %62, %66 : vector<256x128xf32>
    %c14 = arith.constant 14 : index
    %c0_42 = arith.constant 0 : index
    %68 = vector.load %arg36[%c14, %c0_42] : memref<288x256xf32, #tpu.memory_space<vmem>>, vector<256x128xf32>
    %c10_43 = arith.constant 10 : index
    %c0_44 = arith.constant 0 : index
    %69 = vector.load %arg5[%c10_43, %c0_44] : memref<25x128xf32, #tpu.memory_space<vmem>>, vector<1x128xf32>
    %70 = vector.broadcast %69 : vector<1x128xf32> to vector<256x128xf32>
    %71 = arith.mulf %68, %70 : vector<256x128xf32>
    %72 = arith.addf %67, %71 : vector<256x128xf32>
    %c15 = arith.constant 15 : index
    %c0_45 = arith.constant 0 : index
    %73 = vector.load %arg36[%c15, %c0_45] : memref<288x256xf32, #tpu.memory_space<vmem>>, vector<256x128xf32>
    %c11_46 = arith.constant 11 : index
    %c0_47 = arith.constant 0 : index
    %74 = vector.load %arg5[%c11_46, %c0_47] : memref<25x128xf32, #tpu.memory_space<vmem>>, vector<1x128xf32>
    %75 = vector.broadcast %74 : vector<1x128xf32> to vector<256x128xf32>
    %76 = arith.mulf %73, %75 : vector<256x128xf32>
    %77 = arith.addf %72, %76 : vector<256x128xf32>
    %c16_48 = arith.constant 16 : index
    %c0_49 = arith.constant 0 : index
    %78 = vector.load %arg36[%c16_48, %c0_49] : memref<288x256xf32, #tpu.memory_space<vmem>>, vector<256x128xf32>
    %c12_50 = arith.constant 12 : index
    %c0_51 = arith.constant 0 : index
    %79 = vector.load %arg5[%c12_50, %c0_51] : memref<25x128xf32, #tpu.memory_space<vmem>>, vector<1x128xf32>
    %80 = vector.broadcast %79 : vector<1x128xf32> to vector<256x128xf32>
    %81 = arith.mulf %78, %80 : vector<256x128xf32>
    %82 = arith.addf %77, %81 : vector<256x128xf32>
    %c17 = arith.constant 17 : index
    %c0_52 = arith.constant 0 : index
    %83 = vector.load %arg36[%c17, %c0_52] : memref<288x256xf32, #tpu.memory_space<vmem>>, vector<256x128xf32>
    %c13_53 = arith.constant 13 : index
    %c0_54 = arith.constant 0 : index
    %84 = vector.load %arg5[%c13_53, %c0_54] : memref<25x128xf32, #tpu.memory_space<vmem>>, vector<1x128xf32>
    %85 = vector.broadcast %84 : vector<1x128xf32> to vector<256x128xf32>
    %86 = arith.mulf %83, %85 : vector<256x128xf32>
    %87 = arith.addf %82, %86 : vector<256x128xf32>
    %c18 = arith.constant 18 : index
    %c0_55 = arith.constant 0 : index
    %88 = vector.load %arg36[%c18, %c0_55] : memref<288x256xf32, #tpu.memory_space<vmem>>, vector<256x128xf32>
    %c14_56 = arith.constant 14 : index
    %c0_57 = arith.constant 0 : index
    %89 = vector.load %arg5[%c14_56, %c0_57] : memref<25x128xf32, #tpu.memory_space<vmem>>, vector<1x128xf32>
    %90 = vector.broadcast %89 : vector<1x128xf32> to vector<256x128xf32>
    %91 = arith.mulf %88, %90 : vector<256x128xf32>
    %92 = arith.addf %87, %91 : vector<256x128xf32>
    %c19 = arith.constant 19 : index
    %c0_58 = arith.constant 0 : index
    %93 = vector.load %arg36[%c19, %c0_58] : memref<288x256xf32, #tpu.memory_space<vmem>>, vector<256x128xf32>
    %c15_59 = arith.constant 15 : index
    %c0_60 = arith.constant 0 : index
    %94 = vector.load %arg5[%c15_59, %c0_60] : memref<25x128xf32, #tpu.memory_space<vmem>>, vector<1x128xf32>
    %95 = vector.broadcast %94 : vector<1x128xf32> to vector<256x128xf32>
    %96 = arith.mulf %93, %95 : vector<256x128xf32>
    %97 = arith.addf %92, %96 : vector<256x128xf32>
    %c20 = arith.constant 20 : index
    %c0_61 = arith.constant 0 : index
    %98 = vector.load %arg36[%c20, %c0_61] : memref<288x256xf32, #tpu.memory_space<vmem>>, vector<256x128xf32>
    %c16_62 = arith.constant 16 : index
    %c0_63 = arith.constant 0 : index
    %99 = vector.load %arg5[%c16_62, %c0_63] : memref<25x128xf32, #tpu.memory_space<vmem>>, vector<1x128xf32>
    %100 = vector.broadcast %99 : vector<1x128xf32> to vector<256x128xf32>
    %101 = arith.mulf %98, %100 : vector<256x128xf32>
    %102 = arith.addf %97, %101 : vector<256x128xf32>
    %c21 = arith.constant 21 : index
    %c0_64 = arith.constant 0 : index
    %103 = vector.load %arg36[%c21, %c0_64] : memref<288x256xf32, #tpu.memory_space<vmem>>, vector<256x128xf32>
    %c17_65 = arith.constant 17 : index
    %c0_66 = arith.constant 0 : index
    %104 = vector.load %arg5[%c17_65, %c0_66] : memref<25x128xf32, #tpu.memory_space<vmem>>, vector<1x128xf32>
    %105 = vector.broadcast %104 : vector<1x128xf32> to vector<256x128xf32>
    %106 = arith.mulf %103, %105 : vector<256x128xf32>
    %107 = arith.addf %102, %106 : vector<256x128xf32>
    %c22 = arith.constant 22 : index
    %c0_67 = arith.constant 0 : index
    %108 = vector.load %arg36[%c22, %c0_67] : memref<288x256xf32, #tpu.memory_space<vmem>>, vector<256x128xf32>
    %c18_68 = arith.constant 18 : index
    %c0_69 = arith.constant 0 : index
    %109 = vector.load %arg5[%c18_68, %c0_69] : memref<25x128xf32, #tpu.memory_space<vmem>>, vector<1x128xf32>
    %110 = vector.broadcast %109 : vector<1x128xf32> to vector<256x128xf32>
    %111 = arith.mulf %108, %110 : vector<256x128xf32>
    %112 = arith.addf %107, %111 : vector<256x128xf32>
    %c23 = arith.constant 23 : index
    %c0_70 = arith.constant 0 : index
    %113 = vector.load %arg36[%c23, %c0_70] : memref<288x256xf32, #tpu.memory_space<vmem>>, vector<256x128xf32>
    %c19_71 = arith.constant 19 : index
    %c0_72 = arith.constant 0 : index
    %114 = vector.load %arg5[%c19_71, %c0_72] : memref<25x128xf32, #tpu.memory_space<vmem>>, vector<1x128xf32>
    %115 = vector.broadcast %114 : vector<1x128xf32> to vector<256x128xf32>
    %116 = arith.mulf %113, %115 : vector<256x128xf32>
    %117 = arith.addf %112, %116 : vector<256x128xf32>
    %c24 = arith.constant 24 : index
    %c0_73 = arith.constant 0 : index
    %118 = vector.load %arg36[%c24, %c0_73] : memref<288x256xf32, #tpu.memory_space<vmem>>, vector<256x128xf32>
    %c20_74 = arith.constant 20 : index
    %c0_75 = arith.constant 0 : index
    %119 = vector.load %arg5[%c20_74, %c0_75] : memref<25x128xf32, #tpu.memory_space<vmem>>, vector<1x128xf32>
    %120 = vector.broadcast %119 : vector<1x128xf32> to vector<256x128xf32>
    %121 = arith.mulf %118, %120 : vector<256x128xf32>
    %122 = arith.addf %117, %121 : vector<256x128xf32>
    %c25 = arith.constant 25 : index
    %c0_76 = arith.constant 0 : index
    %123 = vector.load %arg36[%c25, %c0_76] : memref<288x256xf32, #tpu.memory_space<vmem>>, vector<256x128xf32>
    %c21_77 = arith.constant 21 : index
    %c0_78 = arith.constant 0 : index
    %124 = vector.load %arg5[%c21_77, %c0_78] : memref<25x128xf32, #tpu.memory_space<vmem>>, vector<1x128xf32>
    %125 = vector.broadcast %124 : vector<1x128xf32> to vector<256x128xf32>
    %126 = arith.mulf %123, %125 : vector<256x128xf32>
    %127 = arith.addf %122, %126 : vector<256x128xf32>
    %c26 = arith.constant 26 : index
    %c0_79 = arith.constant 0 : index
    %128 = vector.load %arg36[%c26, %c0_79] : memref<288x256xf32, #tpu.memory_space<vmem>>, vector<256x128xf32>
    %c22_80 = arith.constant 22 : index
    %c0_81 = arith.constant 0 : index
    %129 = vector.load %arg5[%c22_80, %c0_81] : memref<25x128xf32, #tpu.memory_space<vmem>>, vector<1x128xf32>
    %130 = vector.broadcast %129 : vector<1x128xf32> to vector<256x128xf32>
    %131 = arith.mulf %128, %130 : vector<256x128xf32>
    %132 = arith.addf %127, %131 : vector<256x128xf32>
    %c27 = arith.constant 27 : index
    %c0_82 = arith.constant 0 : index
    %133 = vector.load %arg36[%c27, %c0_82] : memref<288x256xf32, #tpu.memory_space<vmem>>, vector<256x128xf32>
    %c23_83 = arith.constant 23 : index
    %c0_84 = arith.constant 0 : index
    %134 = vector.load %arg5[%c23_83, %c0_84] : memref<25x128xf32, #tpu.memory_space<vmem>>, vector<1x128xf32>
    %135 = vector.broadcast %134 : vector<1x128xf32> to vector<256x128xf32>
    %136 = arith.mulf %133, %135 : vector<256x128xf32>
    %137 = arith.addf %132, %136 : vector<256x128xf32>
    %c28 = arith.constant 28 : index
    %c0_85 = arith.constant 0 : index
    %138 = vector.load %arg36[%c28, %c0_85] : memref<288x256xf32, #tpu.memory_space<vmem>>, vector<256x128xf32>
    %c24_86 = arith.constant 24 : index
    %c0_87 = arith.constant 0 : index
    %139 = vector.load %arg5[%c24_86, %c0_87] : memref<25x128xf32, #tpu.memory_space<vmem>>, vector<1x128xf32>
    %140 = vector.broadcast %139 : vector<1x128xf32> to vector<256x128xf32>
    %141 = arith.mulf %138, %140 : vector<256x128xf32>
    %142 = arith.addf %137, %141 : vector<256x128xf32>
    %143 = tpu.iota {dimensions = array<i32: 1>} : vector<128x256xi32>
    %144 = tpu.iota {dimensions = array<i32: 0>} : vector<128x256xi32>
    %c2_i32 = arith.constant 2 : i32
    %145 = vector.broadcast %c2_i32 : i32 to vector<128x256xi32>
    %146 = arith.muli %145, %144 : vector<128x256xi32>
    %147 = arith.subi %143, %146 : vector<128x256xi32>
    %c0_i32 = arith.constant 0 : i32
    %148 = vector.broadcast %c0_i32 : i32 to vector<128x256xi32>
    %149 = arith.cmpi eq, %147, %148 : vector<128x256xi32>
    %150 = arith.extui %149 : vector<128x256xi1> to vector<128x256xi32>
    %151 = arith.sitofp %150 : vector<128x256xi32> to vector<128x256xf32>
    %cst_88 = arith.constant dense<0.000000e+00> : vector<128x128xf32>
    %152 = tpu.matmul %151, %142, %cst_88 {dimension_numbers = #tpu.dot_dimension_numbers<[1], [0], [0], [1], [0, 0, 1, 1], [], []>} : vector<128x256xf32>, vector<256x128xf32>, vector<128x128xf32> -> vector<128x128xf32>
    %c0_89 = arith.constant 0 : index
    %c0_90 = arith.constant 0 : index
    %153 = vector.load %arg7[%c0_89, %c0_90] : memref<1x128xf32, #tpu.memory_space<vmem>>, vector<1x128xf32>
    %154 = vector.broadcast %153 : vector<1x128xf32> to vector<128x128xf32>
    %155 = arith.mulf %152, %154 : vector<128x128xf32>
    %c0_91 = arith.constant 0 : index
    %c0_92 = arith.constant 0 : index
    %156 = vector.load %arg8[%c0_91, %c0_92] : memref<1x128xf32, #tpu.memory_space<vmem>>, vector<1x128xf32>
    %157 = vector.broadcast %156 : vector<1x128xf32> to vector<128x128xf32>
    %158 = arith.addf %155, %157 : vector<128x128xf32>
    %c0_93 = arith.constant 0 : index
    %c0_94 = arith.constant 0 : index
    %159 = vector.load %arg6[%c0_93, %c0_94] : memref<128x256xf32, #tpu.memory_space<vmem>>, vector<128x256xf32>
    %cst_95 = arith.constant dense<0.000000e+00> : vector<128x256xf32>
    %160 = tpu.matmul %158, %159, %cst_95 {dimension_numbers = #tpu.dot_dimension_numbers<[1], [0], [0], [1], [0, 0, 1, 1], [], []>} : vector<128x128xf32>, vector<128x256xf32>, vector<128x256xf32> -> vector<128x256xf32>
    %c0_96 = arith.constant 0 : index
    %c0_97 = arith.constant 0 : index
    %161 = vector.load %arg9[%c0_96, %c0_97] : memref<1x256xf32, #tpu.memory_space<vmem>>, vector<1x256xf32>
    %162 = vector.broadcast %161 : vector<1x256xf32> to vector<128x256xf32>
    %163 = arith.mulf %160, %162 : vector<128x256xf32>
    %c0_98 = arith.constant 0 : index
    %c0_99 = arith.constant 0 : index
    %164 = vector.load %arg10[%c0_98, %c0_99] : memref<1x256xf32, #tpu.memory_space<vmem>>, vector<1x256xf32>
    %165 = vector.broadcast %164 : vector<1x256xf32> to vector<128x256xf32>
    %166 = arith.addf %163, %165 : vector<128x256xf32>
    %cst_100 = arith.constant 0.000000e+00 : f32
    %167 = vector.broadcast %cst_100 : f32 to vector<128x256xf32>
    %168 = arith.cmpf oge, %166, %167 : vector<128x256xf32>
    %cst_101 = arith.constant 2.000000e-01 : f32
    %169 = vector.broadcast %cst_101 : f32 to vector<128x256xf32>
    %170 = arith.mulf %169, %166 : vector<128x256xf32>
    %171 = arith.select %168, %166, %170 : vector<128x256xi1>, vector<128x256xf32>
    %172 = tpu.iota {dimensions = array<i32: 1>} : vector<64x128xi32>
    %173 = tpu.iota {dimensions = array<i32: 0>} : vector<64x128xi32>
    %c2_i32_102 = arith.constant 2 : i32
    %174 = vector.broadcast %c2_i32_102 : i32 to vector<64x128xi32>
    %175 = arith.muli %174, %173 : vector<64x128xi32>
    %176 = arith.subi %172, %175 : vector<64x128xi32>
    %c-1_i32 = arith.constant -1 : i32
    %177 = vector.broadcast %c-1_i32 : i32 to vector<64x128xi32>
    %178 = arith.cmpi sge, %176, %177 : vector<64x128xi32>
    %c1_i32 = arith.constant 1 : i32
    %179 = vector.broadcast %c1_i32 : i32 to vector<64x128xi32>
    %180 = arith.cmpi sle, %176, %179 : vector<64x128xi32>
    %181 = arith.andi %178, %180 : vector<64x128xi1>
    %cst_103 = arith.constant 0.333333343 : f32
    %cst_104 = arith.constant 0.000000e+00 : f32
    %182 = vector.broadcast %cst_103 : f32 to vector<64x128xf32>
    %183 = vector.broadcast %cst_104 : f32 to vector<64x128xf32>
    %184 = arith.select %181, %182, %183 : vector<64x128xi1>, vector<64x128xf32>
    %cst_105 = arith.constant dense<0.000000e+00> : vector<64x256xf32>
    %185 = tpu.matmul %184, %171, %cst_105 {dimension_numbers = #tpu.dot_dimension_numbers<[1], [0], [0], [1], [0, 0, 1, 1], [], []>} : vector<64x128xf32>, vector<128x256xf32>, vector<64x256xf32> -> vector<64x256xf32>
    %cst_106 = arith.constant 0.000000e+00 : f32
    %186 = vector.broadcast %cst_106 : f32 to vector<16x256xf32>
    %c0_107 = arith.constant 0 : index
    %c0_108 = arith.constant 0 : index
    %187 = vector.load %arg36[%c0_107, %c0_108] : memref<288x256xf32, #tpu.memory_space<vmem>>, vector<16x256xf32>
    tpu.vector_store %arg36[%c0_107, %c0_108], %186 {strides = array<i32>} : memref<288x256xf32, #tpu.memory_space<vmem>>, vector<16x256xf32>,
    %cst_109 = arith.constant 0.000000e+00 : f32
    %188 = vector.broadcast %cst_109 : f32 to vector<16x256xf32>
    %c80 = arith.constant 80 : index
    %c0_110 = arith.constant 0 : index
    %189 = vector.load %arg36[%c80, %c0_110] : memref<288x256xf32, #tpu.memory_space<vmem>>, vector<16x256xf32>
    tpu.vector_store %arg36[%c80, %c0_110], %188 {strides = array<i32>} : memref<288x256xf32, #tpu.memory_space<vmem>>, vector<16x256xf32>,
    %c16_111 = arith.constant 16 : index
    %c0_112 = arith.constant 0 : index
    %190 = vector.load %arg36[%c16_111, %c0_112] : memref<288x256xf32, #tpu.memory_space<vmem>>, vector<64x256xf32>
    tpu.vector_store %arg36[%c16_111, %c0_112], %185 {strides = array<i32>} : memref<288x256xf32, #tpu.memory_space<vmem>>, vector<64x256xf32>,
    %c12_113 = arith.constant 12 : index
    %c0_114 = arith.constant 0 : index
    %191 = vector.load %arg36[%c12_113, %c0_114] : memref<288x256xf32, #tpu.memory_space<vmem>>, vector<64x256xf32>
    %c0_115 = arith.constant 0 : index
    %c0_116 = arith.constant 0 : index
    %192 = vector.load %arg11[%c0_115, %c0_116] : memref<9x256xf32, #tpu.memory_space<vmem>>, vector<1x256xf32>
    %193 = vector.broadcast %192 : vector<1x256xf32> to vector<64x256xf32>
    %194 = arith.mulf %191, %193 : vector<64x256xf32>
    %c13_117 = arith.constant 13 : index
    %c0_118 = arith.constant 0 : index
    %195 = vector.load %arg36[%c13_117, %c0_118] : memref<288x256xf32, #tpu.memory_space<vmem>>, vector<64x256xf32>
    %c1_119 = arith.constant 1 : index
    %c0_120 = arith.constant 0 : index
    %196 = vector.load %arg11[%c1_119, %c0_120] : memref<9x256xf32, #tpu.memory_space<vmem>>, vector<1x256xf32>
    %197 = vector.broadcast %196 : vector<1x256xf32> to vector<64x256xf32>
    %198 = arith.mulf %195, %197 : vector<64x256xf32>
    %199 = arith.addf %194, %198 : vector<64x256xf32>
    %c14_121 = arith.constant 14 : index
    %c0_122 = arith.constant 0 : index
    %200 = vector.load %arg36[%c14_121, %c0_122] : memref<288x256xf32, #tpu.memory_space<vmem>>, vector<64x256xf32>
    %c2_123 = arith.constant 2 : index
    %c0_124 = arith.constant 0 : index
    %201 = vector.load %arg11[%c2_123, %c0_124] : memref<9x256xf32, #tpu.memory_space<vmem>>, vector<1x256xf32>
    %202 = vector.broadcast %201 : vector<1x256xf32> to vector<64x256xf32>
    %203 = arith.mulf %200, %202 : vector<64x256xf32>
    %204 = arith.addf %199, %203 : vector<64x256xf32>
    %c15_125 = arith.constant 15 : index
    %c0_126 = arith.constant 0 : index
    %205 = vector.load %arg36[%c15_125, %c0_126] : memref<288x256xf32, #tpu.memory_space<vmem>>, vector<64x256xf32>
    %c3_127 = arith.constant 3 : index
    %c0_128 = arith.constant 0 : index
    %206 = vector.load %arg11[%c3_127, %c0_128] : memref<9x256xf32, #tpu.memory_space<vmem>>, vector<1x256xf32>
    %207 = vector.broadcast %206 : vector<1x256xf32> to vector<64x256xf32>
    %208 = arith.mulf %205, %207 : vector<64x256xf32>
    %209 = arith.addf %204, %208 : vector<64x256xf32>
    %c16_129 = arith.constant 16 : index
    %c0_130 = arith.constant 0 : index
    %210 = vector.load %arg36[%c16_129, %c0_130] : memref<288x256xf32, #tpu.memory_space<vmem>>, vector<64x256xf32>
    %c4_131 = arith.constant 4 : index
    %c0_132 = arith.constant 0 : index
    %211 = vector.load %arg11[%c4_131, %c0_132] : memref<9x256xf32, #tpu.memory_space<vmem>>, vector<1x256xf32>
    %212 = vector.broadcast %211 : vector<1x256xf32> to vector<64x256xf32>
    %213 = arith.mulf %210, %212 : vector<64x256xf32>
    %214 = arith.addf %209, %213 : vector<64x256xf32>
    %c17_133 = arith.constant 17 : index
    %c0_134 = arith.constant 0 : index
    %215 = vector.load %arg36[%c17_133, %c0_134] : memref<288x256xf32, #tpu.memory_space<vmem>>, vector<64x256xf32>
    %c5_135 = arith.constant 5 : index
    %c0_136 = arith.constant 0 : index
    %216 = vector.load %arg11[%c5_135, %c0_136] : memref<9x256xf32, #tpu.memory_space<vmem>>, vector<1x256xf32>
    %217 = vector.broadcast %216 : vector<1x256xf32> to vector<64x256xf32>
    %218 = arith.mulf %215, %217 : vector<64x256xf32>
    %219 = arith.addf %214, %218 : vector<64x256xf32>
    %c18_137 = arith.constant 18 : index
    %c0_138 = arith.constant 0 : index
    %220 = vector.load %arg36[%c18_137, %c0_138] : memref<288x256xf32, #tpu.memory_space<vmem>>, vector<64x256xf32>
    %c6_139 = arith.constant 6 : index
    %c0_140 = arith.constant 0 : index
    %221 = vector.load %arg11[%c6_139, %c0_140] : memref<9x256xf32, #tpu.memory_space<vmem>>, vector<1x256xf32>
    %222 = vector.broadcast %221 : vector<1x256xf32> to vector<64x256xf32>
    %223 = arith.mulf %220, %222 : vector<64x256xf32>
    %224 = arith.addf %219, %223 : vector<64x256xf32>
    %c19_141 = arith.constant 19 : index
    %c0_142 = arith.constant 0 : index
    %225 = vector.load %arg36[%c19_141, %c0_142] : memref<288x256xf32, #tpu.memory_space<vmem>>, vector<64x256xf32>
    %c7_143 = arith.constant 7 : index
    %c0_144 = arith.constant 0 : index
    %226 = vector.load %arg11[%c7_143, %c0_144] : memref<9x256xf32, #tpu.memory_space<vmem>>, vector<1x256xf32>
    %227 = vector.broadcast %226 : vector<1x256xf32> to vector<64x256xf32>
    %228 = arith.mulf %225, %227 : vector<64x256xf32>
    %229 = arith.addf %224, %228 : vector<64x256xf32>
    %c20_145 = arith.constant 20 : index
    %c0_146 = arith.constant 0 : index
    %230 = vector.load %arg36[%c20_145, %c0_146] : memref<288x256xf32, #tpu.memory_space<vmem>>, vector<64x256xf32>
    %c8_147 = arith.constant 8 : index
    %c0_148 = arith.constant 0 : index
    %231 = vector.load %arg11[%c8_147, %c0_148] : memref<9x256xf32, #tpu.memory_space<vmem>>, vector<1x256xf32>
    %232 = vector.broadcast %231 : vector<1x256xf32> to vector<64x256xf32>
    %233 = arith.mulf %230, %232 : vector<64x256xf32>
    %234 = arith.addf %229, %233 : vector<64x256xf32>
    %c0_149 = arith.constant 0 : index
    %c0_150 = arith.constant 0 : index
    %235 = vector.load %arg13[%c0_149, %c0_150] : memref<1x256xf32, #tpu.memory_space<vmem>>, vector<1x256xf32>
    %236 = vector.broadcast %235 : vector<1x256xf32> to vector<64x256xf32>
    %237 = arith.mulf %234, %236 : vector<64x256xf32>
    %c0_151 = arith.constant 0 : index
    %c0_152 = arith.constant 0 : index
    %238 = vector.load %arg14[%c0_151, %c0_152] : memref<1x256xf32, #tpu.memory_space<vmem>>, vector<1x256xf32>
    %239 = vector.broadcast %238 : vector<1x256xf32> to vector<64x256xf32>
    %240 = arith.addf %237, %239 : vector<64x256xf32>
    %c0_153 = arith.constant 0 : index
    %c0_154 = arith.constant 0 : index
    %241 = vector.load %arg12[%c0_153, %c0_154] : memref<256x256xf32, #tpu.memory_space<vmem>>, vector<256x256xf32>
    %cst_155 = arith.constant dense<0.000000e+00> : vector<64x256xf32>
    %242 = tpu.matmul %240, %241, %cst_155 {dimension_numbers = #tpu.dot_dimension_numbers<[1], [0], [0], [1], [0, 0, 1, 1], [], []>} : vector<64x256xf32>, vector<256x256xf32>, vector<64x256xf32> -> vector<64x256xf32>
    %c0_156 = arith.constant 0 : index
    %c0_157 = arith.constant 0 : index
    %243 = vector.load %arg15[%c0_156, %c0_157] : memref<1x256xf32, #tpu.memory_space<vmem>>, vector<1x256xf32>
    %244 = vector.broadcast %243 : vector<1x256xf32> to vector<64x256xf32>
    %245 = arith.mulf %242, %244 : vector<64x256xf32>
    %c0_158 = arith.constant 0 : index
    %c0_159 = arith.constant 0 : index
    %246 = vector.load %arg16[%c0_158, %c0_159] : memref<1x256xf32, #tpu.memory_space<vmem>>, vector<1x256xf32>
    %247 = vector.broadcast %246 : vector<1x256xf32> to vector<64x256xf32>
    %248 = arith.addf %245, %247 : vector<64x256xf32>
    %cst_160 = arith.constant 0.000000e+00 : f32
    %249 = vector.broadcast %cst_160 : f32 to vector<64x256xf32>
    %250 = arith.cmpf oge, %248, %249 : vector<64x256xf32>
    %cst_161 = arith.constant 2.000000e-01 : f32
    %251 = vector.broadcast %cst_161 : f32 to vector<64x256xf32>
    %252 = arith.mulf %251, %248 : vector<64x256xf32>
    %253 = arith.select %250, %248, %252 : vector<64x256xi1>, vector<64x256xf32>
    %254 = tpu.iota {dimensions = array<i32: 1>} : vector<32x64xi32>
    %255 = tpu.iota {dimensions = array<i32: 0>} : vector<32x64xi32>
    %c2_i32_162 = arith.constant 2 : i32
    %256 = vector.broadcast %c2_i32_162 : i32 to vector<32x64xi32>
    %257 = arith.muli %256, %255 : vector<32x64xi32>
    %258 = arith.subi %254, %257 : vector<32x64xi32>
    %c-1_i32_163 = arith.constant -1 : i32
    %259 = vector.broadcast %c-1_i32_163 : i32 to vector<32x64xi32>
    %260 = arith.cmpi sge, %258, %259 : vector<32x64xi32>
    %c1_i32_164 = arith.constant 1 : i32
    %261 = vector.broadcast %c1_i32_164 : i32 to vector<32x64xi32>
    %262 = arith.cmpi sle, %258, %261 : vector<32x64xi32>
    %263 = arith.andi %260, %262 : vector<32x64xi1>
    %cst_165 = arith.constant 0.333333343 : f32
    %cst_166 = arith.constant 0.000000e+00 : f32
    %264 = vector.broadcast %cst_165 : f32 to vector<32x64xf32>
    %265 = vector.broadcast %cst_166 : f32 to vector<32x64xf32>
    %266 = arith.select %263, %264, %265 : vector<32x64xi1>, vector<32x64xf32>
    %cst_167 = arith.constant dense<0.000000e+00> : vector<32x256xf32>
    %267 = tpu.matmul %266, %253, %cst_167 {dimension_numbers = #tpu.dot_dimension_numbers<[1], [0], [0], [1], [0, 0, 1, 1], [], []>} : vector<32x64xf32>, vector<64x256xf32>, vector<32x256xf32> -> vector<32x256xf32>
    %cst_168 = arith.constant 0.000000e+00 : f32
    %268 = vector.broadcast %cst_168 : f32 to vector<16x256xf32>
    %c0_169 = arith.constant 0 : index
    %c0_170 = arith.constant 0 : index
    %269 = vector.load %arg36[%c0_169, %c0_170] : memref<288x256xf32, #tpu.memory_space<vmem>>, vector<16x256xf32>
    tpu.vector_store %arg36[%c0_169, %c0_170], %268 {strides = array<i32>} : memref<288x256xf32, #tpu.memory_space<vmem>>, vector<16x256xf32>,
    %cst_171 = arith.constant 0.000000e+00 : f32
    %270 = vector.broadcast %cst_171 : f32 to vector<16x256xf32>
    %c48 = arith.constant 48 : index
    %c0_172 = arith.constant 0 : index
    %271 = vector.load %arg36[%c48, %c0_172] : memref<288x256xf32, #tpu.memory_space<vmem>>, vector<16x256xf32>
    tpu.vector_store %arg36[%c48, %c0_172], %270 {strides = array<i32>} : memref<288x256xf32, #tpu.memory_space<vmem>>, vector<16x256xf32>,
    %c16_173 = arith.constant 16 : index
    %c0_174 = arith.constant 0 : index
    %272 = vector.load %arg36[%c16_173, %c0_174] : memref<288x256xf32, #tpu.memory_space<vmem>>, vector<32x256xf32>
    tpu.vector_store %arg36[%c16_173, %c0_174], %267 {strides = array<i32>} : memref<288x256xf32, #tpu.memory_space<vmem>>, vector<32x256xf32>,
    %c12_175 = arith.constant 12 : index
    %c0_176 = arith.constant 0 : index
    %273 = vector.load %arg36[%c12_175, %c0_176] : memref<288x256xf32, #tpu.memory_space<vmem>>, vector<32x256xf32>
    %c0_177 = arith.constant 0 : index
    %c0_178 = arith.constant 0 : index
    %274 = vector.load %arg17[%c0_177, %c0_178] : memref<9x256xf32, #tpu.memory_space<vmem>>, vector<1x256xf32>
    %275 = vector.broadcast %274 : vector<1x256xf32> to vector<32x256xf32>
    %276 = arith.mulf %273, %275 : vector<32x256xf32>
    %c13_179 = arith.constant 13 : index
    %c0_180 = arith.constant 0 : index
    %277 = vector.load %arg36[%c13_179, %c0_180] : memref<288x256xf32, #tpu.memory_space<vmem>>, vector<32x256xf32>
    %c1_181 = arith.constant 1 : index
    %c0_182 = arith.constant 0 : index
    %278 = vector.load %arg17[%c1_181, %c0_182] : memref<9x256xf32, #tpu.memory_space<vmem>>, vector<1x256xf32>
    %279 = vector.broadcast %278 : vector<1x256xf32> to vector<32x256xf32>
    %280 = arith.mulf %277, %279 : vector<32x256xf32>
    %281 = arith.addf %276, %280 : vector<32x256xf32>
    %c14_183 = arith.constant 14 : index
    %c0_184 = arith.constant 0 : index
    %282 = vector.load %arg36[%c14_183, %c0_184] : memref<288x256xf32, #tpu.memory_space<vmem>>, vector<32x256xf32>
    %c2_185 = arith.constant 2 : index
    %c0_186 = arith.constant 0 : index
    %283 = vector.load %arg17[%c2_185, %c0_186] : memref<9x256xf32, #tpu.memory_space<vmem>>, vector<1x256xf32>
    %284 = vector.broadcast %283 : vector<1x256xf32> to vector<32x256xf32>
    %285 = arith.mulf %282, %284 : vector<32x256xf32>
    %286 = arith.addf %281, %285 : vector<32x256xf32>
    %c15_187 = arith.constant 15 : index
    %c0_188 = arith.constant 0 : index
    %287 = vector.load %arg36[%c15_187, %c0_188] : memref<288x256xf32, #tpu.memory_space<vmem>>, vector<32x256xf32>
    %c3_189 = arith.constant 3 : index
    %c0_190 = arith.constant 0 : index
    %288 = vector.load %arg17[%c3_189, %c0_190] : memref<9x256xf32, #tpu.memory_space<vmem>>, vector<1x256xf32>
    %289 = vector.broadcast %288 : vector<1x256xf32> to vector<32x256xf32>
    %290 = arith.mulf %287, %289 : vector<32x256xf32>
    %291 = arith.addf %286, %290 : vector<32x256xf32>
    %c16_191 = arith.constant 16 : index
    %c0_192 = arith.constant 0 : index
    %292 = vector.load %arg36[%c16_191, %c0_192] : memref<288x256xf32, #tpu.memory_space<vmem>>, vector<32x256xf32>
    %c4_193 = arith.constant 4 : index
    %c0_194 = arith.constant 0 : index
    %293 = vector.load %arg17[%c4_193, %c0_194] : memref<9x256xf32, #tpu.memory_space<vmem>>, vector<1x256xf32>
    %294 = vector.broadcast %293 : vector<1x256xf32> to vector<32x256xf32>
    %295 = arith.mulf %292, %294 : vector<32x256xf32>
    %296 = arith.addf %291, %295 : vector<32x256xf32>
    %c17_195 = arith.constant 17 : index
    %c0_196 = arith.constant 0 : index
    %297 = vector.load %arg36[%c17_195, %c0_196] : memref<288x256xf32, #tpu.memory_space<vmem>>, vector<32x256xf32>
    %c5_197 = arith.constant 5 : index
    %c0_198 = arith.constant 0 : index
    %298 = vector.load %arg17[%c5_197, %c0_198] : memref<9x256xf32, #tpu.memory_space<vmem>>, vector<1x256xf32>
    %299 = vector.broadcast %298 : vector<1x256xf32> to vector<32x256xf32>
    %300 = arith.mulf %297, %299 : vector<32x256xf32>
    %301 = arith.addf %296, %300 : vector<32x256xf32>
    %c18_199 = arith.constant 18 : index
    %c0_200 = arith.constant 0 : index
    %302 = vector.load %arg36[%c18_199, %c0_200] : memref<288x256xf32, #tpu.memory_space<vmem>>, vector<32x256xf32>
    %c6_201 = arith.constant 6 : index
    %c0_202 = arith.constant 0 : index
    %303 = vector.load %arg17[%c6_201, %c0_202] : memref<9x256xf32, #tpu.memory_space<vmem>>, vector<1x256xf32>
    %304 = vector.broadcast %303 : vector<1x256xf32> to vector<32x256xf32>
    %305 = arith.mulf %302, %304 : vector<32x256xf32>
    %306 = arith.addf %301, %305 : vector<32x256xf32>
    %c19_203 = arith.constant 19 : index
    %c0_204 = arith.constant 0 : index
    %307 = vector.load %arg36[%c19_203, %c0_204] : memref<288x256xf32, #tpu.memory_space<vmem>>, vector<32x256xf32>
    %c7_205 = arith.constant 7 : index
    %c0_206 = arith.constant 0 : index
    %308 = vector.load %arg17[%c7_205, %c0_206] : memref<9x256xf32, #tpu.memory_space<vmem>>, vector<1x256xf32>
    %309 = vector.broadcast %308 : vector<1x256xf32> to vector<32x256xf32>
    %310 = arith.mulf %307, %309 : vector<32x256xf32>
    %311 = arith.addf %306, %310 : vector<32x256xf32>
    %c20_207 = arith.constant 20 : index
    %c0_208 = arith.constant 0 : index
    %312 = vector.load %arg36[%c20_207, %c0_208] : memref<288x256xf32, #tpu.memory_space<vmem>>, vector<32x256xf32>
    %c8_209 = arith.constant 8 : index
    %c0_210 = arith.constant 0 : index
    %313 = vector.load %arg17[%c8_209, %c0_210] : memref<9x256xf32, #tpu.memory_space<vmem>>, vector<1x256xf32>
    %314 = vector.broadcast %313 : vector<1x256xf32> to vector<32x256xf32>
    %315 = arith.mulf %312, %314 : vector<32x256xf32>
    %316 = arith.addf %311, %315 : vector<32x256xf32>
    %c0_211 = arith.constant 0 : index
    %c0_212 = arith.constant 0 : index
    %317 = vector.load %arg19[%c0_211, %c0_212] : memref<1x256xf32, #tpu.memory_space<vmem>>, vector<1x256xf32>
    %318 = vector.broadcast %317 : vector<1x256xf32> to vector<32x256xf32>
    %319 = arith.mulf %316, %318 : vector<32x256xf32>
    %c0_213 = arith.constant 0 : index
    %c0_214 = arith.constant 0 : index
    %320 = vector.load %arg20[%c0_213, %c0_214] : memref<1x256xf32, #tpu.memory_space<vmem>>, vector<1x256xf32>
    %321 = vector.broadcast %320 : vector<1x256xf32> to vector<32x256xf32>
    %322 = arith.addf %319, %321 : vector<32x256xf32>
    %c0_215 = arith.constant 0 : index
    %c0_216 = arith.constant 0 : index
    %323 = vector.load %arg18[%c0_215, %c0_216] : memref<256x256xf32, #tpu.memory_space<vmem>>, vector<256x256xf32>
    %cst_217 = arith.constant dense<0.000000e+00> : vector<32x256xf32>
    %324 = tpu.matmul %322, %323, %cst_217 {dimension_numbers = #tpu.dot_dimension_numbers<[1], [0], [0], [1], [0, 0, 1, 1], [], []>} : vector<32x256xf32>, vector<256x256xf32>, vector<32x256xf32> -> vector<32x256xf32>
    %c0_218 = arith.constant 0 : index
    %c0_219 = arith.constant 0 : index
    %325 = vector.load %arg21[%c0_218, %c0_219] : memref<1x256xf32, #tpu.memory_space<vmem>>, vector<1x256xf32>
    %326 = vector.broadcast %325 : vector<1x256xf32> to vector<32x256xf32>
    %327 = arith.mulf %324, %326 : vector<32x256xf32>
    %c0_220 = arith.constant 0 : index
    %c0_221 = arith.constant 0 : index
    %328 = vector.load %arg22[%c0_220, %c0_221] : memref<1x256xf32, #tpu.memory_space<vmem>>, vector<1x256xf32>
    %329 = vector.broadcast %328 : vector<1x256xf32> to vector<32x256xf32>
    %330 = arith.addf %327, %329 : vector<32x256xf32>
    %cst_222 = arith.constant 0.000000e+00 : f32
    %331 = vector.broadcast %cst_222 : f32 to vector<32x256xf32>
    %332 = arith.cmpf oge, %330, %331 : vector<32x256xf32>
    %cst_223 = arith.constant 2.000000e-01 : f32
    %333 = vector.broadcast %cst_223 : f32 to vector<32x256xf32>
    %334 = arith.mulf %333, %330 : vector<32x256xf32>
    %335 = arith.select %332, %330, %334 : vector<32x256xi1>, vector<32x256xf32>
    %336 = tpu.iota {dimensions = array<i32: 1>} : vector<16x32xi32>
    %337 = tpu.iota {dimensions = array<i32: 0>} : vector<16x32xi32>
    %c2_i32_224 = arith.constant 2 : i32
    %338 = vector.broadcast %c2_i32_224 : i32 to vector<16x32xi32>
    %339 = arith.muli %338, %337 : vector<16x32xi32>
    %340 = arith.subi %336, %339 : vector<16x32xi32>
    %c-1_i32_225 = arith.constant -1 : i32
    %341 = vector.broadcast %c-1_i32_225 : i32 to vector<16x32xi32>
    %342 = arith.cmpi sge, %340, %341 : vector<16x32xi32>
    %c1_i32_226 = arith.constant 1 : i32
    %343 = vector.broadcast %c1_i32_226 : i32 to vector<16x32xi32>
    %344 = arith.cmpi sle, %340, %343 : vector<16x32xi32>
    %345 = arith.andi %342, %344 : vector<16x32xi1>
    %cst_227 = arith.constant 0.333333343 : f32
    %cst_228 = arith.constant 0.000000e+00 : f32
    %346 = vector.broadcast %cst_227 : f32 to vector<16x32xf32>
    %347 = vector.broadcast %cst_228 : f32 to vector<16x32xf32>
    %348 = arith.select %345, %346, %347 : vector<16x32xi1>, vector<16x32xf32>
    %cst_229 = arith.constant dense<0.000000e+00> : vector<16x256xf32>
    %349 = tpu.matmul %348, %335, %cst_229 {dimension_numbers = #tpu.dot_dimension_numbers<[1], [0], [0], [1], [0, 0, 1, 1], [], []>} : vector<16x32xf32>, vector<32x256xf32>, vector<16x256xf32> -> vector<16x256xf32>
    %cst_230 = arith.constant 0.000000e+00 : f32
    %350 = vector.broadcast %cst_230 : f32 to vector<16x256xf32>
    %c0_231 = arith.constant 0 : index
    %c0_232 = arith.constant 0 : index
    %351 = vector.load %arg36[%c0_231, %c0_232] : memref<288x256xf32, #tpu.memory_space<vmem>>, vector<16x256xf32>
    tpu.vector_store %arg36[%c0_231, %c0_232], %350 {strides = array<i32>} : memref<288x256xf32, #tpu.memory_space<vmem>>, vector<16x256xf32>,
    %cst_233 = arith.constant 0.000000e+00 : f32
    %352 = vector.broadcast %cst_233 : f32 to vector<16x256xf32>
    %c32 = arith.constant 32 : index
    %c0_234 = arith.constant 0 : index
    %353 = vector.load %arg36[%c32, %c0_234] : memref<288x256xf32, #tpu.memory_space<vmem>>, vector<16x256xf32>
    tpu.vector_store %arg36[%c32, %c0_234], %352 {strides = array<i32>} : memref<288x256xf32, #tpu.memory_space<vmem>>, vector<16x256xf32>,
    %c16_235 = arith.constant 16 : index
    %c0_236 = arith.constant 0 : index
    %354 = vector.load %arg36[%c16_235, %c0_236] : memref<288x256xf32, #tpu.memory_space<vmem>>, vector<16x256xf32>
    tpu.vector_store %arg36[%c16_235, %c0_236], %349 {strides = array<i32>} : memref<288x256xf32, #tpu.memory_space<vmem>>, vector<16x256xf32>,
    %c12_237 = arith.constant 12 : index
    %c0_238 = arith.constant 0 : index
    %355 = vector.load %arg36[%c12_237, %c0_238] : memref<288x256xf32, #tpu.memory_space<vmem>>, vector<16x256xf32>
    %c0_239 = arith.constant 0 : index
    %c0_240 = arith.constant 0 : index
    %356 = vector.load %arg23[%c0_239, %c0_240] : memref<9x256xf32, #tpu.memory_space<vmem>>, vector<1x256xf32>
    %357 = vector.broadcast %356 : vector<1x256xf32> to vector<16x256xf32>
    %358 = arith.mulf %355, %357 : vector<16x256xf32>
    %c13_241 = arith.constant 13 : index
    %c0_242 = arith.constant 0 : index
    %359 = vector.load %arg36[%c13_241, %c0_242] : memref<288x256xf32, #tpu.memory_space<vmem>>, vector<16x256xf32>
    %c1_243 = arith.constant 1 : index
    %c0_244 = arith.constant 0 : index
    %360 = vector.load %arg23[%c1_243, %c0_244] : memref<9x256xf32, #tpu.memory_space<vmem>>, vector<1x256xf32>
    %361 = vector.broadcast %360 : vector<1x256xf32> to vector<16x256xf32>
    %362 = arith.mulf %359, %361 : vector<16x256xf32>
    %363 = arith.addf %358, %362 : vector<16x256xf32>
    %c14_245 = arith.constant 14 : index
    %c0_246 = arith.constant 0 : index
    %364 = vector.load %arg36[%c14_245, %c0_246] : memref<288x256xf32, #tpu.memory_space<vmem>>, vector<16x256xf32>
    %c2_247 = arith.constant 2 : index
    %c0_248 = arith.constant 0 : index
    %365 = vector.load %arg23[%c2_247, %c0_248] : memref<9x256xf32, #tpu.memory_space<vmem>>, vector<1x256xf32>
    %366 = vector.broadcast %365 : vector<1x256xf32> to vector<16x256xf32>
    %367 = arith.mulf %364, %366 : vector<16x256xf32>
    %368 = arith.addf %363, %367 : vector<16x256xf32>
    %c15_249 = arith.constant 15 : index
    %c0_250 = arith.constant 0 : index
    %369 = vector.load %arg36[%c15_249, %c0_250] : memref<288x256xf32, #tpu.memory_space<vmem>>, vector<16x256xf32>
    %c3_251 = arith.constant 3 : index
    %c0_252 = arith.constant 0 : index
    %370 = vector.load %arg23[%c3_251, %c0_252] : memref<9x256xf32, #tpu.memory_space<vmem>>, vector<1x256xf32>
    %371 = vector.broadcast %370 : vector<1x256xf32> to vector<16x256xf32>
    %372 = arith.mulf %369, %371 : vector<16x256xf32>
    %373 = arith.addf %368, %372 : vector<16x256xf32>
    %c16_253 = arith.constant 16 : index
    %c0_254 = arith.constant 0 : index
    %374 = vector.load %arg36[%c16_253, %c0_254] : memref<288x256xf32, #tpu.memory_space<vmem>>, vector<16x256xf32>
    %c4_255 = arith.constant 4 : index
    %c0_256 = arith.constant 0 : index
    %375 = vector.load %arg23[%c4_255, %c0_256] : memref<9x256xf32, #tpu.memory_space<vmem>>, vector<1x256xf32>
    %376 = vector.broadcast %375 : vector<1x256xf32> to vector<16x256xf32>
    %377 = arith.mulf %374, %376 : vector<16x256xf32>
    %378 = arith.addf %373, %377 : vector<16x256xf32>
    %c17_257 = arith.constant 17 : index
    %c0_258 = arith.constant 0 : index
    %379 = vector.load %arg36[%c17_257, %c0_258] : memref<288x256xf32, #tpu.memory_space<vmem>>, vector<16x256xf32>
    %c5_259 = arith.constant 5 : index
    %c0_260 = arith.constant 0 : index
    %380 = vector.load %arg23[%c5_259, %c0_260] : memref<9x256xf32, #tpu.memory_space<vmem>>, vector<1x256xf32>
    %381 = vector.broadcast %380 : vector<1x256xf32> to vector<16x256xf32>
    %382 = arith.mulf %379, %381 : vector<16x256xf32>
    %383 = arith.addf %378, %382 : vector<16x256xf32>
    %c18_261 = arith.constant 18 : index
    %c0_262 = arith.constant 0 : index
    %384 = vector.load %arg36[%c18_261, %c0_262] : memref<288x256xf32, #tpu.memory_space<vmem>>, vector<16x256xf32>
    %c6_263 = arith.constant 6 : index
    %c0_264 = arith.constant 0 : index
    %385 = vector.load %arg23[%c6_263, %c0_264] : memref<9x256xf32, #tpu.memory_space<vmem>>, vector<1x256xf32>
    %386 = vector.broadcast %385 : vector<1x256xf32> to vector<16x256xf32>
    %387 = arith.mulf %384, %386 : vector<16x256xf32>
    %388 = arith.addf %383, %387 : vector<16x256xf32>
    %c19_265 = arith.constant 19 : index
    %c0_266 = arith.constant 0 : index
    %389 = vector.load %arg36[%c19_265, %c0_266] : memref<288x256xf32, #tpu.memory_space<vmem>>, vector<16x256xf32>
    %c7_267 = arith.constant 7 : index
    %c0_268 = arith.constant 0 : index
    %390 = vector.load %arg23[%c7_267, %c0_268] : memref<9x256xf32, #tpu.memory_space<vmem>>, vector<1x256xf32>
    %391 = vector.broadcast %390 : vector<1x256xf32> to vector<16x256xf32>
    %392 = arith.mulf %389, %391 : vector<16x256xf32>
    %393 = arith.addf %388, %392 : vector<16x256xf32>
    %c20_269 = arith.constant 20 : index
    %c0_270 = arith.constant 0 : index
    %394 = vector.load %arg36[%c20_269, %c0_270] : memref<288x256xf32, #tpu.memory_space<vmem>>, vector<16x256xf32>
    %c8_271 = arith.constant 8 : index
    %c0_272 = arith.constant 0 : index
    %395 = vector.load %arg23[%c8_271, %c0_272] : memref<9x256xf32, #tpu.memory_space<vmem>>, vector<1x256xf32>
    %396 = vector.broadcast %395 : vector<1x256xf32> to vector<16x256xf32>
    %397 = arith.mulf %394, %396 : vector<16x256xf32>
    %398 = arith.addf %393, %397 : vector<16x256xf32>
    %c0_273 = arith.constant 0 : index
    %c0_274 = arith.constant 0 : index
    %399 = vector.load %arg25[%c0_273, %c0_274] : memref<1x256xf32, #tpu.memory_space<vmem>>, vector<1x256xf32>
    %400 = vector.broadcast %399 : vector<1x256xf32> to vector<16x256xf32>
    %401 = arith.mulf %398, %400 : vector<16x256xf32>
    %c0_275 = arith.constant 0 : index
    %c0_276 = arith.constant 0 : index
    %402 = vector.load %arg26[%c0_275, %c0_276] : memref<1x256xf32, #tpu.memory_space<vmem>>, vector<1x256xf32>
    %403 = vector.broadcast %402 : vector<1x256xf32> to vector<16x256xf32>
    %404 = arith.addf %401, %403 : vector<16x256xf32>
    %c0_277 = arith.constant 0 : index
    %c0_278 = arith.constant 0 : index
    %405 = vector.load %arg24[%c0_277, %c0_278] : memref<256x256xf32, #tpu.memory_space<vmem>>, vector<256x256xf32>
    %cst_279 = arith.constant dense<0.000000e+00> : vector<16x256xf32>
    %406 = tpu.matmul %404, %405, %cst_279 {dimension_numbers = #tpu.dot_dimension_numbers<[1], [0], [0], [1], [0, 0, 1, 1], [], []>} : vector<16x256xf32>, vector<256x256xf32>, vector<16x256xf32> -> vector<16x256xf32>
    %c0_280 = arith.constant 0 : index
    %c0_281 = arith.constant 0 : index
    %407 = vector.load %arg27[%c0_280, %c0_281] : memref<1x256xf32, #tpu.memory_space<vmem>>, vector<1x256xf32>
    %408 = vector.broadcast %407 : vector<1x256xf32> to vector<16x256xf32>
    %409 = arith.mulf %406, %408 : vector<16x256xf32>
    %c0_282 = arith.constant 0 : index
    %c0_283 = arith.constant 0 : index
    %410 = vector.load %arg28[%c0_282, %c0_283] : memref<1x256xf32, #tpu.memory_space<vmem>>, vector<1x256xf32>
    %411 = vector.broadcast %410 : vector<1x256xf32> to vector<16x256xf32>
    %412 = arith.addf %409, %411 : vector<16x256xf32>
    %cst_284 = arith.constant 0.000000e+00 : f32
    %413 = vector.broadcast %cst_284 : f32 to vector<16x256xf32>
    %414 = arith.cmpf oge, %412, %413 : vector<16x256xf32>
    %cst_285 = arith.constant 2.000000e-01 : f32
    %415 = vector.broadcast %cst_285 : f32 to vector<16x256xf32>
    %416 = arith.mulf %415, %412 : vector<16x256xf32>
    %417 = arith.select %414, %412, %416 : vector<16x256xi1>, vector<16x256xf32>
    %418 = tpu.iota {dimensions = array<i32: 1>} : vector<8x16xi32>
    %419 = tpu.iota {dimensions = array<i32: 0>} : vector<8x16xi32>
    %c2_i32_286 = arith.constant 2 : i32
    %420 = vector.broadcast %c2_i32_286 : i32 to vector<8x16xi32>
    %421 = arith.muli %420, %419 : vector<8x16xi32>
    %422 = arith.subi %418, %421 : vector<8x16xi32>
    %c-1_i32_287 = arith.constant -1 : i32
    %423 = vector.broadcast %c-1_i32_287 : i32 to vector<8x16xi32>
    %424 = arith.cmpi sge, %422, %423 : vector<8x16xi32>
    %c1_i32_288 = arith.constant 1 : i32
    %425 = vector.broadcast %c1_i32_288 : i32 to vector<8x16xi32>
    %426 = arith.cmpi sle, %422, %425 : vector<8x16xi32>
    %427 = arith.andi %424, %426 : vector<8x16xi1>
    %cst_289 = arith.constant 0.333333343 : f32
    %cst_290 = arith.constant 0.000000e+00 : f32
    %428 = vector.broadcast %cst_289 : f32 to vector<8x16xf32>
    %429 = vector.broadcast %cst_290 : f32 to vector<8x16xf32>
    %430 = arith.select %427, %428, %429 : vector<8x16xi1>, vector<8x16xf32>
    %cst_291 = arith.constant dense<0.000000e+00> : vector<8x256xf32>
    %431 = tpu.matmul %430, %417, %cst_291 {dimension_numbers = #tpu.dot_dimension_numbers<[1], [0], [0], [1], [0, 0, 1, 1], [], []>} : vector<8x16xf32>, vector<16x256xf32>, vector<8x256xf32> -> vector<8x256xf32>
    %cst_292 = arith.constant 0.000000e+00 : f32
    %432 = vector.broadcast %cst_292 : f32 to vector<16x256xf32>
    %c0_293 = arith.constant 0 : index
    %c0_294 = arith.constant 0 : index
    %433 = vector.load %arg36[%c0_293, %c0_294] : memref<288x256xf32, #tpu.memory_space<vmem>>, vector<16x256xf32>
    tpu.vector_store %arg36[%c0_293, %c0_294], %432 {strides = array<i32>} : memref<288x256xf32, #tpu.memory_space<vmem>>, vector<16x256xf32>,
    %cst_295 = arith.constant 0.000000e+00 : f32
    %434 = vector.broadcast %cst_295 : f32 to vector<16x256xf32>
    %c24_296 = arith.constant 24 : index
    %c0_297 = arith.constant 0 : index
    %435 = vector.load %arg36[%c24_296, %c0_297] : memref<288x256xf32, #tpu.memory_space<vmem>>, vector<16x256xf32>
    tpu.vector_store %arg36[%c24_296, %c0_297], %434 {strides = array<i32>} : memref<288x256xf32, #tpu.memory_space<vmem>>, vector<16x256xf32>,
    %c16_298 = arith.constant 16 : index
    %c0_299 = arith.constant 0 : index
    %436 = vector.load %arg36[%c16_298, %c0_299] : memref<288x256xf32, #tpu.memory_space<vmem>>, vector<8x256xf32>
    tpu.vector_store %arg36[%c16_298, %c0_299], %431 {strides = array<i32>} : memref<288x256xf32, #tpu.memory_space<vmem>>, vector<8x256xf32>,
    %c12_300 = arith.constant 12 : index
    %c0_301 = arith.constant 0 : index
    %437 = vector.load %arg36[%c12_300, %c0_301] : memref<288x256xf32, #tpu.memory_space<vmem>>, vector<8x256xf32>
    %c0_302 = arith.constant 0 : index
    %c0_303 = arith.constant 0 : index
    %438 = vector.load %arg29[%c0_302, %c0_303] : memref<9x256xf32, #tpu.memory_space<vmem>>, vector<1x256xf32>
    %439 = vector.broadcast %438 : vector<1x256xf32> to vector<8x256xf32>
    %440 = arith.mulf %437, %439 : vector<8x256xf32>
    %c13_304 = arith.constant 13 : index
    %c0_305 = arith.constant 0 : index
    %441 = vector.load %arg36[%c13_304, %c0_305] : memref<288x256xf32, #tpu.memory_space<vmem>>, vector<8x256xf32>
    %c1_306 = arith.constant 1 : index
    %c0_307 = arith.constant 0 : index
    %442 = vector.load %arg29[%c1_306, %c0_307] : memref<9x256xf32, #tpu.memory_space<vmem>>, vector<1x256xf32>
    %443 = vector.broadcast %442 : vector<1x256xf32> to vector<8x256xf32>
    %444 = arith.mulf %441, %443 : vector<8x256xf32>
    %445 = arith.addf %440, %444 : vector<8x256xf32>
    %c14_308 = arith.constant 14 : index
    %c0_309 = arith.constant 0 : index
    %446 = vector.load %arg36[%c14_308, %c0_309] : memref<288x256xf32, #tpu.memory_space<vmem>>, vector<8x256xf32>
    %c2_310 = arith.constant 2 : index
    %c0_311 = arith.constant 0 : index
    %447 = vector.load %arg29[%c2_310, %c0_311] : memref<9x256xf32, #tpu.memory_space<vmem>>, vector<1x256xf32>
    %448 = vector.broadcast %447 : vector<1x256xf32> to vector<8x256xf32>
    %449 = arith.mulf %446, %448 : vector<8x256xf32>
    %450 = arith.addf %445, %449 : vector<8x256xf32>
    %c15_312 = arith.constant 15 : index
    %c0_313 = arith.constant 0 : index
    %451 = vector.load %arg36[%c15_312, %c0_313] : memref<288x256xf32, #tpu.memory_space<vmem>>, vector<8x256xf32>
    %c3_314 = arith.constant 3 : index
    %c0_315 = arith.constant 0 : index
    %452 = vector.load %arg29[%c3_314, %c0_315] : memref<9x256xf32, #tpu.memory_space<vmem>>, vector<1x256xf32>
    %453 = vector.broadcast %452 : vector<1x256xf32> to vector<8x256xf32>
    %454 = arith.mulf %451, %453 : vector<8x256xf32>
    %455 = arith.addf %450, %454 : vector<8x256xf32>
    %c16_316 = arith.constant 16 : index
    %c0_317 = arith.constant 0 : index
    %456 = vector.load %arg36[%c16_316, %c0_317] : memref<288x256xf32, #tpu.memory_space<vmem>>, vector<8x256xf32>
    %c4_318 = arith.constant 4 : index
    %c0_319 = arith.constant 0 : index
    %457 = vector.load %arg29[%c4_318, %c0_319] : memref<9x256xf32, #tpu.memory_space<vmem>>, vector<1x256xf32>
    %458 = vector.broadcast %457 : vector<1x256xf32> to vector<8x256xf32>
    %459 = arith.mulf %456, %458 : vector<8x256xf32>
    %460 = arith.addf %455, %459 : vector<8x256xf32>
    %c17_320 = arith.constant 17 : index
    %c0_321 = arith.constant 0 : index
    %461 = vector.load %arg36[%c17_320, %c0_321] : memref<288x256xf32, #tpu.memory_space<vmem>>, vector<8x256xf32>
    %c5_322 = arith.constant 5 : index
    %c0_323 = arith.constant 0 : index
    %462 = vector.load %arg29[%c5_322, %c0_323] : memref<9x256xf32, #tpu.memory_space<vmem>>, vector<1x256xf32>
    %463 = vector.broadcast %462 : vector<1x256xf32> to vector<8x256xf32>
    %464 = arith.mulf %461, %463 : vector<8x256xf32>
    %465 = arith.addf %460, %464 : vector<8x256xf32>
    %c18_324 = arith.constant 18 : index
    %c0_325 = arith.constant 0 : index
    %466 = vector.load %arg36[%c18_324, %c0_325] : memref<288x256xf32, #tpu.memory_space<vmem>>, vector<8x256xf32>
    %c6_326 = arith.constant 6 : index
    %c0_327 = arith.constant 0 : index
    %467 = vector.load %arg29[%c6_326, %c0_327] : memref<9x256xf32, #tpu.memory_space<vmem>>, vector<1x256xf32>
    %468 = vector.broadcast %467 : vector<1x256xf32> to vector<8x256xf32>
    %469 = arith.mulf %466, %468 : vector<8x256xf32>
    %470 = arith.addf %465, %469 : vector<8x256xf32>
    %c19_328 = arith.constant 19 : index
    %c0_329 = arith.constant 0 : index
    %471 = vector.load %arg36[%c19_328, %c0_329] : memref<288x256xf32, #tpu.memory_space<vmem>>, vector<8x256xf32>
    %c7_330 = arith.constant 7 : index
    %c0_331 = arith.constant 0 : index
    %472 = vector.load %arg29[%c7_330, %c0_331] : memref<9x256xf32, #tpu.memory_space<vmem>>, vector<1x256xf32>
    %473 = vector.broadcast %472 : vector<1x256xf32> to vector<8x256xf32>
    %474 = arith.mulf %471, %473 : vector<8x256xf32>
    %475 = arith.addf %470, %474 : vector<8x256xf32>
    %c20_332 = arith.constant 20 : index
    %c0_333 = arith.constant 0 : index
    %476 = vector.load %arg36[%c20_332, %c0_333] : memref<288x256xf32, #tpu.memory_space<vmem>>, vector<8x256xf32>
    %c8_334 = arith.constant 8 : index
    %c0_335 = arith.constant 0 : index
    %477 = vector.load %arg29[%c8_334, %c0_335] : memref<9x256xf32, #tpu.memory_space<vmem>>, vector<1x256xf32>
    %478 = vector.broadcast %477 : vector<1x256xf32> to vector<8x256xf32>
    %479 = arith.mulf %476, %478 : vector<8x256xf32>
    %480 = arith.addf %475, %479 : vector<8x256xf32>
    %c0_336 = arith.constant 0 : index
    %c0_337 = arith.constant 0 : index
    %481 = vector.load %arg31[%c0_336, %c0_337] : memref<1x256xf32, #tpu.memory_space<vmem>>, vector<1x256xf32>
    %482 = vector.broadcast %481 : vector<1x256xf32> to vector<8x256xf32>
    %483 = arith.mulf %480, %482 : vector<8x256xf32>
    %c0_338 = arith.constant 0 : index
    %c0_339 = arith.constant 0 : index
    %484 = vector.load %arg32[%c0_338, %c0_339] : memref<1x256xf32, #tpu.memory_space<vmem>>, vector<1x256xf32>
    %485 = vector.broadcast %484 : vector<1x256xf32> to vector<8x256xf32>
    %486 = arith.addf %483, %485 : vector<8x256xf32>
    %c0_340 = arith.constant 0 : index
    %c0_341 = arith.constant 0 : index
    %487 = vector.load %arg30[%c0_340, %c0_341] : memref<256x128xf32, #tpu.memory_space<vmem>>, vector<256x128xf32>
    %cst_342 = arith.constant dense<0.000000e+00> : vector<8x128xf32>
    %488 = tpu.matmul %486, %487, %cst_342 {dimension_numbers = #tpu.dot_dimension_numbers<[1], [0], [0], [1], [0, 0, 1, 1], [], []>} : vector<8x256xf32>, vector<256x128xf32>, vector<8x128xf32> -> vector<8x128xf32>
    %c0_343 = arith.constant 0 : index
    %c0_344 = arith.constant 0 : index
    %489 = vector.load %arg33[%c0_343, %c0_344] : memref<1x128xf32, #tpu.memory_space<vmem>>, vector<1x128xf32>
    %490 = vector.broadcast %489 : vector<1x128xf32> to vector<8x128xf32>
    %491 = arith.mulf %488, %490 : vector<8x128xf32>
    %c0_345 = arith.constant 0 : index
    %c0_346 = arith.constant 0 : index
    %492 = vector.load %arg34[%c0_345, %c0_346] : memref<1x128xf32, #tpu.memory_space<vmem>>, vector<1x128xf32>
    %493 = vector.broadcast %492 : vector<1x128xf32> to vector<8x128xf32>
    %494 = arith.addf %491, %493 : vector<8x128xf32>
    %cst_347 = arith.constant 0.000000e+00 : f32
    %495 = vector.broadcast %cst_347 : f32 to vector<8x128xf32>
    %496 = arith.cmpf oge, %494, %495 : vector<8x128xf32>
    %cst_348 = arith.constant 2.000000e-01 : f32
    %497 = vector.broadcast %cst_348 : f32 to vector<8x128xf32>
    %498 = arith.mulf %497, %494 : vector<8x128xf32>
    %499 = arith.select %496, %494, %498 : vector<8x128xi1>, vector<8x128xf32>
    %500 = tpu.iota {dimensions = array<i32: 1>} : vector<4x8xi32>
    %501 = tpu.iota {dimensions = array<i32: 0>} : vector<4x8xi32>
    %c2_i32_349 = arith.constant 2 : i32
    %502 = vector.broadcast %c2_i32_349 : i32 to vector<4x8xi32>
    %503 = arith.muli %502, %501 : vector<4x8xi32>
    %504 = arith.subi %500, %503 : vector<4x8xi32>
    %c-1_i32_350 = arith.constant -1 : i32
    %505 = vector.broadcast %c-1_i32_350 : i32 to vector<4x8xi32>
    %506 = arith.cmpi sge, %504, %505 : vector<4x8xi32>
    %c1_i32_351 = arith.constant 1 : i32
    %507 = vector.broadcast %c1_i32_351 : i32 to vector<4x8xi32>
    %508 = arith.cmpi sle, %504, %507 : vector<4x8xi32>
    %509 = arith.andi %506, %508 : vector<4x8xi1>
    %cst_352 = arith.constant 0.333333343 : f32
    %cst_353 = arith.constant 0.000000e+00 : f32
    %510 = vector.broadcast %cst_352 : f32 to vector<4x8xf32>
    %511 = vector.broadcast %cst_353 : f32 to vector<4x8xf32>
    %512 = arith.select %509, %510, %511 : vector<4x8xi1>, vector<4x8xf32>
    %cst_354 = arith.constant dense<0.000000e+00> : vector<4x128xf32>
    %513 = tpu.matmul %512, %499, %cst_354 {dimension_numbers = #tpu.dot_dimension_numbers<[1], [0], [0], [1], [0, 0, 1, 1], [], []>} : vector<4x8xf32>, vector<8x128xf32>, vector<4x128xf32> -> vector<4x128xf32>
    %cst_355 = arith.constant dense<0.000000e+00> : vector<128xf32>
    %514 = vector.multi_reduction <add>, %513, %cst_355 [0] : vector<4x128xf32> to vector<128xf32>
    %515 = vector.shape_cast %514 : vector<128xf32> to vector<1x128xf32>
    %cst_356 = arith.constant 4.000000e+00 : f32
    %516 = vector.broadcast %cst_356 : f32 to vector<1x128xf32>
    %517 = arith.divf %515, %516 : vector<1x128xf32>
    %c0_357 = arith.constant 0 : index
    %c0_358 = arith.constant 0 : index
    %c0_359 = arith.constant 0 : index
    %518 = vector.load %arg35[%c0_357, %c0_358, %c0_359] : memref<1x1x128xf32, #tpu.memory_space<vmem>>, vector<1x1x128xf32>
    %519 = vector.shape_cast %518 : vector<1x1x128xf32> to vector<1x128xf32>
    %520 = vector.shape_cast %517 : vector<1x128xf32> to vector<1x1x128xf32>
    tpu.vector_store %arg35[%c0_357, %c0_358, %c0_359], %520 {strides = array<i32>} : memref<1x1x128xf32, #tpu.memory_space<vmem>>, vector<1x1x128xf32>,
    return
  }
  func.func @transform_0(%arg0: i32) -> (i32, i32, i32) {
    %c0_i32 = arith.constant 0 : i32
    %c0_i32_0 = arith.constant 0 : i32
    %c0_i32_1 = arith.constant 0 : i32
    return %arg0, %c0_i32, %c0_i32_0 : i32, i32, i32
  }
  func.func @transform_1(%arg0: i32) -> (i32, i32) {
    %c0_i32 = arith.constant 0 : i32
    %c0_i32_0 = arith.constant 0 : i32
    %c0_i32_1 = arith.constant 0 : i32
    return %c0_i32, %c0_i32_0 : i32, i32
  }
  func.func @transform_2(%arg0: i32) -> (i32, i32) {
    %c0_i32 = arith.constant 0 : i32
    %c0_i32_0 = arith.constant 0 : i32
    %c0_i32_1 = arith.constant 0 : i32
    return %c0_i32, %c0_i32_0 : i32, i32
  }
  func.func @transform_3(%arg0: i32) -> (i32, i32) {
    %c0_i32 = arith.constant 0 : i32
    %c0_i32_0 = arith.constant 0 : i32
    %c0_i32_1 = arith.constant 0 : i32
    return %c0_i32, %c0_i32_0 : i32, i32
  }
  func.func @transform_4(%arg0: i32) -> (i32, i32) {
    %c0_i32 = arith.constant 0 : i32
    %c0_i32_0 = arith.constant 0 : i32
    %c0_i32_1 = arith.constant 0 : i32
    return %c0_i32, %c0_i32_0 : i32, i32
  }
  func.func @transform_5(%arg0: i32) -> (i32, i32) {
    %c0_i32 = arith.constant 0 : i32
    %c0_i32_0 = arith.constant 0 : i32
    %c0_i32_1 = arith.constant 0 : i32
    return %c0_i32, %c0_i32_0 : i32, i32
  }
  func.func @transform_6(%arg0: i32) -> (i32, i32) {
    %c0_i32 = arith.constant 0 : i32
    %c0_i32_0 = arith.constant 0 : i32
    %c0_i32_1 = arith.constant 0 : i32
    return %c0_i32, %c0_i32_0 : i32, i32
  }
  func.func @transform_7(%arg0: i32) -> (i32, i32) {
    %c0_i32 = arith.constant 0 : i32
    %c0_i32_0 = arith.constant 0 : i32
    %c0_i32_1 = arith.constant 0 : i32
    return %c0_i32, %c0_i32_0 : i32, i32
  }
  func.func @transform_8(%arg0: i32) -> (i32, i32) {
    %c0_i32 = arith.constant 0 : i32
    %c0_i32_0 = arith.constant 0 : i32
    %c0_i32_1 = arith.constant 0 : i32
    return %c0_i32, %c0_i32_0 : i32, i32
  }
  func.func @transform_9(%arg0: i32) -> (i32, i32) {
    %c0_i32 = arith.constant 0 : i32
    %c0_i32_0 = arith.constant 0 : i32
    %c0_i32_1 = arith.constant 0 : i32
    return %c0_i32, %c0_i32_0 : i32, i32
  }
  func.func @transform_10(%arg0: i32) -> (i32, i32) {
    %c0_i32 = arith.constant 0 : i32
    %c0_i32_0 = arith.constant 0 : i32
    %c0_i32_1 = arith.constant 0 : i32
    return %c0_i32, %c0_i32_0 : i32, i32
  }
  func.func @transform_11(%arg0: i32) -> (i32, i32) {
    %c0_i32 = arith.constant 0 : i32
    %c0_i32_0 = arith.constant 0 : i32
    %c0_i32_1 = arith.constant 0 : i32
    return %c0_i32, %c0_i32_0 : i32, i32
  }
  func.func @transform_12(%arg0: i32) -> (i32, i32) {
    %c0_i32 = arith.constant 0 : i32
    %c0_i32_0 = arith.constant 0 : i32
    %c0_i32_1 = arith.constant 0 : i32
    return %c0_i32, %c0_i32_0 : i32, i32
  }
  func.func @transform_13(%arg0: i32) -> (i32, i32) {
    %c0_i32 = arith.constant 0 : i32
    %c0_i32_0 = arith.constant 0 : i32
    %c0_i32_1 = arith.constant 0 : i32
    return %c0_i32, %c0_i32_0 : i32, i32
  }
  func.func @transform_14(%arg0: i32) -> (i32, i32) {
    %c0_i32 = arith.constant 0 : i32
    %c0_i32_0 = arith.constant 0 : i32
    %c0_i32_1 = arith.constant 0 : i32
    return %c0_i32, %c0_i32_0 : i32, i32
  }
  func.func @transform_15(%arg0: i32) -> (i32, i32) {
    %c0_i32 = arith.constant 0 : i32
    %c0_i32_0 = arith.constant 0 : i32
    %c0_i32_1 = arith.constant 0 : i32
    return %c0_i32, %c0_i32_0 : i32, i32
  }
  func.func @transform_16(%arg0: i32) -> (i32, i32) {
    %c0_i32 = arith.constant 0 : i32
    %c0_i32_0 = arith.constant 0 : i32
    %c0_i32_1 = arith.constant 0 : i32
    return %c0_i32, %c0_i32_0 : i32, i32
  }
  func.func @transform_17(%arg0: i32) -> (i32, i32) {
    %c0_i32 = arith.constant 0 : i32
    %c0_i32_0 = arith.constant 0 : i32
    %c0_i32_1 = arith.constant 0 : i32
    return %c0_i32, %c0_i32_0 : i32, i32
  }
  func.func @transform_18(%arg0: i32) -> (i32, i32) {
    %c0_i32 = arith.constant 0 : i32
    %c0_i32_0 = arith.constant 0 : i32
    %c0_i32_1 = arith.constant 0 : i32
    return %c0_i32, %c0_i32_0 : i32, i32
  }
  func.func @transform_19(%arg0: i32) -> (i32, i32) {
    %c0_i32 = arith.constant 0 : i32
    %c0_i32_0 = arith.constant 0 : i32
    %c0_i32_1 = arith.constant 0 : i32
    return %c0_i32, %c0_i32_0 : i32, i32
  }
  func.func @transform_20(%arg0: i32) -> (i32, i32) {
    %c0_i32 = arith.constant 0 : i32
    %c0_i32_0 = arith.constant 0 : i32
    %c0_i32_1 = arith.constant 0 : i32
    return %c0_i32, %c0_i32_0 : i32, i32
  }
  func.func @transform_21(%arg0: i32) -> (i32, i32) {
    %c0_i32 = arith.constant 0 : i32
    %c0_i32_0 = arith.constant 0 : i32
    %c0_i32_1 = arith.constant 0 : i32
    return %c0_i32, %c0_i32_0 : i32, i32
  }
  func.func @transform_22(%arg0: i32) -> (i32, i32) {
    %c0_i32 = arith.constant 0 : i32
    %c0_i32_0 = arith.constant 0 : i32
    %c0_i32_1 = arith.constant 0 : i32
    return %c0_i32, %c0_i32_0 : i32, i32
  }
  func.func @transform_23(%arg0: i32) -> (i32, i32) {
    %c0_i32 = arith.constant 0 : i32
    %c0_i32_0 = arith.constant 0 : i32
    %c0_i32_1 = arith.constant 0 : i32
    return %c0_i32, %c0_i32_0 : i32, i32
  }
  func.func @transform_24(%arg0: i32) -> (i32, i32) {
    %c0_i32 = arith.constant 0 : i32
    %c0_i32_0 = arith.constant 0 : i32
    %c0_i32_1 = arith.constant 0 : i32
    return %c0_i32, %c0_i32_0 : i32, i32
  }
  func.func @transform_25(%arg0: i32) -> (i32, i32) {
    %c0_i32 = arith.constant 0 : i32
    %c0_i32_0 = arith.constant 0 : i32
    %c0_i32_1 = arith.constant 0 : i32
    return %c0_i32, %c0_i32_0 : i32, i32
  }
  func.func @transform_26(%arg0: i32) -> (i32, i32) {
    %c0_i32 = arith.constant 0 : i32
    %c0_i32_0 = arith.constant 0 : i32
    %c0_i32_1 = arith.constant 0 : i32
    return %c0_i32, %c0_i32_0 : i32, i32
  }
  func.func @transform_27(%arg0: i32) -> (i32, i32) {
    %c0_i32 = arith.constant 0 : i32
    %c0_i32_0 = arith.constant 0 : i32
    %c0_i32_1 = arith.constant 0 : i32
    return %c0_i32, %c0_i32_0 : i32, i32
  }
  func.func @transform_28(%arg0: i32) -> (i32, i32) {
    %c0_i32 = arith.constant 0 : i32
    %c0_i32_0 = arith.constant 0 : i32
    %c0_i32_1 = arith.constant 0 : i32
    return %c0_i32, %c0_i32_0 : i32, i32
  }
  func.func @transform_29(%arg0: i32) -> (i32, i32) {
    %c0_i32 = arith.constant 0 : i32
    %c0_i32_0 = arith.constant 0 : i32
    %c0_i32_1 = arith.constant 0 : i32
    return %c0_i32, %c0_i32_0 : i32, i32
  }
  func.func @transform_30(%arg0: i32) -> (i32, i32) {
    %c0_i32 = arith.constant 0 : i32
    %c0_i32_0 = arith.constant 0 : i32
    %c0_i32_1 = arith.constant 0 : i32
    return %c0_i32, %c0_i32_0 : i32, i32
  }
  func.func @transform_31(%arg0: i32) -> (i32, i32) {
    %c0_i32 = arith.constant 0 : i32
    %c0_i32_0 = arith.constant 0 : i32
    %c0_i32_1 = arith.constant 0 : i32
    return %c0_i32, %c0_i32_0 : i32, i32
  }
  func.func @transform_32(%arg0: i32) -> (i32, i32) {
    %c0_i32 = arith.constant 0 : i32
    %c0_i32_0 = arith.constant 0 : i32
    %c0_i32_1 = arith.constant 0 : i32
    return %c0_i32, %c0_i32_0 : i32, i32
  }
  func.func @transform_33(%arg0: i32) -> (i32, i32) {
    %c0_i32 = arith.constant 0 : i32
    %c0_i32_0 = arith.constant 0 : i32
    %c0_i32_1 = arith.constant 0 : i32
    return %c0_i32, %c0_i32_0 : i32, i32
  }
  func.func @transform_34(%arg0: i32) -> (i32, i32, i32) {
    %c0_i32 = arith.constant 0 : i32
    %c0_i32_0 = arith.constant 0 : i32
    %c0_i32_1 = arith.constant 0 : i32
    return %arg0, %c0_i32, %c0_i32_0 : i32, i32, i32
  }
}

</mosaic_0001>

<llo_original>
// kernel: sincdsnet_forward.1
$region0: #{sincdsnet_forward.1}
  #allocation0 [shape = 'u32[]', space=smem, size = 0x4, offset = 0x4, fixed_abs, tag = 'smem constant byte address 0x4 - core index']
  #allocation1 [shape = 'u32[144,128]{1,0:T(1,128)}', space=vmem, size = 0x12000, scoped, tag = 'internal scratch']
  #allocation2 [shape = 'f32[288,256]{1,0:T(8,128)}', space=vmem, size = 0x48000, scoped, tag = 'scratch operand']
  %s0 = inlined_call_operand.smem [shape: u32[35], index: -1, kind: input, shape index: {}]
  %s1 = sld [smem:[%s0]]
  %s2 = scalar_lea.smem %s0, 1
  %s3 = sld [smem:[%s2]]
  %s4 = scalar_lea.smem %s0, 2
  %s5 = sld [smem:[%s4]]
  %s6 = scalar_lea.smem %s0, 3
  %s7 = sld [smem:[%s6]]
  %s8 = scalar_lea.smem %s0, 4
  %s9 = sld [smem:[%s8]]
  %s10 = scalar_lea.smem %s0, 5
  %s11 = sld [smem:[%s10]]
  %s12 = scalar_lea.smem %s0, 6
  %s13 = sld [smem:[%s12]]
  %s14 = scalar_lea.smem %s0, 7
  %s15 = sld [smem:[%s14]]
  %s16 = scalar_lea.smem %s0, 8
  %s17 = sld [smem:[%s16]]
  %s18 = scalar_lea.smem %s0, 9
  %s19 = sld [smem:[%s18]]
  %s20 = scalar_lea.smem %s0, 10
  %s21 = sld [smem:[%s20]]
  %s22 = scalar_lea.smem %s0, 11
  %s23 = sld [smem:[%s22]]
  %s24 = scalar_lea.smem %s0, 12
  %s25 = sld [smem:[%s24]]
  %s26 = scalar_lea.smem %s0, 13
  %s27 = sld [smem:[%s26]]
  %s28 = scalar_lea.smem %s0, 14
  %s29 = sld [smem:[%s28]]
  %s30 = scalar_lea.smem %s0, 15
  %s31 = sld [smem:[%s30]]
  %s32 = scalar_lea.smem %s0, 16
  %s33 = sld [smem:[%s32]]
  %s34 = scalar_lea.smem %s0, 17
  %s35 = sld [smem:[%s34]]
  %s36 = scalar_lea.smem %s0, 18
  %s37 = sld [smem:[%s36]]
  %s38 = scalar_lea.smem %s0, 19
  %s39 = sld [smem:[%s38]]
  %s40 = scalar_lea.smem %s0, 20
  %s41 = sld [smem:[%s40]]
  %s42 = scalar_lea.smem %s0, 21
  %s43 = sld [smem:[%s42]]
  %s44 = scalar_lea.smem %s0, 22
  %s45 = sld [smem:[%s44]]
  %s46 = scalar_lea.smem %s0, 23
  %s47 = sld [smem:[%s46]]
  %s48 = scalar_lea.smem %s0, 24
  %s49 = sld [smem:[%s48]]
  %s50 = scalar_lea.smem %s0, 25
  %s51 = sld [smem:[%s50]]
  %s52 = scalar_lea.smem %s0, 26
  %s53 = sld [smem:[%s52]]
  %s54 = scalar_lea.smem %s0, 27
  %s55 = sld [smem:[%s54]]
  %s56 = scalar_lea.smem %s0, 28
  %s57 = sld [smem:[%s56]]
  %s58 = scalar_lea.smem %s0, 29
  %s59 = sld [smem:[%s58]]
  %s60 = scalar_lea.smem %s0, 30
  %s61 = sld [smem:[%s60]]
  %s62 = scalar_lea.smem %s0, 31
  %s63 = sld [smem:[%s62]]
  %s64 = scalar_lea.smem %s0, 32
  %s65 = sld [smem:[%s64]]
  %s66 = scalar_lea.smem %s0, 33
  %s67 = sld [smem:[%s66]]
  %s68 = scalar_lea.smem %s0, 34
  %s69 = sld [smem:[%s68]]
  %s70 = sld [smem:[#allocation0]]
  $region169: #{sincdsnet_forward.1} parent=0
    _
  %s72 = ssub.s32 1, %s70
  %s73 = scalar_select 0, %s72, %s70
  $region1: #{sincdsnet_forward.1} parent=0
    #allocation3 [shape = 'u8[1024]{0}', space=vmem, size = 0x400, scoped, tag = 'output window, operand 0']
    #allocation4 [shape = 's32[2]{0}', space=sflag, size = 0x8, scoped, tag = 'scoped memory for sincdsnet_forward.1']
    %74 = vsyncpa [#allocation4], 0
    %s75 = scalar_lea.sflag [#allocation4], 1
    %76 = vsyncpa %s75, 0
    loop: start=0, step=1, limit=4
    $region2: #{sincdsnet_forward.1} parent=1 // loop_pre_header
      _
    $region3: #{sincdsnet_forward.1} parent=1 // loop_header
      %s78 = sphi 0, %s82
      %p79 = scmp.ge.s32.totalorder %s78, 4
      %s88 = sphi 0, %s90
      %s91 = sphi 0, %s88
      %s92 = sphi 0, %s91
      %s108 = sphi 0, %s92
      %s112 = sphi 0, %s112
      %s114 = sphi 0, %s112
      %s115 = sphi 0, %s114
      %s129 = sphi 0, %s115
      %s133 = sphi 0, %s133
      %s135 = sphi 0, %s133
      %s136 = sphi 0, %s135
      %s150 = sphi 0, %s136
      %s154 = sphi 0, %s154
      %s156 = sphi 0, %s154
      %s157 = sphi 0, %s156
      %s171 = sphi 0, %s157
      %s175 = sphi 0, %s175
      %s177 = sphi 0, %s175
      %s178 = sphi 0, %s177
      %s192 = sphi 0, %s178
      %s196 = sphi 0, %s196
      %s198 = sphi 0, %s196
      %s199 = sphi 0, %s198
      %s213 = sphi 0, %s199
      %s217 = sphi 0, %s217
      %s219 = sphi 0, %s217
      %s220 = sphi 0, %s219
      %s234 = sphi 0, %s220
      %s238 = sphi 0, %s238
      %s240 = sphi 0, %s238
      %s241 = sphi 0, %s240
      %s255 = sphi 0, %s241
      %s259 = sphi 0, %s259
      %s261 = sphi 0, %s259
      %s262 = sphi 0, %s261
      %s276 = sphi 0, %s262
      %s280 = sphi 0, %s280
      %s282 = sphi 0, %s280
      %s283 = sphi 0, %s282
      %s297 = sphi 0, %s283
      %s301 = sphi 0, %s301
      %s303 = sphi 0, %s301
      %s304 = sphi 0, %s303
      %s318 = sphi 0, %s304
      %s322 = sphi 0, %s322
      %s324 = sphi 0, %s322
      %s325 = sphi 0, %s324
      %s339 = sphi 0, %s325
      %s343 = sphi 0, %s343
      %s345 = sphi 0, %s343
      %s346 = sphi 0, %s345
      %s360 = sphi 0, %s346
      %s364 = sphi 0, %s364
      %s366 = sphi 0, %s364
      %s367 = sphi 0, %s366
      %s381 = sphi 0, %s367
      %s385 = sphi 0, %s385
      %s387 = sphi 0, %s385
      %s388 = sphi 0, %s387
      %s402 = sphi 0, %s388
      %s406 = sphi 0, %s406
      %s408 = sphi 0, %s406
      %s409 = sphi 0, %s408
      %s423 = sphi 0, %s409
      %s427 = sphi 0, %s427
      %s429 = sphi 0, %s427
      %s430 = sphi 0, %s429
      %s444 = sphi 0, %s430
      %s448 = sphi 0, %s448
      %s450 = sphi 0, %s448
      %s451 = sphi 0, %s450
      %s465 = sphi 0, %s451
      %s469 = sphi 0, %s469
      %s471 = sphi 0, %s469
      %s472 = sphi 0, %s471
      %s486 = sphi 0, %s472
      %s490 = sphi 0, %s490
      %s492 = sphi 0, %s490
      %s493 = sphi 0, %s492
      %s507 = sphi 0, %s493
      %s511 = sphi 0, %s511
      %s513 = sphi 0, %s511
      %s514 = sphi 0, %s513
      %s528 = sphi 0, %s514
      %s532 = sphi 0, %s532
      %s534 = sphi 0, %s532
      %s535 = sphi 0, %s534
      %s549 = sphi 0, %s535
      %s553 = sphi 0, %s553
      %s555 = sphi 0, %s553
      %s556 = sphi 0, %s555
      %s570 = sphi 0, %s556
      %s574 = sphi 0, %s574
      %s576 = sphi 0, %s574
      %s577 = sphi 0, %s576
      %s591 = sphi 0, %s577
      %s595 = sphi 0, %s595
      %s597 = sphi 0, %s595
      %s598 = sphi 0, %s597
      %s612 = sphi 0, %s598
      %s616 = sphi 0, %s616
      %s618 = sphi 0, %s616
      %s619 = sphi 0, %s618
      %s633 = sphi 0, %s619
      %s637 = sphi 0, %s637
      %s639 = sphi 0, %s637
      %s640 = sphi 0, %s639
      %s654 = sphi 0, %s640
      %s658 = sphi 0, %s658
      %s660 = sphi 0, %s658
      %s661 = sphi 0, %s660
      %s675 = sphi 0, %s661
      %s679 = sphi 0, %s679
      %s681 = sphi 0, %s679
      %s682 = sphi 0, %s681
      %s696 = sphi 0, %s682
      %s700 = sphi 0, %s700
      %s702 = sphi 0, %s700
      %s703 = sphi 0, %s702
      %s717 = sphi 0, %s703
      %s721 = sphi 0, %s721
      %s723 = sphi 0, %s721
      %s724 = sphi 0, %s723
      %s738 = sphi 0, %s724
      %s742 = sphi 0, %s742
      %s744 = sphi 0, %s742
      %s745 = sphi 0, %s744
      %s759 = sphi 0, %s745
      %s763 = sphi 0, %s763
      %s765 = sphi 0, %s763
      %s766 = sphi 0, %s765
      %s780 = sphi 0, %s766
      %s784 = sphi 0, %s784
      %s786 = sphi 0, %s784
      %s787 = sphi 0, %s786
      %s801 = sphi 0, %s787
      %s807 = sphi 0, %s809
      %s810 = sphi 0, %s807
      %s811 = sphi 0, %s810
      %s827 = sphi 0, %s811
    $region4: #{sincdsnet_forward.1} parent=1 // loop_header_branch
      %81 = sbr.rel (%p79) target = $region8
    $region5: #{sincdsnet_forward.1} parent=1 // loop_body
      %s83 = ssub.s32 %s78, 1
      %s84 = ssub.s32 %s78, 2
      %s85 = sadd.s32 %s78, 1
      %s86 = ssub.s32 %s78, %s85
      %p87 = scmp.eq.s32.totalorder %s86, 0
      %s89 = sadd.s32 %s88, 1
      %s90 = scalar_select %p87, %s88, %s89
      %p93 = pneg %p87
      %p94 = scmp.eq.s32.totalorder %s78, 1
      %p95 = por %p93, %p94
      %p96 = scmp.ne.s32.totalorder %s88, %s91
      %p97 = scmp.eq.s32.totalorder %s78, 0
      %p98 = por %p96, %p97
      %p99 = scmp.ne.s32.totalorder %s88, %s91
      %p100 = scmp.eq.s32.totalorder %s83, 1
      %p101 = por %p99, %p100
      %p102 = scmp.ne.s32.totalorder %s91, %s92
      %p103 = scmp.eq.s32.totalorder %s83, 0
      %p104 = por %p102, %p103
      %p105 = scmp.ne.s32.totalorder %s91, %s92
      %p106 = scmp.eq.s32.totalorder %s84, 1
      %p107 = por %p105, %p106
      %p109 = scmp.ne.s32.totalorder %s92, %s108
      %p110 = scmp.eq.s32.totalorder %s84, 0
      %p111 = por %p109, %p110
      %s113 = sadd.s32 %s112, 1
      %p116 = scmp.eq.s32.totalorder %s78, 1
      %p117 = scmp.ne.s32.totalorder %s112, %s114
      %p118 = scmp.eq.s32.totalorder %s78, 0
      %p119 = por %p117, %p118
      %p120 = scmp.ne.s32.totalorder %s112, %s114
      %p121 = scmp.eq.s32.totalorder %s83, 1
      %p122 = por %p120, %p121
      %p123 = scmp.ne.s32.totalorder %s114, %s115
      %p124 = scmp.eq.s32.totalorder %s83, 0
      %p125 = por %p123, %p124
      %p126 = scmp.ne.s32.totalorder %s114, %s115
      %p127 = scmp.eq.s32.totalorder %s84, 1
      %p128 = por %p126, %p127
      %p130 = scmp.ne.s32.totalorder %s115, %s129
      %p131 = scmp.eq.s32.totalorder %s84, 0
      %p132 = por %p130, %p131
      %s134 = sadd.s32 %s133, 1
      %p137 = scmp.eq.s32.totalorder %s78, 1
      %p138 = scmp.ne.s32.totalorder %s133, %s135
      %p139 = scmp.eq.s32.totalorder %s78, 0
      %p140 = por %p138, %p139
      %p141 = scmp.ne.s32.totalorder %s133, %s135
      %p142 = scmp.eq.s32.totalorder %s83, 1
      %p143 = por %p141, %p142
      %p144 = scmp.ne.s32.totalorder %s135, %s136
      %p145 = scmp.eq.s32.totalorder %s83, 0
      %p146 = por %p144, %p145
      %p147 = scmp.ne.s32.totalorder %s135, %s136
      %p148 = scmp.eq.s32.totalorder %s84, 1
      %p149 = por %p147, %p148
      %p151 = scmp.ne.s32.totalorder %s136, %s150
      %p152 = scmp.eq.s32.totalorder %s84, 0
      %p153 = por %p151, %p152
      %s155 = sadd.s32 %s154, 1
      %p158 = scmp.eq.s32.totalorder %s78, 1
      %p159 = scmp.ne.s32.totalorder %s154, %s156
      %p160 = scmp.eq.s32.totalorder %s78, 0
      %p161 = por %p159, %p160
      %p162 = scmp.ne.s32.totalorder %s154, %s156
      %p163 = scmp.eq.s32.totalorder %s83, 1
      %p164 = por %p162, %p163
      %p165 = scmp.ne.s32.totalorder %s156, %s157
      %p166 = scmp.eq.s32.totalorder %s83, 0
      %p167 = por %p165, %p166
      %p168 = scmp.ne.s32.totalorder %s156, %s157
      %p169 = scmp.eq.s32.totalorder %s84, 1
      %p170 = por %p168, %p169
      %p172 = scmp.ne.s32.totalorder %s157, %s171
      %p173 = scmp.eq.s32.totalorder %s84, 0
      %p174 = por %p172, %p173
      %s176 = sadd.s32 %s175, 1
      %p179 = scmp.eq.s32.totalorder %s78, 1
      %p180 = scmp.ne.s32.totalorder %s175, %s177
      %p181 = scmp.eq.s32.totalorder %s78, 0
      %p182 = por %p180, %p181
      %p183 = scmp.ne.s32.totalorder %s175, %s177
      %p184 = scmp.eq.s32.totalorder %s83, 1
      %p185 = por %p183, %p184
      %p186 = scmp.ne.s32.totalorder %s177, %s178
      %p187 = scmp.eq.s32.totalorder %s83, 0
      %p188 = por %p186, %p187
      %p189 = scmp.ne.s32.totalorder %s177, %s178
      %p190 = scmp.eq.s32.totalorder %s84, 1
      %p191 = por %p189, %p190
      %p193 = scmp.ne.s32.totalorder %s178, %s192
      %p194 = scmp.eq.s32.totalorder %s84, 0
      %p195 = por %p193, %p194
      %s197 = sadd.s32 %s196, 1
      %p200 = scmp.eq.s32.totalorder %s78, 1
      %p201 = scmp.ne.s32.totalorder %s196, %s198
      %p202 = scmp.eq.s32.totalorder %s78, 0
      %p203 = por %p201, %p202
      %p204 = scmp.ne.s32.totalorder %s196, %s198
      %p205 = scmp.eq.s32.totalorder %s83, 1
      %p206 = por %p204, %p205
      %p207 = scmp.ne.s32.totalorder %s198, %s199
      %p208 = scmp.eq.s32.totalorder %s83, 0
      %p209 = por %p207, %p208
      %p210 = scmp.ne.s32.totalorder %s198, %s199
      %p211 = scmp.eq.s32.totalorder %s84, 1
      %p212 = por %p210, %p211
      %p214 = scmp.ne.s32.totalorder %s199, %s213
      %p215 = scmp.eq.s32.totalorder %s84, 0
      %p216 = por %p214, %p215
      %s218 = sadd.s32 %s217, 1
      %p221 = scmp.eq.s32.totalorder %s78, 1
      %p222 = scmp.ne.s32.totalorder %s217, %s219
      %p223 = scmp.eq.s32.totalorder %s78, 0
      %p224 = por %p222, %p223
      %p225 = scmp.ne.s32.totalorder %s217, %s219
      %p226 = scmp.eq.s32.totalorder %s83, 1
      %p227 = por %p225, %p226
      %p228 = scmp.ne.s32.totalorder %s219, %s220
      %p229 = scmp.eq.s32.totalorder %s83, 0
      %p230 = por %p228, %p229
      %p231 = scmp.ne.s32.totalorder %s219, %s220
      %p232 = scmp.eq.s32.totalorder %s84, 1
      %p233 = por %p231, %p232
      %p235 = scmp.ne.s32.totalorder %s220, %s234
      %p236 = scmp.eq.s32.totalorder %s84, 0
      %p237 = por %p235, %p236
      %s239 = sadd.s32 %s238, 1
      %p242 = scmp.eq.s32.totalorder %s78, 1
      %p243 = scmp.ne.s32.totalorder %s238, %s240
      %p244 = scmp.eq.s32.totalorder %s78, 0
      %p245 = por %p243, %p244
      %p246 = scmp.ne.s32.totalorder %s238, %s240
      %p247 = scmp.eq.s32.totalorder %s83, 1
      %p248 = por %p246, %p247
      %p249 = scmp.ne.s32.totalorder %s240, %s241
      %p250 = scmp.eq.s32.totalorder %s83, 0
      %p251 = por %p249, %p250
      %p252 = scmp.ne.s32.totalorder %s240, %s241
      %p253 = scmp.eq.s32.totalorder %s84, 1
      %p254 = por %p252, %p253
      %p256 = scmp.ne.s32.totalorder %s241, %s255
      %p257 = scmp.eq.s32.totalorder %s84, 0
      %p258 = por %p256, %p257
      %s260 = sadd.s32 %s259, 1
      %p263 = scmp.eq.s32.totalorder %s78, 1
      %p264 = scmp.ne.s32.totalorder %s259, %s261
      %p265 = scmp.eq.s32.totalorder %s78, 0
      %p266 = por %p264, %p265
      %p267 = scmp.ne.s32.totalorder %s259, %s261
      %p268 = scmp.eq.s32.totalorder %s83, 1
      %p269 = por %p267, %p268
      %p270 = scmp.ne.s32.totalorder %s261, %s262
      %p271 = scmp.eq.s32.totalorder %s83, 0
      %p272 = por %p270, %p271
      %p273 = scmp.ne.s32.totalorder %s261, %s262
      %p274 = scmp.eq.s32.totalorder %s84, 1
      %p275 = por %p273, %p274
      %p277 = scmp.ne.s32.totalorder %s262, %s276
      %p278 = scmp.eq.s32.totalorder %s84, 0
      %p279 = por %p277, %p278
      %s281 = sadd.s32 %s280, 1
      %p284 = scmp.eq.s32.totalorder %s78, 1
      %p285 = scmp.ne.s32.totalorder %s280, %s282
      %p286 = scmp.eq.s32.totalorder %s78, 0
      %p287 = por %p285, %p286
      %p288 = scmp.ne.s32.totalorder %s280, %s282
      %p289 = scmp.eq.s32.totalorder %s83, 1
      %p290 = por %p288, %p289
      %p291 = scmp.ne.s32.totalorder %s282, %s283
      %p292 = scmp.eq.s32.totalorder %s83, 0
      %p293 = por %p291, %p292
      %p294 = scmp.ne.s32.totalorder %s282, %s283
      %p295 = scmp.eq.s32.totalorder %s84, 1
      %p296 = por %p294, %p295
      %p298 = scmp.ne.s32.totalorder %s283, %s297
      %p299 = scmp.eq.s32.totalorder %s84, 0
      %p300 = por %p298, %p299
      %s302 = sadd.s32 %s301, 1
      %p305 = scmp.eq.s32.totalorder %s78, 1
      %p306 = scmp.ne.s32.totalorder %s301, %s303
      %p307 = scmp.eq.s32.totalorder %s78, 0
      %p308 = por %p306, %p307
      %p309 = scmp.ne.s32.totalorder %s301, %s303
      %p310 = scmp.eq.s32.totalorder %s83, 1
      %p311 = por %p309, %p310
      %p312 = scmp.ne.s32.totalorder %s303, %s304
      %p313 = scmp.eq.s32.totalorder %s83, 0
      %p314 = por %p312, %p313
      %p315 = scmp.ne.s32.totalorder %s303, %s304
      %p316 = scmp.eq.s32.totalorder %s84, 1
      %p317 = por %p315, %p316
      %p319 = scmp.ne.s32.totalorder %s304, %s318
      %p320 = scmp.eq.s32.totalorder %s84, 0
      %p321 = por %p319, %p320
      %s323 = sadd.s32 %s322, 1
      %p326 = scmp.eq.s32.totalorder %s78, 1
      %p327 = scmp.ne.s32.totalorder %s322, %s324
      %p328 = scmp.eq.s32.totalorder %s78, 0
      %p329 = por %p327, %p328
      %p330 = scmp.ne.s32.totalorder %s322, %s324
      %p331 = scmp.eq.s32.totalorder %s83, 1
      %p332 = por %p330, %p331
      %p333 = scmp.ne.s32.totalorder %s324, %s325
      %p334 = scmp.eq.s32.totalorder %s83, 0
      %p335 = por %p333, %p334
      %p336 = scmp.ne.s32.totalorder %s324, %s325
      %p337 = scmp.eq.s32.totalorder %s84, 1
      %p338 = por %p336, %p337
      %p340 = scmp.ne.s32.totalorder %s325, %s339
      %p341 = scmp.eq.s32.totalorder %s84, 0
      %p342 = por %p340, %p341
      %s344 = sadd.s32 %s343, 1
      %p347 = scmp.eq.s32.totalorder %s78, 1
      %p348 = scmp.ne.s32.totalorder %s343, %s345
      %p349 = scmp.eq.s32.totalorder %s78, 0
      %p350 = por %p348, %p349
      %p351 = scmp.ne.s32.totalorder %s343, %s345
      %p352 = scmp.eq.s32.totalorder %s83, 1
      %p353 = por %p351, %p352
      %p354 = scmp.ne.s32.totalorder %s345, %s346
      %p355 = scmp.eq.s32.totalorder %s83, 0
      %p356 = por %p354, %p355
      %p357 = scmp.ne.s32.totalorder %s345, %s346
      %p358 = scmp.eq.s32.totalorder %s84, 1
      %p359 = por %p357, %p358
      %p361 = scmp.ne.s32.totalorder %s346, %s360
      %p362 = scmp.eq.s32.totalorder %s84, 0
      %p363 = por %p361, %p362
      %s365 = sadd.s32 %s364, 1
      %p368 = scmp.eq.s32.totalorder %s78, 1
      %p369 = scmp.ne.s32.totalorder %s364, %s366
      %p370 = scmp.eq.s32.totalorder %s78, 0
      %p371 = por %p369, %p370
      %p372 = scmp.ne.s32.totalorder %s364, %s366
      %p373 = scmp.eq.s32.totalorder %s83, 1
      %p374 = por %p372, %p373
      %p375 = scmp.ne.s32.totalorder %s366, %s367
      %p376 = scmp.eq.s32.totalorder %s83, 0
      %p377 = por %p375, %p376
      %p378 = scmp.ne.s32.totalorder %s366, %s367
      %p379 = scmp.eq.s32.totalorder %s84, 1
      %p380 = por %p378, %p379
      %p382 = scmp.ne.s32.totalorder %s367, %s381
      %p383 = scmp.eq.s32.totalorder %s84, 0
      %p384 = por %p382, %p383
      %s386 = sadd.s32 %s385, 1
      %p389 = scmp.eq.s32.totalorder %s78, 1
      %p390 = scmp.ne.s32.totalorder %s385, %s387
      %p391 = scmp.eq.s32.totalorder %s78, 0
      %p392 = por %p390, %p391
      %p393 = scmp.ne.s32.totalorder %s385, %s387
      %p394 = scmp.eq.s32.totalorder %s83, 1
      %p395 = por %p393, %p394
      %p396 = scmp.ne.s32.totalorder %s387, %s388
      %p397 = scmp.eq.s32.totalorder %s83, 0
      %p398 = por %p396, %p397
      %p399 = scmp.ne.s32.totalorder %s387, %s388
      %p400 = scmp.eq.s32.totalorder %s84, 1
      %p401 = por %p399, %p400
      %p403 = scmp.ne.s32.totalorder %s388, %s402
      %p404 = scmp.eq.s32.totalorder %s84, 0
      %p405 = por %p403, %p404
      %s407 = sadd.s32 %s406, 1
      %p410 = scmp.eq.s32.totalorder %s78, 1
      %p411 = scmp.ne.s32.totalorder %s406, %s408
      %p412 = scmp.eq.s32.totalorder %s78, 0
      %p413 = por %p411, %p412
      %p414 = scmp.ne.s32.totalorder %s406, %s408
      %p415 = scmp.eq.s32.totalorder %s83, 1
      %p416 = por %p414, %p415
      %p417 = scmp.ne.s32.totalorder %s408, %s409
      %p418 = scmp.eq.s32.totalorder %s83, 0
      %p419 = por %p417, %p418
      %p420 = scmp.ne.s32.totalorder %s408, %s409
      %p421 = scmp.eq.s32.totalorder %s84, 1
      %p422 = por %p420, %p421
      %p424 = scmp.ne.s32.totalorder %s409, %s423
      %p425 = scmp.eq.s32.totalorder %s84, 0
      %p426 = por %p424, %p425
      %s428 = sadd.s32 %s427, 1
      %p431 = scmp.eq.s32.totalorder %s78, 1
      %p432 = scmp.ne.s32.totalorder %s427, %s429
      %p433 = scmp.eq.s32.totalorder %s78, 0
      %p434 = por %p432, %p433
      %p435 = scmp.ne.s32.totalorder %s427, %s429
      %p436 = scmp.eq.s32.totalorder %s83, 1
      %p437 = por %p435, %p436
      %p438 = scmp.ne.s32.totalorder %s429, %s430
      %p439 = scmp.eq.s32.totalorder %s83, 0
      %p440 = por %p438, %p439
      %p441 = scmp.ne.s32.totalorder %s429, %s430
      %p442 = scmp.eq.s32.totalorder %s84, 1
      %p443 = por %p441, %p442
      %p445 = scmp.ne.s32.totalorder %s430, %s444
      %p446 = scmp.eq.s32.totalorder %s84, 0
      %p447 = por %p445, %p446
      %s449 = sadd.s32 %s448, 1
      %p452 = scmp.eq.s32.totalorder %s78, 1
      %p453 = scmp.ne.s32.totalorder %s448, %s450
      %p454 = scmp.eq.s32.totalorder %s78, 0
      %p455 = por %p453, %p454
      %p456 = scmp.ne.s32.totalorder %s448, %s450
      %p457 = scmp.eq.s32.totalorder %s83, 1
      %p458 = por %p456, %p457
      %p459 = scmp.ne.s32.totalorder %s450, %s451
      %p460 = scmp.eq.s32.totalorder %s83, 0
      %p461 = por %p459, %p460
      %p462 = scmp.ne.s32.totalorder %s450, %s451
      %p463 = scmp.eq.s32.totalorder %s84, 1
      %p464 = por %p462, %p463
      %p466 = scmp.ne.s32.totalorder %s451, %s465
      %p467 = scmp.eq.s32.totalorder %s84, 0
      %p468 = por %p466, %p467
      %s470 = sadd.s32 %s469, 1
      %p473 = scmp.eq.s32.totalorder %s78, 1
      %p474 = scmp.ne.s32.totalorder %s469, %s471
      %p475 = scmp.eq.s32.totalorder %s78, 0
      %p476 = por %p474, %p475
      %p477 = scmp.ne.s32.totalorder %s469, %s471
      %p478 = scmp.eq.s32.totalorder %s83, 1
      %p479 = por %p477, %p478
      %p480 = scmp.ne.s32.totalorder %s471, %s472
      %p481 = scmp.eq.s32.totalorder %s83, 0
      %p482 = por %p480, %p481
      %p483 = scmp.ne.s32.totalorder %s471, %s472
      %p484 = scmp.eq.s32.totalorder %s84, 1
      %p485 = por %p483, %p484
      %p487 = scmp.ne.s32.totalorder %s472, %s486
      %p488 = scmp.eq.s32.totalorder %s84, 0
      %p489 = por %p487, %p488
      %s491 = sadd.s32 %s490, 1
      %p494 = scmp.eq.s32.totalorder %s78, 1
      %p495 = scmp.ne.s32.totalorder %s490, %s492
      %p496 = scmp.eq.s32.totalorder %s78, 0
      %p497 = por %p495, %p496
      %p498 = scmp.ne.s32.totalorder %s490, %s492
      %p499 = scmp.eq.s32.totalorder %s83, 1
      %p500 = por %p498, %p499
      %p501 = scmp.ne.s32.totalorder %s492, %s493
      %p502 = scmp.eq.s32.totalorder %s83, 0
      %p503 = por %p501, %p502
      %p504 = scmp.ne.s32.totalorder %s492, %s493
      %p505 = scmp.eq.s32.totalorder %s84, 1
      %p506 = por %p504, %p505
      %p508 = scmp.ne.s32.totalorder %s493, %s507
      %p509 = scmp.eq.s32.totalorder %s84, 0
      %p510 = por %p508, %p509
      %s512 = sadd.s32 %s511, 1
      %p515 = scmp.eq.s32.totalorder %s78, 1
      %p516 = scmp.ne.s32.totalorder %s511, %s513
      %p517 = scmp.eq.s32.totalorder %s78, 0
      %p518 = por %p516, %p517
      %p519 = scmp.ne.s32.totalorder %s511, %s513
      %p520 = scmp.eq.s32.totalorder %s83, 1
      %p521 = por %p519, %p520
      %p522 = scmp.ne.s32.totalorder %s513, %s514
      %p523 = scmp.eq.s32.totalorder %s83, 0
      %p524 = por %p522, %p523
      %p525 = scmp.ne.s32.totalorder %s513, %s514
      %p526 = scmp.eq.s32.totalorder %s84, 1
      %p527 = por %p525, %p526
      %p529 = scmp.ne.s32.totalorder %s514, %s528
      %p530 = scmp.eq.s32.totalorder %s84, 0
      %p531 = por %p529, %p530
      %s533 = sadd.s32 %s532, 1
      %p536 = scmp.eq.s32.totalorder %s78, 1
      %p537 = scmp.ne.s32.totalorder %s532, %s534
      %p538 = scmp.eq.s32.totalorder %s78, 0
      %p539 = por %p537, %p538
      %p540 = scmp.ne.s32.totalorder %s532, %s534
      %p541 = scmp.eq.s32.totalorder %s83, 1
      %p542 = por %p540, %p541
      %p543 = scmp.ne.s32.totalorder %s534, %s535
      %p544 = scmp.eq.s32.totalorder %s83, 0
      %p545 = por %p543, %p544
      %p546 = scmp.ne.s32.totalorder %s534, %s535
      %p547 = scmp.eq.s32.totalorder %s84, 1
      %p548 = por %p546, %p547
      %p550 = scmp.ne.s32.totalorder %s535, %s549
      %p551 = scmp.eq.s32.totalorder %s84, 0
      %p552 = por %p550, %p551
      %s554 = sadd.s32 %s553, 1
      %p557 = scmp.eq.s32.totalorder %s78, 1
      %p558 = scmp.ne.s32.totalorder %s553, %s555
      %p559 = scmp.eq.s32.totalorder %s78, 0
      %p560 = por %p558, %p559
      %p561 = scmp.ne.s32.totalorder %s553, %s555
      %p562 = scmp.eq.s32.totalorder %s83, 1
      %p563 = por %p561, %p562
      %p564 = scmp.ne.s32.totalorder %s555, %s556
      %p565 = scmp.eq.s32.totalorder %s83, 0
      %p566 = por %p564, %p565
      %p567 = scmp.ne.s32.totalorder %s555, %s556
      %p568 = scmp.eq.s32.totalorder %s84, 1
      %p569 = por %p567, %p568
      %p571 = scmp.ne.s32.totalorder %s556, %s570
      %p572 = scmp.eq.s32.totalorder %s84, 0
      %p573 = por %p571, %p572
      %s575 = sadd.s32 %s574, 1
      %p578 = scmp.eq.s32.totalorder %s78, 1
      %p579 = scmp.ne.s32.totalorder %s574, %s576
      %p580 = scmp.eq.s32.totalorder %s78, 0
      %p581 = por %p579, %p580
      %p582 = scmp.ne.s32.totalorder %s574, %s576
      %p583 = scmp.eq.s32.totalorder %s83, 1
      %p584 = por %p582, %p583
      %p585 = scmp.ne.s32.totalorder %s576, %s577
      %p586 = scmp.eq.s32.totalorder %s83, 0
      %p587 = por %p585, %p586
      %p588 = scmp.ne.s32.totalorder %s576, %s577
      %p589 = scmp.eq.s32.totalorder %s84, 1
      %p590 = por %p588, %p589
      %p592 = scmp.ne.s32.totalorder %s577, %s591
      %p593 = scmp.eq.s32.totalorder %s84, 0
      %p594 = por %p592, %p593
      %s596 = sadd.s32 %s595, 1
      %p599 = scmp.eq.s32.totalorder %s78, 1
      %p600 = scmp.ne.s32.totalorder %s595, %s597
      %p601 = scmp.eq.s32.totalorder %s78, 0
      %p602 = por %p600, %p601
      %p603 = scmp.ne.s32.totalorder %s595, %s597
      %p604 = scmp.eq.s32.totalorder %s83, 1
      %p605 = por %p603, %p604
      %p606 = scmp.ne.s32.totalorder %s597, %s598
      %p607 = scmp.eq.s32.totalorder %s83, 0
      %p608 = por %p606, %p607
      %p609 = scmp.ne.s32.totalorder %s597, %s598
      %p610 = scmp.eq.s32.totalorder %s84, 1
      %p611 = por %p609, %p610
      %p613 = scmp.ne.s32.totalorder %s598, %s612
      %p614 = scmp.eq.s32.totalorder %s84, 0
      %p615 = por %p613, %p614
      %s617 = sadd.s32 %s616, 1
      %p620 = scmp.eq.s32.totalorder %s78, 1
      %p621 = scmp.ne.s32.totalorder %s616, %s618
      %p622 = scmp.eq.s32.totalorder %s78, 0
      %p623 = por %p621, %p622
      %p624 = scmp.ne.s32.totalorder %s616, %s618
      %p625 = scmp.eq.s32.totalorder %s83, 1
      %p626 = por %p624, %p625
      %p627 = scmp.ne.s32.totalorder %s618, %s619
      %p628 = scmp.eq.s32.totalorder %s83, 0
      %p629 = por %p627, %p628
      %p630 = scmp.ne.s32.totalorder %s618, %s619
      %p631 = scmp.eq.s32.totalorder %s84, 1
      %p632 = por %p630, %p631
      %p634 = scmp.ne.s32.totalorder %s619, %s633
      %p635 = scmp.eq.s32.totalorder %s84, 0
      %p636 = por %p634, %p635
      %s638 = sadd.s32 %s637, 1
      %p641 = scmp.eq.s32.totalorder %s78, 1
      %p642 = scmp.ne.s32.totalorder %s637, %s639
      %p643 = scmp.eq.s32.totalorder %s78, 0
      %p644 = por %p642, %p643
      %p645 = scmp.ne.s32.totalorder %s637, %s639
      %p646 = scmp.eq.s32.totalorder %s83, 1
      %p647 = por %p645, %p646
      %p648 = scmp.ne.s32.totalorder %s639, %s640
      %p649 = scmp.eq.s32.totalorder %s83, 0
      %p650 = por %p648, %p649
      %p651 = scmp.ne.s32.totalorder %s639, %s640
      %p652 = scmp.eq.s32.totalorder %s84, 1
      %p653 = por %p651, %p652
      %p655 = scmp.ne.s32.totalorder %s640, %s654
      %p656 = scmp.eq.s32.totalorder %s84, 0
      %p657 = por %p655, %p656
      %s659 = sadd.s32 %s658, 1
      %p662 = scmp.eq.s32.totalorder %s78, 1
      %p663 = scmp.ne.s32.totalorder %s658, %s660
      %p664 = scmp.eq.s32.totalorder %s78, 0
      %p665 = por %p663, %p664
      %p666 = scmp.ne.s32.totalorder %s658, %s660
      %p667 = scmp.eq.s32.totalorder %s83, 1
      %p668 = por %p666, %p667
      %p669 = scmp.ne.s32.totalorder %s660, %s661
      %p670 = scmp.eq.s32.totalorder %s83, 0
      %p671 = por %p669, %p670
      %p672 = scmp.ne.s32.totalorder %s660, %s661
      %p673 = scmp.eq.s32.totalorder %s84, 1
      %p674 = por %p672, %p673
      %p676 = scmp.ne.s32.totalorder %s661, %s675
      %p677 = scmp.eq.s32.totalorder %s84, 0
      %p678 = por %p676, %p677
      %s680 = sadd.s32 %s679, 1
      %p683 = scmp.eq.s32.totalorder %s78, 1
      %p684 = scmp.ne.s32.totalorder %s679, %s681
      %p685 = scmp.eq.s32.totalorder %s78, 0
      %p686 = por %p684, %p685
      %p687 = scmp.ne.s32.totalorder %s679, %s681
      %p688 = scmp.eq.s32.totalorder %s83, 1
      %p689 = por %p687, %p688
      %p690 = scmp.ne.s32.totalorder %s681, %s682
      %p691 = scmp.eq.s32.totalorder %s83, 0
      %p692 = por %p690, %p691
      %p693 = scmp.ne.s32.totalorder %s681, %s682
      %p694 = scmp.eq.s32.totalorder %s84, 1
      %p695 = por %p693, %p694
      %p697 = scmp.ne.s32.totalorder %s682, %s696
      %p698 = scmp.eq.s32.totalorder %s84, 0
      %p699 = por %p697, %p698
      %s701 = sadd.s32 %s700, 1
      %p704 = scmp.eq.s32.totalorder %s78, 1
      %p705 = scmp.ne.s32.totalorder %s700, %s702
      %p706 = scmp.eq.s32.totalorder %s78, 0
      %p707 = por %p705, %p706
      %p708 = scmp.ne.s32.totalorder %s700, %s702
      %p709 = scmp.eq.s32.totalorder %s83, 1
      %p710 = por %p708, %p709
      %p711 = scmp.ne.s32.totalorder %s702, %s703
      %p712 = scmp.eq.s32.totalorder %s83, 0
      %p713 = por %p711, %p712
      %p714 = scmp.ne.s32.totalorder %s702, %s703
      %p715 = scmp.eq.s32.totalorder %s84, 1
      %p716 = por %p714, %p715
      %p718 = scmp.ne.s32.totalorder %s703, %s717
      %p719 = scmp.eq.s32.totalorder %s84, 0
      %p720 = por %p718, %p719
      %s722 = sadd.s32 %s721, 1
      %p725 = scmp.eq.s32.totalorder %s78, 1
      %p726 = scmp.ne.s32.totalorder %s721, %s723
      %p727 = scmp.eq.s32.totalorder %s78, 0
      %p728 = por %p726, %p727
      %p729 = scmp.ne.s32.totalorder %s721, %s723
      %p730 = scmp.eq.s32.totalorder %s83, 1
      %p731 = por %p729, %p730
      %p732 = scmp.ne.s32.totalorder %s723, %s724
      %p733 = scmp.eq.s32.totalorder %s83, 0
      %p734 = por %p732, %p733
      %p735 = scmp.ne.s32.totalorder %s723, %s724
      %p736 = scmp.eq.s32.totalorder %s84, 1
      %p737 = por %p735, %p736
      %p739 = scmp.ne.s32.totalorder %s724, %s738
      %p740 = scmp.eq.s32.totalorder %s84, 0
      %p741 = por %p739, %p740
      %s743 = sadd.s32 %s742, 1
      %p746 = scmp.eq.s32.totalorder %s78, 1
      %p747 = scmp.ne.s32.totalorder %s742, %s744
      %p748 = scmp.eq.s32.totalorder %s78, 0
      %p749 = por %p747, %p748
      %p750 = scmp.ne.s32.totalorder %s742, %s744
      %p751 = scmp.eq.s32.totalorder %s83, 1
      %p752 = por %p750, %p751
      %p753 = scmp.ne.s32.totalorder %s744, %s745
      %p754 = scmp.eq.s32.totalorder %s83, 0
      %p755 = por %p753, %p754
      %p756 = scmp.ne.s32.totalorder %s744, %s745
      %p757 = scmp.eq.s32.totalorder %s84, 1
      %p758 = por %p756, %p757
      %p760 = scmp.ne.s32.totalorder %s745, %s759
      %p761 = scmp.eq.s32.totalorder %s84, 0
      %p762 = por %p760, %p761
      %s764 = sadd.s32 %s763, 1
      %p767 = scmp.eq.s32.totalorder %s78, 1
      %p768 = scmp.ne.s32.totalorder %s763, %s765
      %p769 = scmp.eq.s32.totalorder %s78, 0
      %p770 = por %p768, %p769
      %p771 = scmp.ne.s32.totalorder %s763, %s765
      %p772 = scmp.eq.s32.totalorder %s83, 1
      %p773 = por %p771, %p772
      %p774 = scmp.ne.s32.totalorder %s765, %s766
      %p775 = scmp.eq.s32.totalorder %s83, 0
      %p776 = por %p774, %p775
      %p777 = scmp.ne.s32.totalorder %s765, %s766
      %p778 = scmp.eq.s32.totalorder %s84, 1
      %p779 = por %p777, %p778
      %p781 = scmp.ne.s32.totalorder %s766, %s780
      %p782 = scmp.eq.s32.totalorder %s84, 0
      %p783 = por %p781, %p782
      %s785 = sadd.s32 %s784, 1
      %p788 = scmp.eq.s32.totalorder %s78, 1
      %p789 = scmp.ne.s32.totalorder %s784, %s786
      %p790 = scmp.eq.s32.totalorder %s78, 0
      %p791 = por %p789, %p790
      %p792 = scmp.ne.s32.totalorder %s784, %s786
      %p793 = scmp.eq.s32.totalorder %s83, 1
      %p794 = por %p792, %p793
      %p795 = scmp.ne.s32.totalorder %s786, %s787
      %p796 = scmp.eq.s32.totalorder %s83, 0
      %p797 = por %p795, %p796
      %p798 = scmp.ne.s32.totalorder %s786, %s787
      %p799 = scmp.eq.s32.totalorder %s84, 1
      %p800 = por %p798, %p799
      %p802 = scmp.ne.s32.totalorder %s787, %s801
      %p803 = scmp.eq.s32.totalorder %s84, 0
      %p804 = por %p802, %p803
      %s805 = ssub.s32 %s78, %s85
      %p806 = scmp.eq.s32.totalorder %s805, 0
      %s808 = sadd.s32 %s807, 1
      %s809 = scalar_select %p806, %s807, %s808
      %p812 = pneg %p806
      %p813 = scmp.eq.s32.totalorder %s78, 1
      %p814 = por %p812, %p813
      %p815 = scmp.ne.s32.totalorder %s807, %s810
      %p816 = scmp.eq.s32.totalorder %s78, 0
      %p817 = por %p815, %p816
      %p818 = scmp.ne.s32.totalorder %s807, %s810
      %p819 = scmp.eq.s32.totalorder %s83, 1
      %p820 = por %p818, %p819
      %p821 = scmp.ne.s32.totalorder %s810, %s811
      %p822 = scmp.eq.s32.totalorder %s83, 0
      %p823 = por %p821, %p822
      %p824 = scmp.ne.s32.totalorder %s810, %s811
      %p825 = scmp.eq.s32.totalorder %s84, 1
      %p826 = por %p824, %p825
      %p828 = scmp.ne.s32.totalorder %s811, %s827
      %p829 = scmp.eq.s32.totalorder %s84, 0
      %p830 = por %p828, %p829
      %p831 = scmp.le.s32.totalorder 1, %s78
      %p832 = scmp.lt.s32.totalorder %s78, 3
      %p833 = pnand %p831, %p832
      %p834 = pneg %p833
      // Predicated region
      $region9: #{sincdsnet_forward.1} parent=5 // pred_check
        _
      $region10: #{sincdsnet_forward.1} parent=5 // pred_check_branch
        %836 = sbr.rel (%p833) target = $region12
      $region11: #{sincdsnet_forward.1} parent=5 // pred_region
        %s837 = ssub.s32 %s78, 1
        // Predicated region
        $region13: #{sincdsnet_forward.1} parent=11 // pred_check
          %p838 = pneg %p125
        $region14: #{sincdsnet_forward.1} parent=11 // pred_check_branch
          %840 = sbr.rel (%p838) target = $region16
        $region15: #{sincdsnet_forward.1} parent=11 // pred_region
          _
        $region16: #{sincdsnet_forward.1} parent=11 // pred_fallthru
          _
        // Predicated region
        $region17: #{sincdsnet_forward.1} parent=11 // pred_check
          %p841 = pneg %p146
        $region18: #{sincdsnet_forward.1} parent=11 // pred_check_branch
          %843 = sbr.rel (%p841) target = $region20
        $region19: #{sincdsnet_forward.1} parent=11 // pred_region
          _
        $region20: #{sincdsnet_forward.1} parent=11 // pred_fallthru
          _
        // Predicated region
        $region21: #{sincdsnet_forward.1} parent=11 // pred_check
          %p844 = pneg %p167
        $region22: #{sincdsnet_forward.1} parent=11 // pred_check_branch
          %846 = sbr.rel (%p844) target = $region24
        $region23: #{sincdsnet_forward.1} parent=11 // pred_region
          _
        $region24: #{sincdsnet_forward.1} parent=11 // pred_fallthru
          _
        // Predicated region
        $region25: #{sincdsnet_forward.1} parent=11 // pred_check
          %p847 = pneg %p188
        $region26: #{sincdsnet_forward.1} parent=11 // pred_check_branch
          %849 = sbr.rel (%p847) target = $region28
        $region27: #{sincdsnet_forward.1} parent=11 // pred_region
          _
        $region28: #{sincdsnet_forward.1} parent=11 // pred_fallthru
          _
        // Predicated region
        $region29: #{sincdsnet_forward.1} parent=11 // pred_check
          %p850 = pneg %p209
        $region30: #{sincdsnet_forward.1} parent=11 // pred_check_branch
          %852 = sbr.rel (%p850) target = $region32
        $region31: #{sincdsnet_forward.1} parent=11 // pred_region
          _
        $region32: #{sincdsnet_forward.1} parent=11 // pred_fallthru
          _
        // Predicated region
        $region33: #{sincdsnet_forward.1} parent=11 // pred_check
          %p853 = pneg %p230
        $region34: #{sincdsnet_forward.1} parent=11 // pred_check_branch
          %855 = sbr.rel (%p853) target = $region36
        $region35: #{sincdsnet_forward.1} parent=11 // pred_region
          _
        $region36: #{sincdsnet_forward.1} parent=11 // pred_fallthru
          _
        // Predicated region
        $region37: #{sincdsnet_forward.1} parent=11 // pred_check
          %p856 = pneg %p251
        $region38: #{sincdsnet_forward.1} parent=11 // pred_check_branch
          %858 = sbr.rel (%p856) target = $region40
        $region39: #{sincdsnet_forward.1} parent=11 // pred_region
          _
        $region40: #{sincdsnet_forward.1} parent=11 // pred_fallthru
          _
        // Predicated region
        $region41: #{sincdsnet_forward.1} parent=11 // pred_check
          %p859 = pneg %p272
        $region42: #{sincdsnet_forward.1} parent=11 // pred_check_branch
          %861 = sbr.rel (%p859) target = $region44
        $region43: #{sincdsnet_forward.1} parent=11 // pred_region
          _
        $region44: #{sincdsnet_forward.1} parent=11 // pred_fallthru
          _
        // Predicated region
        $region45: #{sincdsnet_forward.1} parent=11 // pred_check
          %p862 = pneg %p293
        $region46: #{sincdsnet_forward.1} parent=11 // pred_check_branch
          %864 = sbr.rel (%p862) target = $region48
        $region47: #{sincdsnet_forward.1} parent=11 // pred_region
          _
        $region48: #{sincdsnet_forward.1} parent=11 // pred_fallthru
          _
        // Predicated region
        $region49: #{sincdsnet_forward.1} parent=11 // pred_check
          %p865 = pneg %p314
        $region50: #{sincdsnet_forward.1} parent=11 // pred_check_branch
          %867 = sbr.rel (%p865) target = $region52
        $region51: #{sincdsnet_forward.1} parent=11 // pred_region
          _
        $region52: #{sincdsnet_forward.1} parent=11 // pred_fallthru
          _
        // Predicated region
        $region53: #{sincdsnet_forward.1} parent=11 // pred_check
          %p868 = pneg %p335
        $region54: #{sincdsnet_forward.1} parent=11 // pred_check_branch
          %870 = sbr.rel (%p868) target = $region56
        $region55: #{sincdsnet_forward.1} parent=11 // pred_region
          _
        $region56: #{sincdsnet_forward.1} parent=11 // pred_fallthru
          _
        // Predicated region
        $region57: #{sincdsnet_forward.1} parent=11 // pred_check
          %p871 = pneg %p356
        $region58: #{sincdsnet_forward.1} parent=11 // pred_check_branch
          %873 = sbr.rel (%p871) target = $region60
        $region59: #{sincdsnet_forward.1} parent=11 // pred_region
          _
        $region60: #{sincdsnet_forward.1} parent=11 // pred_fallthru
          _
        // Predicated region
        $region61: #{sincdsnet_forward.1} parent=11 // pred_check
          %p874 = pneg %p377
        $region62: #{sincdsnet_forward.1} parent=11 // pred_check_branch
          %876 = sbr.rel (%p874) target = $region64
        $region63: #{sincdsnet_forward.1} parent=11 // pred_region
          _
        $region64: #{sincdsnet_forward.1} parent=11 // pred_fallthru
          _
        // Predicated region
        $region65: #{sincdsnet_forward.1} parent=11 // pred_check
          %p877 = pneg %p398
        $region66: #{sincdsnet_forward.1} parent=11 // pred_check_branch
          %879 = sbr.rel (%p877) target = $region68
        $region67: #{sincdsnet_forward.1} parent=11 // pred_region
          _
        $region68: #{sincdsnet_forward.1} parent=11 // pred_fallthru
          _
        // Predicated region
        $region69: #{sincdsnet_forward.1} parent=11 // pred_check
          %p880 = pneg %p419
        $region70: #{sincdsnet_forward.1} parent=11 // pred_check_branch
          %882 = sbr.rel (%p880) target = $region72
        $region71: #{sincdsnet_forward.1} parent=11 // pred_region
          _
        $region72: #{sincdsnet_forward.1} parent=11 // pred_fallthru
          _
        // Predicated region
        $region73: #{sincdsnet_forward.1} parent=11 // pred_check
          %p883 = pneg %p440
        $region74: #{sincdsnet_forward.1} parent=11 // pred_check_branch
          %885 = sbr.rel (%p883) target = $region76
        $region75: #{sincdsnet_forward.1} parent=11 // pred_region
          _
        $region76: #{sincdsnet_forward.1} parent=11 // pred_fallthru
          _
        // Predicated region
        $region77: #{sincdsnet_forward.1} parent=11 // pred_check
          %p886 = pneg %p461
        $region78: #{sincdsnet_forward.1} parent=11 // pred_check_branch
          %888 = sbr.rel (%p886) target = $region80
        $region79: #{sincdsnet_forward.1} parent=11 // pred_region
          _
        $region80: #{sincdsnet_forward.1} parent=11 // pred_fallthru
          _
        // Predicated region
        $region81: #{sincdsnet_forward.1} parent=11 // pred_check
          %p889 = pneg %p482
        $region82: #{sincdsnet_forward.1} parent=11 // pred_check_branch
          %891 = sbr.rel (%p889) target = $region84
        $region83: #{sincdsnet_forward.1} parent=11 // pred_region
          _
        $region84: #{sincdsnet_forward.1} parent=11 // pred_fallthru
          _
        // Predicated region
        $region85: #{sincdsnet_forward.1} parent=11 // pred_check
          %p892 = pneg %p503
        $region86: #{sincdsnet_forward.1} parent=11 // pred_check_branch
          %894 = sbr.rel (%p892) target = $region88
        $region87: #{sincdsnet_forward.1} parent=11 // pred_region
          _
        $region88: #{sincdsnet_forward.1} parent=11 // pred_fallthru
          _
        // Predicated region
        $region89: #{sincdsnet_forward.1} parent=11 // pred_check
          %p895 = pneg %p524
        $region90: #{sincdsnet_forward.1} parent=11 // pred_check_branch
          %897 = sbr.rel (%p895) target = $region92
        $region91: #{sincdsnet_forward.1} parent=11 // pred_region
          _
        $region92: #{sincdsnet_forward.1} parent=11 // pred_fallthru
          _
        // Predicated region
        $region93: #{sincdsnet_forward.1} parent=11 // pred_check
          %p898 = pneg %p545
        $region94: #{sincdsnet_forward.1} parent=11 // pred_check_branch
          %900 = sbr.rel (%p898) target = $region96
        $region95: #{sincdsnet_forward.1} parent=11 // pred_region
          _
        $region96: #{sincdsnet_forward.1} parent=11 // pred_fallthru
          _
        // Predicated region
        $region97: #{sincdsnet_forward.1} parent=11 // pred_check
          %p901 = pneg %p566
        $region98: #{sincdsnet_forward.1} parent=11 // pred_check_branch
          %903 = sbr.rel (%p901) target = $region100
        $region99: #{sincdsnet_forward.1} parent=11 // pred_region
          _
        $region100: #{sincdsnet_forward.1} parent=11 // pred_fallthru
          _
        // Predicated region
        $region101: #{sincdsnet_forward.1} parent=11 // pred_check
          %p904 = pneg %p587
        $region102: #{sincdsnet_forward.1} parent=11 // pred_check_branch
          %906 = sbr.rel (%p904) target = $region104
        $region103: #{sincdsnet_forward.1} parent=11 // pred_region
          _
        $region104: #{sincdsnet_forward.1} parent=11 // pred_fallthru
          _
        // Predicated region
        $region105: #{sincdsnet_forward.1} parent=11 // pred_check
          %p907 = pneg %p608
        $region106: #{sincdsnet_forward.1} parent=11 // pred_check_branch
          %909 = sbr.rel (%p907) target = $region108
        $region107: #{sincdsnet_forward.1} parent=11 // pred_region
          _
        $region108: #{sincdsnet_forward.1} parent=11 // pred_fallthru
          _
        // Predicated region
        $region109: #{sincdsnet_forward.1} parent=11 // pred_check
          %p910 = pneg %p629
        $region110: #{sincdsnet_forward.1} parent=11 // pred_check_branch
          %912 = sbr.rel (%p910) target = $region112
        $region111: #{sincdsnet_forward.1} parent=11 // pred_region
          _
        $region112: #{sincdsnet_forward.1} parent=11 // pred_fallthru
          _
        // Predicated region
        $region113: #{sincdsnet_forward.1} parent=11 // pred_check
          %p913 = pneg %p650
        $region114: #{sincdsnet_forward.1} parent=11 // pred_check_branch
          %915 = sbr.rel (%p913) target = $region116
        $region115: #{sincdsnet_forward.1} parent=11 // pred_region
          _
        $region116: #{sincdsnet_forward.1} parent=11 // pred_fallthru
          _
        // Predicated region
        $region117: #{sincdsnet_forward.1} parent=11 // pred_check
          %p916 = pneg %p671
        $region118: #{sincdsnet_forward.1} parent=11 // pred_check_branch
          %918 = sbr.rel (%p916) target = $region120
        $region119: #{sincdsnet_forward.1} parent=11 // pred_region
          _
        $region120: #{sincdsnet_forward.1} parent=11 // pred_fallthru
          _
        // Predicated region
        $region121: #{sincdsnet_forward.1} parent=11 // pred_check
          %p919 = pneg %p692
        $region122: #{sincdsnet_forward.1} parent=11 // pred_check_branch
          %921 = sbr.rel (%p919) target = $region124
        $region123: #{sincdsnet_forward.1} parent=11 // pred_region
          _
        $region124: #{sincdsnet_forward.1} parent=11 // pred_fallthru
          _
        // Predicated region
        $region125: #{sincdsnet_forward.1} parent=11 // pred_check
          %p922 = pneg %p713
        $region126: #{sincdsnet_forward.1} parent=11 // pred_check_branch
          %924 = sbr.rel (%p922) target = $region128
        $region127: #{sincdsnet_forward.1} parent=11 // pred_region
          _
        $region128: #{sincdsnet_forward.1} parent=11 // pred_fallthru
          _
        // Predicated region
        $region129: #{sincdsnet_forward.1} parent=11 // pred_check
          %p925 = pneg %p734
        $region130: #{sincdsnet_forward.1} parent=11 // pred_check_branch
          %927 = sbr.rel (%p925) target = $region132
        $region131: #{sincdsnet_forward.1} parent=11 // pred_region
          _
        $region132: #{sincdsnet_forward.1} parent=11 // pred_fallthru
          _
        // Predicated region
        $region133: #{sincdsnet_forward.1} parent=11 // pred_check
          %p928 = pneg %p755
        $region134: #{sincdsnet_forward.1} parent=11 // pred_check_branch
          %930 = sbr.rel (%p928) target = $region136
        $region135: #{sincdsnet_forward.1} parent=11 // pred_region
          _
        $region136: #{sincdsnet_forward.1} parent=11 // pred_fallthru
          _
        // Predicated region
        $region137: #{sincdsnet_forward.1} parent=11 // pred_check
          %p931 = pneg %p776
        $region138: #{sincdsnet_forward.1} parent=11 // pred_check_branch
          %933 = sbr.rel (%p931) target = $region140
        $region139: #{sincdsnet_forward.1} parent=11 // pred_region
          _
        $region140: #{sincdsnet_forward.1} parent=11 // pred_fallthru
          _
        // Predicated region
        $region141: #{sincdsnet_forward.1} parent=11 // pred_check
          %p934 = pneg %p797
        $region142: #{sincdsnet_forward.1} parent=11 // pred_check_branch
          %936 = sbr.rel (%p934) target = $region144
        $region143: #{sincdsnet_forward.1} parent=11 // pred_region
          _
        $region144: #{sincdsnet_forward.1} parent=11 // pred_fallthru
          _
      $region12: #{sincdsnet_forward.1} parent=5 // pred_fallthru
        _
      %p937 = scmp.lt.s32.totalorder %s78, 2
      // Predicated region
      $region145: #{sincdsnet_forward.1} parent=5 // pred_check
        %p938 = pneg %p937
      $region146: #{sincdsnet_forward.1} parent=5 // pred_check_branch
        %940 = sbr.rel (%p938) target = $region148
      $region147: #{sincdsnet_forward.1} parent=5 // pred_region
        // Predicated region
        $region149: #{sincdsnet_forward.1} parent=147 // pred_check
          %p941 = pneg %p98
        $region150: #{sincdsnet_forward.1} parent=147 // pred_check_branch
          %943 = sbr.rel (%p941) target = $region152
        $region151: #{sincdsnet_forward.1} parent=147 // pred_region
          %p944 = scmp.lt.s32.totalorder %s78, 1
          %s945 = scalar_select %p944, %s78, 1
          %s946 = smul.addr %s945, 64
          %s947 = smul.addr %s946, 8
          %s948 = scalar_lea.vmem %s1, %s947
        $region152: #{sincdsnet_forward.1} parent=147 // pred_fallthru
          _
      $region148: #{sincdsnet_forward.1} parent=5 // pred_fallthru
        _
      %p949 = scmp.le.s32.totalorder 1, %s78
      %p950 = scmp.lt.s32.totalorder %s78, 3
      %p951 = pnand %p949, %p950
      %p952 = pneg %p951
      // Predicated region
      $region153: #{sincdsnet_forward.1} parent=5 // pred_check
        _
      $region154: #{sincdsnet_forward.1} parent=5 // pred_check_branch
        %954 = sbr.rel (%p951) target = $region156
      $region155: #{sincdsnet_forward.1} parent=5 // pred_region
        %s955 = ssub.s32 %s78, 1
        %p956 = scmp.lt.s32.totalorder %s83, 1
        %s957 = scalar_select %p956, %s83, 1
        %s958 = smul.addr %s957, 64
        %s959 = smul.addr %s958, 8
        %s960 = scalar_lea.vmem %s1, %s959
        %p961 = pneg %p104
        %p962 = pneg %p101
        %p963 = pneg %p125
        %p964 = pneg %p122
        %p965 = pneg %p146
        %p966 = pneg %p143
        %p967 = pneg %p167
        %p968 = pneg %p164
        %p969 = pneg %p188
        %p970 = pneg %p185
        %p971 = pneg %p209
        %p972 = pneg %p206
        %p973 = pneg %p230
        %p974 = pneg %p227
        %p975 = pneg %p251
        %p976 = pneg %p248
        %p977 = pneg %p272
        %p978 = pneg %p269
        %p979 = pneg %p293
        %p980 = pneg %p290
        %p981 = pneg %p314
        %p982 = pneg %p311
        %p983 = pneg %p335
        %p984 = pneg %p332
        %p985 = pneg %p356
        %p986 = pneg %p353
        %p987 = pneg %p377
        %p988 = pneg %p374
        %p989 = pneg %p398
        %p990 = pneg %p395
        %p991 = pneg %p419
        %p992 = pneg %p416
        %p993 = pneg %p440
        %p994 = pneg %p437
        %p995 = pneg %p461
        %p996 = pneg %p458
        %p997 = pneg %p482
        %p998 = pneg %p479
        %p999 = pneg %p503
        %p1000 = pneg %p500
        %p1001 = pneg %p524
        %p1002 = pneg %p521
        %p1003 = pneg %p545
        %p1004 = pneg %p542
        %p1005 = pneg %p566
        %p1006 = pneg %p563
        %p1007 = pneg %p587
        %p1008 = pneg %p584
        %p1009 = pneg %p608
        %p1010 = pneg %p605
        %p1011 = pneg %p629
        %p1012 = pneg %p626
        %p1013 = pneg %p650
        %p1014 = pneg %p647
        %p1015 = pneg %p671
        %p1016 = pneg %p668
        %p1017 = pneg %p692
        %p1018 = pneg %p689
        %p1019 = pneg %p713
        %p1020 = pneg %p710
        %p1021 = pneg %p734
        %p1022 = pneg %p731
        %p1023 = pneg %p755
        %p1024 = pneg %p752
        %p1025 = pneg %p776
        %p1026 = pneg %p773
        %p1027 = pneg %p797
        %p1028 = pneg %p794
        %p1029 = pneg %p823
        %p1030 = pneg %p820
        %s1031 = sand.u32 %s810, 1
        %s1032 = scalar_lea.sflag [#allocation4], %s1031
        %s1033 = sand.u32 %s810, 1
        %s1034 = scalar_lea.vmem [#allocation3], %s1033
        %p1035 = scmp.lt.s32.totalorder %s83, 1
        %s1036 = scalar_select %p1035, %s83, 1
        %s1037 = smul.addr %s1036, 64
        %s1038 = smul.addr %s1037, 8
        %s1039 = scalar_lea.vmem %s1, %s1038
        %v1040 = vld [vmem:[%s1039] sm:$0xff]
        %v1041 = vld [vmem:[%s1039 + $0x8] sm:$0xff]
        %v1042 = vld [vmem:[%s1039 + $0x10] sm:$0xff]
        %v1043 = vld [vmem:[%s1039 + $0x18] sm:$0xff]
        %v1044 = vld [vmem:[%s1039 + $0x20] sm:$0xff]
        %v1045 = vld [vmem:[%s1039 + $0x28] sm:$0xff]
        %v1046 = vld [vmem:[%s1039 + $0x30] sm:$0xff]
        %v1047 = vld [vmem:[%s1039 + $0x38] sm:$0xff]
        %v1048 = vld [vmem:[%s1039 + $0x40] sm:$0xff]
        %v1049 = vld [vmem:[%s1039 + $0x48] sm:$0xff]
        %v1050 = vld [vmem:[%s1039 + $0x50] sm:$0xff]
        %v1051 = vld [vmem:[%s1039 + $0x58] sm:$0xff]
        %v1052 = vld [vmem:[%s1039 + $0x60] sm:$0xff]
        %v1053 = vld [vmem:[%s1039 + $0x68] sm:$0xff]
        %v1054 = vld [vmem:[%s1039 + $0x70] sm:$0xff]
        %v1055 = vld [vmem:[%s1039 + $0x78] sm:$0xff]
        %v1056 = vld [vmem:[%s1039 + $0x80] sm:$0xff]
        %v1057 = vld [vmem:[%s1039 + $0x88] sm:$0xff]
        %v1058 = vld [vmem:[%s1039 + $0x90] sm:$0xff]
        %v1059 = vld [vmem:[%s1039 + $0x98] sm:$0xff]
        %v1060 = vld [vmem:[%s1039 + $0xa0] sm:$0xff]
        %v1061 = vld [vmem:[%s1039 + $0xa8] sm:$0xff]
        %v1062 = vld [vmem:[%s1039 + $0xb0] sm:$0xff]
        %v1063 = vld [vmem:[%s1039 + $0xb8] sm:$0xff]
        %v1064 = vld [vmem:[%s1039 + $0xc0] sm:$0xff]
        %v1065 = vld [vmem:[%s1039 + $0xc8] sm:$0xff]
        %v1066 = vld [vmem:[%s1039 + $0xd0] sm:$0xff]
        %v1067 = vld [vmem:[%s1039 + $0xd8] sm:$0xff]
        %v1068 = vld [vmem:[%s1039 + $0xe0] sm:$0xff]
        %v1069 = vld [vmem:[%s1039 + $0xe8] sm:$0xff]
        %v1070 = vld [vmem:[%s1039 + $0xf0] sm:$0xff]
        %v1071 = vld [vmem:[%s1039 + $0xf8] sm:$0xff]
        %v1072 = vld [vmem:[%s1039 + $0x100] sm:$0xff]
        %v1073 = vld [vmem:[%s1039 + $0x108] sm:$0xff]
        %v1074 = vld [vmem:[%s1039 + $0x110] sm:$0xff]
        %v1075 = vld [vmem:[%s1039 + $0x118] sm:$0xff]
        %v1076 = vld [vmem:[%s1039 + $0x120] sm:$0xff]
        %v1077 = vld [vmem:[%s1039 + $0x128] sm:$0xff]
        %v1078 = vld [vmem:[%s1039 + $0x130] sm:$0xff]
        %v1079 = vld [vmem:[%s1039 + $0x138] sm:$0xff]
        %v1080 = vld [vmem:[%s1039 + $0x140] sm:$0xff]
        %v1081 = vld [vmem:[%s1039 + $0x148] sm:$0xff]
        %v1082 = vld [vmem:[%s1039 + $0x150] sm:$0xff]
        %v1083 = vld [vmem:[%s1039 + $0x158] sm:$0xff]
        %v1084 = vld [vmem:[%s1039 + $0x160] sm:$0xff]
        %v1085 = vld [vmem:[%s1039 + $0x168] sm:$0xff]
        %v1086 = vld [vmem:[%s1039 + $0x170] sm:$0xff]
        %v1087 = vld [vmem:[%s1039 + $0x178] sm:$0xff]
        %v1088 = vld [vmem:[%s1039 + $0x180] sm:$0xff]
        %v1089 = vld [vmem:[%s1039 + $0x188] sm:$0xff]
        %v1090 = vld [vmem:[%s1039 + $0x190] sm:$0xff]
        %v1091 = vld [vmem:[%s1039 + $0x198] sm:$0xff]
        %v1092 = vld [vmem:[%s1039 + $0x1a0] sm:$0xff]
        %v1093 = vld [vmem:[%s1039 + $0x1a8] sm:$0xff]
        %v1094 = vld [vmem:[%s1039 + $0x1b0] sm:$0xff]
        %v1095 = vld [vmem:[%s1039 + $0x1b8] sm:$0xff]
        %v1096 = vld [vmem:[%s1039 + $0x1c0] sm:$0xff]
        %v1097 = vld [vmem:[%s1039 + $0x1c8] sm:$0xff]
        %v1098 = vld [vmem:[%s1039 + $0x1d0] sm:$0xff]
        %v1099 = vld [vmem:[%s1039 + $0x1d8] sm:$0xff]
        %v1100 = vld [vmem:[%s1039 + $0x1e0] sm:$0xff]
        %v1101 = vld [vmem:[%s1039 + $0x1e8] sm:$0xff]
        %v1102 = vld [vmem:[%s1039 + $0x1f0] sm:$0xff]
        %v1103 = vld [vmem:[%s1039 + $0x1f8] sm:$0xff]
        %v1104 = vld [vmem:[%s3] sm:$0xff]
        %v1105 = vld [vmem:[%s3 + $0x8] sm:$0xff]
        %v1106 = vld [vmem:[%s3 + $0x10] sm:$0xff]
        %v1107 = vld [vmem:[%s3 + $0x18] sm:$0xff]
        %v1108 = vld [vmem:[%s3 + $0x20] sm:$0xff]
        %v1109 = vld [vmem:[%s3 + $0x28] sm:$0xff]
        %v1110 = vld [vmem:[%s3 + $0x30] sm:$0xff]
        %v1111 = vld [vmem:[%s3 + $0x38] sm:$0xff]
        %v1112 = vld [vmem:[%s3 + $0x40] sm:$0xff]
        %v1113 = vld [vmem:[%s3 + $0x48] sm:$0xff]
        %v1114 = vld [vmem:[%s3 + $0x50] sm:$0xff]
        %v1115 = vld [vmem:[%s3 + $0x58] sm:$0xff]
        %v1116 = vld [vmem:[%s3 + $0x60] sm:$0xff]
        %v1117 = vld [vmem:[%s3 + $0x68] sm:$0xff]
        %v1118 = vld [vmem:[%s3 + $0x70] sm:$0xff]
        %v1119 = vld [vmem:[%s3 + $0x78] sm:$0xff]
        %v1120 = vld [vmem:[%s3 + $0x80] sm:$0xff]
        %v1121 = vld [vmem:[%s3 + $0x88] sm:$0xff]
        %v1122 = vld [vmem:[%s3 + $0x90] sm:$0xff]
        %v1123 = vld [vmem:[%s3 + $0x98] sm:$0xff]
        %v1124 = vld [vmem:[%s3 + $0xa0] sm:$0xff]
        %v1125 = vld [vmem:[%s3 + $0xa8] sm:$0xff]
        %v1126 = vld [vmem:[%s3 + $0xb0] sm:$0xff]
        %v1127 = vld [vmem:[%s3 + $0xb8] sm:$0xff]
        %v1128 = vld [vmem:[%s3 + $0xc0] sm:$0xff]
        %v1129 = vld [vmem:[%s3 + $0xc8] sm:$0xff]
        %v1130 = vld [vmem:[%s3 + $0xd0] sm:$0xff]
        %v1131 = vld [vmem:[%s3 + $0xd8] sm:$0xff]
        %v1132 = vld [vmem:[%s3 + $0xe0] sm:$0xff]
        %v1133 = vld [vmem:[%s3 + $0xe8] sm:$0xff]
        %v1134 = vld [vmem:[%s3 + $0xf0] sm:$0xff]
        %v1135 = vld [vmem:[%s3 + $0xf8] sm:$0xff]
        %1136 = vmatprep.subr.mxu0 0.0
        %1137 = vmatpush1.msra.mxu0 %v1119
        %1138 = vmatprep.subr.mxu0 0.0
        %1139 = vmatpush1.msra.mxu0 %v1118
        %1140 = vmatprep.subr.mxu0 0.0
        %1141 = vmatpush1.msra.mxu0 %v1117
        %1142 = vmatprep.subr.mxu0 0.0
        %1143 = vmatpush1.msra.mxu0 %v1116
        %1144 = vmatprep.subr.mxu0 0.0
        %1145 = vmatpush1.msra.mxu0 %v1115
        %1146 = vmatprep.subr.mxu0 0.0
        %1147 = vmatpush1.msra.mxu0 %v1114
        %1148 = vmatprep.subr.mxu0 0.0
        %1149 = vmatpush1.msra.mxu0 %v1113
        %1150 = vmatprep.subr.mxu0 0.0
        %1151 = vmatpush1.msra.mxu0 %v1112
        %1152 = vmatprep.subr.mxu0 0.0
        %1153 = vmatpush1.msra.mxu0 %v1111
        %1154 = vmatprep.subr.mxu0 0.0
        %1155 = vmatpush1.msra.mxu0 %v1110
        %1156 = vmatprep.subr.mxu0 0.0
        %1157 = vmatpush1.msra.mxu0 %v1109
        %1158 = vmatprep.subr.mxu0 0.0
        %1159 = vmatpush1.msra.mxu0 %v1108
        %1160 = vmatprep.subr.mxu0 0.0
        %1161 = vmatpush1.msra.mxu0 %v1107
        %1162 = vmatprep.subr.mxu0 0.0
        %1163 = vmatpush1.msra.mxu0 %v1106
        %1164 = vmatprep.subr.mxu0 0.0
        %1165 = vmatpush1.msra.mxu0 %v1105
        %1166 = vmatprep.subr.mxu0 0.0
        %1167 = vmatpush1.msra.mxu0 %v1104
        %1168 = vmatprep.subr.mxu0 0.0
        %1169 = vmatpush2.msra.mxu0 %v1135
        %1170 = vmatprep.subr.mxu0 0.0
        %1171 = vmatpush2.msra.mxu0 %v1134
        %1172 = vmatprep.subr.mxu0 0.0
        %1173 = vmatpush2.msra.mxu0 %v1133
        %1174 = vmatprep.subr.mxu0 0.0
        %1175 = vmatpush2.msra.mxu0 %v1132
        %1176 = vmatprep.subr.mxu0 0.0
        %1177 = vmatpush2.msra.mxu0 %v1131
        %1178 = vmatprep.subr.mxu0 0.0
        %1179 = vmatpush2.msra.mxu0 %v1130
        %1180 = vmatprep.subr.mxu0 0.0
        %1181 = vmatpush2.msra.mxu0 %v1129
        %1182 = vmatprep.subr.mxu0 0.0
        %1183 = vmatpush2.msra.mxu0 %v1128
        %1184 = vmatprep.subr.mxu0 0.0
        %1185 = vmatpush2.msra.mxu0 %v1127
        %1186 = vmatprep.subr.mxu0 0.0
        %1187 = vmatpush2.msra.mxu0 %v1126
        %1188 = vmatprep.subr.mxu0 0.0
        %1189 = vmatpush2.msra.mxu0 %v1125
        %1190 = vmatprep.subr.mxu0 0.0
        %1191 = vmatpush2.msra.mxu0 %v1124
        %1192 = vmatprep.subr.mxu0 0.0
        %1193 = vmatpush2.msra.mxu0 %v1123
        %1194 = vmatprep.subr.mxu0 0.0
        %1195 = vmatpush2.msra.mxu0 %v1122
        %1196 = vmatprep.subr.mxu0 0.0
        %1197 = vmatpush2.msra.mxu0 %v1121
        %1198 = vmatprep.subr.mxu0 0.0
        %1199 = vmatpush2.msra.mxu0 %v1120
        %1200 = vmatprep.mubr.f32.mxu0 %v1041
        %1201 = vmatmul.mubr.f32.gmra.mxu0 %v1040
        %v1202 = vpop.f32.mrf.mxu0
        %v1203 = vadd.f32 0.0, %v1202
        %v1204 = vpop.f32.mrf.mxu0
        %1205 = vmatprep.mubr.f32.mxu0 %v1043
        %1206 = vmatmul.mubr.f32.gmra.mxu0 %v1042
        %v1207 = vpop.f32.mrf.mxu0
        %v1208 = vadd.f32 0.0, %v1207
        %v1209 = vpop.f32.mrf.mxu0
        %1210 = vmatprep.mubr.f32.mxu0 %v1045
        %1211 = vmatmul.mubr.f32.gmra.mxu0 %v1044
        %v1212 = vpop.f32.mrf.mxu0
        %v1213 = vadd.f32 0.0, %v1212
        %v1214 = vpop.f32.mrf.mxu0
        %1215 = vmatprep.mubr.f32.mxu0 %v1047
        %1216 = vmatmul.mubr.f32.gmra.mxu0 %v1046
        %v1217 = vpop.f32.mrf.mxu0
        %v1218 = vadd.f32 0.0, %v1217
        %v1219 = vpop.f32.mrf.mxu0
        %1220 = vmatprep.mubr.f32.mxu0 %v1049
        %1221 = vmatmul.mubr.f32.gmra.mxu0 %v1048
        %v1222 = vpop.f32.mrf.mxu0
        %v1223 = vadd.f32 0.0, %v1222
        %v1224 = vpop.f32.mrf.mxu0
        %1225 = vmatprep.mubr.f32.mxu0 %v1051
        %1226 = vmatmul.mubr.f32.gmra.mxu0 %v1050
        %v1227 = vpop.f32.mrf.mxu0
        %v1228 = vadd.f32 0.0, %v1227
        %v1229 = vpop.f32.mrf.mxu0
        %1230 = vmatprep.mubr.f32.mxu0 %v1053
        %1231 = vmatmul.mubr.f32.gmra.mxu0 %v1052
        %v1232 = vpop.f32.mrf.mxu0
        %v1233 = vadd.f32 0.0, %v1232
        %v1234 = vpop.f32.mrf.mxu0
        %1235 = vmatprep.mubr.f32.mxu0 %v1055
        %1236 = vmatmul.mubr.f32.gmra.mxu0 %v1054
        %v1237 = vpop.f32.mrf.mxu0
        %v1238 = vadd.f32 0.0, %v1237
        %v1239 = vpop.f32.mrf.mxu0
        %1240 = vmatprep.mubr.f32.mxu0 %v1057
        %1241 = vmatmul.mubr.f32.gmra.mxu0 %v1056
        %v1242 = vpop.f32.mrf.mxu0
        %v1243 = vadd.f32 0.0, %v1242
        %v1244 = vpop.f32.mrf.mxu0
        %1245 = vmatprep.mubr.f32.mxu0 %v1059
        %1246 = vmatmul.mubr.f32.gmra.mxu0 %v1058
        %v1247 = vpop.f32.mrf.mxu0
        %v1248 = vadd.f32 0.0, %v1247
        %v1249 = vpop.f32.mrf.mxu0
        %1250 = vmatprep.mubr.f32.mxu0 %v1061
        %1251 = vmatmul.mubr.f32.gmra.mxu0 %v1060
        %v1252 = vpop.f32.mrf.mxu0
        %v1253 = vadd.f32 0.0, %v1252
        %v1254 = vpop.f32.mrf.mxu0
        %1255 = vmatprep.mubr.f32.mxu0 %v1063
        %1256 = vmatmul.mubr.f32.gmra.mxu0 %v1062
        %v1257 = vpop.f32.mrf.mxu0
        %v1258 = vadd.f32 0.0, %v1257
        %v1259 = vpop.f32.mrf.mxu0
        %1260 = vmatprep.mubr.f32.mxu0 %v1065
        %1261 = vmatmul.mubr.f32.gmra.mxu0 %v1064
        %v1262 = vpop.f32.mrf.mxu0
        %v1263 = vadd.f32 0.0, %v1262
        %v1264 = vpop.f32.mrf.mxu0
        %1265 = vmatprep.mubr.f32.mxu0 %v1067
        %1266 = vmatmul.mubr.f32.gmra.mxu0 %v1066
        %v1267 = vpop.f32.mrf.mxu0
        %v1268 = vadd.f32 0.0, %v1267
        %v1269 = vpop.f32.mrf.mxu0
        %1270 = vmatprep.mubr.f32.mxu0 %v1069
        %1271 = vmatmul.mubr.f32.gmra.mxu0 %v1068
        %v1272 = vpop.f32.mrf.mxu0
        %v1273 = vadd.f32 0.0, %v1272
        %v1274 = vpop.f32.mrf.mxu0
        %1275 = vmatprep.mubr.f32.mxu0 %v1071
        %1276 = vmatmul.mubr.f32.gmra.mxu0 %v1070
        %v1277 = vpop.f32.mrf.mxu0
        %v1278 = vadd.f32 0.0, %v1277
        %v1279 = vpop.f32.mrf.mxu0
        %1280 = vmatprep.mubr.f32.mxu0 %v1073
        %1281 = vmatmul.mubr.f32.gmra.mxu0 %v1072
        %v1282 = vpop.f32.mrf.mxu0
        %v1283 = vadd.f32 0.0, %v1282
        %v1284 = vpop.f32.mrf.mxu0
        %1285 = vmatprep.mubr.f32.mxu0 %v1075
        %1286 = vmatmul.mubr.f32.gmra.mxu0 %v1074
        %v1287 = vpop.f32.mrf.mxu0
        %v1288 = vadd.f32 0.0, %v1287
        %v1289 = vpop.f32.mrf.mxu0
        %1290 = vmatprep.mubr.f32.mxu0 %v1077
        %1291 = vmatmul.mubr.f32.gmra.mxu0 %v1076
        %v1292 = vpop.f32.mrf.mxu0
        %v1293 = vadd.f32 0.0, %v1292
        %v1294 = vpop.f32.mrf.mxu0
        %1295 = vmatprep.mubr.f32.mxu0 %v1079
        %1296 = vmatmul.mubr.f32.gmra.mxu0 %v1078
        %v1297 = vpop.f32.mrf.mxu0
        %v1298 = vadd.f32 0.0, %v1297
        %v1299 = vpop.f32.mrf.mxu0
        %1300 = vmatprep.mubr.f32.mxu0 %v1081
        %1301 = vmatmul.mubr.f32.gmra.mxu0 %v1080
        %v1302 = vpop.f32.mrf.mxu0
        %v1303 = vadd.f32 0.0, %v1302
        %v1304 = vpop.f32.mrf.mxu0
        %1305 = vmatprep.mubr.f32.mxu0 %v1083
        %1306 = vmatmul.mubr.f32.gmra.mxu0 %v1082
        %v1307 = vpop.f32.mrf.mxu0
        %v1308 = vadd.f32 0.0, %v1307
        %v1309 = vpop.f32.mrf.mxu0
        %1310 = vmatprep.mubr.f32.mxu0 %v1085
        %1311 = vmatmul.mubr.f32.gmra.mxu0 %v1084
        %v1312 = vpop.f32.mrf.mxu0
        %v1313 = vadd.f32 0.0, %v1312
        %v1314 = vpop.f32.mrf.mxu0
        %1315 = vmatprep.mubr.f32.mxu0 %v1087
        %1316 = vmatmul.mubr.f32.gmra.mxu0 %v1086
        %v1317 = vpop.f32.mrf.mxu0
        %v1318 = vadd.f32 0.0, %v1317
        %v1319 = vpop.f32.mrf.mxu0
        %1320 = vmatprep.mubr.f32.mxu0 %v1089
        %1321 = vmatmul.mubr.f32.gmra.mxu0 %v1088
        %v1322 = vpop.f32.mrf.mxu0
        %v1323 = vadd.f32 0.0, %v1322
        %v1324 = vpop.f32.mrf.mxu0
        %1325 = vmatprep.mubr.f32.mxu0 %v1091
        %1326 = vmatmul.mubr.f32.gmra.mxu0 %v1090
        %v1327 = vpop.f32.mrf.mxu0
        %v1328 = vadd.f32 0.0, %v1327
        %v1329 = vpop.f32.mrf.mxu0
        %1330 = vmatprep.mubr.f32.mxu0 %v1093
        %1331 = vmatmul.mubr.f32.gmra.mxu0 %v1092
        %v1332 = vpop.f32.mrf.mxu0
        %v1333 = vadd.f32 0.0, %v1332
        %v1334 = vpop.f32.mrf.mxu0
        %1335 = vmatprep.mubr.f32.mxu0 %v1095
        %1336 = vmatmul.mubr.f32.gmra.mxu0 %v1094
        %v1337 = vpop.f32.mrf.mxu0
        %v1338 = vadd.f32 0.0, %v1337
        %v1339 = vpop.f32.mrf.mxu0
        %1340 = vmatprep.mubr.f32.mxu0 %v1097
        %1341 = vmatmul.mubr.f32.gmra.mxu0 %v1096
        %v1342 = vpop.f32.mrf.mxu0
        %v1343 = vadd.f32 0.0, %v1342
        %v1344 = vpop.f32.mrf.mxu0
        %1345 = vmatprep.mubr.f32.mxu0 %v1099
        %1346 = vmatmul.mubr.f32.gmra.mxu0 %v1098
        %v1347 = vpop.f32.mrf.mxu0
        %v1348 = vadd.f32 0.0, %v1347
        %v1349 = vpop.f32.mrf.mxu0
        %1350 = vmatprep.mubr.f32.mxu0 %v1101
        %1351 = vmatmul.mubr.f32.gmra.mxu0 %v1100
        %v1352 = vpop.f32.mrf.mxu0
        %v1353 = vadd.f32 0.0, %v1352
        %v1354 = vpop.f32.mrf.mxu0
        %1355 = vmatprep.mubr.f32.mxu0 %v1103
        %1356 = vmatmul.mubr.f32.gmra.mxu0 %v1102
        %v1357 = vpop.f32.mrf.mxu0
        %v1358 = vadd.f32 0.0, %v1357
        %v1359 = vpop.f32.mrf.mxu0
        %1360 = vdwg.mxu0
        %v1361 = vand.u32 2147483647, %v1203
        %v1362 = vand.u32 2147483647, %v1208
        %v1363 = vand.u32 2147483647, %v1213
        %v1364 = vand.u32 2147483647, %v1218
        %v1365 = vand.u32 2147483647, %v1223
        %v1366 = vand.u32 2147483647, %v1228
        %v1367 = vand.u32 2147483647, %v1233
        %v1368 = vand.u32 2147483647, %v1238
        %v1369 = vand.u32 2147483647, %v1243
        %v1370 = vand.u32 2147483647, %v1248
        %v1371 = vand.u32 2147483647, %v1253
        %v1372 = vand.u32 2147483647, %v1258
        %v1373 = vand.u32 2147483647, %v1263
        %v1374 = vand.u32 2147483647, %v1268
        %v1375 = vand.u32 2147483647, %v1273
        %v1376 = vand.u32 2147483647, %v1278
        %v1377 = vand.u32 2147483647, %v1283
        %v1378 = vand.u32 2147483647, %v1288
        %v1379 = vand.u32 2147483647, %v1293
        %v1380 = vand.u32 2147483647, %v1298
        %v1381 = vand.u32 2147483647, %v1303
        %v1382 = vand.u32 2147483647, %v1308
        %v1383 = vand.u32 2147483647, %v1313
        %v1384 = vand.u32 2147483647, %v1318
        %v1385 = vand.u32 2147483647, %v1323
        %v1386 = vand.u32 2147483647, %v1328
        %v1387 = vand.u32 2147483647, %v1333
        %v1388 = vand.u32 2147483647, %v1338
        %v1389 = vand.u32 2147483647, %v1343
        %v1390 = vand.u32 2147483647, %v1348
        %v1391 = vand.u32 2147483647, %v1353
        %v1392 = vand.u32 2147483647, %v1358
        %v1393 = vadd.f32 %v1361, 1.0
        %v1394 = vadd.f32 %v1362, 1.0
        %v1395 = vadd.f32 %v1363, 1.0
        %v1396 = vadd.f32 %v1364, 1.0
        %v1397 = vadd.f32 %v1365, 1.0
        %v1398 = vadd.f32 %v1366, 1.0
        %v1399 = vadd.f32 %v1367, 1.0
        %v1400 = vadd.f32 %v1368, 1.0
        %v1401 = vadd.f32 %v1369, 1.0
        %v1402 = vadd.f32 %v1370, 1.0
        %v1403 = vadd.f32 %v1371, 1.0
        %v1404 = vadd.f32 %v1372, 1.0
        %v1405 = vadd.f32 %v1373, 1.0
        %v1406 = vadd.f32 %v1374, 1.0
        %v1407 = vadd.f32 %v1375, 1.0
        %v1408 = vadd.f32 %v1376, 1.0
        %v1409 = vadd.f32 %v1377, 1.0
        %v1410 = vadd.f32 %v1378, 1.0
        %v1411 = vadd.f32 %v1379, 1.0
        %v1412 = vadd.f32 %v1380, 1.0
        %v1413 = vadd.f32 %v1381, 1.0
        %v1414 = vadd.f32 %v1382, 1.0
        %v1415 = vadd.f32 %v1383, 1.0
        %v1416 = vadd.f32 %v1384, 1.0
        %v1417 = vadd.f32 %v1385, 1.0
        %v1418 = vadd.f32 %v1386, 1.0
        %v1419 = vadd.f32 %v1387, 1.0
        %v1420 = vadd.f32 %v1388, 1.0
        %v1421 = vadd.f32 %v1389, 1.0
        %v1422 = vadd.f32 %v1390, 1.0
        %v1423 = vadd.f32 %v1391, 1.0
        %v1424 = vadd.f32 %v1392, 1.0
        %v1425 = vlog2.pop %v1393
        %v1426 = vmul.f32 %v1425, 0.6931472
        %v1427 = vlog2.pop %v1394
        %v1428 = vmul.f32 %v1427, 0.6931472
        %v1429 = vlog2.pop %v1395
        %v1430 = vmul.f32 %v1429, 0.6931472
        %v1431 = vlog2.pop %v1396
        %v1432 = vmul.f32 %v1431, 0.6931472
        %v1433 = vlog2.pop %v1397
        %v1434 = vmul.f32 %v1433, 0.6931472
        %v1435 = vlog2.pop %v1398
        %v1436 = vmul.f32 %v1435, 0.6931472
        %v1437 = vlog2.pop %v1399
        %v1438 = vmul.f32 %v1437, 0.6931472
        %v1439 = vlog2.pop %v1400
        %v1440 = vmul.f32 %v1439, 0.6931472
        %v1441 = vlog2.pop %v1401
        %v1442 = vmul.f32 %v1441, 0.6931472
        %v1443 = vlog2.pop %v1402
        %v1444 = vmul.f32 %v1443, 0.6931472
        %v1445 = vlog2.pop %v1403
        %v1446 = vmul.f32 %v1445, 0.6931472
        %v1447 = vlog2.pop %v1404
        %v1448 = vmul.f32 %v1447, 0.6931472
        %v1449 = vlog2.pop %v1405
        %v1450 = vmul.f32 %v1449, 0.6931472
        %v1451 = vlog2.pop %v1406
        %v1452 = vmul.f32 %v1451, 0.6931472
        %v1453 = vlog2.pop %v1407
        %v1454 = vmul.f32 %v1453, 0.6931472
        %v1455 = vlog2.pop %v1408
        %v1456 = vmul.f32 %v1455, 0.6931472
        %v1457 = vlog2.pop %v1409
        %v1458 = vmul.f32 %v1457, 0.6931472
        %v1459 = vlog2.pop %v1410
        %v1460 = vmul.f32 %v1459, 0.6931472
        %v1461 = vlog2.pop %v1411
        %v1462 = vmul.f32 %v1461, 0.6931472
        %v1463 = vlog2.pop %v1412
        %v1464 = vmul.f32 %v1463, 0.6931472
        %v1465 = vlog2.pop %v1413
        %v1466 = vmul.f32 %v1465, 0.6931472
        %v1467 = vlog2.pop %v1414
        %v1468 = vmul.f32 %v1467, 0.6931472
        %v1469 = vlog2.pop %v1415
        %v1470 = vmul.f32 %v1469, 0.6931472
        %v1471 = vlog2.pop %v1416
        %v1472 = vmul.f32 %v1471, 0.6931472
        %v1473 = vlog2.pop %v1417
        %v1474 = vmul.f32 %v1473, 0.6931472
        %v1475 = vlog2.pop %v1418
        %v1476 = vmul.f32 %v1475, 0.6931472
        %v1477 = vlog2.pop %v1419
        %v1478 = vmul.f32 %v1477, 0.6931472
        %v1479 = vlog2.pop %v1420
        %v1480 = vmul.f32 %v1479, 0.6931472
        %v1481 = vlog2.pop %v1421
        %v1482 = vmul.f32 %v1481, 0.6931472
        %v1483 = vlog2.pop %v1422
        %v1484 = vmul.f32 %v1483, 0.6931472
        %v1485 = vlog2.pop %v1423
        %v1486 = vmul.f32 %v1485, 0.6931472
        %v1487 = vlog2.pop %v1424
        %v1488 = vmul.f32 %v1487, 0.6931472
        %v1489 = vld [vmem:[%s5] sm:$0x1]
        %v1491 = vlaneseq
        %v1492 = vshrl.u32 %v1491, 7
        %v1493 = vsub.s32 0, %v1492
        %v1494 = vrot.slane %v1489, %v1493
        %v1496 = vmul.f32 %v1426, %v1494
        %v1497 = vmul.f32 %v1428, %v1494
        %v1498 = vmul.f32 %v1430, %v1494
        %v1499 = vmul.f32 %v1432, %v1494
        %v1500 = vmul.f32 %v1434, %v1494
        %v1501 = vmul.f32 %v1436, %v1494
        %v1502 = vmul.f32 %v1438, %v1494
        %v1503 = vmul.f32 %v1440, %v1494
        %v1504 = vmul.f32 %v1442, %v1494
        %v1505 = vmul.f32 %v1444, %v1494
        %v1506 = vmul.f32 %v1446, %v1494
        %v1507 = vmul.f32 %v1448, %v1494
        %v1508 = vmul.f32 %v1450, %v1494
        %v1509 = vmul.f32 %v1452, %v1494
        %v1510 = vmul.f32 %v1454, %v1494
        %v1511 = vmul.f32 %v1456, %v1494
        %v1512 = vmul.f32 %v1458, %v1494
        %v1513 = vmul.f32 %v1460, %v1494
        %v1514 = vmul.f32 %v1462, %v1494
        %v1515 = vmul.f32 %v1464, %v1494
        %v1516 = vmul.f32 %v1466, %v1494
        %v1517 = vmul.f32 %v1468, %v1494
        %v1518 = vmul.f32 %v1470, %v1494
        %v1519 = vmul.f32 %v1472, %v1494
        %v1520 = vmul.f32 %v1474, %v1494
        %v1521 = vmul.f32 %v1476, %v1494
        %v1522 = vmul.f32 %v1478, %v1494
        %v1523 = vmul.f32 %v1480, %v1494
        %v1524 = vmul.f32 %v1482, %v1494
        %v1525 = vmul.f32 %v1484, %v1494
        %v1526 = vmul.f32 %v1486, %v1494
        %v1527 = vmul.f32 %v1488, %v1494
        %v1528 = vld [vmem:[%s7] sm:$0x1]
        %v1530 = vlaneseq
        %v1531 = vshrl.u32 %v1530, 7
        %v1532 = vsub.s32 0, %v1531
        %v1533 = vrot.slane %v1528, %v1532
        %v1535 = vadd.f32 %v1496, %v1533
        %v1536 = vadd.f32 %v1497, %v1533
        %v1537 = vadd.f32 %v1498, %v1533
        %v1538 = vadd.f32 %v1499, %v1533
        %v1539 = vadd.f32 %v1500, %v1533
        %v1540 = vadd.f32 %v1501, %v1533
        %v1541 = vadd.f32 %v1502, %v1533
        %v1542 = vadd.f32 %v1503, %v1533
        %v1543 = vadd.f32 %v1504, %v1533
        %v1544 = vadd.f32 %v1505, %v1533
        %v1545 = vadd.f32 %v1506, %v1533
        %v1546 = vadd.f32 %v1507, %v1533
        %v1547 = vadd.f32 %v1508, %v1533
        %v1548 = vadd.f32 %v1509, %v1533
        %v1549 = vadd.f32 %v1510, %v1533
        %v1550 = vadd.f32 %v1511, %v1533
        %v1551 = vadd.f32 %v1512, %v1533
        %v1552 = vadd.f32 %v1513, %v1533
        %v1553 = vadd.f32 %v1514, %v1533
        %v1554 = vadd.f32 %v1515, %v1533
        %v1555 = vadd.f32 %v1516, %v1533
        %v1556 = vadd.f32 %v1517, %v1533
        %v1557 = vadd.f32 %v1518, %v1533
        %v1558 = vadd.f32 %v1519, %v1533
        %v1559 = vadd.f32 %v1520, %v1533
        %v1560 = vadd.f32 %v1521, %v1533
        %v1561 = vadd.f32 %v1522, %v1533
        %v1562 = vadd.f32 %v1523, %v1533
        %v1563 = vadd.f32 %v1524, %v1533
        %v1564 = vadd.f32 %v1525, %v1533
        %v1565 = vadd.f32 %v1526, %v1533
        %v1566 = vadd.f32 %v1527, %v1533
        %1567 = vst [vmem:[#allocation2] sm:$0xff] 0.0
        %1568 = vst [vmem:[#allocation2 + $0x10] sm:$0xff] 0.0
        %1569 = vst [vmem:[#allocation2 + $0x220] sm:$0xff] 0.0
        %1570 = vst [vmem:[#allocation2 + $0x230] sm:$0xff] 0.0
        %1571 = vst [vmem:[#allocation2 + $0x20] sm:$0xff] %v1535
        %1572 = vst [vmem:[#allocation2 + $0x30] sm:$0xff] %v1536
        %1573 = vst [vmem:[#allocation2 + $0x40] sm:$0xff] %v1537
        %1574 = vst [vmem:[#allocation2 + $0x50] sm:$0xff] %v1538
        %1575 = vst [vmem:[#allocation2 + $0x60] sm:$0xff] %v1539
        %1576 = vst [vmem:[#allocation2 + $0x70] sm:$0xff] %v1540
        %1577 = vst [vmem:[#allocation2 + $0x80] sm:$0xff] %v1541
        %1578 = vst [vmem:[#allocation2 + $0x90] sm:$0xff] %v1542
        %1579 = vst [vmem:[#allocation2 + $0xa0] sm:$0xff] %v1543
        %1580 = vst [vmem:[#allocation2 + $0xb0] sm:$0xff] %v1544
        %1581 = vst [vmem:[#allocation2 + $0xc0] sm:$0xff] %v1545
        %1582 = vst [vmem:[#allocation2 + $0xd0] sm:$0xff] %v1546
        %1583 = vst [vmem:[#allocation2 + $0xe0] sm:$0xff] %v1547
        %1584 = vst [vmem:[#allocation2 + $0xf0] sm:$0xff] %v1548
        %1585 = vst [vmem:[#allocation2 + $0x100] sm:$0xff] %v1549
        %1586 = vst [vmem:[#allocation2 + $0x110] sm:$0xff] %v1550
        %1587 = vst [vmem:[#allocation2 + $0x120] sm:$0xff] %v1551
        %1588 = vst [vmem:[#allocation2 + $0x130] sm:$0xff] %v1552
        %1589 = vst [vmem:[#allocation2 + $0x140] sm:$0xff] %v1553
        %1590 = vst [vmem:[#allocation2 + $0x150] sm:$0xff] %v1554
        %1591 = vst [vmem:[#allocation2 + $0x160] sm:$0xff] %v1555
        %1592 = vst [vmem:[#allocation2 + $0x170] sm:$0xff] %v1556
        %1593 = vst [vmem:[#allocation2 + $0x180] sm:$0xff] %v1557
        %1594 = vst [vmem:[#allocation2 + $0x190] sm:$0xff] %v1558
        %1595 = vst [vmem:[#allocation2 + $0x1a0] sm:$0xff] %v1559
        %1596 = vst [vmem:[#allocation2 + $0x1b0] sm:$0xff] %v1560
        %1597 = vst [vmem:[#allocation2 + $0x1c0] sm:$0xff] %v1561
        %1598 = vst [vmem:[#allocation2 + $0x1d0] sm:$0xff] %v1562
        %1599 = vst [vmem:[#allocation2 + $0x1e0] sm:$0xff] %v1563
        %1600 = vst [vmem:[#allocation2 + $0x1f0] sm:$0xff] %v1564
        %1601 = vst [vmem:[#allocation2 + $0x200] sm:$0xff] %v1565
        %1602 = vst [vmem:[#allocation2 + $0x210] sm:$0xff] %v1566
        %v1603 = vld [vmem:[#allocation2] sm:$0xf0]
        %v1604 = vld [vmem:[#allocation2 + $0x10] sm:$0xff]
        %v1605 = vld [vmem:[#allocation2 + $0x20] sm:$0xff]
        %v1606 = vld [vmem:[#allocation2 + $0x30] sm:$0xff]
        %v1607 = vld [vmem:[#allocation2 + $0x40] sm:$0xff]
        %v1608 = vld [vmem:[#allocation2 + $0x50] sm:$0xff]
        %v1609 = vld [vmem:[#allocation2 + $0x60] sm:$0xff]
        %v1610 = vld [vmem:[#allocation2 + $0x70] sm:$0xff]
        %v1611 = vld [vmem:[#allocation2 + $0x80] sm:$0xff]
        %v1612 = vld [vmem:[#allocation2 + $0x90] sm:$0xff]
        %v1613 = vld [vmem:[#allocation2 + $0xa0] sm:$0xff]
        %v1614 = vld [vmem:[#allocation2 + $0xb0] sm:$0xff]
        %v1615 = vld [vmem:[#allocation2 + $0xc0] sm:$0xff]
        %v1616 = vld [vmem:[#allocation2 + $0xd0] sm:$0xff]
        %v1617 = vld [vmem:[#allocation2 + $0xe0] sm:$0xff]
        %v1618 = vld [vmem:[#allocation2 + $0xf0] sm:$0xff]
        %v1619 = vld [vmem:[#allocation2 + $0x100] sm:$0xff]
        %v1620 = vld [vmem:[#allocation2 + $0x110] sm:$0xff]
        %v1621 = vld [vmem:[#allocation2 + $0x120] sm:$0xff]
        %v1622 = vld [vmem:[#allocation2 + $0x130] sm:$0xff]
        %v1623 = vld [vmem:[#allocation2 + $0x140] sm:$0xff]
        %v1624 = vld [vmem:[#allocation2 + $0x150] sm:$0xff]
        %v1625 = vld [vmem:[#allocation2 + $0x160] sm:$0xff]
        %v1626 = vld [vmem:[#allocation2 + $0x170] sm:$0xff]
        %v1627 = vld [vmem:[#allocation2 + $0x180] sm:$0xff]
        %v1628 = vld [vmem:[#allocation2 + $0x190] sm:$0xff]
        %v1629 = vld [vmem:[#allocation2 + $0x1a0] sm:$0xff]
        %v1630 = vld [vmem:[#allocation2 + $0x1b0] sm:$0xff]
        %v1631 = vld [vmem:[#allocation2 + $0x1c0] sm:$0xff]
        %v1632 = vld [vmem:[#allocation2 + $0x1d0] sm:$0xff]
        %v1633 = vld [vmem:[#allocation2 + $0x1e0] sm:$0xff]
        %v1634 = vld [vmem:[#allocation2 + $0x1f0] sm:$0xff]
        %v1635 = vld [vmem:[#allocation2 + $0x200] sm:$0xf]
        %v1636 = vld [vmem:[%s9] sm:$0x1]
        %v1637 = vlaneseq
        %v1638 = vshrl.u32 %v1637, 7
        %v1639 = vsub.s32 0, %v1638
        %v1640 = vrot.slane %v1636, %v1639
        %v1641 = vmul.f32 %v1603, %v1640
        %v1642 = vmul.f32 %v1604, %v1640
        %v1643 = vmul.f32 %v1605, %v1640
        %v1644 = vmul.f32 %v1606, %v1640
        %v1645 = vmul.f32 %v1607, %v1640
        %v1646 = vmul.f32 %v1608, %v1640
        %v1647 = vmul.f32 %v1609, %v1640
        %v1648 = vmul.f32 %v1610, %v1640
        %v1649 = vmul.f32 %v1611, %v1640
        %v1650 = vmul.f32 %v1612, %v1640
        %v1651 = vmul.f32 %v1613, %v1640
        %v1652 = vmul.f32 %v1614, %v1640
        %v1653 = vmul.f32 %v1615, %v1640
        %v1654 = vmul.f32 %v1616, %v1640
        %v1655 = vmul.f32 %v1617, %v1640
        %v1656 = vmul.f32 %v1618, %v1640
        %v1657 = vmul.f32 %v1619, %v1640
        %v1658 = vmul.f32 %v1620, %v1640
        %v1659 = vmul.f32 %v1621, %v1640
        %v1660 = vmul.f32 %v1622, %v1640
        %v1661 = vmul.f32 %v1623, %v1640
        %v1662 = vmul.f32 %v1624, %v1640
        %v1663 = vmul.f32 %v1625, %v1640
        %v1664 = vmul.f32 %v1626, %v1640
        %v1665 = vmul.f32 %v1627, %v1640
        %v1666 = vmul.f32 %v1628, %v1640
        %v1667 = vmul.f32 %v1629, %v1640
        %v1668 = vmul.f32 %v1630, %v1640
        %v1669 = vmul.f32 %v1631, %v1640
        %v1670 = vmul.f32 %v1632, %v1640
        %v1671 = vmul.f32 %v1633, %v1640
        %v1672 = vmul.f32 %v1634, %v1640
        %v1673 = vmul.f32 %v1635, %v1640
        %v1674 = vld [vmem:[#allocation2] sm:$0xe0]
        %v1675 = vld [vmem:[#allocation2 + $0x200] sm:$0x1f]
        %v1676 = vld [vmem:[%s9 + $0x1] sm:$0x1]
        %v1677 = vlaneseq
        %v1678 = vshrl.u32 %v1677, 7
        %v1679 = vsub.s32 0, %v1678
        %v1680 = vrot.slane %v1676, %v1679
        %v1681 = vmul.f32 %v1674, %v1680
        %v1682 = vmul.f32 %v1604, %v1680
        %v1683 = vmul.f32 %v1605, %v1680
        %v1684 = vmul.f32 %v1606, %v1680
        %v1685 = vmul.f32 %v1607, %v1680
        %v1686 = vmul.f32 %v1608, %v1680
        %v1687 = vmul.f32 %v1609, %v1680
        %v1688 = vmul.f32 %v1610, %v1680
        %v1689 = vmul.f32 %v1611, %v1680
        %v1690 = vmul.f32 %v1612, %v1680
        %v1691 = vmul.f32 %v1613, %v1680
        %v1692 = vmul.f32 %v1614, %v1680
        %v1693 = vmul.f32 %v1615, %v1680
        %v1694 = vmul.f32 %v1616, %v1680
        %v1695 = vmul.f32 %v1617, %v1680
        %v1696 = vmul.f32 %v1618, %v1680
        %v1697 = vmul.f32 %v1619, %v1680
        %v1698 = vmul.f32 %v1620, %v1680
        %v1699 = vmul.f32 %v1621, %v1680
        %v1700 = vmul.f32 %v1622, %v1680
        %v1701 = vmul.f32 %v1623, %v1680
        %v1702 = vmul.f32 %v1624, %v1680
        %v1703 = vmul.f32 %v1625, %v1680
        %v1704 = vmul.f32 %v1626, %v1680
        %v1705 = vmul.f32 %v1627, %v1680
        %v1706 = vmul.f32 %v1628, %v1680
        %v1707 = vmul.f32 %v1629, %v1680
        %v1708 = vmul.f32 %v1630, %v1680
        %v1709 = vmul.f32 %v1631, %v1680
        %v1710 = vmul.f32 %v1632, %v1680
        %v1711 = vmul.f32 %v1633, %v1680
        %v1712 = vmul.f32 %v1634, %v1680
        %v1713 = vmul.f32 %v1675, %v1680
        %vm1747 = vcmask 1046528
        %v1748 = vrot.slane %v1681, 1
        %v1749 = vrot.slane %v1682, 1
        %v1750 = vsel %vm1747, %v1748, %v1749
        %v1751 = vrot.slane %v1683, 1
        %v1752 = vsel %vm1747, %v1749, %v1751
        %v1753 = vrot.slane %v1684, 1
        %v1754 = vsel %vm1747, %v1751, %v1753
        %v1755 = vrot.slane %v1685, 1
        %v1756 = vsel %vm1747, %v1753, %v1755
        %v1757 = vrot.slane %v1686, 1
        %v1758 = vsel %vm1747, %v1755, %v1757
        %v1759 = vrot.slane %v1687, 1
        %v1760 = vsel %vm1747, %v1757, %v1759
        %v1761 = vrot.slane %v1688, 1
        %v1762 = vsel %vm1747, %v1759, %v1761
        %v1763 = vrot.slane %v1689, 1
        %v1764 = vsel %vm1747, %v1761, %v1763
        %v1765 = vrot.slane %v1690, 1
        %v1766 = vsel %vm1747, %v1763, %v1765
        %v1767 = vrot.slane %v1691, 1
        %v1768 = vsel %vm1747, %v1765, %v1767
        %v1769 = vrot.slane %v1692, 1
        %v1770 = vsel %vm1747, %v1767, %v1769
        %v1771 = vrot.slane %v1693, 1
        %v1772 = vsel %vm1747, %v1769, %v1771
        %v1773 = vrot.slane %v1694, 1
        %v1774 = vsel %vm1747, %v1771, %v1773
        %v1775 = vrot.slane %v1695, 1
        %v1776 = vsel %vm1747, %v1773, %v1775
        %v1777 = vrot.slane %v1696, 1
        %v1778 = vsel %vm1747, %v1775, %v1777
        %v1779 = vrot.slane %v1697, 1
        %v1780 = vsel %vm1747, %v1777, %v1779
        %v1781 = vrot.slane %v1698, 1
        %v1782 = vsel %vm1747, %v1779, %v1781
        %v1783 = vrot.slane %v1699, 1
        %v1784 = vsel %vm1747, %v1781, %v1783
        %v1785 = vrot.slane %v1700, 1
        %v1786 = vsel %vm1747, %v1783, %v1785
        %v1787 = vrot.slane %v1701, 1
        %v1788 = vsel %vm1747, %v1785, %v1787
        %v1789 = vrot.slane %v1702, 1
        %v1790 = vsel %vm1747, %v1787, %v1789
        %v1791 = vrot.slane %v1703, 1
        %v1792 = vsel %vm1747, %v1789, %v1791
        %v1793 = vrot.slane %v1704, 1
        %v1794 = vsel %vm1747, %v1791, %v1793
        %v1795 = vrot.slane %v1705, 1
        %v1796 = vsel %vm1747, %v1793, %v1795
        %v1797 = vrot.slane %v1706, 1
        %v1798 = vsel %vm1747, %v1795, %v1797
        %v1799 = vrot.slane %v1707, 1
        %v1800 = vsel %vm1747, %v1797, %v1799
        %v1801 = vrot.slane %v1708, 1
        %v1802 = vsel %vm1747, %v1799, %v1801
        %v1803 = vrot.slane %v1709, 1
        %v1804 = vsel %vm1747, %v1801, %v1803
        %v1805 = vrot.slane %v1710, 1
        %v1806 = vsel %vm1747, %v1803, %v1805
        %v1807 = vrot.slane %v1711, 1
        %v1808 = vsel %vm1747, %v1805, %v1807
        %v1809 = vrot.slane %v1712, 1
        %v1810 = vsel %vm1747, %v1807, %v1809
        %v1811 = vrot.slane %v1713, 1
        %v1812 = vsel %vm1747, %v1809, %v1811
        %v1846 = vadd.f32 %v1641, %v1750
        %v1847 = vadd.f32 %v1642, %v1752
        %v1848 = vadd.f32 %v1643, %v1754
        %v1849 = vadd.f32 %v1644, %v1756
        %v1850 = vadd.f32 %v1645, %v1758
        %v1851 = vadd.f32 %v1646, %v1760
        %v1852 = vadd.f32 %v1647, %v1762
        %v1853 = vadd.f32 %v1648, %v1764
        %v1854 = vadd.f32 %v1649, %v1766
        %v1855 = vadd.f32 %v1650, %v1768
        %v1856 = vadd.f32 %v1651, %v1770
        %v1857 = vadd.f32 %v1652, %v1772
        %v1858 = vadd.f32 %v1653, %v1774
        %v1859 = vadd.f32 %v1654, %v1776
        %v1860 = vadd.f32 %v1655, %v1778
        %v1861 = vadd.f32 %v1656, %v1780
        %v1862 = vadd.f32 %v1657, %v1782
        %v1863 = vadd.f32 %v1658, %v1784
        %v1864 = vadd.f32 %v1659, %v1786
        %v1865 = vadd.f32 %v1660, %v1788
        %v1866 = vadd.f32 %v1661, %v1790
        %v1867 = vadd.f32 %v1662, %v1792
        %v1868 = vadd.f32 %v1663, %v1794
        %v1869 = vadd.f32 %v1664, %v1796
        %v1870 = vadd.f32 %v1665, %v1798
        %v1871 = vadd.f32 %v1666, %v1800
        %v1872 = vadd.f32 %v1667, %v1802
        %v1873 = vadd.f32 %v1668, %v1804
        %v1874 = vadd.f32 %v1669, %v1806
        %v1875 = vadd.f32 %v1670, %v1808
        %v1876 = vadd.f32 %v1671, %v1810
        %v1877 = vadd.f32 %v1672, %v1812
        %v1878 = vadd.f32 %v1673, %v1811
        %v1879 = vld [vmem:[#allocation2] sm:$0xc0]
        %v1880 = vld [vmem:[#allocation2 + $0x200] sm:$0x3f]
        %v1881 = vld [vmem:[%s9 + $0x2] sm:$0x1]
        %v1882 = vlaneseq
        %v1883 = vshrl.u32 %v1882, 7
        %v1884 = vsub.s32 0, %v1883
        %v1885 = vrot.slane %v1881, %v1884
        %v1886 = vmul.f32 %v1879, %v1885
        %v1887 = vmul.f32 %v1604, %v1885
        %v1888 = vmul.f32 %v1605, %v1885
        %v1889 = vmul.f32 %v1606, %v1885
        %v1890 = vmul.f32 %v1607, %v1885
        %v1891 = vmul.f32 %v1608, %v1885
        %v1892 = vmul.f32 %v1609, %v1885
        %v1893 = vmul.f32 %v1610, %v1885
        %v1894 = vmul.f32 %v1611, %v1885
        %v1895 = vmul.f32 %v1612, %v1885
        %v1896 = vmul.f32 %v1613, %v1885
        %v1897 = vmul.f32 %v1614, %v1885
        %v1898 = vmul.f32 %v1615, %v1885
        %v1899 = vmul.f32 %v1616, %v1885
        %v1900 = vmul.f32 %v1617, %v1885
        %v1901 = vmul.f32 %v1618, %v1885
        %v1902 = vmul.f32 %v1619, %v1885
        %v1903 = vmul.f32 %v1620, %v1885
        %v1904 = vmul.f32 %v1621, %v1885
        %v1905 = vmul.f32 %v1622, %v1885
        %v1906 = vmul.f32 %v1623, %v1885
        %v1907 = vmul.f32 %v1624, %v1885
        %v1908 = vmul.f32 %v1625, %v1885
        %v1909 = vmul.f32 %v1626, %v1885
        %v1910 = vmul.f32 %v1627, %v1885
        %v1911 = vmul.f32 %v1628, %v1885
        %v1912 = vmul.f32 %v1629, %v1885
        %v1913 = vmul.f32 %v1630, %v1885
        %v1914 = vmul.f32 %v1631, %v1885
        %v1915 = vmul.f32 %v1632, %v1885
        %v1916 = vmul.f32 %v1633, %v1885
        %v1917 = vmul.f32 %v1634, %v1885
        %v1918 = vmul.f32 %v1880, %v1885
        %vm1952 = vcmask 1045504
        %v1953 = vrot.slane %v1886, 2
        %v1954 = vrot.slane %v1887, 2
        %v1955 = vsel %vm1952, %v1953, %v1954
        %v1956 = vrot.slane %v1888, 2
        %v1957 = vsel %vm1952, %v1954, %v1956
        %v1958 = vrot.slane %v1889, 2
        %v1959 = vsel %vm1952, %v1956, %v1958
        %v1960 = vrot.slane %v1890, 2
        %v1961 = vsel %vm1952, %v1958, %v1960
        %v1962 = vrot.slane %v1891, 2
        %v1963 = vsel %vm1952, %v1960, %v1962
        %v1964 = vrot.slane %v1892, 2
        %v1965 = vsel %vm1952, %v1962, %v1964
        %v1966 = vrot.slane %v1893, 2
        %v1967 = vsel %vm1952, %v1964, %v1966
        %v1968 = vrot.slane %v1894, 2
        %v1969 = vsel %vm1952, %v1966, %v1968
        %v1970 = vrot.slane %v1895, 2
        %v1971 = vsel %vm1952, %v1968, %v1970
        %v1972 = vrot.slane %v1896, 2
        %v1973 = vsel %vm1952, %v1970, %v1972
        %v1974 = vrot.slane %v1897, 2
        %v1975 = vsel %vm1952, %v1972, %v1974
        %v1976 = vrot.slane %v1898, 2
        %v1977 = vsel %vm1952, %v1974, %v1976
        %v1978 = vrot.slane %v1899, 2
        %v1979 = vsel %vm1952, %v1976, %v1978
        %v1980 = vrot.slane %v1900, 2
        %v1981 = vsel %vm1952, %v1978, %v1980
        %v1982 = vrot.slane %v1901, 2
        %v1983 = vsel %vm1952, %v1980, %v1982
        %v1984 = vrot.slane %v1902, 2
        %v1985 = vsel %vm1952, %v1982, %v1984
        %v1986 = vrot.slane %v1903, 2
        %v1987 = vsel %vm1952, %v1984, %v1986
        %v1988 = vrot.slane %v1904, 2
        %v1989 = vsel %vm1952, %v1986, %v1988
        %v1990 = vrot.slane %v1905, 2
        %v1991 = vsel %vm1952, %v1988, %v1990
        %v1992 = vrot.slane %v1906, 2
        %v1993 = vsel %vm1952, %v1990, %v1992
        %v1994 = vrot.slane %v1907, 2
        %v1995 = vsel %vm1952, %v1992, %v1994
        %v1996 = vrot.slane %v1908, 2
        %v1997 = vsel %vm1952, %v1994, %v1996
        %v1998 = vrot.slane %v1909, 2
        %v1999 = vsel %vm1952, %v1996, %v1998
        %v2000 = vrot.slane %v1910, 2
        %v2001 = vsel %vm1952, %v1998, %v2000
        %v2002 = vrot.slane %v1911, 2
        %v2003 = vsel %vm1952, %v2000, %v2002
        %v2004 = vrot.slane %v1912, 2
        %v2005 = vsel %vm1952, %v2002, %v2004
        %v2006 = vrot.slane %v1913, 2
        %v2007 = vsel %vm1952, %v2004, %v2006
        %v2008 = vrot.slane %v1914, 2
        %v2009 = vsel %vm1952, %v2006, %v2008
        %v2010 = vrot.slane %v1915, 2
        %v2011 = vsel %vm1952, %v2008, %v2010
        %v2012 = vrot.slane %v1916, 2
        %v2013 = vsel %vm1952, %v2010, %v2012
        %v2014 = vrot.slane %v1917, 2
        %v2015 = vsel %vm1952, %v2012, %v2014
        %v2016 = vrot.slane %v1918, 2
        %v2017 = vsel %vm1952, %v2014, %v2016
        %v2051 = vadd.f32 %v1846, %v1955
        %v2052 = vadd.f32 %v1847, %v1957
        %v2053 = vadd.f32 %v1848, %v1959
        %v2054 = vadd.f32 %v1849, %v1961
        %v2055 = vadd.f32 %v1850, %v1963
        %v2056 = vadd.f32 %v1851, %v1965
        %v2057 = vadd.f32 %v1852, %v1967
        %v2058 = vadd.f32 %v1853, %v1969
        %v2059 = vadd.f32 %v1854, %v1971
        %v2060 = vadd.f32 %v1855, %v1973
        %v2061 = vadd.f32 %v1856, %v1975
        %v2062 = vadd.f32 %v1857, %v1977
        %v2063 = vadd.f32 %v1858, %v1979
        %v2064 = vadd.f32 %v1859, %v1981
        %v2065 = vadd.f32 %v1860, %v1983
        %v2066 = vadd.f32 %v1861, %v1985
        %v2067 = vadd.f32 %v1862, %v1987
        %v2068 = vadd.f32 %v1863, %v1989
        %v2069 = vadd.f32 %v1864, %v1991
        %v2070 = vadd.f32 %v1865, %v1993
        %v2071 = vadd.f32 %v1866, %v1995
        %v2072 = vadd.f32 %v1867, %v1997
        %v2073 = vadd.f32 %v1868, %v1999
        %v2074 = vadd.f32 %v1869, %v2001
        %v2075 = vadd.f32 %v1870, %v2003
        %v2076 = vadd.f32 %v1871, %v2005
        %v2077 = vadd.f32 %v1872, %v2007
        %v2078 = vadd.f32 %v1873, %v2009
        %v2079 = vadd.f32 %v1874, %v2011
        %v2080 = vadd.f32 %v1875, %v2013
        %v2081 = vadd.f32 %v1876, %v2015
        %v2082 = vadd.f32 %v1877, %v2017
        %v2083 = vadd.f32 %v1878, %v2016
        %v2084 = vld [vmem:[#allocation2] sm:$0x80]
        %v2085 = vld [vmem:[#allocation2 + $0x200] sm:$0x7f]
        %v2086 = vld [vmem:[%s9 + $0x3] sm:$0x1]
        %v2087 = vlaneseq
        %v2088 = vshrl.u32 %v2087, 7
        %v2089 = vsub.s32 0, %v2088
        %v2090 = vrot.slane %v2086, %v2089
        %v2091 = vmul.f32 %v2084, %v2090
        %v2092 = vmul.f32 %v1604, %v2090
        %v2093 = vmul.f32 %v1605, %v2090
        %v2094 = vmul.f32 %v1606, %v2090
        %v2095 = vmul.f32 %v1607, %v2090
        %v2096 = vmul.f32 %v1608, %v2090
        %v2097 = vmul.f32 %v1609, %v2090
        %v2098 = vmul.f32 %v1610, %v2090
        %v2099 = vmul.f32 %v1611, %v2090
        %v2100 = vmul.f32 %v1612, %v2090
        %v2101 = vmul.f32 %v1613, %v2090
        %v2102 = vmul.f32 %v1614, %v2090
        %v2103 = vmul.f32 %v1615, %v2090
        %v2104 = vmul.f32 %v1616, %v2090
        %v2105 = vmul.f32 %v1617, %v2090
        %v2106 = vmul.f32 %v1618, %v2090
        %v2107 = vmul.f32 %v1619, %v2090
        %v2108 = vmul.f32 %v1620, %v2090
        %v2109 = vmul.f32 %v1621, %v2090
        %v2110 = vmul.f32 %v1622, %v2090
        %v2111 = vmul.f32 %v1623, %v2090
        %v2112 = vmul.f32 %v1624, %v2090
        %v2113 = vmul.f32 %v1625, %v2090
        %v2114 = vmul.f32 %v1626, %v2090
        %v2115 = vmul.f32 %v1627, %v2090
        %v2116 = vmul.f32 %v1628, %v2090
        %v2117 = vmul.f32 %v1629, %v2090
        %v2118 = vmul.f32 %v1630, %v2090
        %v2119 = vmul.f32 %v1631, %v2090
        %v2120 = vmul.f32 %v1632, %v2090
        %v2121 = vmul.f32 %v1633, %v2090
        %v2122 = vmul.f32 %v1634, %v2090
        %v2123 = vmul.f32 %v2085, %v2090
        %vm2157 = vcmask 1044480
        %v2158 = vrot.slane %v2091, 3
        %v2159 = vrot.slane %v2092, 3
        %v2160 = vsel %vm2157, %v2158, %v2159
        %v2161 = vrot.slane %v2093, 3
        %v2162 = vsel %vm2157, %v2159, %v2161
        %v2163 = vrot.slane %v2094, 3
        %v2164 = vsel %vm2157, %v2161, %v2163
        %v2165 = vrot.slane %v2095, 3
        %v2166 = vsel %vm2157, %v2163, %v2165
        %v2167 = vrot.slane %v2096, 3
        %v2168 = vsel %vm2157, %v2165, %v2167
        %v2169 = vrot.slane %v2097, 3
        %v2170 = vsel %vm2157, %v2167, %v2169
        %v2171 = vrot.slane %v2098, 3
        %v2172 = vsel %vm2157, %v2169, %v2171
        %v2173 = vrot.slane %v2099, 3
        %v2174 = vsel %vm2157, %v2171, %v2173
        %v2175 = vrot.slane %v2100, 3
        %v2176 = vsel %vm2157, %v2173, %v2175
        %v2177 = vrot.slane %v2101, 3
        %v2178 = vsel %vm2157, %v2175, %v2177
        %v2179 = vrot.slane %v2102, 3
        %v2180 = vsel %vm2157, %v2177, %v2179
        %v2181 = vrot.slane %v2103, 3
        %v2182 = vsel %vm2157, %v2179, %v2181
        %v2183 = vrot.slane %v2104, 3
        %v2184 = vsel %vm2157, %v2181, %v2183
        %v2185 = vrot.slane %v2105, 3
        %v2186 = vsel %vm2157, %v2183, %v2185
        %v2187 = vrot.slane %v2106, 3
        %v2188 = vsel %vm2157, %v2185, %v2187
        %v2189 = vrot.slane %v2107, 3
        %v2190 = vsel %vm2157, %v2187, %v2189
        %v2191 = vrot.slane %v2108, 3
        %v2192 = vsel %vm2157, %v2189, %v2191
        %v2193 = vrot.slane %v2109, 3
        %v2194 = vsel %vm2157, %v2191, %v2193
        %v2195 = vrot.slane %v2110, 3
        %v2196 = vsel %vm2157, %v2193, %v2195
        %v2197 = vrot.slane %v2111, 3
        %v2198 = vsel %vm2157, %v2195, %v2197
        %v2199 = vrot.slane %v2112, 3
        %v2200 = vsel %vm2157, %v2197, %v2199
        %v2201 = vrot.slane %v2113, 3
        %v2202 = vsel %vm2157, %v2199, %v2201
        %v2203 = vrot.slane %v2114, 3
        %v2204 = vsel %vm2157, %v2201, %v2203
        %v2205 = vrot.slane %v2115, 3
        %v2206 = vsel %vm2157, %v2203, %v2205
        %v2207 = vrot.slane %v2116, 3
        %v2208 = vsel %vm2157, %v2205, %v2207
        %v2209 = vrot.slane %v2117, 3
        %v2210 = vsel %vm2157, %v2207, %v2209
        %v2211 = vrot.slane %v2118, 3
        %v2212 = vsel %vm2157, %v2209, %v2211
        %v2213 = vrot.slane %v2119, 3
        %v2214 = vsel %vm2157, %v2211, %v2213
        %v2215 = vrot.slane %v2120, 3
        %v2216 = vsel %vm2157, %v2213, %v2215
        %v2217 = vrot.slane %v2121, 3
        %v2218 = vsel %vm2157, %v2215, %v2217
        %v2219 = vrot.slane %v2122, 3
        %v2220 = vsel %vm2157, %v2217, %v2219
        %v2221 = vrot.slane %v2123, 3
        %v2222 = vsel %vm2157, %v2219, %v2221
        %v2256 = vadd.f32 %v2051, %v2160
        %v2257 = vadd.f32 %v2052, %v2162
        %v2258 = vadd.f32 %v2053, %v2164
        %v2259 = vadd.f32 %v2054, %v2166
        %v2260 = vadd.f32 %v2055, %v2168
        %v2261 = vadd.f32 %v2056, %v2170
        %v2262 = vadd.f32 %v2057, %v2172
        %v2263 = vadd.f32 %v2058, %v2174
        %v2264 = vadd.f32 %v2059, %v2176
        %v2265 = vadd.f32 %v2060, %v2178
        %v2266 = vadd.f32 %v2061, %v2180
        %v2267 = vadd.f32 %v2062, %v2182
        %v2268 = vadd.f32 %v2063, %v2184
        %v2269 = vadd.f32 %v2064, %v2186
        %v2270 = vadd.f32 %v2065, %v2188
        %v2271 = vadd.f32 %v2066, %v2190
        %v2272 = vadd.f32 %v2067, %v2192
        %v2273 = vadd.f32 %v2068, %v2194
        %v2274 = vadd.f32 %v2069, %v2196
        %v2275 = vadd.f32 %v2070, %v2198
        %v2276 = vadd.f32 %v2071, %v2200
        %v2277 = vadd.f32 %v2072, %v2202
        %v2278 = vadd.f32 %v2073, %v2204
        %v2279 = vadd.f32 %v2074, %v2206
        %v2280 = vadd.f32 %v2075, %v2208
        %v2281 = vadd.f32 %v2076, %v2210
        %v2282 = vadd.f32 %v2077, %v2212
        %v2283 = vadd.f32 %v2078, %v2214
        %v2284 = vadd.f32 %v2079, %v2216
        %v2285 = vadd.f32 %v2080, %v2218
        %v2286 = vadd.f32 %v2081, %v2220
        %v2287 = vadd.f32 %v2082, %v2222
        %v2288 = vadd.f32 %v2083, %v2221
        %v2289 = vld [vmem:[#allocation2 + $0x200] sm:$0xff]
        %v2290 = vld [vmem:[%s9 + $0x4] sm:$0x1]
        %v2291 = vlaneseq
        %v2292 = vshrl.u32 %v2291, 7
        %v2293 = vsub.s32 0, %v2292
        %v2294 = vrot.slane %v2290, %v2293
        %v2295 = vmul.f32 %v1604, %v2294
        %v2296 = vmul.f32 %v1605, %v2294
        %v2297 = vmul.f32 %v1606, %v2294
        %v2298 = vmul.f32 %v1607, %v2294
        %v2299 = vmul.f32 %v1608, %v2294
        %v2300 = vmul.f32 %v1609, %v2294
        %v2301 = vmul.f32 %v1610, %v2294
        %v2302 = vmul.f32 %v1611, %v2294
        %v2303 = vmul.f32 %v1612, %v2294
        %v2304 = vmul.f32 %v1613, %v2294
        %v2305 = vmul.f32 %v1614, %v2294
        %v2306 = vmul.f32 %v1615, %v2294
        %v2307 = vmul.f32 %v1616, %v2294
        %v2308 = vmul.f32 %v1617, %v2294
        %v2309 = vmul.f32 %v1618, %v2294
        %v2310 = vmul.f32 %v1619, %v2294
        %v2311 = vmul.f32 %v1620, %v2294
        %v2312 = vmul.f32 %v1621, %v2294
        %v2313 = vmul.f32 %v1622, %v2294
        %v2314 = vmul.f32 %v1623, %v2294
        %v2315 = vmul.f32 %v1624, %v2294
        %v2316 = vmul.f32 %v1625, %v2294
        %v2317 = vmul.f32 %v1626, %v2294
        %v2318 = vmul.f32 %v1627, %v2294
        %v2319 = vmul.f32 %v1628, %v2294
        %v2320 = vmul.f32 %v1629, %v2294
        %v2321 = vmul.f32 %v1630, %v2294
        %v2322 = vmul.f32 %v1631, %v2294
        %v2323 = vmul.f32 %v1632, %v2294
        %v2324 = vmul.f32 %v1633, %v2294
        %v2325 = vmul.f32 %v1634, %v2294
        %v2326 = vmul.f32 %v2289, %v2294
        %vm2359 = vcmask 1043456
        %v2360 = vrot.slane %v2295, 4
        %v2361 = vrot.slane %v2296, 4
        %v2362 = vsel %vm2359, %v2360, %v2361
        %v2363 = vrot.slane %v2297, 4
        %v2364 = vsel %vm2359, %v2361, %v2363
        %v2365 = vrot.slane %v2298, 4
        %v2366 = vsel %vm2359, %v2363, %v2365
        %v2367 = vrot.slane %v2299, 4
        %v2368 = vsel %vm2359, %v2365, %v2367
        %v2369 = vrot.slane %v2300, 4
        %v2370 = vsel %vm2359, %v2367, %v2369
        %v2371 = vrot.slane %v2301, 4
        %v2372 = vsel %vm2359, %v2369, %v2371
        %v2373 = vrot.slane %v2302, 4
        %v2374 = vsel %vm2359, %v2371, %v2373
        %v2375 = vrot.slane %v2303, 4
        %v2376 = vsel %vm2359, %v2373, %v2375
        %v2377 = vrot.slane %v2304, 4
        %v2378 = vsel %vm2359, %v2375, %v2377
        %v2379 = vrot.slane %v2305, 4
        %v2380 = vsel %vm2359, %v2377, %v2379
        %v2381 = vrot.slane %v2306, 4
        %v2382 = vsel %vm2359, %v2379, %v2381
        %v2383 = vrot.slane %v2307, 4
        %v2384 = vsel %vm2359, %v2381, %v2383
        %v2385 = vrot.slane %v2308, 4
        %v2386 = vsel %vm2359, %v2383, %v2385
        %v2387 = vrot.slane %v2309, 4
        %v2388 = vsel %vm2359, %v2385, %v2387
        %v2389 = vrot.slane %v2310, 4
        %v2390 = vsel %vm2359, %v2387, %v2389
        %v2391 = vrot.slane %v2311, 4
        %v2392 = vsel %vm2359, %v2389, %v2391
        %v2393 = vrot.slane %v2312, 4
        %v2394 = vsel %vm2359, %v2391, %v2393
        %v2395 = vrot.slane %v2313, 4
        %v2396 = vsel %vm2359, %v2393, %v2395
        %v2397 = vrot.slane %v2314, 4
        %v2398 = vsel %vm2359, %v2395, %v2397
        %v2399 = vrot.slane %v2315, 4
        %v2400 = vsel %vm2359, %v2397, %v2399
        %v2401 = vrot.slane %v2316, 4
        %v2402 = vsel %vm2359, %v2399, %v2401
        %v2403 = vrot.slane %v2317, 4
        %v2404 = vsel %vm2359, %v2401, %v2403
        %v2405 = vrot.slane %v2318, 4
        %v2406 = vsel %vm2359, %v2403, %v2405
        %v2407 = vrot.slane %v2319, 4
        %v2408 = vsel %vm2359, %v2405, %v2407
        %v2409 = vrot.slane %v2320, 4
        %v2410 = vsel %vm2359, %v2407, %v2409
        %v2411 = vrot.slane %v2321, 4
        %v2412 = vsel %vm2359, %v2409, %v2411
        %v2413 = vrot.slane %v2322, 4
        %v2414 = vsel %vm2359, %v2411, %v2413
        %v2415 = vrot.slane %v2323, 4
        %v2416 = vsel %vm2359, %v2413, %v2415
        %v2417 = vrot.slane %v2324, 4
        %v2418 = vsel %vm2359, %v2415, %v2417
        %v2419 = vrot.slane %v2325, 4
        %v2420 = vsel %vm2359, %v2417, %v2419
        %v2421 = vrot.slane %v2326, 4
        %v2422 = vsel %vm2359, %v2419, %v2421
        %v2456 = vadd.f32 %v2256, %v2360
        %v2457 = vadd.f32 %v2257, %v2362
        %v2458 = vadd.f32 %v2258, %v2364
        %v2459 = vadd.f32 %v2259, %v2366
        %v2460 = vadd.f32 %v2260, %v2368
        %v2461 = vadd.f32 %v2261, %v2370
        %v2462 = vadd.f32 %v2262, %v2372
        %v2463 = vadd.f32 %v2263, %v2374
        %v2464 = vadd.f32 %v2264, %v2376
        %v2465 = vadd.f32 %v2265, %v2378
        %v2466 = vadd.f32 %v2266, %v2380
        %v2467 = vadd.f32 %v2267, %v2382
        %v2468 = vadd.f32 %v2268, %v2384
        %v2469 = vadd.f32 %v2269, %v2386
        %v2470 = vadd.f32 %v2270, %v2388
        %v2471 = vadd.f32 %v2271, %v2390
        %v2472 = vadd.f32 %v2272, %v2392
        %v2473 = vadd.f32 %v2273, %v2394
        %v2474 = vadd.f32 %v2274, %v2396
        %v2475 = vadd.f32 %v2275, %v2398
        %v2476 = vadd.f32 %v2276, %v2400
        %v2477 = vadd.f32 %v2277, %v2402
        %v2478 = vadd.f32 %v2278, %v2404
        %v2479 = vadd.f32 %v2279, %v2406
        %v2480 = vadd.f32 %v2280, %v2408
        %v2481 = vadd.f32 %v2281, %v2410
        %v2482 = vadd.f32 %v2282, %v2412
        %v2483 = vadd.f32 %v2283, %v2414
        %v2484 = vadd.f32 %v2284, %v2416
        %v2485 = vadd.f32 %v2285, %v2418
        %v2486 = vadd.f32 %v2286, %v2420
        %v2487 = vadd.f32 %v2287, %v2422
        %v2488 = vadd.f32 %v2288, %v2421
        %v2489 = vld [vmem:[#allocation2 + $0x10] sm:$0xfe]
        %v2490 = vld [vmem:[#allocation2 + $0x210] sm:$0x1]
        %v2491 = vld [vmem:[%s9 + $0x5] sm:$0x1]
        %v2492 = vlaneseq
        %v2493 = vshrl.u32 %v2492, 7
        %v2494 = vsub.s32 0, %v2493
        %v2495 = vrot.slane %v2491, %v2494
        %v2496 = vmul.f32 %v2489, %v2495
        %v2497 = vmul.f32 %v1605, %v2495
        %v2498 = vmul.f32 %v1606, %v2495
        %v2499 = vmul.f32 %v1607, %v2495
        %v2500 = vmul.f32 %v1608, %v2495
        %v2501 = vmul.f32 %v1609, %v2495
        %v2502 = vmul.f32 %v1610, %v2495
        %v2503 = vmul.f32 %v1611, %v2495
        %v2504 = vmul.f32 %v1612, %v2495
        %v2505 = vmul.f32 %v1613, %v2495
        %v2506 = vmul.f32 %v1614, %v2495
        %v2507 = vmul.f32 %v1615, %v2495
        %v2508 = vmul.f32 %v1616, %v2495
        %v2509 = vmul.f32 %v1617, %v2495
        %v2510 = vmul.f32 %v1618, %v2495
        %v2511 = vmul.f32 %v1619, %v2495
        %v2512 = vmul.f32 %v1620, %v2495
        %v2513 = vmul.f32 %v1621, %v2495
        %v2514 = vmul.f32 %v1622, %v2495
        %v2515 = vmul.f32 %v1623, %v2495
        %v2516 = vmul.f32 %v1624, %v2495
        %v2517 = vmul.f32 %v1625, %v2495
        %v2518 = vmul.f32 %v1626, %v2495
        %v2519 = vmul.f32 %v1627, %v2495
        %v2520 = vmul.f32 %v1628, %v2495
        %v2521 = vmul.f32 %v1629, %v2495
        %v2522 = vmul.f32 %v1630, %v2495
        %v2523 = vmul.f32 %v1631, %v2495
        %v2524 = vmul.f32 %v1632, %v2495
        %v2525 = vmul.f32 %v1633, %v2495
        %v2526 = vmul.f32 %v1634, %v2495
        %v2527 = vmul.f32 %v2289, %v2495
        %v2528 = vmul.f32 %v2490, %v2495
        %vm2562 = vcmask 1042432
        %v2563 = vrot.slane %v2496, 5
        %v2564 = vrot.slane %v2497, 5
        %v2565 = vsel %vm2562, %v2563, %v2564
        %v2566 = vrot.slane %v2498, 5
        %v2567 = vsel %vm2562, %v2564, %v2566
        %v2568 = vrot.slane %v2499, 5
        %v2569 = vsel %vm2562, %v2566, %v2568
        %v2570 = vrot.slane %v2500, 5
        %v2571 = vsel %vm2562, %v2568, %v2570
        %v2572 = vrot.slane %v2501, 5
        %v2573 = vsel %vm2562, %v2570, %v2572
        %v2574 = vrot.slane %v2502, 5
        %v2575 = vsel %vm2562, %v2572, %v2574
        %v2576 = vrot.slane %v2503, 5
        %v2577 = vsel %vm2562, %v2574, %v2576
        %v2578 = vrot.slane %v2504, 5
        %v2579 = vsel %vm2562, %v2576, %v2578
        %v2580 = vrot.slane %v2505, 5
        %v2581 = vsel %vm2562, %v2578, %v2580
        %v2582 = vrot.slane %v2506, 5
        %v2583 = vsel %vm2562, %v2580, %v2582
        %v2584 = vrot.slane %v2507, 5
        %v2585 = vsel %vm2562, %v2582, %v2584
        %v2586 = vrot.slane %v2508, 5
        %v2587 = vsel %vm2562, %v2584, %v2586
        %v2588 = vrot.slane %v2509, 5
        %v2589 = vsel %vm2562, %v2586, %v2588
        %v2590 = vrot.slane %v2510, 5
        %v2591 = vsel %vm2562, %v2588, %v2590
        %v2592 = vrot.slane %v2511, 5
        %v2593 = vsel %vm2562, %v2590, %v2592
        %v2594 = vrot.slane %v2512, 5
        %v2595 = vsel %vm2562, %v2592, %v2594
        %v2596 = vrot.slane %v2513, 5
        %v2597 = vsel %vm2562, %v2594, %v2596
        %v2598 = vrot.slane %v2514, 5
        %v2599 = vsel %vm2562, %v2596, %v2598
        %v2600 = vrot.slane %v2515, 5
        %v2601 = vsel %vm2562, %v2598, %v2600
        %v2602 = vrot.slane %v2516, 5
        %v2603 = vsel %vm2562, %v2600, %v2602
        %v2604 = vrot.slane %v2517, 5
        %v2605 = vsel %vm2562, %v2602, %v2604
        %v2606 = vrot.slane %v2518, 5
        %v2607 = vsel %vm2562, %v2604, %v2606
        %v2608 = vrot.slane %v2519, 5
        %v2609 = vsel %vm2562, %v2606, %v2608
        %v2610 = vrot.slane %v2520, 5
        %v2611 = vsel %vm2562, %v2608, %v2610
        %v2612 = vrot.slane %v2521, 5
        %v2613 = vsel %vm2562, %v2610, %v2612
        %v2614 = vrot.slane %v2522, 5
        %v2615 = vsel %vm2562, %v2612, %v2614
        %v2616 = vrot.slane %v2523, 5
        %v2617 = vsel %vm2562, %v2614, %v2616
        %v2618 = vrot.slane %v2524, 5
        %v2619 = vsel %vm2562, %v2616, %v2618
        %v2620 = vrot.slane %v2525, 5
        %v2621 = vsel %vm2562, %v2618, %v2620
        %v2622 = vrot.slane %v2526, 5
        %v2623 = vsel %vm2562, %v2620, %v2622
        %v2624 = vrot.slane %v2527, 5
        %v2625 = vsel %vm2562, %v2622, %v2624
        %v2626 = vrot.slane %v2528, 5
        %v2627 = vsel %vm2562, %v2624, %v2626
        %v2661 = vadd.f32 %v2456, %v2563
        %v2662 = vadd.f32 %v2457, %v2565
        %v2663 = vadd.f32 %v2458, %v2567
        %v2664 = vadd.f32 %v2459, %v2569
        %v2665 = vadd.f32 %v2460, %v2571
        %v2666 = vadd.f32 %v2461, %v2573
        %v2667 = vadd.f32 %v2462, %v2575
        %v2668 = vadd.f32 %v2463, %v2577
        %v2669 = vadd.f32 %v2464, %v2579
        %v2670 = vadd.f32 %v2465, %v2581
        %v2671 = vadd.f32 %v2466, %v2583
        %v2672 = vadd.f32 %v2467, %v2585
        %v2673 = vadd.f32 %v2468, %v2587
        %v2674 = vadd.f32 %v2469, %v2589
        %v2675 = vadd.f32 %v2470, %v2591
        %v2676 = vadd.f32 %v2471, %v2593
        %v2677 = vadd.f32 %v2472, %v2595
        %v2678 = vadd.f32 %v2473, %v2597
        %v2679 = vadd.f32 %v2474, %v2599
        %v2680 = vadd.f32 %v2475, %v2601
        %v2681 = vadd.f32 %v2476, %v2603
        %v2682 = vadd.f32 %v2477, %v2605
        %v2683 = vadd.f32 %v2478, %v2607
        %v2684 = vadd.f32 %v2479, %v2609
        %v2685 = vadd.f32 %v2480, %v2611
        %v2686 = vadd.f32 %v2481, %v2613
        %v2687 = vadd.f32 %v2482, %v2615
        %v2688 = vadd.f32 %v2483, %v2617
        %v2689 = vadd.f32 %v2484, %v2619
        %v2690 = vadd.f32 %v2485, %v2621
        %v2691 = vadd.f32 %v2486, %v2623
        %v2692 = vadd.f32 %v2487, %v2625
        %v2693 = vadd.f32 %v2488, %v2627
        %v2694 = vld [vmem:[#allocation2 + $0x10] sm:$0xfc]
        %v2695 = vld [vmem:[#allocation2 + $0x210] sm:$0x3]
        %v2696 = vld [vmem:[%s9 + $0x6] sm:$0x1]
        %v2697 = vlaneseq
        %v2698 = vshrl.u32 %v2697, 7
        %v2699 = vsub.s32 0, %v2698
        %v2700 = vrot.slane %v2696, %v2699
        %v2701 = vmul.f32 %v2694, %v2700
        %v2702 = vmul.f32 %v1605, %v2700
        %v2703 = vmul.f32 %v1606, %v2700
        %v2704 = vmul.f32 %v1607, %v2700
        %v2705 = vmul.f32 %v1608, %v2700
        %v2706 = vmul.f32 %v1609, %v2700
        %v2707 = vmul.f32 %v1610, %v2700
        %v2708 = vmul.f32 %v1611, %v2700
        %v2709 = vmul.f32 %v1612, %v2700
        %v2710 = vmul.f32 %v1613, %v2700
        %v2711 = vmul.f32 %v1614, %v2700
        %v2712 = vmul.f32 %v1615, %v2700
        %v2713 = vmul.f32 %v1616, %v2700
        %v2714 = vmul.f32 %v1617, %v2700
        %v2715 = vmul.f32 %v1618, %v2700
        %v2716 = vmul.f32 %v1619, %v2700
        %v2717 = vmul.f32 %v1620, %v2700
        %v2718 = vmul.f32 %v1621, %v2700
        %v2719 = vmul.f32 %v1622, %v2700
        %v2720 = vmul.f32 %v1623, %v2700
        %v2721 = vmul.f32 %v1624, %v2700
        %v2722 = vmul.f32 %v1625, %v2700
        %v2723 = vmul.f32 %v1626, %v2700
        %v2724 = vmul.f32 %v1627, %v2700
        %v2725 = vmul.f32 %v1628, %v2700
        %v2726 = vmul.f32 %v1629, %v2700
        %v2727 = vmul.f32 %v1630, %v2700
        %v2728 = vmul.f32 %v1631, %v2700
        %v2729 = vmul.f32 %v1632, %v2700
        %v2730 = vmul.f32 %v1633, %v2700
        %v2731 = vmul.f32 %v1634, %v2700
        %v2732 = vmul.f32 %v2289, %v2700
        %v2733 = vmul.f32 %v2695, %v2700
        %vm2767 = vcmask 1041408
        %v2768 = vrot.slane %v2701, 6
        %v2769 = vrot.slane %v2702, 6
        %v2770 = vsel %vm2767, %v2768, %v2769
        %v2771 = vrot.slane %v2703, 6
        %v2772 = vsel %vm2767, %v2769, %v2771
        %v2773 = vrot.slane %v2704, 6
        %v2774 = vsel %vm2767, %v2771, %v2773
        %v2775 = vrot.slane %v2705, 6
        %v2776 = vsel %vm2767, %v2773, %v2775
        %v2777 = vrot.slane %v2706, 6
        %v2778 = vsel %vm2767, %v2775, %v2777
        %v2779 = vrot.slane %v2707, 6
        %v2780 = vsel %vm2767, %v2777, %v2779
        %v2781 = vrot.slane %v2708, 6
        %v2782 = vsel %vm2767, %v2779, %v2781
        %v2783 = vrot.slane %v2709, 6
        %v2784 = vsel %vm2767, %v2781, %v2783
        %v2785 = vrot.slane %v2710, 6
        %v2786 = vsel %vm2767, %v2783, %v2785
        %v2787 = vrot.slane %v2711, 6
        %v2788 = vsel %vm2767, %v2785, %v2787
        %v2789 = vrot.slane %v2712, 6
        %v2790 = vsel %vm2767, %v2787, %v2789
        %v2791 = vrot.slane %v2713, 6
        %v2792 = vsel %vm2767, %v2789, %v2791
        %v2793 = vrot.slane %v2714, 6
        %v2794 = vsel %vm2767, %v2791, %v2793
        %v2795 = vrot.slane %v2715, 6
        %v2796 = vsel %vm2767, %v2793, %v2795
        %v2797 = vrot.slane %v2716, 6
        %v2798 = vsel %vm2767, %v2795, %v2797
        %v2799 = vrot.slane %v2717, 6
        %v2800 = vsel %vm2767, %v2797, %v2799
        %v2801 = vrot.slane %v2718, 6
        %v2802 = vsel %vm2767, %v2799, %v2801
        %v2803 = vrot.slane %v2719, 6
        %v2804 = vsel %vm2767, %v2801, %v2803
        %v2805 = vrot.slane %v2720, 6
        %v2806 = vsel %vm2767, %v2803, %v2805
        %v2807 = vrot.slane %v2721, 6
        %v2808 = vsel %vm2767, %v2805, %v2807
        %v2809 = vrot.slane %v2722, 6
        %v2810 = vsel %vm2767, %v2807, %v2809
        %v2811 = vrot.slane %v2723, 6
        %v2812 = vsel %vm2767, %v2809, %v2811
        %v2813 = vrot.slane %v2724, 6
        %v2814 = vsel %vm2767, %v2811, %v2813
        %v2815 = vrot.slane %v2725, 6
        %v2816 = vsel %vm2767, %v2813, %v2815
        %v2817 = vrot.slane %v2726, 6
        %v2818 = vsel %vm2767, %v2815, %v2817
        %v2819 = vrot.slane %v2727, 6
        %v2820 = vsel %vm2767, %v2817, %v2819
        %v2821 = vrot.slane %v2728, 6
        %v2822 = vsel %vm2767, %v2819, %v2821
        %v2823 = vrot.slane %v2729, 6
        %v2824 = vsel %vm2767, %v2821, %v2823
        %v2825 = vrot.slane %v2730, 6
        %v2826 = vsel %vm2767, %v2823, %v2825
        %v2827 = vrot.slane %v2731, 6
        %v2828 = vsel %vm2767, %v2825, %v2827
        %v2829 = vrot.slane %v2732, 6
        %v2830 = vsel %vm2767, %v2827, %v2829
        %v2831 = vrot.slane %v2733, 6
        %v2832 = vsel %vm2767, %v2829, %v2831
        %v2866 = vadd.f32 %v2661, %v2768
        %v2867 = vadd.f32 %v2662, %v2770
        %v2868 = vadd.f32 %v2663, %v2772
        %v2869 = vadd.f32 %v2664, %v2774
        %v2870 = vadd.f32 %v2665, %v2776
        %v2871 = vadd.f32 %v2666, %v2778
        %v2872 = vadd.f32 %v2667, %v2780
        %v2873 = vadd.f32 %v2668, %v2782
        %v2874 = vadd.f32 %v2669, %v2784
        %v2875 = vadd.f32 %v2670, %v2786
        %v2876 = vadd.f32 %v2671, %v2788
        %v2877 = vadd.f32 %v2672, %v2790
        %v2878 = vadd.f32 %v2673, %v2792
        %v2879 = vadd.f32 %v2674, %v2794
        %v2880 = vadd.f32 %v2675, %v2796
        %v2881 = vadd.f32 %v2676, %v2798
        %v2882 = vadd.f32 %v2677, %v2800
        %v2883 = vadd.f32 %v2678, %v2802
        %v2884 = vadd.f32 %v2679, %v2804
        %v2885 = vadd.f32 %v2680, %v2806
        %v2886 = vadd.f32 %v2681, %v2808
        %v2887 = vadd.f32 %v2682, %v2810
        %v2888 = vadd.f32 %v2683, %v2812
        %v2889 = vadd.f32 %v2684, %v2814
        %v2890 = vadd.f32 %v2685, %v2816
        %v2891 = vadd.f32 %v2686, %v2818
        %v2892 = vadd.f32 %v2687, %v2820
        %v2893 = vadd.f32 %v2688, %v2822
        %v2894 = vadd.f32 %v2689, %v2824
        %v2895 = vadd.f32 %v2690, %v2826
        %v2896 = vadd.f32 %v2691, %v2828
        %v2897 = vadd.f32 %v2692, %v2830
        %v2898 = vadd.f32 %v2693, %v2832
        %v2899 = vld [vmem:[#allocation2 + $0x10] sm:$0xf8]
        %v2900 = vld [vmem:[#allocation2 + $0x210] sm:$0x7]
        %v2901 = vld [vmem:[%s9 + $0x7] sm:$0x1]
        %v2902 = vlaneseq
        %v2903 = vshrl.u32 %v2902, 7
        %v2904 = vsub.s32 0, %v2903
        %v2905 = vrot.slane %v2901, %v2904
        %v2906 = vmul.f32 %v2899, %v2905
        %v2907 = vmul.f32 %v1605, %v2905
        %v2908 = vmul.f32 %v1606, %v2905
        %v2909 = vmul.f32 %v1607, %v2905
        %v2910 = vmul.f32 %v1608, %v2905
        %v2911 = vmul.f32 %v1609, %v2905
        %v2912 = vmul.f32 %v1610, %v2905
        %v2913 = vmul.f32 %v1611, %v2905
        %v2914 = vmul.f32 %v1612, %v2905
        %v2915 = vmul.f32 %v1613, %v2905
        %v2916 = vmul.f32 %v1614, %v2905
        %v2917 = vmul.f32 %v1615, %v2905
        %v2918 = vmul.f32 %v1616, %v2905
        %v2919 = vmul.f32 %v1617, %v2905
        %v2920 = vmul.f32 %v1618, %v2905
        %v2921 = vmul.f32 %v1619, %v2905
        %v2922 = vmul.f32 %v1620, %v2905
        %v2923 = vmul.f32 %v1621, %v2905
        %v2924 = vmul.f32 %v1622, %v2905
        %v2925 = vmul.f32 %v1623, %v2905
        %v2926 = vmul.f32 %v1624, %v2905
        %v2927 = vmul.f32 %v1625, %v2905
        %v2928 = vmul.f32 %v1626, %v2905
        %v2929 = vmul.f32 %v1627, %v2905
        %v2930 = vmul.f32 %v1628, %v2905
        %v2931 = vmul.f32 %v1629, %v2905
        %v2932 = vmul.f32 %v1630, %v2905
        %v2933 = vmul.f32 %v1631, %v2905
        %v2934 = vmul.f32 %v1632, %v2905
        %v2935 = vmul.f32 %v1633, %v2905
        %v2936 = vmul.f32 %v1634, %v2905
        %v2937 = vmul.f32 %v2289, %v2905
        %v2938 = vmul.f32 %v2900, %v2905
        %vm2972 = vcmask 1040384
        %v2973 = vrot.slane %v2906, 7
        %v2974 = vrot.slane %v2907, 7
        %v2975 = vsel %vm2972, %v2973, %v2974
        %v2976 = vrot.slane %v2908, 7
        %v2977 = vsel %vm2972, %v2974, %v2976
        %v2978 = vrot.slane %v2909, 7
        %v2979 = vsel %vm2972, %v2976, %v2978
        %v2980 = vrot.slane %v2910, 7
        %v2981 = vsel %vm2972, %v2978, %v2980
        %v2982 = vrot.slane %v2911, 7
        %v2983 = vsel %vm2972, %v2980, %v2982
        %v2984 = vrot.slane %v2912, 7
        %v2985 = vsel %vm2972, %v2982, %v2984
        %v2986 = vrot.slane %v2913, 7
        %v2987 = vsel %vm2972, %v2984, %v2986
        %v2988 = vrot.slane %v2914, 7
        %v2989 = vsel %vm2972, %v2986, %v2988
        %v2990 = vrot.slane %v2915, 7
        %v2991 = vsel %vm2972, %v2988, %v2990
        %v2992 = vrot.slane %v2916, 7
        %v2993 = vsel %vm2972, %v2990, %v2992
        %v2994 = vrot.slane %v2917, 7
        %v2995 = vsel %vm2972, %v2992, %v2994
        %v2996 = vrot.slane %v2918, 7
        %v2997 = vsel %vm2972, %v2994, %v2996
        %v2998 = vrot.slane %v2919, 7
        %v2999 = vsel %vm2972, %v2996, %v2998
        %v3000 = vrot.slane %v2920, 7
        %v3001 = vsel %vm2972, %v2998, %v3000
        %v3002 = vrot.slane %v2921, 7
        %v3003 = vsel %vm2972, %v3000, %v3002
        %v3004 = vrot.slane %v2922, 7
        %v3005 = vsel %vm2972, %v3002, %v3004
        %v3006 = vrot.slane %v2923, 7
        %v3007 = vsel %vm2972, %v3004, %v3006
        %v3008 = vrot.slane %v2924, 7
        %v3009 = vsel %vm2972, %v3006, %v3008
        %v3010 = vrot.slane %v2925, 7
        %v3011 = vsel %vm2972, %v3008, %v3010
        %v3012 = vrot.slane %v2926, 7
        %v3013 = vsel %vm2972, %v3010, %v3012
        %v3014 = vrot.slane %v2927, 7
        %v3015 = vsel %vm2972, %v3012, %v3014
        %v3016 = vrot.slane %v2928, 7
        %v3017 = vsel %vm2972, %v3014, %v3016
        %v3018 = vrot.slane %v2929, 7
        %v3019 = vsel %vm2972, %v3016, %v3018
        %v3020 = vrot.slane %v2930, 7
        %v3021 = vsel %vm2972, %v3018, %v3020
        %v3022 = vrot.slane %v2931, 7
        %v3023 = vsel %vm2972, %v3020, %v3022
        %v3024 = vrot.slane %v2932, 7
        %v3025 = vsel %vm2972, %v3022, %v3024
        %v3026 = vrot.slane %v2933, 7
        %v3027 = vsel %vm2972, %v3024, %v3026
        %v3028 = vrot.slane %v2934, 7
        %v3029 = vsel %vm2972, %v3026, %v3028
        %v3030 = vrot.slane %v2935, 7
        %v3031 = vsel %vm2972, %v3028, %v3030
        %v3032 = vrot.slane %v2936, 7
        %v3033 = vsel %vm2972, %v3030, %v3032
        %v3034 = vrot.slane %v2937, 7
        %v3035 = vsel %vm2972, %v3032, %v3034
        %v3036 = vrot.slane %v2938, 7
        %v3037 = vsel %vm2972, %v3034, %v3036
        %v3071 = vadd.f32 %v2866, %v2973
        %v3072 = vadd.f32 %v2867, %v2975
        %v3073 = vadd.f32 %v2868, %v2977
        %v3074 = vadd.f32 %v2869, %v2979
        %v3075 = vadd.f32 %v2870, %v2981
        %v3076 = vadd.f32 %v2871, %v2983
        %v3077 = vadd.f32 %v2872, %v2985
        %v3078 = vadd.f32 %v2873, %v2987
        %v3079 = vadd.f32 %v2874, %v2989
        %v3080 = vadd.f32 %v2875, %v2991
        %v3081 = vadd.f32 %v2876, %v2993
        %v3082 = vadd.f32 %v2877, %v2995
        %v3083 = vadd.f32 %v2878, %v2997
        %v3084 = vadd.f32 %v2879, %v2999
        %v3085 = vadd.f32 %v2880, %v3001
        %v3086 = vadd.f32 %v2881, %v3003
        %v3087 = vadd.f32 %v2882, %v3005
        %v3088 = vadd.f32 %v2883, %v3007
        %v3089 = vadd.f32 %v2884, %v3009
        %v3090 = vadd.f32 %v2885, %v3011
        %v3091 = vadd.f32 %v2886, %v3013
        %v3092 = vadd.f32 %v2887, %v3015
        %v3093 = vadd.f32 %v2888, %v3017
        %v3094 = vadd.f32 %v2889, %v3019
        %v3095 = vadd.f32 %v2890, %v3021
        %v3096 = vadd.f32 %v2891, %v3023
        %v3097 = vadd.f32 %v2892, %v3025
        %v3098 = vadd.f32 %v2893, %v3027
        %v3099 = vadd.f32 %v2894, %v3029
        %v3100 = vadd.f32 %v2895, %v3031
        %v3101 = vadd.f32 %v2896, %v3033
        %v3102 = vadd.f32 %v2897, %v3035
        %v3103 = vadd.f32 %v2898, %v3037
        %v3104 = vld [vmem:[#allocation2 + $0x10] sm:$0xf0]
        %v3105 = vld [vmem:[#allocation2 + $0x210] sm:$0xf]
        %v3106 = vld [vmem:[%s9 + $0x8] sm:$0x1]
        %v3107 = vlaneseq
        %v3108 = vshrl.u32 %v3107, 7
        %v3109 = vsub.s32 0, %v3108
        %v3110 = vrot.slane %v3106, %v3109
        %v3111 = vmul.f32 %v3104, %v3110
        %v3112 = vmul.f32 %v1605, %v3110
        %v3113 = vmul.f32 %v1606, %v3110
        %v3114 = vmul.f32 %v1607, %v3110
        %v3115 = vmul.f32 %v1608, %v3110
        %v3116 = vmul.f32 %v1609, %v3110
        %v3117 = vmul.f32 %v1610, %v3110
        %v3118 = vmul.f32 %v1611, %v3110
        %v3119 = vmul.f32 %v1612, %v3110
        %v3120 = vmul.f32 %v1613, %v3110
        %v3121 = vmul.f32 %v1614, %v3110
        %v3122 = vmul.f32 %v1615, %v3110
        %v3123 = vmul.f32 %v1616, %v3110
        %v3124 = vmul.f32 %v1617, %v3110
        %v3125 = vmul.f32 %v1618, %v3110
        %v3126 = vmul.f32 %v1619, %v3110
        %v3127 = vmul.f32 %v1620, %v3110
        %v3128 = vmul.f32 %v1621, %v3110
        %v3129 = vmul.f32 %v1622, %v3110
        %v3130 = vmul.f32 %v1623, %v3110
        %v3131 = vmul.f32 %v1624, %v3110
        %v3132 = vmul.f32 %v1625, %v3110
        %v3133 = vmul.f32 %v1626, %v3110
        %v3134 = vmul.f32 %v1627, %v3110
        %v3135 = vmul.f32 %v1628, %v3110
        %v3136 = vmul.f32 %v1629, %v3110
        %v3137 = vmul.f32 %v1630, %v3110
        %v3138 = vmul.f32 %v1631, %v3110
        %v3139 = vmul.f32 %v1632, %v3110
        %v3140 = vmul.f32 %v1633, %v3110
        %v3141 = vmul.f32 %v1634, %v3110
        %v3142 = vmul.f32 %v2289, %v3110
        %v3143 = vmul.f32 %v3105, %v3110
        %v3144 = vadd.f32 %v3071, %v3111
        %v3145 = vadd.f32 %v3072, %v3112
        %v3146 = vadd.f32 %v3073, %v3113
        %v3147 = vadd.f32 %v3074, %v3114
        %v3148 = vadd.f32 %v3075, %v3115
        %v3149 = vadd.f32 %v3076, %v3116
        %v3150 = vadd.f32 %v3077, %v3117
        %v3151 = vadd.f32 %v3078, %v3118
        %v3152 = vadd.f32 %v3079, %v3119
        %v3153 = vadd.f32 %v3080, %v3120
        %v3154 = vadd.f32 %v3081, %v3121
        %v3155 = vadd.f32 %v3082, %v3122
        %v3156 = vadd.f32 %v3083, %v3123
        %v3157 = vadd.f32 %v3084, %v3124
        %v3158 = vadd.f32 %v3085, %v3125
        %v3159 = vadd.f32 %v3086, %v3126
        %v3160 = vadd.f32 %v3087, %v3127
        %v3161 = vadd.f32 %v3088, %v3128
        %v3162 = vadd.f32 %v3089, %v3129
        %v3163 = vadd.f32 %v3090, %v3130
        %v3164 = vadd.f32 %v3091, %v3131
        %v3165 = vadd.f32 %v3092, %v3132
        %v3166 = vadd.f32 %v3093, %v3133
        %v3167 = vadd.f32 %v3094, %v3134
        %v3168 = vadd.f32 %v3095, %v3135
        %v3169 = vadd.f32 %v3096, %v3136
        %v3170 = vadd.f32 %v3097, %v3137
        %v3171 = vadd.f32 %v3098, %v3138
        %v3172 = vadd.f32 %v3099, %v3139
        %v3173 = vadd.f32 %v3100, %v3140
        %v3174 = vadd.f32 %v3101, %v3141
        %v3175 = vadd.f32 %v3102, %v3142
        %v3176 = vadd.f32 %v3103, %v3143
        %v3177 = vld [vmem:[#allocation2 + $0x10] sm:$0xe0]
        %v3178 = vld [vmem:[#allocation2 + $0x210] sm:$0x1f]
        %v3179 = vld [vmem:[%s9 + $0x9] sm:$0x1]
        %v3180 = vlaneseq
        %v3181 = vshrl.u32 %v3180, 7
        %v3182 = vsub.s32 0, %v3181
        %v3183 = vrot.slane %v3179, %v3182
        %v3184 = vmul.f32 %v3177, %v3183
        %v3185 = vmul.f32 %v1605, %v3183
        %v3186 = vmul.f32 %v1606, %v3183
        %v3187 = vmul.f32 %v1607, %v3183
        %v3188 = vmul.f32 %v1608, %v3183
        %v3189 = vmul.f32 %v1609, %v3183
        %v3190 = vmul.f32 %v1610, %v3183
        %v3191 = vmul.f32 %v1611, %v3183
        %v3192 = vmul.f32 %v1612, %v3183
        %v3193 = vmul.f32 %v1613, %v3183
        %v3194 = vmul.f32 %v1614, %v3183
        %v3195 = vmul.f32 %v1615, %v3183
        %v3196 = vmul.f32 %v1616, %v3183
        %v3197 = vmul.f32 %v1617, %v3183
        %v3198 = vmul.f32 %v1618, %v3183
        %v3199 = vmul.f32 %v1619, %v3183
        %v3200 = vmul.f32 %v1620, %v3183
        %v3201 = vmul.f32 %v1621, %v3183
        %v3202 = vmul.f32 %v1622, %v3183
        %v3203 = vmul.f32 %v1623, %v3183
        %v3204 = vmul.f32 %v1624, %v3183
        %v3205 = vmul.f32 %v1625, %v3183
        %v3206 = vmul.f32 %v1626, %v3183
        %v3207 = vmul.f32 %v1627, %v3183
        %v3208 = vmul.f32 %v1628, %v3183
        %v3209 = vmul.f32 %v1629, %v3183
        %v3210 = vmul.f32 %v1630, %v3183
        %v3211 = vmul.f32 %v1631, %v3183
        %v3212 = vmul.f32 %v1632, %v3183
        %v3213 = vmul.f32 %v1633, %v3183
        %v3214 = vmul.f32 %v1634, %v3183
        %v3215 = vmul.f32 %v2289, %v3183
        %v3216 = vmul.f32 %v3178, %v3183
        %v3250 = vrot.slane %v3184, 1
        %v3251 = vrot.slane %v3185, 1
        %v3252 = vsel %vm1747, %v3250, %v3251
        %v3253 = vrot.slane %v3186, 1
        %v3254 = vsel %vm1747, %v3251, %v3253
        %v3255 = vrot.slane %v3187, 1
        %v3256 = vsel %vm1747, %v3253, %v3255
        %v3257 = vrot.slane %v3188, 1
        %v3258 = vsel %vm1747, %v3255, %v3257
        %v3259 = vrot.slane %v3189, 1
        %v3260 = vsel %vm1747, %v3257, %v3259
        %v3261 = vrot.slane %v3190, 1
        %v3262 = vsel %vm1747, %v3259, %v3261
        %v3263 = vrot.slane %v3191, 1
        %v3264 = vsel %vm1747, %v3261, %v3263
        %v3265 = vrot.slane %v3192, 1
        %v3266 = vsel %vm1747, %v3263, %v3265
        %v3267 = vrot.slane %v3193, 1
        %v3268 = vsel %vm1747, %v3265, %v3267
        %v3269 = vrot.slane %v3194, 1
        %v3270 = vsel %vm1747, %v3267, %v3269
        %v3271 = vrot.slane %v3195, 1
        %v3272 = vsel %vm1747, %v3269, %v3271
        %v3273 = vrot.slane %v3196, 1
        %v3274 = vsel %vm1747, %v3271, %v3273
        %v3275 = vrot.slane %v3197, 1
        %v3276 = vsel %vm1747, %v3273, %v3275
        %v3277 = vrot.slane %v3198, 1
        %v3278 = vsel %vm1747, %v3275, %v3277
        %v3279 = vrot.slane %v3199, 1
        %v3280 = vsel %vm1747, %v3277, %v3279
        %v3281 = vrot.slane %v3200, 1
        %v3282 = vsel %vm1747, %v3279, %v3281
        %v3283 = vrot.slane %v3201, 1
        %v3284 = vsel %vm1747, %v3281, %v3283
        %v3285 = vrot.slane %v3202, 1
        %v3286 = vsel %vm1747, %v3283, %v3285
        %v3287 = vrot.slane %v3203, 1
        %v3288 = vsel %vm1747, %v3285, %v3287
        %v3289 = vrot.slane %v3204, 1
        %v3290 = vsel %vm1747, %v3287, %v3289
        %v3291 = vrot.slane %v3205, 1
        %v3292 = vsel %vm1747, %v3289, %v3291
        %v3293 = vrot.slane %v3206, 1
        %v3294 = vsel %vm1747, %v3291, %v3293
        %v3295 = vrot.slane %v3207, 1
        %v3296 = vsel %vm1747, %v3293, %v3295
        %v3297 = vrot.slane %v3208, 1
        %v3298 = vsel %vm1747, %v3295, %v3297
        %v3299 = vrot.slane %v3209, 1
        %v3300 = vsel %vm1747, %v3297, %v3299
        %v3301 = vrot.slane %v3210, 1
        %v3302 = vsel %vm1747, %v3299, %v3301
        %v3303 = vrot.slane %v3211, 1
        %v3304 = vsel %vm1747, %v3301, %v3303
        %v3305 = vrot.slane %v3212, 1
        %v3306 = vsel %vm1747, %v3303, %v3305
        %v3307 = vrot.slane %v3213, 1
        %v3308 = vsel %vm1747, %v3305, %v3307
        %v3309 = vrot.slane %v3214, 1
        %v3310 = vsel %vm1747, %v3307, %v3309
        %v3311 = vrot.slane %v3215, 1
        %v3312 = vsel %vm1747, %v3309, %v3311
        %v3313 = vrot.slane %v3216, 1
        %v3314 = vsel %vm1747, %v3311, %v3313
        %v3348 = vadd.f32 %v3144, %v3252
        %v3349 = vadd.f32 %v3145, %v3254
        %v3350 = vadd.f32 %v3146, %v3256
        %v3351 = vadd.f32 %v3147, %v3258
        %v3352 = vadd.f32 %v3148, %v3260
        %v3353 = vadd.f32 %v3149, %v3262
        %v3354 = vadd.f32 %v3150, %v3264
        %v3355 = vadd.f32 %v3151, %v3266
        %v3356 = vadd.f32 %v3152, %v3268
        %v3357 = vadd.f32 %v3153, %v3270
        %v3358 = vadd.f32 %v3154, %v3272
        %v3359 = vadd.f32 %v3155, %v3274
        %v3360 = vadd.f32 %v3156, %v3276
        %v3361 = vadd.f32 %v3157, %v3278
        %v3362 = vadd.f32 %v3158, %v3280
        %v3363 = vadd.f32 %v3159, %v3282
        %v3364 = vadd.f32 %v3160, %v3284
        %v3365 = vadd.f32 %v3161, %v3286
        %v3366 = vadd.f32 %v3162, %v3288
        %v3367 = vadd.f32 %v3163, %v3290
        %v3368 = vadd.f32 %v3164, %v3292
        %v3369 = vadd.f32 %v3165, %v3294
        %v3370 = vadd.f32 %v3166, %v3296
        %v3371 = vadd.f32 %v3167, %v3298
        %v3372 = vadd.f32 %v3168, %v3300
        %v3373 = vadd.f32 %v3169, %v3302
        %v3374 = vadd.f32 %v3170, %v3304
        %v3375 = vadd.f32 %v3171, %v3306
        %v3376 = vadd.f32 %v3172, %v3308
        %v3377 = vadd.f32 %v3173, %v3310
        %v3378 = vadd.f32 %v3174, %v3312
        %v3379 = vadd.f32 %v3175, %v3314
        %v3380 = vadd.f32 %v3176, %v3313
        %v3381 = vld [vmem:[#allocation2 + $0x10] sm:$0xc0]
        %v3382 = vld [vmem:[#allocation2 + $0x210] sm:$0x3f]
        %v3383 = vld [vmem:[%s9 + $0xa] sm:$0x1]
        %v3384 = vlaneseq
        %v3385 = vshrl.u32 %v3384, 7
        %v3386 = vsub.s32 0, %v3385
        %v3387 = vrot.slane %v3383, %v3386
        %v3388 = vmul.f32 %v3381, %v3387
        %v3389 = vmul.f32 %v1605, %v3387
        %v3390 = vmul.f32 %v1606, %v3387
        %v3391 = vmul.f32 %v1607, %v3387
        %v3392 = vmul.f32 %v1608, %v3387
        %v3393 = vmul.f32 %v1609, %v3387
        %v3394 = vmul.f32 %v1610, %v3387
        %v3395 = vmul.f32 %v1611, %v3387
        %v3396 = vmul.f32 %v1612, %v3387
        %v3397 = vmul.f32 %v1613, %v3387
        %v3398 = vmul.f32 %v1614, %v3387
        %v3399 = vmul.f32 %v1615, %v3387
        %v3400 = vmul.f32 %v1616, %v3387
        %v3401 = vmul.f32 %v1617, %v3387
        %v3402 = vmul.f32 %v1618, %v3387
        %v3403 = vmul.f32 %v1619, %v3387
        %v3404 = vmul.f32 %v1620, %v3387
        %v3405 = vmul.f32 %v1621, %v3387
        %v3406 = vmul.f32 %v1622, %v3387
        %v3407 = vmul.f32 %v1623, %v3387
        %v3408 = vmul.f32 %v1624, %v3387
        %v3409 = vmul.f32 %v1625, %v3387
        %v3410 = vmul.f32 %v1626, %v3387
        %v3411 = vmul.f32 %v1627, %v3387
        %v3412 = vmul.f32 %v1628, %v3387
        %v3413 = vmul.f32 %v1629, %v3387
        %v3414 = vmul.f32 %v1630, %v3387
        %v3415 = vmul.f32 %v1631, %v3387
        %v3416 = vmul.f32 %v1632, %v3387
        %v3417 = vmul.f32 %v1633, %v3387
        %v3418 = vmul.f32 %v1634, %v3387
        %v3419 = vmul.f32 %v2289, %v3387
        %v3420 = vmul.f32 %v3382, %v3387
        %v3454 = vrot.slane %v3388, 2
        %v3455 = vrot.slane %v3389, 2
        %v3456 = vsel %vm1952, %v3454, %v3455
        %v3457 = vrot.slane %v3390, 2
        %v3458 = vsel %vm1952, %v3455, %v3457
        %v3459 = vrot.slane %v3391, 2
        %v3460 = vsel %vm1952, %v3457, %v3459
        %v3461 = vrot.slane %v3392, 2
        %v3462 = vsel %vm1952, %v3459, %v3461
        %v3463 = vrot.slane %v3393, 2
        %v3464 = vsel %vm1952, %v3461, %v3463
        %v3465 = vrot.slane %v3394, 2
        %v3466 = vsel %vm1952, %v3463, %v3465
        %v3467 = vrot.slane %v3395, 2
        %v3468 = vsel %vm1952, %v3465, %v3467
        %v3469 = vrot.slane %v3396, 2
        %v3470 = vsel %vm1952, %v3467, %v3469
        %v3471 = vrot.slane %v3397, 2
        %v3472 = vsel %vm1952, %v3469, %v3471
        %v3473 = vrot.slane %v3398, 2
        %v3474 = vsel %vm1952, %v3471, %v3473
        %v3475 = vrot.slane %v3399, 2
        %v3476 = vsel %vm1952, %v3473, %v3475
        %v3477 = vrot.slane %v3400, 2
        %v3478 = vsel %vm1952, %v3475, %v3477
        %v3479 = vrot.slane %v3401, 2
        %v3480 = vsel %vm1952, %v3477, %v3479
        %v3481 = vrot.slane %v3402, 2
        %v3482 = vsel %vm1952, %v3479, %v3481
        %v3483 = vrot.slane %v3403, 2
        %v3484 = vsel %vm1952, %v3481, %v3483
        %v3485 = vrot.slane %v3404, 2
        %v3486 = vsel %vm1952, %v3483, %v3485
        %v3487 = vrot.slane %v3405, 2
        %v3488 = vsel %vm1952, %v3485, %v3487
        %v3489 = vrot.slane %v3406, 2
        %v3490 = vsel %vm1952, %v3487, %v3489
        %v3491 = vrot.slane %v3407, 2
        %v3492 = vsel %vm1952, %v3489, %v3491
        %v3493 = vrot.slane %v3408, 2
        %v3494 = vsel %vm1952, %v3491, %v3493
        %v3495 = vrot.slane %v3409, 2
        %v3496 = vsel %vm1952, %v3493, %v3495
        %v3497 = vrot.slane %v3410, 2
        %v3498 = vsel %vm1952, %v3495, %v3497
        %v3499 = vrot.slane %v3411, 2
        %v3500 = vsel %vm1952, %v3497, %v3499
        %v3501 = vrot.slane %v3412, 2
        %v3502 = vsel %vm1952, %v3499, %v3501
        %v3503 = vrot.slane %v3413, 2
        %v3504 = vsel %vm1952, %v3501, %v3503
        %v3505 = vrot.slane %v3414, 2
        %v3506 = vsel %vm1952, %v3503, %v3505
        %v3507 = vrot.slane %v3415, 2
        %v3508 = vsel %vm1952, %v3505, %v3507
        %v3509 = vrot.slane %v3416, 2
        %v3510 = vsel %vm1952, %v3507, %v3509
        %v3511 = vrot.slane %v3417, 2
        %v3512 = vsel %vm1952, %v3509, %v3511
        %v3513 = vrot.slane %v3418, 2
        %v3514 = vsel %vm1952, %v3511, %v3513
        %v3515 = vrot.slane %v3419, 2
        %v3516 = vsel %vm1952, %v3513, %v3515
        %v3517 = vrot.slane %v3420, 2
        %v3518 = vsel %vm1952, %v3515, %v3517
        %v3552 = vadd.f32 %v3348, %v3456
        %v3553 = vadd.f32 %v3349, %v3458
        %v3554 = vadd.f32 %v3350, %v3460
        %v3555 = vadd.f32 %v3351, %v3462
        %v3556 = vadd.f32 %v3352, %v3464
        %v3557 = vadd.f32 %v3353, %v3466
        %v3558 = vadd.f32 %v3354, %v3468
        %v3559 = vadd.f32 %v3355, %v3470
        %v3560 = vadd.f32 %v3356, %v3472
        %v3561 = vadd.f32 %v3357, %v3474
        %v3562 = vadd.f32 %v3358, %v3476
        %v3563 = vadd.f32 %v3359, %v3478
        %v3564 = vadd.f32 %v3360, %v3480
        %v3565 = vadd.f32 %v3361, %v3482
        %v3566 = vadd.f32 %v3362, %v3484
        %v3567 = vadd.f32 %v3363, %v3486
        %v3568 = vadd.f32 %v3364, %v3488
        %v3569 = vadd.f32 %v3365, %v3490
        %v3570 = vadd.f32 %v3366, %v3492
        %v3571 = vadd.f32 %v3367, %v3494
        %v3572 = vadd.f32 %v3368, %v3496
        %v3573 = vadd.f32 %v3369, %v3498
        %v3574 = vadd.f32 %v3370, %v3500
        %v3575 = vadd.f32 %v3371, %v3502
        %v3576 = vadd.f32 %v3372, %v3504
        %v3577 = vadd.f32 %v3373, %v3506
        %v3578 = vadd.f32 %v3374, %v3508
        %v3579 = vadd.f32 %v3375, %v3510
        %v3580 = vadd.f32 %v3376, %v3512
        %v3581 = vadd.f32 %v3377, %v3514
        %v3582 = vadd.f32 %v3378, %v3516
        %v3583 = vadd.f32 %v3379, %v3518
        %v3584 = vadd.f32 %v3380, %v3517
        %v3585 = vld [vmem:[#allocation2 + $0x10] sm:$0x80]
        %v3586 = vld [vmem:[#allocation2 + $0x210] sm:$0x7f]
        %v3587 = vld [vmem:[%s9 + $0xb] sm:$0x1]
        %v3588 = vlaneseq
        %v3589 = vshrl.u32 %v3588, 7
        %v3590 = vsub.s32 0, %v3589
        %v3591 = vrot.slane %v3587, %v3590
        %v3592 = vmul.f32 %v3585, %v3591
        %v3593 = vmul.f32 %v1605, %v3591
        %v3594 = vmul.f32 %v1606, %v3591
        %v3595 = vmul.f32 %v1607, %v3591
        %v3596 = vmul.f32 %v1608, %v3591
        %v3597 = vmul.f32 %v1609, %v3591
        %v3598 = vmul.f32 %v1610, %v3591
        %v3599 = vmul.f32 %v1611, %v3591
        %v3600 = vmul.f32 %v1612, %v3591
        %v3601 = vmul.f32 %v1613, %v3591
        %v3602 = vmul.f32 %v1614, %v3591
        %v3603 = vmul.f32 %v1615, %v3591
        %v3604 = vmul.f32 %v1616, %v3591
        %v3605 = vmul.f32 %v1617, %v3591
        %v3606 = vmul.f32 %v1618, %v3591
        %v3607 = vmul.f32 %v1619, %v3591
        %v3608 = vmul.f32 %v1620, %v3591
        %v3609 = vmul.f32 %v1621, %v3591
        %v3610 = vmul.f32 %v1622, %v3591
        %v3611 = vmul.f32 %v1623, %v3591
        %v3612 = vmul.f32 %v1624, %v3591
        %v3613 = vmul.f32 %v1625, %v3591
        %v3614 = vmul.f32 %v1626, %v3591
        %v3615 = vmul.f32 %v1627, %v3591
        %v3616 = vmul.f32 %v1628, %v3591
        %v3617 = vmul.f32 %v1629, %v3591
        %v3618 = vmul.f32 %v1630, %v3591
        %v3619 = vmul.f32 %v1631, %v3591
        %v3620 = vmul.f32 %v1632, %v3591
        %v3621 = vmul.f32 %v1633, %v3591
        %v3622 = vmul.f32 %v1634, %v3591
        %v3623 = vmul.f32 %v2289, %v3591
        %v3624 = vmul.f32 %v3586, %v3591
        %v3658 = vrot.slane %v3592, 3
        %v3659 = vrot.slane %v3593, 3
        %v3660 = vsel %vm2157, %v3658, %v3659
        %v3661 = vrot.slane %v3594, 3
        %v3662 = vsel %vm2157, %v3659, %v3661
        %v3663 = vrot.slane %v3595, 3
        %v3664 = vsel %vm2157, %v3661, %v3663
        %v3665 = vrot.slane %v3596, 3
        %v3666 = vsel %vm2157, %v3663, %v3665
        %v3667 = vrot.slane %v3597, 3
        %v3668 = vsel %vm2157, %v3665, %v3667
        %v3669 = vrot.slane %v3598, 3
        %v3670 = vsel %vm2157, %v3667, %v3669
        %v3671 = vrot.slane %v3599, 3
        %v3672 = vsel %vm2157, %v3669, %v3671
        %v3673 = vrot.slane %v3600, 3
        %v3674 = vsel %vm2157, %v3671, %v3673
        %v3675 = vrot.slane %v3601, 3
        %v3676 = vsel %vm2157, %v3673, %v3675
        %v3677 = vrot.slane %v3602, 3
        %v3678 = vsel %vm2157, %v3675, %v3677
        %v3679 = vrot.slane %v3603, 3
        %v3680 = vsel %vm2157, %v3677, %v3679
        %v3681 = vrot.slane %v3604, 3
        %v3682 = vsel %vm2157, %v3679, %v3681
        %v3683 = vrot.slane %v3605, 3
        %v3684 = vsel %vm2157, %v3681, %v3683
        %v3685 = vrot.slane %v3606, 3
        %v3686 = vsel %vm2157, %v3683, %v3685
        %v3687 = vrot.slane %v3607, 3
        %v3688 = vsel %vm2157, %v3685, %v3687
        %v3689 = vrot.slane %v3608, 3
        %v3690 = vsel %vm2157, %v3687, %v3689
        %v3691 = vrot.slane %v3609, 3
        %v3692 = vsel %vm2157, %v3689, %v3691
        %v3693 = vrot.slane %v3610, 3
        %v3694 = vsel %vm2157, %v3691, %v3693
        %v3695 = vrot.slane %v3611, 3
        %v3696 = vsel %vm2157, %v3693, %v3695
        %v3697 = vrot.slane %v3612, 3
        %v3698 = vsel %vm2157, %v3695, %v3697
        %v3699 = vrot.slane %v3613, 3
        %v3700 = vsel %vm2157, %v3697, %v3699
        %v3701 = vrot.slane %v3614, 3
        %v3702 = vsel %vm2157, %v3699, %v3701
        %v3703 = vrot.slane %v3615, 3
        %v3704 = vsel %vm2157, %v3701, %v3703
        %v3705 = vrot.slane %v3616, 3
        %v3706 = vsel %vm2157, %v3703, %v3705
        %v3707 = vrot.slane %v3617, 3
        %v3708 = vsel %vm2157, %v3705, %v3707
        %v3709 = vrot.slane %v3618, 3
        %v3710 = vsel %vm2157, %v3707, %v3709
        %v3711 = vrot.slane %v3619, 3
        %v3712 = vsel %vm2157, %v3709, %v3711
        %v3713 = vrot.slane %v3620, 3
        %v3714 = vsel %vm2157, %v3711, %v3713
        %v3715 = vrot.slane %v3621, 3
        %v3716 = vsel %vm2157, %v3713, %v3715
        %v3717 = vrot.slane %v3622, 3
        %v3718 = vsel %vm2157, %v3715, %v3717
        %v3719 = vrot.slane %v3623, 3
        %v3720 = vsel %vm2157, %v3717, %v3719
        %v3721 = vrot.slane %v3624, 3
        %v3722 = vsel %vm2157, %v3719, %v3721
        %v3756 = vadd.f32 %v3552, %v3660
        %v3757 = vadd.f32 %v3553, %v3662
        %v3758 = vadd.f32 %v3554, %v3664
        %v3759 = vadd.f32 %v3555, %v3666
        %v3760 = vadd.f32 %v3556, %v3668
        %v3761 = vadd.f32 %v3557, %v3670
        %v3762 = vadd.f32 %v3558, %v3672
        %v3763 = vadd.f32 %v3559, %v3674
        %v3764 = vadd.f32 %v3560, %v3676
        %v3765 = vadd.f32 %v3561, %v3678
        %v3766 = vadd.f32 %v3562, %v3680
        %v3767 = vadd.f32 %v3563, %v3682
        %v3768 = vadd.f32 %v3564, %v3684
        %v3769 = vadd.f32 %v3565, %v3686
        %v3770 = vadd.f32 %v3566, %v3688
        %v3771 = vadd.f32 %v3567, %v3690
        %v3772 = vadd.f32 %v3568, %v3692
        %v3773 = vadd.f32 %v3569, %v3694
        %v3774 = vadd.f32 %v3570, %v3696
        %v3775 = vadd.f32 %v3571, %v3698
        %v3776 = vadd.f32 %v3572, %v3700
        %v3777 = vadd.f32 %v3573, %v3702
        %v3778 = vadd.f32 %v3574, %v3704
        %v3779 = vadd.f32 %v3575, %v3706
        %v3780 = vadd.f32 %v3576, %v3708
        %v3781 = vadd.f32 %v3577, %v3710
        %v3782 = vadd.f32 %v3578, %v3712
        %v3783 = vadd.f32 %v3579, %v3714
        %v3784 = vadd.f32 %v3580, %v3716
        %v3785 = vadd.f32 %v3581, %v3718
        %v3786 = vadd.f32 %v3582, %v3720
        %v3787 = vadd.f32 %v3583, %v3722
        %v3788 = vadd.f32 %v3584, %v3721
        %v3789 = vld [vmem:[#allocation2 + $0x210] sm:$0xff]
        %v3790 = vld [vmem:[%s9 + $0xc] sm:$0x1]
        %v3791 = vlaneseq
        %v3792 = vshrl.u32 %v3791, 7
        %v3793 = vsub.s32 0, %v3792
        %v3794 = vrot.slane %v3790, %v3793
        %v3795 = vmul.f32 %v1605, %v3794
        %v3796 = vmul.f32 %v1606, %v3794
        %v3797 = vmul.f32 %v1607, %v3794
        %v3798 = vmul.f32 %v1608, %v3794
        %v3799 = vmul.f32 %v1609, %v3794
        %v3800 = vmul.f32 %v1610, %v3794
        %v3801 = vmul.f32 %v1611, %v3794
        %v3802 = vmul.f32 %v1612, %v3794
        %v3803 = vmul.f32 %v1613, %v3794
        %v3804 = vmul.f32 %v1614, %v3794
        %v3805 = vmul.f32 %v1615, %v3794
        %v3806 = vmul.f32 %v1616, %v3794
        %v3807 = vmul.f32 %v1617, %v3794
        %v3808 = vmul.f32 %v1618, %v3794
        %v3809 = vmul.f32 %v1619, %v3794
        %v3810 = vmul.f32 %v1620, %v3794
        %v3811 = vmul.f32 %v1621, %v3794
        %v3812 = vmul.f32 %v1622, %v3794
        %v3813 = vmul.f32 %v1623, %v3794
        %v3814 = vmul.f32 %v1624, %v3794
        %v3815 = vmul.f32 %v1625, %v3794
        %v3816 = vmul.f32 %v1626, %v3794
        %v3817 = vmul.f32 %v1627, %v3794
        %v3818 = vmul.f32 %v1628, %v3794
        %v3819 = vmul.f32 %v1629, %v3794
        %v3820 = vmul.f32 %v1630, %v3794
        %v3821 = vmul.f32 %v1631, %v3794
        %v3822 = vmul.f32 %v1632, %v3794
        %v3823 = vmul.f32 %v1633, %v3794
        %v3824 = vmul.f32 %v1634, %v3794
        %v3825 = vmul.f32 %v2289, %v3794
        %v3826 = vmul.f32 %v3789, %v3794
        %v3859 = vrot.slane %v3795, 4
        %v3860 = vrot.slane %v3796, 4
        %v3861 = vsel %vm2359, %v3859, %v3860
        %v3862 = vrot.slane %v3797, 4
        %v3863 = vsel %vm2359, %v3860, %v3862
        %v3864 = vrot.slane %v3798, 4
        %v3865 = vsel %vm2359, %v3862, %v3864
        %v3866 = vrot.slane %v3799, 4
        %v3867 = vsel %vm2359, %v3864, %v3866
        %v3868 = vrot.slane %v3800, 4
        %v3869 = vsel %vm2359, %v3866, %v3868
        %v3870 = vrot.slane %v3801, 4
        %v3871 = vsel %vm2359, %v3868, %v3870
        %v3872 = vrot.slane %v3802, 4
        %v3873 = vsel %vm2359, %v3870, %v3872
        %v3874 = vrot.slane %v3803, 4
        %v3875 = vsel %vm2359, %v3872, %v3874
        %v3876 = vrot.slane %v3804, 4
        %v3877 = vsel %vm2359, %v3874, %v3876
        %v3878 = vrot.slane %v3805, 4
        %v3879 = vsel %vm2359, %v3876, %v3878
        %v3880 = vrot.slane %v3806, 4
        %v3881 = vsel %vm2359, %v3878, %v3880
        %v3882 = vrot.slane %v3807, 4
        %v3883 = vsel %vm2359, %v3880, %v3882
        %v3884 = vrot.slane %v3808, 4
        %v3885 = vsel %vm2359, %v3882, %v3884
        %v3886 = vrot.slane %v3809, 4
        %v3887 = vsel %vm2359, %v3884, %v3886
        %v3888 = vrot.slane %v3810, 4
        %v3889 = vsel %vm2359, %v3886, %v3888
        %v3890 = vrot.slane %v3811, 4
        %v3891 = vsel %vm2359, %v3888, %v3890
        %v3892 = vrot.slane %v3812, 4
        %v3893 = vsel %vm2359, %v3890, %v3892
        %v3894 = vrot.slane %v3813, 4
        %v3895 = vsel %vm2359, %v3892, %v3894
        %v3896 = vrot.slane %v3814, 4
        %v3897 = vsel %vm2359, %v3894, %v3896
        %v3898 = vrot.slane %v3815, 4
        %v3899 = vsel %vm2359, %v3896, %v3898
        %v3900 = vrot.slane %v3816, 4
        %v3901 = vsel %vm2359, %v3898, %v3900
        %v3902 = vrot.slane %v3817, 4
        %v3903 = vsel %vm2359, %v3900, %v3902
        %v3904 = vrot.slane %v3818, 4
        %v3905 = vsel %vm2359, %v3902, %v3904
        %v3906 = vrot.slane %v3819, 4
        %v3907 = vsel %vm2359, %v3904, %v3906
        %v3908 = vrot.slane %v3820, 4
        %v3909 = vsel %vm2359, %v3906, %v3908
        %v3910 = vrot.slane %v3821, 4
        %v3911 = vsel %vm2359, %v3908, %v3910
        %v3912 = vrot.slane %v3822, 4
        %v3913 = vsel %vm2359, %v3910, %v3912
        %v3914 = vrot.slane %v3823, 4
        %v3915 = vsel %vm2359, %v3912, %v3914
        %v3916 = vrot.slane %v3824, 4
        %v3917 = vsel %vm2359, %v3914, %v3916
        %v3918 = vrot.slane %v3825, 4
        %v3919 = vsel %vm2359, %v3916, %v3918
        %v3920 = vrot.slane %v3826, 4
        %v3921 = vsel %vm2359, %v3918, %v3920
        %v3955 = vadd.f32 %v3756, %v3859
        %v3956 = vadd.f32 %v3757, %v3861
        %v3957 = vadd.f32 %v3758, %v3863
        %v3958 = vadd.f32 %v3759, %v3865
        %v3959 = vadd.f32 %v3760, %v3867
        %v3960 = vadd.f32 %v3761, %v3869
        %v3961 = vadd.f32 %v3762, %v3871
        %v3962 = vadd.f32 %v3763, %v3873
        %v3963 = vadd.f32 %v3764, %v3875
        %v3964 = vadd.f32 %v3765, %v3877
        %v3965 = vadd.f32 %v3766, %v3879
        %v3966 = vadd.f32 %v3767, %v3881
        %v3967 = vadd.f32 %v3768, %v3883
        %v3968 = vadd.f32 %v3769, %v3885
        %v3969 = vadd.f32 %v3770, %v3887
        %v3970 = vadd.f32 %v3771, %v3889
        %v3971 = vadd.f32 %v3772, %v3891
        %v3972 = vadd.f32 %v3773, %v3893
        %v3973 = vadd.f32 %v3774, %v3895
        %v3974 = vadd.f32 %v3775, %v3897
        %v3975 = vadd.f32 %v3776, %v3899
        %v3976 = vadd.f32 %v3777, %v3901
        %v3977 = vadd.f32 %v3778, %v3903
        %v3978 = vadd.f32 %v3779, %v3905
        %v3979 = vadd.f32 %v3780, %v3907
        %v3980 = vadd.f32 %v3781, %v3909
        %v3981 = vadd.f32 %v3782, %v3911
        %v3982 = vadd.f32 %v3783, %v3913
        %v3983 = vadd.f32 %v3784, %v3915
        %v3984 = vadd.f32 %v3785, %v3917
        %v3985 = vadd.f32 %v3786, %v3919
        %v3986 = vadd.f32 %v3787, %v3921
        %v3987 = vadd.f32 %v3788, %v3920
        %v3988 = vld [vmem:[#allocation2 + $0x20] sm:$0xfe]
        %v3989 = vld [vmem:[#allocation2 + $0x220] sm:$0x1]
        %v3990 = vld [vmem:[%s9 + $0xd] sm:$0x1]
        %v3991 = vlaneseq
        %v3992 = vshrl.u32 %v3991, 7
        %v3993 = vsub.s32 0, %v3992
        %v3994 = vrot.slane %v3990, %v3993
        %v3995 = vmul.f32 %v3988, %v3994
        %v3996 = vmul.f32 %v1606, %v3994
        %v3997 = vmul.f32 %v1607, %v3994
        %v3998 = vmul.f32 %v1608, %v3994
        %v3999 = vmul.f32 %v1609, %v3994
        %v4000 = vmul.f32 %v1610, %v3994
        %v4001 = vmul.f32 %v1611, %v3994
        %v4002 = vmul.f32 %v1612, %v3994
        %v4003 = vmul.f32 %v1613, %v3994
        %v4004 = vmul.f32 %v1614, %v3994
        %v4005 = vmul.f32 %v1615, %v3994
        %v4006 = vmul.f32 %v1616, %v3994
        %v4007 = vmul.f32 %v1617, %v3994
        %v4008 = vmul.f32 %v1618, %v3994
        %v4009 = vmul.f32 %v1619, %v3994
        %v4010 = vmul.f32 %v1620, %v3994
        %v4011 = vmul.f32 %v1621, %v3994
        %v4012 = vmul.f32 %v1622, %v3994
        %v4013 = vmul.f32 %v1623, %v3994
        %v4014 = vmul.f32 %v1624, %v3994
        %v4015 = vmul.f32 %v1625, %v3994
        %v4016 = vmul.f32 %v1626, %v3994
        %v4017 = vmul.f32 %v1627, %v3994
        %v4018 = vmul.f32 %v1628, %v3994
        %v4019 = vmul.f32 %v1629, %v3994
        %v4020 = vmul.f32 %v1630, %v3994
        %v4021 = vmul.f32 %v1631, %v3994
        %v4022 = vmul.f32 %v1632, %v3994
        %v4023 = vmul.f32 %v1633, %v3994
        %v4024 = vmul.f32 %v1634, %v3994
        %v4025 = vmul.f32 %v2289, %v3994
        %v4026 = vmul.f32 %v3789, %v3994
        %v4027 = vmul.f32 %v3989, %v3994
        %v4061 = vrot.slane %v3995, 5
        %v4062 = vrot.slane %v3996, 5
        %v4063 = vsel %vm2562, %v4061, %v4062
        %v4064 = vrot.slane %v3997, 5
        %v4065 = vsel %vm2562, %v4062, %v4064
        %v4066 = vrot.slane %v3998, 5
        %v4067 = vsel %vm2562, %v4064, %v4066
        %v4068 = vrot.slane %v3999, 5
        %v4069 = vsel %vm2562, %v4066, %v4068
        %v4070 = vrot.slane %v4000, 5
        %v4071 = vsel %vm2562, %v4068, %v4070
        %v4072 = vrot.slane %v4001, 5
        %v4073 = vsel %vm2562, %v4070, %v4072
        %v4074 = vrot.slane %v4002, 5
        %v4075 = vsel %vm2562, %v4072, %v4074
        %v4076 = vrot.slane %v4003, 5
        %v4077 = vsel %vm2562, %v4074, %v4076
        %v4078 = vrot.slane %v4004, 5
        %v4079 = vsel %vm2562, %v4076, %v4078
        %v4080 = vrot.slane %v4005, 5
        %v4081 = vsel %vm2562, %v4078, %v4080
        %v4082 = vrot.slane %v4006, 5
        %v4083 = vsel %vm2562, %v4080, %v4082
        %v4084 = vrot.slane %v4007, 5
        %v4085 = vsel %vm2562, %v4082, %v4084
        %v4086 = vrot.slane %v4008, 5
        %v4087 = vsel %vm2562, %v4084, %v4086
        %v4088 = vrot.slane %v4009, 5
        %v4089 = vsel %vm2562, %v4086, %v4088
        %v4090 = vrot.slane %v4010, 5
        %v4091 = vsel %vm2562, %v4088, %v4090
        %v4092 = vrot.slane %v4011, 5
        %v4093 = vsel %vm2562, %v4090, %v4092
        %v4094 = vrot.slane %v4012, 5
        %v4095 = vsel %vm2562, %v4092, %v4094
        %v4096 = vrot.slane %v4013, 5
        %v4097 = vsel %vm2562, %v4094, %v4096
        %v4098 = vrot.slane %v4014, 5
        %v4099 = vsel %vm2562, %v4096, %v4098
        %v4100 = vrot.slane %v4015, 5
        %v4101 = vsel %vm2562, %v4098, %v4100
        %v4102 = vrot.slane %v4016, 5
        %v4103 = vsel %vm2562, %v4100, %v4102
        %v4104 = vrot.slane %v4017, 5
        %v4105 = vsel %vm2562, %v4102, %v4104
        %v4106 = vrot.slane %v4018, 5
        %v4107 = vsel %vm2562, %v4104, %v4106
        %v4108 = vrot.slane %v4019, 5
        %v4109 = vsel %vm2562, %v4106, %v4108
        %v4110 = vrot.slane %v4020, 5
        %v4111 = vsel %vm2562, %v4108, %v4110
        %v4112 = vrot.slane %v4021, 5
        %v4113 = vsel %vm2562, %v4110, %v4112
        %v4114 = vrot.slane %v4022, 5
        %v4115 = vsel %vm2562, %v4112, %v4114
        %v4116 = vrot.slane %v4023, 5
        %v4117 = vsel %vm2562, %v4114, %v4116
        %v4118 = vrot.slane %v4024, 5
        %v4119 = vsel %vm2562, %v4116, %v4118
        %v4120 = vrot.slane %v4025, 5
        %v4121 = vsel %vm2562, %v4118, %v4120
        %v4122 = vrot.slane %v4026, 5
        %v4123 = vsel %vm2562, %v4120, %v4122
        %v4124 = vrot.slane %v4027, 5
        %v4125 = vsel %vm2562, %v4122, %v4124
        %v4159 = vadd.f32 %v3955, %v4061
        %v4160 = vadd.f32 %v3956, %v4063
        %v4161 = vadd.f32 %v3957, %v4065
        %v4162 = vadd.f32 %v3958, %v4067
        %v4163 = vadd.f32 %v3959, %v4069
        %v4164 = vadd.f32 %v3960, %v4071
        %v4165 = vadd.f32 %v3961, %v4073
        %v4166 = vadd.f32 %v3962, %v4075
        %v4167 = vadd.f32 %v3963, %v4077
        %v4168 = vadd.f32 %v3964, %v4079
        %v4169 = vadd.f32 %v3965, %v4081
        %v4170 = vadd.f32 %v3966, %v4083
        %v4171 = vadd.f32 %v3967, %v4085
        %v4172 = vadd.f32 %v3968, %v4087
        %v4173 = vadd.f32 %v3969, %v4089
        %v4174 = vadd.f32 %v3970, %v4091
        %v4175 = vadd.f32 %v3971, %v4093
        %v4176 = vadd.f32 %v3972, %v4095
        %v4177 = vadd.f32 %v3973, %v4097
        %v4178 = vadd.f32 %v3974, %v4099
        %v4179 = vadd.f32 %v3975, %v4101
        %v4180 = vadd.f32 %v3976, %v4103
        %v4181 = vadd.f32 %v3977, %v4105
        %v4182 = vadd.f32 %v3978, %v4107
        %v4183 = vadd.f32 %v3979, %v4109
        %v4184 = vadd.f32 %v3980, %v4111
        %v4185 = vadd.f32 %v3981, %v4113
        %v4186 = vadd.f32 %v3982, %v4115
        %v4187 = vadd.f32 %v3983, %v4117
        %v4188 = vadd.f32 %v3984, %v4119
        %v4189 = vadd.f32 %v3985, %v4121
        %v4190 = vadd.f32 %v3986, %v4123
        %v4191 = vadd.f32 %v3987, %v4125
        %v4192 = vld [vmem:[#allocation2 + $0x20] sm:$0xfc]
        %v4193 = vld [vmem:[#allocation2 + $0x220] sm:$0x3]
        %v4194 = vld [vmem:[%s9 + $0xe] sm:$0x1]
        %v4195 = vlaneseq
        %v4196 = vshrl.u32 %v4195, 7
        %v4197 = vsub.s32 0, %v4196
        %v4198 = vrot.slane %v4194, %v4197
        %v4199 = vmul.f32 %v4192, %v4198
        %v4200 = vmul.f32 %v1606, %v4198
        %v4201 = vmul.f32 %v1607, %v4198
        %v4202 = vmul.f32 %v1608, %v4198
        %v4203 = vmul.f32 %v1609, %v4198
        %v4204 = vmul.f32 %v1610, %v4198
        %v4205 = vmul.f32 %v1611, %v4198
        %v4206 = vmul.f32 %v1612, %v4198
        %v4207 = vmul.f32 %v1613, %v4198
        %v4208 = vmul.f32 %v1614, %v4198
        %v4209 = vmul.f32 %v1615, %v4198
        %v4210 = vmul.f32 %v1616, %v4198
        %v4211 = vmul.f32 %v1617, %v4198
        %v4212 = vmul.f32 %v1618, %v4198
        %v4213 = vmul.f32 %v1619, %v4198
        %v4214 = vmul.f32 %v1620, %v4198
        %v4215 = vmul.f32 %v1621, %v4198
        %v4216 = vmul.f32 %v1622, %v4198
        %v4217 = vmul.f32 %v1623, %v4198
        %v4218 = vmul.f32 %v1624, %v4198
        %v4219 = vmul.f32 %v1625, %v4198
        %v4220 = vmul.f32 %v1626, %v4198
        %v4221 = vmul.f32 %v1627, %v4198
        %v4222 = vmul.f32 %v1628, %v4198
        %v4223 = vmul.f32 %v1629, %v4198
        %v4224 = vmul.f32 %v1630, %v4198
        %v4225 = vmul.f32 %v1631, %v4198
        %v4226 = vmul.f32 %v1632, %v4198
        %v4227 = vmul.f32 %v1633, %v4198
        %v4228 = vmul.f32 %v1634, %v4198
        %v4229 = vmul.f32 %v2289, %v4198
        %v4230 = vmul.f32 %v3789, %v4198
        %v4231 = vmul.f32 %v4193, %v4198
        %v4265 = vrot.slane %v4199, 6
        %v4266 = vrot.slane %v4200, 6
        %v4267 = vsel %vm2767, %v4265, %v4266
        %v4268 = vrot.slane %v4201, 6
        %v4269 = vsel %vm2767, %v4266, %v4268
        %v4270 = vrot.slane %v4202, 6
        %v4271 = vsel %vm2767, %v4268, %v4270
        %v4272 = vrot.slane %v4203, 6
        %v4273 = vsel %vm2767, %v4270, %v4272
        %v4274 = vrot.slane %v4204, 6
        %v4275 = vsel %vm2767, %v4272, %v4274
        %v4276 = vrot.slane %v4205, 6
        %v4277 = vsel %vm2767, %v4274, %v4276
        %v4278 = vrot.slane %v4206, 6
        %v4279 = vsel %vm2767, %v4276, %v4278
        %v4280 = vrot.slane %v4207, 6
        %v4281 = vsel %vm2767, %v4278, %v4280
        %v4282 = vrot.slane %v4208, 6
        %v4283 = vsel %vm2767, %v4280, %v4282
        %v4284 = vrot.slane %v4209, 6
        %v4285 = vsel %vm2767, %v4282, %v4284
        %v4286 = vrot.slane %v4210, 6
        %v4287 = vsel %vm2767, %v4284, %v4286
        %v4288 = vrot.slane %v4211, 6
        %v4289 = vsel %vm2767, %v4286, %v4288
        %v4290 = vrot.slane %v4212, 6
        %v4291 = vsel %vm2767, %v4288, %v4290
        %v4292 = vrot.slane %v4213, 6
        %v4293 = vsel %vm2767, %v4290, %v4292
        %v4294 = vrot.slane %v4214, 6
        %v4295 = vsel %vm2767, %v4292, %v4294
        %v4296 = vrot.slane %v4215, 6
        %v4297 = vsel %vm2767, %v4294, %v4296
        %v4298 = vrot.slane %v4216, 6
        %v4299 = vsel %vm2767, %v4296, %v4298
        %v4300 = vrot.slane %v4217, 6
        %v4301 = vsel %vm2767, %v4298, %v4300
        %v4302 = vrot.slane %v4218, 6
        %v4303 = vsel %vm2767, %v4300, %v4302
        %v4304 = vrot.slane %v4219, 6
        %v4305 = vsel %vm2767, %v4302, %v4304
        %v4306 = vrot.slane %v4220, 6
        %v4307 = vsel %vm2767, %v4304, %v4306
        %v4308 = vrot.slane %v4221, 6
        %v4309 = vsel %vm2767, %v4306, %v4308
        %v4310 = vrot.slane %v4222, 6
        %v4311 = vsel %vm2767, %v4308, %v4310
        %v4312 = vrot.slane %v4223, 6
        %v4313 = vsel %vm2767, %v4310, %v4312
        %v4314 = vrot.slane %v4224, 6
        %v4315 = vsel %vm2767, %v4312, %v4314
        %v4316 = vrot.slane %v4225, 6
        %v4317 = vsel %vm2767, %v4314, %v4316
        %v4318 = vrot.slane %v4226, 6
        %v4319 = vsel %vm2767, %v4316, %v4318
        %v4320 = vrot.slane %v4227, 6
        %v4321 = vsel %vm2767, %v4318, %v4320
        %v4322 = vrot.slane %v4228, 6
        %v4323 = vsel %vm2767, %v4320, %v4322
        %v4324 = vrot.slane %v4229, 6
        %v4325 = vsel %vm2767, %v4322, %v4324
        %v4326 = vrot.slane %v4230, 6
        %v4327 = vsel %vm2767, %v4324, %v4326
        %v4328 = vrot.slane %v4231, 6
        %v4329 = vsel %vm2767, %v4326, %v4328
        %v4363 = vadd.f32 %v4159, %v4265
        %v4364 = vadd.f32 %v4160, %v4267
        %v4365 = vadd.f32 %v4161, %v4269
        %v4366 = vadd.f32 %v4162, %v4271
        %v4367 = vadd.f32 %v4163, %v4273
        %v4368 = vadd.f32 %v4164, %v4275
        %v4369 = vadd.f32 %v4165, %v4277
        %v4370 = vadd.f32 %v4166, %v4279
        %v4371 = vadd.f32 %v4167, %v4281
        %v4372 = vadd.f32 %v4168, %v4283
        %v4373 = vadd.f32 %v4169, %v4285
        %v4374 = vadd.f32 %v4170, %v4287
        %v4375 = vadd.f32 %v4171, %v4289
        %v4376 = vadd.f32 %v4172, %v4291
        %v4377 = vadd.f32 %v4173, %v4293
        %v4378 = vadd.f32 %v4174, %v4295
        %v4379 = vadd.f32 %v4175, %v4297
        %v4380 = vadd.f32 %v4176, %v4299
        %v4381 = vadd.f32 %v4177, %v4301
        %v4382 = vadd.f32 %v4178, %v4303
        %v4383 = vadd.f32 %v4179, %v4305
        %v4384 = vadd.f32 %v4180, %v4307
        %v4385 = vadd.f32 %v4181, %v4309
        %v4386 = vadd.f32 %v4182, %v4311
        %v4387 = vadd.f32 %v4183, %v4313
        %v4388 = vadd.f32 %v4184, %v4315
        %v4389 = vadd.f32 %v4185, %v4317
        %v4390 = vadd.f32 %v4186, %v4319
        %v4391 = vadd.f32 %v4187, %v4321
        %v4392 = vadd.f32 %v4188, %v4323
        %v4393 = vadd.f32 %v4189, %v4325
        %v4394 = vadd.f32 %v4190, %v4327
        %v4395 = vadd.f32 %v4191, %v4329
        %v4396 = vld [vmem:[#allocation2 + $0x20] sm:$0xf8]
        %v4397 = vld [vmem:[#allocation2 + $0x220] sm:$0x7]
        %v4398 = vld [vmem:[%s9 + $0xf] sm:$0x1]
        %v4399 = vlaneseq
        %v4400 = vshrl.u32 %v4399, 7
        %v4401 = vsub.s32 0, %v4400
        %v4402 = vrot.slane %v4398, %v4401
        %v4403 = vmul.f32 %v4396, %v4402
        %v4404 = vmul.f32 %v1606, %v4402
        %v4405 = vmul.f32 %v1607, %v4402
        %v4406 = vmul.f32 %v1608, %v4402
        %v4407 = vmul.f32 %v1609, %v4402
        %v4408 = vmul.f32 %v1610, %v4402
        %v4409 = vmul.f32 %v1611, %v4402
        %v4410 = vmul.f32 %v1612, %v4402
        %v4411 = vmul.f32 %v1613, %v4402
        %v4412 = vmul.f32 %v1614, %v4402
        %v4413 = vmul.f32 %v1615, %v4402
        %v4414 = vmul.f32 %v1616, %v4402
        %v4415 = vmul.f32 %v1617, %v4402
        %v4416 = vmul.f32 %v1618, %v4402
        %v4417 = vmul.f32 %v1619, %v4402
        %v4418 = vmul.f32 %v1620, %v4402
        %v4419 = vmul.f32 %v1621, %v4402
        %v4420 = vmul.f32 %v1622, %v4402
        %v4421 = vmul.f32 %v1623, %v4402
        %v4422 = vmul.f32 %v1624, %v4402
        %v4423 = vmul.f32 %v1625, %v4402
        %v4424 = vmul.f32 %v1626, %v4402
        %v4425 = vmul.f32 %v1627, %v4402
        %v4426 = vmul.f32 %v1628, %v4402
        %v4427 = vmul.f32 %v1629, %v4402
        %v4428 = vmul.f32 %v1630, %v4402
        %v4429 = vmul.f32 %v1631, %v4402
        %v4430 = vmul.f32 %v1632, %v4402
        %v4431 = vmul.f32 %v1633, %v4402
        %v4432 = vmul.f32 %v1634, %v4402
        %v4433 = vmul.f32 %v2289, %v4402
        %v4434 = vmul.f32 %v3789, %v4402
        %v4435 = vmul.f32 %v4397, %v4402
        %v4469 = vrot.slane %v4403, 7
        %v4470 = vrot.slane %v4404, 7
        %v4471 = vsel %vm2972, %v4469, %v4470
        %v4472 = vrot.slane %v4405, 7
        %v4473 = vsel %vm2972, %v4470, %v4472
        %v4474 = vrot.slane %v4406, 7
        %v4475 = vsel %vm2972, %v4472, %v4474
        %v4476 = vrot.slane %v4407, 7
        %v4477 = vsel %vm2972, %v4474, %v4476
        %v4478 = vrot.slane %v4408, 7
        %v4479 = vsel %vm2972, %v4476, %v4478
        %v4480 = vrot.slane %v4409, 7
        %v4481 = vsel %vm2972, %v4478, %v4480
        %v4482 = vrot.slane %v4410, 7
        %v4483 = vsel %vm2972, %v4480, %v4482
        %v4484 = vrot.slane %v4411, 7
        %v4485 = vsel %vm2972, %v4482, %v4484
        %v4486 = vrot.slane %v4412, 7
        %v4487 = vsel %vm2972, %v4484, %v4486
        %v4488 = vrot.slane %v4413, 7
        %v4489 = vsel %vm2972, %v4486, %v4488
        %v4490 = vrot.slane %v4414, 7
        %v4491 = vsel %vm2972, %v4488, %v4490
        %v4492 = vrot.slane %v4415, 7
        %v4493 = vsel %vm2972, %v4490, %v4492
        %v4494 = vrot.slane %v4416, 7
        %v4495 = vsel %vm2972, %v4492, %v4494
        %v4496 = vrot.slane %v4417, 7
        %v4497 = vsel %vm2972, %v4494, %v4496
        %v4498 = vrot.slane %v4418, 7
        %v4499 = vsel %vm2972, %v4496, %v4498
        %v4500 = vrot.slane %v4419, 7
        %v4501 = vsel %vm2972, %v4498, %v4500
        %v4502 = vrot.slane %v4420, 7
        %v4503 = vsel %vm2972, %v4500, %v4502
        %v4504 = vrot.slane %v4421, 7
        %v4505 = vsel %vm2972, %v4502, %v4504
        %v4506 = vrot.slane %v4422, 7
        %v4507 = vsel %vm2972, %v4504, %v4506
        %v4508 = vrot.slane %v4423, 7
        %v4509 = vsel %vm2972, %v4506, %v4508
        %v4510 = vrot.slane %v4424, 7
        %v4511 = vsel %vm2972, %v4508, %v4510
        %v4512 = vrot.slane %v4425, 7
        %v4513 = vsel %vm2972, %v4510, %v4512
        %v4514 = vrot.slane %v4426, 7
        %v4515 = vsel %vm2972, %v4512, %v4514
        %v4516 = vrot.slane %v4427, 7
        %v4517 = vsel %vm2972, %v4514, %v4516
        %v4518 = vrot.slane %v4428, 7
        %v4519 = vsel %vm2972, %v4516, %v4518
        %v4520 = vrot.slane %v4429, 7
        %v4521 = vsel %vm2972, %v4518, %v4520
        %v4522 = vrot.slane %v4430, 7
        %v4523 = vsel %vm2972, %v4520, %v4522
        %v4524 = vrot.slane %v4431, 7
        %v4525 = vsel %vm2972, %v4522, %v4524
        %v4526 = vrot.slane %v4432, 7
        %v4527 = vsel %vm2972, %v4524, %v4526
        %v4528 = vrot.slane %v4433, 7
        %v4529 = vsel %vm2972, %v4526, %v4528
        %v4530 = vrot.slane %v4434, 7
        %v4531 = vsel %vm2972, %v4528, %v4530
        %v4532 = vrot.slane %v4435, 7
        %v4533 = vsel %vm2972, %v4530, %v4532
        %v4567 = vadd.f32 %v4363, %v4469
        %v4568 = vadd.f32 %v4364, %v4471
        %v4569 = vadd.f32 %v4365, %v4473
        %v4570 = vadd.f32 %v4366, %v4475
        %v4571 = vadd.f32 %v4367, %v4477
        %v4572 = vadd.f32 %v4368, %v4479
        %v4573 = vadd.f32 %v4369, %v4481
        %v4574 = vadd.f32 %v4370, %v4483
        %v4575 = vadd.f32 %v4371, %v4485
        %v4576 = vadd.f32 %v4372, %v4487
        %v4577 = vadd.f32 %v4373, %v4489
        %v4578 = vadd.f32 %v4374, %v4491
        %v4579 = vadd.f32 %v4375, %v4493
        %v4580 = vadd.f32 %v4376, %v4495
        %v4581 = vadd.f32 %v4377, %v4497
        %v4582 = vadd.f32 %v4378, %v4499
        %v4583 = vadd.f32 %v4379, %v4501
        %v4584 = vadd.f32 %v4380, %v4503
        %v4585 = vadd.f32 %v4381, %v4505
        %v4586 = vadd.f32 %v4382, %v4507
        %v4587 = vadd.f32 %v4383, %v4509
        %v4588 = vadd.f32 %v4384, %v4511
        %v4589 = vadd.f32 %v4385, %v4513
        %v4590 = vadd.f32 %v4386, %v4515
        %v4591 = vadd.f32 %v4387, %v4517
        %v4592 = vadd.f32 %v4388, %v4519
        %v4593 = vadd.f32 %v4389, %v4521
        %v4594 = vadd.f32 %v4390, %v4523
        %v4595 = vadd.f32 %v4391, %v4525
        %v4596 = vadd.f32 %v4392, %v4527
        %v4597 = vadd.f32 %v4393, %v4529
        %v4598 = vadd.f32 %v4394, %v4531
        %v4599 = vadd.f32 %v4395, %v4533
        %v4600 = vld [vmem:[#allocation2 + $0x20] sm:$0xf0]
        %v4601 = vld [vmem:[#allocation2 + $0x220] sm:$0xf]
        %v4602 = vld [vmem:[%s9 + $0x10] sm:$0x1]
        %v4603 = vlaneseq
        %v4604 = vshrl.u32 %v4603, 7
        %v4605 = vsub.s32 0, %v4604
        %v4606 = vrot.slane %v4602, %v4605
        %v4607 = vmul.f32 %v4600, %v4606
        %v4608 = vmul.f32 %v1606, %v4606
        %v4609 = vmul.f32 %v1607, %v4606
        %v4610 = vmul.f32 %v1608, %v4606
        %v4611 = vmul.f32 %v1609, %v4606
        %v4612 = vmul.f32 %v1610, %v4606
        %v4613 = vmul.f32 %v1611, %v4606
        %v4614 = vmul.f32 %v1612, %v4606
        %v4615 = vmul.f32 %v1613, %v4606
        %v4616 = vmul.f32 %v1614, %v4606
        %v4617 = vmul.f32 %v1615, %v4606
        %v4618 = vmul.f32 %v1616, %v4606
        %v4619 = vmul.f32 %v1617, %v4606
        %v4620 = vmul.f32 %v1618, %v4606
        %v4621 = vmul.f32 %v1619, %v4606
        %v4622 = vmul.f32 %v1620, %v4606
        %v4623 = vmul.f32 %v1621, %v4606
        %v4624 = vmul.f32 %v1622, %v4606
        %v4625 = vmul.f32 %v1623, %v4606
        %v4626 = vmul.f32 %v1624, %v4606
        %v4627 = vmul.f32 %v1625, %v4606
        %v4628 = vmul.f32 %v1626, %v4606
        %v4629 = vmul.f32 %v1627, %v4606
        %v4630 = vmul.f32 %v1628, %v4606
        %v4631 = vmul.f32 %v1629, %v4606
        %v4632 = vmul.f32 %v1630, %v4606
        %v4633 = vmul.f32 %v1631, %v4606
        %v4634 = vmul.f32 %v1632, %v4606
        %v4635 = vmul.f32 %v1633, %v4606
        %v4636 = vmul.f32 %v1634, %v4606
        %v4637 = vmul.f32 %v2289, %v4606
        %v4638 = vmul.f32 %v3789, %v4606
        %v4639 = vmul.f32 %v4601, %v4606
        %v4640 = vadd.f32 %v4567, %v4607
        %v4641 = vadd.f32 %v4568, %v4608
        %v4642 = vadd.f32 %v4569, %v4609
        %v4643 = vadd.f32 %v4570, %v4610
        %v4644 = vadd.f32 %v4571, %v4611
        %v4645 = vadd.f32 %v4572, %v4612
        %v4646 = vadd.f32 %v4573, %v4613
        %v4647 = vadd.f32 %v4574, %v4614
        %v4648 = vadd.f32 %v4575, %v4615
        %v4649 = vadd.f32 %v4576, %v4616
        %v4650 = vadd.f32 %v4577, %v4617
        %v4651 = vadd.f32 %v4578, %v4618
        %v4652 = vadd.f32 %v4579, %v4619
        %v4653 = vadd.f32 %v4580, %v4620
        %v4654 = vadd.f32 %v4581, %v4621
        %v4655 = vadd.f32 %v4582, %v4622
        %v4656 = vadd.f32 %v4583, %v4623
        %v4657 = vadd.f32 %v4584, %v4624
        %v4658 = vadd.f32 %v4585, %v4625
        %v4659 = vadd.f32 %v4586, %v4626
        %v4660 = vadd.f32 %v4587, %v4627
        %v4661 = vadd.f32 %v4588, %v4628
        %v4662 = vadd.f32 %v4589, %v4629
        %v4663 = vadd.f32 %v4590, %v4630
        %v4664 = vadd.f32 %v4591, %v4631
        %v4665 = vadd.f32 %v4592, %v4632
        %v4666 = vadd.f32 %v4593, %v4633
        %v4667 = vadd.f32 %v4594, %v4634
        %v4668 = vadd.f32 %v4595, %v4635
        %v4669 = vadd.f32 %v4596, %v4636
        %v4670 = vadd.f32 %v4597, %v4637
        %v4671 = vadd.f32 %v4598, %v4638
        %v4672 = vadd.f32 %v4599, %v4639
        %v4673 = vld [vmem:[#allocation2 + $0x20] sm:$0xe0]
        %v4674 = vld [vmem:[#allocation2 + $0x220] sm:$0x1f]
        %v4675 = vld [vmem:[%s9 + $0x11] sm:$0x1]
        %v4676 = vlaneseq
        %v4677 = vshrl.u32 %v4676, 7
        %v4678 = vsub.s32 0, %v4677
        %v4679 = vrot.slane %v4675, %v4678
        %v4680 = vmul.f32 %v4673, %v4679
        %v4681 = vmul.f32 %v1606, %v4679
        %v4682 = vmul.f32 %v1607, %v4679
        %v4683 = vmul.f32 %v1608, %v4679
        %v4684 = vmul.f32 %v1609, %v4679
        %v4685 = vmul.f32 %v1610, %v4679
        %v4686 = vmul.f32 %v1611, %v4679
        %v4687 = vmul.f32 %v1612, %v4679
        %v4688 = vmul.f32 %v1613, %v4679
        %v4689 = vmul.f32 %v1614, %v4679
        %v4690 = vmul.f32 %v1615, %v4679
        %v4691 = vmul.f32 %v1616, %v4679
        %v4692 = vmul.f32 %v1617, %v4679
        %v4693 = vmul.f32 %v1618, %v4679
        %v4694 = vmul.f32 %v1619, %v4679
        %v4695 = vmul.f32 %v1620, %v4679
        %v4696 = vmul.f32 %v1621, %v4679
        %v4697 = vmul.f32 %v1622, %v4679
        %v4698 = vmul.f32 %v1623, %v4679
        %v4699 = vmul.f32 %v1624, %v4679
        %v4700 = vmul.f32 %v1625, %v4679
        %v4701 = vmul.f32 %v1626, %v4679
        %v4702 = vmul.f32 %v1627, %v4679
        %v4703 = vmul.f32 %v1628, %v4679
        %v4704 = vmul.f32 %v1629, %v4679
        %v4705 = vmul.f32 %v1630, %v4679
        %v4706 = vmul.f32 %v1631, %v4679
        %v4707 = vmul.f32 %v1632, %v4679
        %v4708 = vmul.f32 %v1633, %v4679
        %v4709 = vmul.f32 %v1634, %v4679
        %v4710 = vmul.f32 %v2289, %v4679
        %v4711 = vmul.f32 %v3789, %v4679
        %v4712 = vmul.f32 %v4674, %v4679
        %v4746 = vrot.slane %v4680, 1
        %v4747 = vrot.slane %v4681, 1
        %v4748 = vsel %vm1747, %v4746, %v4747
        %v4749 = vrot.slane %v4682, 1
        %v4750 = vsel %vm1747, %v4747, %v4749
        %v4751 = vrot.slane %v4683, 1
        %v4752 = vsel %vm1747, %v4749, %v4751
        %v4753 = vrot.slane %v4684, 1
        %v4754 = vsel %vm1747, %v4751, %v4753
        %v4755 = vrot.slane %v4685, 1
        %v4756 = vsel %vm1747, %v4753, %v4755
        %v4757 = vrot.slane %v4686, 1
        %v4758 = vsel %vm1747, %v4755, %v4757
        %v4759 = vrot.slane %v4687, 1
        %v4760 = vsel %vm1747, %v4757, %v4759
        %v4761 = vrot.slane %v4688, 1
        %v4762 = vsel %vm1747, %v4759, %v4761
        %v4763 = vrot.slane %v4689, 1
        %v4764 = vsel %vm1747, %v4761, %v4763
        %v4765 = vrot.slane %v4690, 1
        %v4766 = vsel %vm1747, %v4763, %v4765
        %v4767 = vrot.slane %v4691, 1
        %v4768 = vsel %vm1747, %v4765, %v4767
        %v4769 = vrot.slane %v4692, 1
        %v4770 = vsel %vm1747, %v4767, %v4769
        %v4771 = vrot.slane %v4693, 1
        %v4772 = vsel %vm1747, %v4769, %v4771
        %v4773 = vrot.slane %v4694, 1
        %v4774 = vsel %vm1747, %v4771, %v4773
        %v4775 = vrot.slane %v4695, 1
        %v4776 = vsel %vm1747, %v4773, %v4775
        %v4777 = vrot.slane %v4696, 1
        %v4778 = vsel %vm1747, %v4775, %v4777
        %v4779 = vrot.slane %v4697, 1
        %v4780 = vsel %vm1747, %v4777, %v4779
        %v4781 = vrot.slane %v4698, 1
        %v4782 = vsel %vm1747, %v4779, %v4781
        %v4783 = vrot.slane %v4699, 1
        %v4784 = vsel %vm1747, %v4781, %v4783
        %v4785 = vrot.slane %v4700, 1
        %v4786 = vsel %vm1747, %v4783, %v4785
        %v4787 = vrot.slane %v4701, 1
        %v4788 = vsel %vm1747, %v4785, %v4787
        %v4789 = vrot.slane %v4702, 1
        %v4790 = vsel %vm1747, %v4787, %v4789
        %v4791 = vrot.slane %v4703, 1
        %v4792 = vsel %vm1747, %v4789, %v4791
        %v4793 = vrot.slane %v4704, 1
        %v4794 = vsel %vm1747, %v4791, %v4793
        %v4795 = vrot.slane %v4705, 1
        %v4796 = vsel %vm1747, %v4793, %v4795
        %v4797 = vrot.slane %v4706, 1
        %v4798 = vsel %vm1747, %v4795, %v4797
        %v4799 = vrot.slane %v4707, 1
        %v4800 = vsel %vm1747, %v4797, %v4799
        %v4801 = vrot.slane %v4708, 1
        %v4802 = vsel %vm1747, %v4799, %v4801
        %v4803 = vrot.slane %v4709, 1
        %v4804 = vsel %vm1747, %v4801, %v4803
        %v4805 = vrot.slane %v4710, 1
        %v4806 = vsel %vm1747, %v4803, %v4805
        %v4807 = vrot.slane %v4711, 1
        %v4808 = vsel %vm1747, %v4805, %v4807
        %v4809 = vrot.slane %v4712, 1
        %v4810 = vsel %vm1747, %v4807, %v4809
        %v4844 = vadd.f32 %v4640, %v4748
        %v4845 = vadd.f32 %v4641, %v4750
        %v4846 = vadd.f32 %v4642, %v4752
        %v4847 = vadd.f32 %v4643, %v4754
        %v4848 = vadd.f32 %v4644, %v4756
        %v4849 = vadd.f32 %v4645, %v4758
        %v4850 = vadd.f32 %v4646, %v4760
        %v4851 = vadd.f32 %v4647, %v4762
        %v4852 = vadd.f32 %v4648, %v4764
        %v4853 = vadd.f32 %v4649, %v4766
        %v4854 = vadd.f32 %v4650, %v4768
        %v4855 = vadd.f32 %v4651, %v4770
        %v4856 = vadd.f32 %v4652, %v4772
        %v4857 = vadd.f32 %v4653, %v4774
        %v4858 = vadd.f32 %v4654, %v4776
        %v4859 = vadd.f32 %v4655, %v4778
        %v4860 = vadd.f32 %v4656, %v4780
        %v4861 = vadd.f32 %v4657, %v4782
        %v4862 = vadd.f32 %v4658, %v4784
        %v4863 = vadd.f32 %v4659, %v4786
        %v4864 = vadd.f32 %v4660, %v4788
        %v4865 = vadd.f32 %v4661, %v4790
        %v4866 = vadd.f32 %v4662, %v4792
        %v4867 = vadd.f32 %v4663, %v4794
        %v4868 = vadd.f32 %v4664, %v4796
        %v4869 = vadd.f32 %v4665, %v4798
        %v4870 = vadd.f32 %v4666, %v4800
        %v4871 = vadd.f32 %v4667, %v4802
        %v4872 = vadd.f32 %v4668, %v4804
        %v4873 = vadd.f32 %v4669, %v4806
        %v4874 = vadd.f32 %v4670, %v4808
        %v4875 = vadd.f32 %v4671, %v4810
        %v4876 = vadd.f32 %v4672, %v4809
        %v4877 = vld [vmem:[#allocation2 + $0x20] sm:$0xc0]
        %v4878 = vld [vmem:[#allocation2 + $0x220] sm:$0x3f]
        %v4879 = vld [vmem:[%s9 + $0x12] sm:$0x1]
        %v4880 = vlaneseq
        %v4881 = vshrl.u32 %v4880, 7
        %v4882 = vsub.s32 0, %v4881
        %v4883 = vrot.slane %v4879, %v4882
        %v4884 = vmul.f32 %v4877, %v4883
        %v4885 = vmul.f32 %v1606, %v4883
        %v4886 = vmul.f32 %v1607, %v4883
        %v4887 = vmul.f32 %v1608, %v4883
        %v4888 = vmul.f32 %v1609, %v4883
        %v4889 = vmul.f32 %v1610, %v4883
        %v4890 = vmul.f32 %v1611, %v4883
        %v4891 = vmul.f32 %v1612, %v4883
        %v4892 = vmul.f32 %v1613, %v4883
        %v4893 = vmul.f32 %v1614, %v4883
        %v4894 = vmul.f32 %v1615, %v4883
        %v4895 = vmul.f32 %v1616, %v4883
        %v4896 = vmul.f32 %v1617, %v4883
        %v4897 = vmul.f32 %v1618, %v4883
        %v4898 = vmul.f32 %v1619, %v4883
        %v4899 = vmul.f32 %v1620, %v4883
        %v4900 = vmul.f32 %v1621, %v4883
        %v4901 = vmul.f32 %v1622, %v4883
        %v4902 = vmul.f32 %v1623, %v4883
        %v4903 = vmul.f32 %v1624, %v4883
        %v4904 = vmul.f32 %v1625, %v4883
        %v4905 = vmul.f32 %v1626, %v4883
        %v4906 = vmul.f32 %v1627, %v4883
        %v4907 = vmul.f32 %v1628, %v4883
        %v4908 = vmul.f32 %v1629, %v4883
        %v4909 = vmul.f32 %v1630, %v4883
        %v4910 = vmul.f32 %v1631, %v4883
        %v4911 = vmul.f32 %v1632, %v4883
        %v4912 = vmul.f32 %v1633, %v4883
        %v4913 = vmul.f32 %v1634, %v4883
        %v4914 = vmul.f32 %v2289, %v4883
        %v4915 = vmul.f32 %v3789, %v4883
        %v4916 = vmul.f32 %v4878, %v4883
        %v4950 = vrot.slane %v4884, 2
        %v4951 = vrot.slane %v4885, 2
        %v4952 = vsel %vm1952, %v4950, %v4951
        %v4953 = vrot.slane %v4886, 2
        %v4954 = vsel %vm1952, %v4951, %v4953
        %v4955 = vrot.slane %v4887, 2
        %v4956 = vsel %vm1952, %v4953, %v4955
        %v4957 = vrot.slane %v4888, 2
        %v4958 = vsel %vm1952, %v4955, %v4957
        %v4959 = vrot.slane %v4889, 2
        %v4960 = vsel %vm1952, %v4957, %v4959
        %v4961 = vrot.slane %v4890, 2
        %v4962 = vsel %vm1952, %v4959, %v4961
        %v4963 = vrot.slane %v4891, 2
        %v4964 = vsel %vm1952, %v4961, %v4963
        %v4965 = vrot.slane %v4892, 2
        %v4966 = vsel %vm1952, %v4963, %v4965
        %v4967 = vrot.slane %v4893, 2
        %v4968 = vsel %vm1952, %v4965, %v4967
        %v4969 = vrot.slane %v4894, 2
        %v4970 = vsel %vm1952, %v4967, %v4969
        %v4971 = vrot.slane %v4895, 2
        %v4972 = vsel %vm1952, %v4969, %v4971
        %v4973 = vrot.slane %v4896, 2
        %v4974 = vsel %vm1952, %v4971, %v4973
        %v4975 = vrot.slane %v4897, 2
        %v4976 = vsel %vm1952, %v4973, %v4975
        %v4977 = vrot.slane %v4898, 2
        %v4978 = vsel %vm1952, %v4975, %v4977
        %v4979 = vrot.slane %v4899, 2
        %v4980 = vsel %vm1952, %v4977, %v4979
        %v4981 = vrot.slane %v4900, 2
        %v4982 = vsel %vm1952, %v4979, %v4981
        %v4983 = vrot.slane %v4901, 2
        %v4984 = vsel %vm1952, %v4981, %v4983
        %v4985 = vrot.slane %v4902, 2
        %v4986 = vsel %vm1952, %v4983, %v4985
        %v4987 = vrot.slane %v4903, 2
        %v4988 = vsel %vm1952, %v4985, %v4987
        %v4989 = vrot.slane %v4904, 2
        %v4990 = vsel %vm1952, %v4987, %v4989
        %v4991 = vrot.slane %v4905, 2
        %v4992 = vsel %vm1952, %v4989, %v4991
        %v4993 = vrot.slane %v4906, 2
        %v4994 = vsel %vm1952, %v4991, %v4993
        %v4995 = vrot.slane %v4907, 2
        %v4996 = vsel %vm1952, %v4993, %v4995
        %v4997 = vrot.slane %v4908, 2
        %v4998 = vsel %vm1952, %v4995, %v4997
        %v4999 = vrot.slane %v4909, 2
        %v5000 = vsel %vm1952, %v4997, %v4999
        %v5001 = vrot.slane %v4910, 2
        %v5002 = vsel %vm1952, %v4999, %v5001
        %v5003 = vrot.slane %v4911, 2
        %v5004 = vsel %vm1952, %v5001, %v5003
        %v5005 = vrot.slane %v4912, 2
        %v5006 = vsel %vm1952, %v5003, %v5005
        %v5007 = vrot.slane %v4913, 2
        %v5008 = vsel %vm1952, %v5005, %v5007
        %v5009 = vrot.slane %v4914, 2
        %v5010 = vsel %vm1952, %v5007, %v5009
        %v5011 = vrot.slane %v4915, 2
        %v5012 = vsel %vm1952, %v5009, %v5011
        %v5013 = vrot.slane %v4916, 2
        %v5014 = vsel %vm1952, %v5011, %v5013
        %v5048 = vadd.f32 %v4844, %v4952
        %v5049 = vadd.f32 %v4845, %v4954
        %v5050 = vadd.f32 %v4846, %v4956
        %v5051 = vadd.f32 %v4847, %v4958
        %v5052 = vadd.f32 %v4848, %v4960
        %v5053 = vadd.f32 %v4849, %v4962
        %v5054 = vadd.f32 %v4850, %v4964
        %v5055 = vadd.f32 %v4851, %v4966
        %v5056 = vadd.f32 %v4852, %v4968
        %v5057 = vadd.f32 %v4853, %v4970
        %v5058 = vadd.f32 %v4854, %v4972
        %v5059 = vadd.f32 %v4855, %v4974
        %v5060 = vadd.f32 %v4856, %v4976
        %v5061 = vadd.f32 %v4857, %v4978
        %v5062 = vadd.f32 %v4858, %v4980
        %v5063 = vadd.f32 %v4859, %v4982
        %v5064 = vadd.f32 %v4860, %v4984
        %v5065 = vadd.f32 %v4861, %v4986
        %v5066 = vadd.f32 %v4862, %v4988
        %v5067 = vadd.f32 %v4863, %v4990
        %v5068 = vadd.f32 %v4864, %v4992
        %v5069 = vadd.f32 %v4865, %v4994
        %v5070 = vadd.f32 %v4866, %v4996
        %v5071 = vadd.f32 %v4867, %v4998
        %v5072 = vadd.f32 %v4868, %v5000
        %v5073 = vadd.f32 %v4869, %v5002
        %v5074 = vadd.f32 %v4870, %v5004
        %v5075 = vadd.f32 %v4871, %v5006
        %v5076 = vadd.f32 %v4872, %v5008
        %v5077 = vadd.f32 %v4873, %v5010
        %v5078 = vadd.f32 %v4874, %v5012
        %v5079 = vadd.f32 %v4875, %v5014
        %v5080 = vadd.f32 %v4876, %v5013
        %v5081 = vld [vmem:[#allocation2 + $0x20] sm:$0x80]
        %v5082 = vld [vmem:[#allocation2 + $0x220] sm:$0x7f]
        %v5083 = vld [vmem:[%s9 + $0x13] sm:$0x1]
        %v5084 = vlaneseq
        %v5085 = vshrl.u32 %v5084, 7
        %v5086 = vsub.s32 0, %v5085
        %v5087 = vrot.slane %v5083, %v5086
        %v5088 = vmul.f32 %v5081, %v5087
        %v5089 = vmul.f32 %v1606, %v5087
        %v5090 = vmul.f32 %v1607, %v5087
        %v5091 = vmul.f32 %v1608, %v5087
        %v5092 = vmul.f32 %v1609, %v5087
        %v5093 = vmul.f32 %v1610, %v5087
        %v5094 = vmul.f32 %v1611, %v5087
        %v5095 = vmul.f32 %v1612, %v5087
        %v5096 = vmul.f32 %v1613, %v5087
        %v5097 = vmul.f32 %v1614, %v5087
        %v5098 = vmul.f32 %v1615, %v5087
        %v5099 = vmul.f32 %v1616, %v5087
        %v5100 = vmul.f32 %v1617, %v5087
        %v5101 = vmul.f32 %v1618, %v5087
        %v5102 = vmul.f32 %v1619, %v5087
        %v5103 = vmul.f32 %v1620, %v5087
        %v5104 = vmul.f32 %v1621, %v5087
        %v5105 = vmul.f32 %v1622, %v5087
        %v5106 = vmul.f32 %v1623, %v5087
        %v5107 = vmul.f32 %v1624, %v5087
        %v5108 = vmul.f32 %v1625, %v5087
        %v5109 = vmul.f32 %v1626, %v5087
        %v5110 = vmul.f32 %v1627, %v5087
        %v5111 = vmul.f32 %v1628, %v5087
        %v5112 = vmul.f32 %v1629, %v5087
        %v5113 = vmul.f32 %v1630, %v5087
        %v5114 = vmul.f32 %v1631, %v5087
        %v5115 = vmul.f32 %v1632, %v5087
        %v5116 = vmul.f32 %v1633, %v5087
        %v5117 = vmul.f32 %v1634, %v5087
        %v5118 = vmul.f32 %v2289, %v5087
        %v5119 = vmul.f32 %v3789, %v5087
        %v5120 = vmul.f32 %v5082, %v5087
        %v5154 = vrot.slane %v5088, 3
        %v5155 = vrot.slane %v5089, 3
        %v5156 = vsel %vm2157, %v5154, %v5155
        %v5157 = vrot.slane %v5090, 3
        %v5158 = vsel %vm2157, %v5155, %v5157
        %v5159 = vrot.slane %v5091, 3
        %v5160 = vsel %vm2157, %v5157, %v5159
        %v5161 = vrot.slane %v5092, 3
        %v5162 = vsel %vm2157, %v5159, %v5161
        %v5163 = vrot.slane %v5093, 3
        %v5164 = vsel %vm2157, %v5161, %v5163
        %v5165 = vrot.slane %v5094, 3
        %v5166 = vsel %vm2157, %v5163, %v5165
        %v5167 = vrot.slane %v5095, 3
        %v5168 = vsel %vm2157, %v5165, %v5167
        %v5169 = vrot.slane %v5096, 3
        %v5170 = vsel %vm2157, %v5167, %v5169
        %v5171 = vrot.slane %v5097, 3
        %v5172 = vsel %vm2157, %v5169, %v5171
        %v5173 = vrot.slane %v5098, 3
        %v5174 = vsel %vm2157, %v5171, %v5173
        %v5175 = vrot.slane %v5099, 3
        %v5176 = vsel %vm2157, %v5173, %v5175
        %v5177 = vrot.slane %v5100, 3
        %v5178 = vsel %vm2157, %v5175, %v5177
        %v5179 = vrot.slane %v5101, 3
        %v5180 = vsel %vm2157, %v5177, %v5179
        %v5181 = vrot.slane %v5102, 3
        %v5182 = vsel %vm2157, %v5179, %v5181
        %v5183 = vrot.slane %v5103, 3
        %v5184 = vsel %vm2157, %v5181, %v5183
        %v5185 = vrot.slane %v5104, 3
        %v5186 = vsel %vm2157, %v5183, %v5185
        %v5187 = vrot.slane %v5105, 3
        %v5188 = vsel %vm2157, %v5185, %v5187
        %v5189 = vrot.slane %v5106, 3
        %v5190 = vsel %vm2157, %v5187, %v5189
        %v5191 = vrot.slane %v5107, 3
        %v5192 = vsel %vm2157, %v5189, %v5191
        %v5193 = vrot.slane %v5108, 3
        %v5194 = vsel %vm2157, %v5191, %v5193
        %v5195 = vrot.slane %v5109, 3
        %v5196 = vsel %vm2157, %v5193, %v5195
        %v5197 = vrot.slane %v5110, 3
        %v5198 = vsel %vm2157, %v5195, %v5197
        %v5199 = vrot.slane %v5111, 3
        %v5200 = vsel %vm2157, %v5197, %v5199
        %v5201 = vrot.slane %v5112, 3
        %v5202 = vsel %vm2157, %v5199, %v5201
        %v5203 = vrot.slane %v5113, 3
        %v5204 = vsel %vm2157, %v5201, %v5203
        %v5205 = vrot.slane %v5114, 3
        %v5206 = vsel %vm2157, %v5203, %v5205
        %v5207 = vrot.slane %v5115, 3
        %v5208 = vsel %vm2157, %v5205, %v5207
        %v5209 = vrot.slane %v5116, 3
        %v5210 = vsel %vm2157, %v5207, %v5209
        %v5211 = vrot.slane %v5117, 3
        %v5212 = vsel %vm2157, %v5209, %v5211
        %v5213 = vrot.slane %v5118, 3
        %v5214 = vsel %vm2157, %v5211, %v5213
        %v5215 = vrot.slane %v5119, 3
        %v5216 = vsel %vm2157, %v5213, %v5215
        %v5217 = vrot.slane %v5120, 3
        %v5218 = vsel %vm2157, %v5215, %v5217
        %v5252 = vadd.f32 %v5048, %v5156
        %v5253 = vadd.f32 %v5049, %v5158
        %v5254 = vadd.f32 %v5050, %v5160
        %v5255 = vadd.f32 %v5051, %v5162
        %v5256 = vadd.f32 %v5052, %v5164
        %v5257 = vadd.f32 %v5053, %v5166
        %v5258 = vadd.f32 %v5054, %v5168
        %v5259 = vadd.f32 %v5055, %v5170
        %v5260 = vadd.f32 %v5056, %v5172
        %v5261 = vadd.f32 %v5057, %v5174
        %v5262 = vadd.f32 %v5058, %v5176
        %v5263 = vadd.f32 %v5059, %v5178
        %v5264 = vadd.f32 %v5060, %v5180
        %v5265 = vadd.f32 %v5061, %v5182
        %v5266 = vadd.f32 %v5062, %v5184
        %v5267 = vadd.f32 %v5063, %v5186
        %v5268 = vadd.f32 %v5064, %v5188
        %v5269 = vadd.f32 %v5065, %v5190
        %v5270 = vadd.f32 %v5066, %v5192
        %v5271 = vadd.f32 %v5067, %v5194
        %v5272 = vadd.f32 %v5068, %v5196
        %v5273 = vadd.f32 %v5069, %v5198
        %v5274 = vadd.f32 %v5070, %v5200
        %v5275 = vadd.f32 %v5071, %v5202
        %v5276 = vadd.f32 %v5072, %v5204
        %v5277 = vadd.f32 %v5073, %v5206
        %v5278 = vadd.f32 %v5074, %v5208
        %v5279 = vadd.f32 %v5075, %v5210
        %v5280 = vadd.f32 %v5076, %v5212
        %v5281 = vadd.f32 %v5077, %v5214
        %v5282 = vadd.f32 %v5078, %v5216
        %v5283 = vadd.f32 %v5079, %v5218
        %v5284 = vadd.f32 %v5080, %v5217
        %v5285 = vld [vmem:[#allocation2 + $0x220] sm:$0xff]
        %v5286 = vld [vmem:[%s9 + $0x14] sm:$0x1]
        %v5287 = vlaneseq
        %v5288 = vshrl.u32 %v5287, 7
        %v5289 = vsub.s32 0, %v5288
        %v5290 = vrot.slane %v5286, %v5289
        %v5291 = vmul.f32 %v1606, %v5290
        %v5292 = vmul.f32 %v1607, %v5290
        %v5293 = vmul.f32 %v1608, %v5290
        %v5294 = vmul.f32 %v1609, %v5290
        %v5295 = vmul.f32 %v1610, %v5290
        %v5296 = vmul.f32 %v1611, %v5290
        %v5297 = vmul.f32 %v1612, %v5290
        %v5298 = vmul.f32 %v1613, %v5290
        %v5299 = vmul.f32 %v1614, %v5290
        %v5300 = vmul.f32 %v1615, %v5290
        %v5301 = vmul.f32 %v1616, %v5290
        %v5302 = vmul.f32 %v1617, %v5290
        %v5303 = vmul.f32 %v1618, %v5290
        %v5304 = vmul.f32 %v1619, %v5290
        %v5305 = vmul.f32 %v1620, %v5290
        %v5306 = vmul.f32 %v1621, %v5290
        %v5307 = vmul.f32 %v1622, %v5290
        %v5308 = vmul.f32 %v1623, %v5290
        %v5309 = vmul.f32 %v1624, %v5290
        %v5310 = vmul.f32 %v1625, %v5290
        %v5311 = vmul.f32 %v1626, %v5290
        %v5312 = vmul.f32 %v1627, %v5290
        %v5313 = vmul.f32 %v1628, %v5290
        %v5314 = vmul.f32 %v1629, %v5290
        %v5315 = vmul.f32 %v1630, %v5290
        %v5316 = vmul.f32 %v1631, %v5290
        %v5317 = vmul.f32 %v1632, %v5290
        %v5318 = vmul.f32 %v1633, %v5290
        %v5319 = vmul.f32 %v1634, %v5290
        %v5320 = vmul.f32 %v2289, %v5290
        %v5321 = vmul.f32 %v3789, %v5290
        %v5322 = vmul.f32 %v5285, %v5290
        %v5355 = vrot.slane %v5291, 4
        %v5356 = vrot.slane %v5292, 4
        %v5357 = vsel %vm2359, %v5355, %v5356
        %v5358 = vrot.slane %v5293, 4
        %v5359 = vsel %vm2359, %v5356, %v5358
        %v5360 = vrot.slane %v5294, 4
        %v5361 = vsel %vm2359, %v5358, %v5360
        %v5362 = vrot.slane %v5295, 4
        %v5363 = vsel %vm2359, %v5360, %v5362
        %v5364 = vrot.slane %v5296, 4
        %v5365 = vsel %vm2359, %v5362, %v5364
        %v5366 = vrot.slane %v5297, 4
        %v5367 = vsel %vm2359, %v5364, %v5366
        %v5368 = vrot.slane %v5298, 4
        %v5369 = vsel %vm2359, %v5366, %v5368
        %v5370 = vrot.slane %v5299, 4
        %v5371 = vsel %vm2359, %v5368, %v5370
        %v5372 = vrot.slane %v5300, 4
        %v5373 = vsel %vm2359, %v5370, %v5372
        %v5374 = vrot.slane %v5301, 4
        %v5375 = vsel %vm2359, %v5372, %v5374
        %v5376 = vrot.slane %v5302, 4
        %v5377 = vsel %vm2359, %v5374, %v5376
        %v5378 = vrot.slane %v5303, 4
        %v5379 = vsel %vm2359, %v5376, %v5378
        %v5380 = vrot.slane %v5304, 4
        %v5381 = vsel %vm2359, %v5378, %v5380
        %v5382 = vrot.slane %v5305, 4
        %v5383 = vsel %vm2359, %v5380, %v5382
        %v5384 = vrot.slane %v5306, 4
        %v5385 = vsel %vm2359, %v5382, %v5384
        %v5386 = vrot.slane %v5307, 4
        %v5387 = vsel %vm2359, %v5384, %v5386
        %v5388 = vrot.slane %v5308, 4
        %v5389 = vsel %vm2359, %v5386, %v5388
        %v5390 = vrot.slane %v5309, 4
        %v5391 = vsel %vm2359, %v5388, %v5390
        %v5392 = vrot.slane %v5310, 4
        %v5393 = vsel %vm2359, %v5390, %v5392
        %v5394 = vrot.slane %v5311, 4
        %v5395 = vsel %vm2359, %v5392, %v5394
        %v5396 = vrot.slane %v5312, 4
        %v5397 = vsel %vm2359, %v5394, %v5396
        %v5398 = vrot.slane %v5313, 4
        %v5399 = vsel %vm2359, %v5396, %v5398
        %v5400 = vrot.slane %v5314, 4
        %v5401 = vsel %vm2359, %v5398, %v5400
        %v5402 = vrot.slane %v5315, 4
        %v5403 = vsel %vm2359, %v5400, %v5402
        %v5404 = vrot.slane %v5316, 4
        %v5405 = vsel %vm2359, %v5402, %v5404
        %v5406 = vrot.slane %v5317, 4
        %v5407 = vsel %vm2359, %v5404, %v5406
        %v5408 = vrot.slane %v5318, 4
        %v5409 = vsel %vm2359, %v5406, %v5408
        %v5410 = vrot.slane %v5319, 4
        %v5411 = vsel %vm2359, %v5408, %v5410
        %v5412 = vrot.slane %v5320, 4
        %v5413 = vsel %vm2359, %v5410, %v5412
        %v5414 = vrot.slane %v5321, 4
        %v5415 = vsel %vm2359, %v5412, %v5414
        %v5416 = vrot.slane %v5322, 4
        %v5417 = vsel %vm2359, %v5414, %v5416
        %v5451 = vadd.f32 %v5252, %v5355
        %v5452 = vadd.f32 %v5253, %v5357
        %v5453 = vadd.f32 %v5254, %v5359
        %v5454 = vadd.f32 %v5255, %v5361
        %v5455 = vadd.f32 %v5256, %v5363
        %v5456 = vadd.f32 %v5257, %v5365
        %v5457 = vadd.f32 %v5258, %v5367
        %v5458 = vadd.f32 %v5259, %v5369
        %v5459 = vadd.f32 %v5260, %v5371
        %v5460 = vadd.f32 %v5261, %v5373
        %v5461 = vadd.f32 %v5262, %v5375
        %v5462 = vadd.f32 %v5263, %v5377
        %v5463 = vadd.f32 %v5264, %v5379
        %v5464 = vadd.f32 %v5265, %v5381
        %v5465 = vadd.f32 %v5266, %v5383
        %v5466 = vadd.f32 %v5267, %v5385
        %v5467 = vadd.f32 %v5268, %v5387
        %v5468 = vadd.f32 %v5269, %v5389
        %v5469 = vadd.f32 %v5270, %v5391
        %v5470 = vadd.f32 %v5271, %v5393
        %v5471 = vadd.f32 %v5272, %v5395
        %v5472 = vadd.f32 %v5273, %v5397
        %v5473 = vadd.f32 %v5274, %v5399
        %v5474 = vadd.f32 %v5275, %v5401
        %v5475 = vadd.f32 %v5276, %v5403
        %v5476 = vadd.f32 %v5277, %v5405
        %v5477 = vadd.f32 %v5278, %v5407
        %v5478 = vadd.f32 %v5279, %v5409
        %v5479 = vadd.f32 %v5280, %v5411
        %v5480 = vadd.f32 %v5281, %v5413
        %v5481 = vadd.f32 %v5282, %v5415
        %v5482 = vadd.f32 %v5283, %v5417
        %v5483 = vadd.f32 %v5284, %v5416
        %v5484 = vld [vmem:[#allocation2 + $0x30] sm:$0xfe]
        %v5485 = vld [vmem:[#allocation2 + $0x230] sm:$0x1]
        %v5486 = vld [vmem:[%s9 + $0x15] sm:$0x1]
        %v5487 = vlaneseq
        %v5488 = vshrl.u32 %v5487, 7
        %v5489 = vsub.s32 0, %v5488
        %v5490 = vrot.slane %v5486, %v5489
        %v5491 = vmul.f32 %v5484, %v5490
        %v5492 = vmul.f32 %v1607, %v5490
        %v5493 = vmul.f32 %v1608, %v5490
        %v5494 = vmul.f32 %v1609, %v5490
        %v5495 = vmul.f32 %v1610, %v5490
        %v5496 = vmul.f32 %v1611, %v5490
        %v5497 = vmul.f32 %v1612, %v5490
        %v5498 = vmul.f32 %v1613, %v5490
        %v5499 = vmul.f32 %v1614, %v5490
        %v5500 = vmul.f32 %v1615, %v5490
        %v5501 = vmul.f32 %v1616, %v5490
        %v5502 = vmul.f32 %v1617, %v5490
        %v5503 = vmul.f32 %v1618, %v5490
        %v5504 = vmul.f32 %v1619, %v5490
        %v5505 = vmul.f32 %v1620, %v5490
        %v5506 = vmul.f32 %v1621, %v5490
        %v5507 = vmul.f32 %v1622, %v5490
        %v5508 = vmul.f32 %v1623, %v5490
        %v5509 = vmul.f32 %v1624, %v5490
        %v5510 = vmul.f32 %v1625, %v5490
        %v5511 = vmul.f32 %v1626, %v5490
        %v5512 = vmul.f32 %v1627, %v5490
        %v5513 = vmul.f32 %v1628, %v5490
        %v5514 = vmul.f32 %v1629, %v5490
        %v5515 = vmul.f32 %v1630, %v5490
        %v5516 = vmul.f32 %v1631, %v5490
        %v5517 = vmul.f32 %v1632, %v5490
        %v5518 = vmul.f32 %v1633, %v5490
        %v5519 = vmul.f32 %v1634, %v5490
        %v5520 = vmul.f32 %v2289, %v5490
        %v5521 = vmul.f32 %v3789, %v5490
        %v5522 = vmul.f32 %v5285, %v5490
        %v5523 = vmul.f32 %v5485, %v5490
        %v5557 = vrot.slane %v5491, 5
        %v5558 = vrot.slane %v5492, 5
        %v5559 = vsel %vm2562, %v5557, %v5558
        %v5560 = vrot.slane %v5493, 5
        %v5561 = vsel %vm2562, %v5558, %v5560
        %v5562 = vrot.slane %v5494, 5
        %v5563 = vsel %vm2562, %v5560, %v5562
        %v5564 = vrot.slane %v5495, 5
        %v5565 = vsel %vm2562, %v5562, %v5564
        %v5566 = vrot.slane %v5496, 5
        %v5567 = vsel %vm2562, %v5564, %v5566
        %v5568 = vrot.slane %v5497, 5
        %v5569 = vsel %vm2562, %v5566, %v5568
        %v5570 = vrot.slane %v5498, 5
        %v5571 = vsel %vm2562, %v5568, %v5570
        %v5572 = vrot.slane %v5499, 5
        %v5573 = vsel %vm2562, %v5570, %v5572
        %v5574 = vrot.slane %v5500, 5
        %v5575 = vsel %vm2562, %v5572, %v5574
        %v5576 = vrot.slane %v5501, 5
        %v5577 = vsel %vm2562, %v5574, %v5576
        %v5578 = vrot.slane %v5502, 5
        %v5579 = vsel %vm2562, %v5576, %v5578
        %v5580 = vrot.slane %v5503, 5
        %v5581 = vsel %vm2562, %v5578, %v5580
        %v5582 = vrot.slane %v5504, 5
        %v5583 = vsel %vm2562, %v5580, %v5582
        %v5584 = vrot.slane %v5505, 5
        %v5585 = vsel %vm2562, %v5582, %v5584
        %v5586 = vrot.slane %v5506, 5
        %v5587 = vsel %vm2562, %v5584, %v5586
        %v5588 = vrot.slane %v5507, 5
        %v5589 = vsel %vm2562, %v5586, %v5588
        %v5590 = vrot.slane %v5508, 5
        %v5591 = vsel %vm2562, %v5588, %v5590
        %v5592 = vrot.slane %v5509, 5
        %v5593 = vsel %vm2562, %v5590, %v5592
        %v5594 = vrot.slane %v5510, 5
        %v5595 = vsel %vm2562, %v5592, %v5594
        %v5596 = vrot.slane %v5511, 5
        %v5597 = vsel %vm2562, %v5594, %v5596
        %v5598 = vrot.slane %v5512, 5
        %v5599 = vsel %vm2562, %v5596, %v5598
        %v5600 = vrot.slane %v5513, 5
        %v5601 = vsel %vm2562, %v5598, %v5600
        %v5602 = vrot.slane %v5514, 5
        %v5603 = vsel %vm2562, %v5600, %v5602
        %v5604 = vrot.slane %v5515, 5
        %v5605 = vsel %vm2562, %v5602, %v5604
        %v5606 = vrot.slane %v5516, 5
        %v5607 = vsel %vm2562, %v5604, %v5606
        %v5608 = vrot.slane %v5517, 5
        %v5609 = vsel %vm2562, %v5606, %v5608
        %v5610 = vrot.slane %v5518, 5
        %v5611 = vsel %vm2562, %v5608, %v5610
        %v5612 = vrot.slane %v5519, 5
        %v5613 = vsel %vm2562, %v5610, %v5612
        %v5614 = vrot.slane %v5520, 5
        %v5615 = vsel %vm2562, %v5612, %v5614
        %v5616 = vrot.slane %v5521, 5
        %v5617 = vsel %vm2562, %v5614, %v5616
        %v5618 = vrot.slane %v5522, 5
        %v5619 = vsel %vm2562, %v5616, %v5618
        %v5620 = vrot.slane %v5523, 5
        %v5621 = vsel %vm2562, %v5618, %v5620
        %v5655 = vadd.f32 %v5451, %v5557
        %v5656 = vadd.f32 %v5452, %v5559
        %v5657 = vadd.f32 %v5453, %v5561
        %v5658 = vadd.f32 %v5454, %v5563
        %v5659 = vadd.f32 %v5455, %v5565
        %v5660 = vadd.f32 %v5456, %v5567
        %v5661 = vadd.f32 %v5457, %v5569
        %v5662 = vadd.f32 %v5458, %v5571
        %v5663 = vadd.f32 %v5459, %v5573
        %v5664 = vadd.f32 %v5460, %v5575
        %v5665 = vadd.f32 %v5461, %v5577
        %v5666 = vadd.f32 %v5462, %v5579
        %v5667 = vadd.f32 %v5463, %v5581
        %v5668 = vadd.f32 %v5464, %v5583
        %v5669 = vadd.f32 %v5465, %v5585
        %v5670 = vadd.f32 %v5466, %v5587
        %v5671 = vadd.f32 %v5467, %v5589
        %v5672 = vadd.f32 %v5468, %v5591
        %v5673 = vadd.f32 %v5469, %v5593
        %v5674 = vadd.f32 %v5470, %v5595
        %v5675 = vadd.f32 %v5471, %v5597
        %v5676 = vadd.f32 %v5472, %v5599
        %v5677 = vadd.f32 %v5473, %v5601
        %v5678 = vadd.f32 %v5474, %v5603
        %v5679 = vadd.f32 %v5475, %v5605
        %v5680 = vadd.f32 %v5476, %v5607
        %v5681 = vadd.f32 %v5477, %v5609
        %v5682 = vadd.f32 %v5478, %v5611
        %v5683 = vadd.f32 %v5479, %v5613
        %v5684 = vadd.f32 %v5480, %v5615
        %v5685 = vadd.f32 %v5481, %v5617
        %v5686 = vadd.f32 %v5482, %v5619
        %v5687 = vadd.f32 %v5483, %v5621
        %v5688 = vld [vmem:[#allocation2 + $0x30] sm:$0xfc]
        %v5689 = vld [vmem:[#allocation2 + $0x230] sm:$0x3]
        %v5690 = vld [vmem:[%s9 + $0x16] sm:$0x1]
        %v5691 = vlaneseq
        %v5692 = vshrl.u32 %v5691, 7
        %v5693 = vsub.s32 0, %v5692
        %v5694 = vrot.slane %v5690, %v5693
        %v5695 = vmul.f32 %v5688, %v5694
        %v5696 = vmul.f32 %v1607, %v5694
        %v5697 = vmul.f32 %v1608, %v5694
        %v5698 = vmul.f32 %v1609, %v5694
        %v5699 = vmul.f32 %v1610, %v5694
        %v5700 = vmul.f32 %v1611, %v5694
        %v5701 = vmul.f32 %v1612, %v5694
        %v5702 = vmul.f32 %v1613, %v5694
        %v5703 = vmul.f32 %v1614, %v5694
        %v5704 = vmul.f32 %v1615, %v5694
        %v5705 = vmul.f32 %v1616, %v5694
        %v5706 = vmul.f32 %v1617, %v5694
        %v5707 = vmul.f32 %v1618, %v5694
        %v5708 = vmul.f32 %v1619, %v5694
        %v5709 = vmul.f32 %v1620, %v5694
        %v5710 = vmul.f32 %v1621, %v5694
        %v5711 = vmul.f32 %v1622, %v5694
        %v5712 = vmul.f32 %v1623, %v5694
        %v5713 = vmul.f32 %v1624, %v5694
        %v5714 = vmul.f32 %v1625, %v5694
        %v5715 = vmul.f32 %v1626, %v5694
        %v5716 = vmul.f32 %v1627, %v5694
        %v5717 = vmul.f32 %v1628, %v5694
        %v5718 = vmul.f32 %v1629, %v5694
        %v5719 = vmul.f32 %v1630, %v5694
        %v5720 = vmul.f32 %v1631, %v5694
        %v5721 = vmul.f32 %v1632, %v5694
        %v5722 = vmul.f32 %v1633, %v5694
        %v5723 = vmul.f32 %v1634, %v5694
        %v5724 = vmul.f32 %v2289, %v5694
        %v5725 = vmul.f32 %v3789, %v5694
        %v5726 = vmul.f32 %v5285, %v5694
        %v5727 = vmul.f32 %v5689, %v5694
        %v5761 = vrot.slane %v5695, 6
        %v5762 = vrot.slane %v5696, 6
        %v5763 = vsel %vm2767, %v5761, %v5762
        %v5764 = vrot.slane %v5697, 6
        %v5765 = vsel %vm2767, %v5762, %v5764
        %v5766 = vrot.slane %v5698, 6
        %v5767 = vsel %vm2767, %v5764, %v5766
        %v5768 = vrot.slane %v5699, 6
        %v5769 = vsel %vm2767, %v5766, %v5768
        %v5770 = vrot.slane %v5700, 6
        %v5771 = vsel %vm2767, %v5768, %v5770
        %v5772 = vrot.slane %v5701, 6
        %v5773 = vsel %vm2767, %v5770, %v5772
        %v5774 = vrot.slane %v5702, 6
        %v5775 = vsel %vm2767, %v5772, %v5774
        %v5776 = vrot.slane %v5703, 6
        %v5777 = vsel %vm2767, %v5774, %v5776
        %v5778 = vrot.slane %v5704, 6
        %v5779 = vsel %vm2767, %v5776, %v5778
        %v5780 = vrot.slane %v5705, 6
        %v5781 = vsel %vm2767, %v5778, %v5780
        %v5782 = vrot.slane %v5706, 6
        %v5783 = vsel %vm2767, %v5780, %v5782
        %v5784 = vrot.slane %v5707, 6
        %v5785 = vsel %vm2767, %v5782, %v5784
        %v5786 = vrot.slane %v5708, 6
        %v5787 = vsel %vm2767, %v5784, %v5786
        %v5788 = vrot.slane %v5709, 6
        %v5789 = vsel %vm2767, %v5786, %v5788
        %v5790 = vrot.slane %v5710, 6
        %v5791 = vsel %vm2767, %v5788, %v5790
        %v5792 = vrot.slane %v5711, 6
        %v5793 = vsel %vm2767, %v5790, %v5792
        %v5794 = vrot.slane %v5712, 6
        %v5795 = vsel %vm2767, %v5792, %v5794
        %v5796 = vrot.slane %v5713, 6
        %v5797 = vsel %vm2767, %v5794, %v5796
        %v5798 = vrot.slane %v5714, 6
        %v5799 = vsel %vm2767, %v5796, %v5798
        %v5800 = vrot.slane %v5715, 6
        %v5801 = vsel %vm2767, %v5798, %v5800
        %v5802 = vrot.slane %v5716, 6
        %v5803 = vsel %vm2767, %v5800, %v5802
        %v5804 = vrot.slane %v5717, 6
        %v5805 = vsel %vm2767, %v5802, %v5804
        %v5806 = vrot.slane %v5718, 6
        %v5807 = vsel %vm2767, %v5804, %v5806
        %v5808 = vrot.slane %v5719, 6
        %v5809 = vsel %vm2767, %v5806, %v5808
        %v5810 = vrot.slane %v5720, 6
        %v5811 = vsel %vm2767, %v5808, %v5810
        %v5812 = vrot.slane %v5721, 6
        %v5813 = vsel %vm2767, %v5810, %v5812
        %v5814 = vrot.slane %v5722, 6
        %v5815 = vsel %vm2767, %v5812, %v5814
        %v5816 = vrot.slane %v5723, 6
        %v5817 = vsel %vm2767, %v5814, %v5816
        %v5818 = vrot.slane %v5724, 6
        %v5819 = vsel %vm2767, %v5816, %v5818
        %v5820 = vrot.slane %v5725, 6
        %v5821 = vsel %vm2767, %v5818, %v5820
        %v5822 = vrot.slane %v5726, 6
        %v5823 = vsel %vm2767, %v5820, %v5822
        %v5824 = vrot.slane %v5727, 6
        %v5825 = vsel %vm2767, %v5822, %v5824
        %v5859 = vadd.f32 %v5655, %v5761
        %v5860 = vadd.f32 %v5656, %v5763
        %v5861 = vadd.f32 %v5657, %v5765
        %v5862 = vadd.f32 %v5658, %v5767
        %v5863 = vadd.f32 %v5659, %v5769
        %v5864 = vadd.f32 %v5660, %v5771
        %v5865 = vadd.f32 %v5661, %v5773
        %v5866 = vadd.f32 %v5662, %v5775
        %v5867 = vadd.f32 %v5663, %v5777
        %v5868 = vadd.f32 %v5664, %v5779
        %v5869 = vadd.f32 %v5665, %v5781
        %v5870 = vadd.f32 %v5666, %v5783
        %v5871 = vadd.f32 %v5667, %v5785
        %v5872 = vadd.f32 %v5668, %v5787
        %v5873 = vadd.f32 %v5669, %v5789
        %v5874 = vadd.f32 %v5670, %v5791
        %v5875 = vadd.f32 %v5671, %v5793
        %v5876 = vadd.f32 %v5672, %v5795
        %v5877 = vadd.f32 %v5673, %v5797
        %v5878 = vadd.f32 %v5674, %v5799
        %v5879 = vadd.f32 %v5675, %v5801
        %v5880 = vadd.f32 %v5676, %v5803
        %v5881 = vadd.f32 %v5677, %v5805
        %v5882 = vadd.f32 %v5678, %v5807
        %v5883 = vadd.f32 %v5679, %v5809
        %v5884 = vadd.f32 %v5680, %v5811
        %v5885 = vadd.f32 %v5681, %v5813
        %v5886 = vadd.f32 %v5682, %v5815
        %v5887 = vadd.f32 %v5683, %v5817
        %v5888 = vadd.f32 %v5684, %v5819
        %v5889 = vadd.f32 %v5685, %v5821
        %v5890 = vadd.f32 %v5686, %v5823
        %v5891 = vadd.f32 %v5687, %v5825
        %v5892 = vld [vmem:[#allocation2 + $0x30] sm:$0xf8]
        %v5893 = vld [vmem:[#allocation2 + $0x230] sm:$0x7]
        %v5894 = vld [vmem:[%s9 + $0x17] sm:$0x1]
        %v5895 = vlaneseq
        %v5896 = vshrl.u32 %v5895, 7
        %v5897 = vsub.s32 0, %v5896
        %v5898 = vrot.slane %v5894, %v5897
        %v5899 = vmul.f32 %v5892, %v5898
        %v5900 = vmul.f32 %v1607, %v5898
        %v5901 = vmul.f32 %v1608, %v5898
        %v5902 = vmul.f32 %v1609, %v5898
        %v5903 = vmul.f32 %v1610, %v5898
        %v5904 = vmul.f32 %v1611, %v5898
        %v5905 = vmul.f32 %v1612, %v5898
        %v5906 = vmul.f32 %v1613, %v5898
        %v5907 = vmul.f32 %v1614, %v5898
        %v5908 = vmul.f32 %v1615, %v5898
        %v5909 = vmul.f32 %v1616, %v5898
        %v5910 = vmul.f32 %v1617, %v5898
        %v5911 = vmul.f32 %v1618, %v5898
        %v5912 = vmul.f32 %v1619, %v5898
        %v5913 = vmul.f32 %v1620, %v5898
        %v5914 = vmul.f32 %v1621, %v5898
        %v5915 = vmul.f32 %v1622, %v5898
        %v5916 = vmul.f32 %v1623, %v5898
        %v5917 = vmul.f32 %v1624, %v5898
        %v5918 = vmul.f32 %v1625, %v5898
        %v5919 = vmul.f32 %v1626, %v5898
        %v5920 = vmul.f32 %v1627, %v5898
        %v5921 = vmul.f32 %v1628, %v5898
        %v5922 = vmul.f32 %v1629, %v5898
        %v5923 = vmul.f32 %v1630, %v5898
        %v5924 = vmul.f32 %v1631, %v5898
        %v5925 = vmul.f32 %v1632, %v5898
        %v5926 = vmul.f32 %v1633, %v5898
        %v5927 = vmul.f32 %v1634, %v5898
        %v5928 = vmul.f32 %v2289, %v5898
        %v5929 = vmul.f32 %v3789, %v5898
        %v5930 = vmul.f32 %v5285, %v5898
        %v5931 = vmul.f32 %v5893, %v5898
        %v5965 = vrot.slane %v5899, 7
        %v5966 = vrot.slane %v5900, 7
        %v5967 = vsel %vm2972, %v5965, %v5966
        %v5968 = vrot.slane %v5901, 7
        %v5969 = vsel %vm2972, %v5966, %v5968
        %v5970 = vrot.slane %v5902, 7
        %v5971 = vsel %vm2972, %v5968, %v5970
        %v5972 = vrot.slane %v5903, 7
        %v5973 = vsel %vm2972, %v5970, %v5972
        %v5974 = vrot.slane %v5904, 7
        %v5975 = vsel %vm2972, %v5972, %v5974
        %v5976 = vrot.slane %v5905, 7
        %v5977 = vsel %vm2972, %v5974, %v5976
        %v5978 = vrot.slane %v5906, 7
        %v5979 = vsel %vm2972, %v5976, %v5978
        %v5980 = vrot.slane %v5907, 7
        %v5981 = vsel %vm2972, %v5978, %v5980
        %v5982 = vrot.slane %v5908, 7
        %v5983 = vsel %vm2972, %v5980, %v5982
        %v5984 = vrot.slane %v5909, 7
        %v5985 = vsel %vm2972, %v5982, %v5984
        %v5986 = vrot.slane %v5910, 7
        %v5987 = vsel %vm2972, %v5984, %v5986
        %v5988 = vrot.slane %v5911, 7
        %v5989 = vsel %vm2972, %v5986, %v5988
        %v5990 = vrot.slane %v5912, 7
        %v5991 = vsel %vm2972, %v5988, %v5990
        %v5992 = vrot.slane %v5913, 7
        %v5993 = vsel %vm2972, %v5990, %v5992
        %v5994 = vrot.slane %v5914, 7
        %v5995 = vsel %vm2972, %v5992, %v5994
        %v5996 = vrot.slane %v5915, 7
        %v5997 = vsel %vm2972, %v5994, %v5996
        %v5998 = vrot.slane %v5916, 7
        %v5999 = vsel %vm2972, %v5996, %v5998
        %v6000 = vrot.slane %v5917, 7
        %v6001 = vsel %vm2972, %v5998, %v6000
        %v6002 = vrot.slane %v5918, 7
        %v6003 = vsel %vm2972, %v6000, %v6002
        %v6004 = vrot.slane %v5919, 7
        %v6005 = vsel %vm2972, %v6002, %v6004
        %v6006 = vrot.slane %v5920, 7
        %v6007 = vsel %vm2972, %v6004, %v6006
        %v6008 = vrot.slane %v5921, 7
        %v6009 = vsel %vm2972, %v6006, %v6008
        %v6010 = vrot.slane %v5922, 7
        %v6011 = vsel %vm2972, %v6008, %v6010
        %v6012 = vrot.slane %v5923, 7
        %v6013 = vsel %vm2972, %v6010, %v6012
        %v6014 = vrot.slane %v5924, 7
        %v6015 = vsel %vm2972, %v6012, %v6014
        %v6016 = vrot.slane %v5925, 7
        %v6017 = vsel %vm2972, %v6014, %v6016
        %v6018 = vrot.slane %v5926, 7
        %v6019 = vsel %vm2972, %v6016, %v6018
        %v6020 = vrot.slane %v5927, 7
        %v6021 = vsel %vm2972, %v6018, %v6020
        %v6022 = vrot.slane %v5928, 7
        %v6023 = vsel %vm2972, %v6020, %v6022
        %v6024 = vrot.slane %v5929, 7
        %v6025 = vsel %vm2972, %v6022, %v6024
        %v6026 = vrot.slane %v5930, 7
        %v6027 = vsel %vm2972, %v6024, %v6026
        %v6028 = vrot.slane %v5931, 7
        %v6029 = vsel %vm2972, %v6026, %v6028
        %v6063 = vadd.f32 %v5859, %v5965
        %v6064 = vadd.f32 %v5860, %v5967
        %v6065 = vadd.f32 %v5861, %v5969
        %v6066 = vadd.f32 %v5862, %v5971
        %v6067 = vadd.f32 %v5863, %v5973
        %v6068 = vadd.f32 %v5864, %v5975
        %v6069 = vadd.f32 %v5865, %v5977
        %v6070 = vadd.f32 %v5866, %v5979
        %v6071 = vadd.f32 %v5867, %v5981
        %v6072 = vadd.f32 %v5868, %v5983
        %v6073 = vadd.f32 %v5869, %v5985
        %v6074 = vadd.f32 %v5870, %v5987
        %v6075 = vadd.f32 %v5871, %v5989
        %v6076 = vadd.f32 %v5872, %v5991
        %v6077 = vadd.f32 %v5873, %v5993
        %v6078 = vadd.f32 %v5874, %v5995
        %v6079 = vadd.f32 %v5875, %v5997
        %v6080 = vadd.f32 %v5876, %v5999
        %v6081 = vadd.f32 %v5877, %v6001
        %v6082 = vadd.f32 %v5878, %v6003
        %v6083 = vadd.f32 %v5879, %v6005
        %v6084 = vadd.f32 %v5880, %v6007
        %v6085 = vadd.f32 %v5881, %v6009
        %v6086 = vadd.f32 %v5882, %v6011
        %v6087 = vadd.f32 %v5883, %v6013
        %v6088 = vadd.f32 %v5884, %v6015
        %v6089 = vadd.f32 %v5885, %v6017
        %v6090 = vadd.f32 %v5886, %v6019
        %v6091 = vadd.f32 %v5887, %v6021
        %v6092 = vadd.f32 %v5888, %v6023
        %v6093 = vadd.f32 %v5889, %v6025
        %v6094 = vadd.f32 %v5890, %v6027
        %v6095 = vadd.f32 %v5891, %v6029
        %v6096 = vld [vmem:[#allocation2 + $0x30] sm:$0xf0]
        %v6097 = vld [vmem:[#allocation2 + $0x230] sm:$0xf]
        %v6098 = vld [vmem:[%s9 + $0x18] sm:$0x1]
        %v6099 = vlaneseq
        %v6100 = vshrl.u32 %v6099, 7
        %v6101 = vsub.s32 0, %v6100
        %v6102 = vrot.slane %v6098, %v6101
        %v6103 = vmul.f32 %v6096, %v6102
        %v6104 = vmul.f32 %v1607, %v6102
        %v6105 = vmul.f32 %v1608, %v6102
        %v6106 = vmul.f32 %v1609, %v6102
        %v6107 = vmul.f32 %v1610, %v6102
        %v6108 = vmul.f32 %v1611, %v6102
        %v6109 = vmul.f32 %v1612, %v6102
        %v6110 = vmul.f32 %v1613, %v6102
        %v6111 = vmul.f32 %v1614, %v6102
        %v6112 = vmul.f32 %v1615, %v6102
        %v6113 = vmul.f32 %v1616, %v6102
        %v6114 = vmul.f32 %v1617, %v6102
        %v6115 = vmul.f32 %v1618, %v6102
        %v6116 = vmul.f32 %v1619, %v6102
        %v6117 = vmul.f32 %v1620, %v6102
        %v6118 = vmul.f32 %v1621, %v6102
        %v6119 = vmul.f32 %v1622, %v6102
        %v6120 = vmul.f32 %v1623, %v6102
        %v6121 = vmul.f32 %v1624, %v6102
        %v6122 = vmul.f32 %v1625, %v6102
        %v6123 = vmul.f32 %v1626, %v6102
        %v6124 = vmul.f32 %v1627, %v6102
        %v6125 = vmul.f32 %v1628, %v6102
        %v6126 = vmul.f32 %v1629, %v6102
        %v6127 = vmul.f32 %v1630, %v6102
        %v6128 = vmul.f32 %v1631, %v6102
        %v6129 = vmul.f32 %v1632, %v6102
        %v6130 = vmul.f32 %v1633, %v6102
        %v6131 = vmul.f32 %v1634, %v6102
        %v6132 = vmul.f32 %v2289, %v6102
        %v6133 = vmul.f32 %v3789, %v6102
        %v6134 = vmul.f32 %v5285, %v6102
        %v6135 = vmul.f32 %v6097, %v6102
        %v6136 = vadd.f32 %v6063, %v6103
        %v6137 = vadd.f32 %v6064, %v6104
        %v6138 = vadd.f32 %v6065, %v6105
        %v6139 = vadd.f32 %v6066, %v6106
        %v6140 = vadd.f32 %v6067, %v6107
        %v6141 = vadd.f32 %v6068, %v6108
        %v6142 = vadd.f32 %v6069, %v6109
        %v6143 = vadd.f32 %v6070, %v6110
        %v6144 = vadd.f32 %v6071, %v6111
        %v6145 = vadd.f32 %v6072, %v6112
        %v6146 = vadd.f32 %v6073, %v6113
        %v6147 = vadd.f32 %v6074, %v6114
        %v6148 = vadd.f32 %v6075, %v6115
        %v6149 = vadd.f32 %v6076, %v6116
        %v6150 = vadd.f32 %v6077, %v6117
        %v6151 = vadd.f32 %v6078, %v6118
        %v6152 = vadd.f32 %v6079, %v6119
        %v6153 = vadd.f32 %v6080, %v6120
        %v6154 = vadd.f32 %v6081, %v6121
        %v6155 = vadd.f32 %v6082, %v6122
        %v6156 = vadd.f32 %v6083, %v6123
        %v6157 = vadd.f32 %v6084, %v6124
        %v6158 = vadd.f32 %v6085, %v6125
        %v6159 = vadd.f32 %v6086, %v6126
        %v6160 = vadd.f32 %v6087, %v6127
        %v6161 = vadd.f32 %v6088, %v6128
        %v6162 = vadd.f32 %v6089, %v6129
        %v6163 = vadd.f32 %v6090, %v6130
        %v6164 = vadd.f32 %v6091, %v6131
        %v6165 = vadd.f32 %v6092, %v6132
        %v6166 = vadd.f32 %v6093, %v6133
        %v6167 = vadd.f32 %v6094, %v6134
        %v6168 = vadd.f32 %v6095, %v6135
        %v6169 = vlaneseq
        %v6170 = vand.u32 %v6169, 127
        %v6171 = vadd.s32 %v6170, 128
        %v6172 = vlaneseq
        %v6173 = vshrl.u32 %v6172, 7
        %v6174 = vadd.s32 %v6173, 8
        %v6175 = vadd.s32 %v6173, 16
        %v6176 = vadd.s32 %v6173, 24
        %v6177 = vadd.s32 %v6173, 32
        %v6178 = vadd.s32 %v6173, 40
        %v6179 = vadd.s32 %v6173, 48
        %v6180 = vadd.s32 %v6173, 56
        %v6181 = vadd.s32 %v6173, 64
        %v6182 = vadd.s32 %v6173, 72
        %v6183 = vadd.s32 %v6173, 80
        %v6184 = vadd.s32 %v6173, 88
        %v6185 = vadd.s32 %v6173, 96
        %v6186 = vadd.s32 %v6173, 104
        %v6187 = vadd.s32 %v6173, 112
        %v6188 = vadd.s32 %v6173, 120
        %v6189 = vmul.u32 %v6173, 2
        %v6190 = vmul.u32 %v6174, 2
        %v6191 = vmul.u32 %v6175, 2
        %v6192 = vmul.u32 %v6176, 2
        %v6193 = vmul.u32 %v6177, 2
        %v6194 = vmul.u32 %v6178, 2
        %v6195 = vmul.u32 %v6179, 2
        %v6196 = vmul.u32 %v6180, 2
        %v6197 = vmul.u32 %v6181, 2
        %v6198 = vmul.u32 %v6182, 2
        %v6199 = vmul.u32 %v6183, 2
        %v6200 = vmul.u32 %v6184, 2
        %v6201 = vmul.u32 %v6185, 2
        %v6202 = vmul.u32 %v6186, 2
        %v6203 = vmul.u32 %v6187, 2
        %v6204 = vmul.u32 %v6188, 2
        %v6205 = vsub.s32 %v6170, %v6189
        %v6206 = vsub.s32 %v6171, %v6189
        %v6207 = vsub.s32 %v6170, %v6190
        %v6208 = vsub.s32 %v6171, %v6190
        %v6209 = vsub.s32 %v6170, %v6191
        %v6210 = vsub.s32 %v6171, %v6191
        %v6211 = vsub.s32 %v6170, %v6192
        %v6212 = vsub.s32 %v6171, %v6192
        %v6213 = vsub.s32 %v6170, %v6193
        %v6214 = vsub.s32 %v6171, %v6193
        %v6215 = vsub.s32 %v6170, %v6194
        %v6216 = vsub.s32 %v6171, %v6194
        %v6217 = vsub.s32 %v6170, %v6195
        %v6218 = vsub.s32 %v6171, %v6195
        %v6219 = vsub.s32 %v6170, %v6196
        %v6220 = vsub.s32 %v6171, %v6196
        %v6221 = vsub.s32 %v6170, %v6197
        %v6222 = vsub.s32 %v6171, %v6197
        %v6223 = vsub.s32 %v6170, %v6198
        %v6224 = vsub.s32 %v6171, %v6198
        %v6225 = vsub.s32 %v6170, %v6199
        %v6226 = vsub.s32 %v6171, %v6199
        %v6227 = vsub.s32 %v6170, %v6200
        %v6228 = vsub.s32 %v6171, %v6200
        %v6229 = vsub.s32 %v6170, %v6201
        %v6230 = vsub.s32 %v6171, %v6201
        %v6231 = vsub.s32 %v6170, %v6202
        %v6232 = vsub.s32 %v6171, %v6202
        %v6233 = vsub.s32 %v6170, %v6203
        %v6234 = vsub.s32 %v6171, %v6203
        %v6235 = vsub.s32 %v6170, %v6204
        %v6236 = vsub.s32 %v6171, %v6204
        %vm6237 = vcmp.eq.s32.totalorder %v6205, 0
        %vm6238 = vcmp.eq.s32.totalorder %v6206, 0
        %vm6239 = vcmp.eq.s32.totalorder %v6207, 0
        %vm6240 = vcmp.eq.s32.totalorder %v6208, 0
        %vm6241 = vcmp.eq.s32.totalorder %v6209, 0
        %vm6242 = vcmp.eq.s32.totalorder %v6210, 0
        %vm6243 = vcmp.eq.s32.totalorder %v6211, 0
        %vm6244 = vcmp.eq.s32.totalorder %v6212, 0
        %vm6245 = vcmp.eq.s32.totalorder %v6213, 0
        %vm6246 = vcmp.eq.s32.totalorder %v6214, 0
        %vm6247 = vcmp.eq.s32.totalorder %v6215, 0
        %vm6248 = vcmp.eq.s32.totalorder %v6216, 0
        %vm6249 = vcmp.eq.s32.totalorder %v6217, 0
        %vm6250 = vcmp.eq.s32.totalorder %v6218, 0
        %vm6251 = vcmp.eq.s32.totalorder %v6219, 0
        %vm6252 = vcmp.eq.s32.totalorder %v6220, 0
        %vm6253 = vcmp.eq.s32.totalorder %v6221, 0
        %vm6254 = vcmp.eq.s32.totalorder %v6222, 0
        %vm6255 = vcmp.eq.s32.totalorder %v6223, 0
        %vm6256 = vcmp.eq.s32.totalorder %v6224, 0
        %vm6257 = vcmp.eq.s32.totalorder %v6225, 0
        %vm6258 = vcmp.eq.s32.totalorder %v6226, 0
        %vm6259 = vcmp.eq.s32.totalorder %v6227, 0
        %vm6260 = vcmp.eq.s32.totalorder %v6228, 0
        %vm6261 = vcmp.eq.s32.totalorder %v6229, 0
        %vm6262 = vcmp.eq.s32.totalorder %v6230, 0
        %vm6263 = vcmp.eq.s32.totalorder %v6231, 0
        %vm6264 = vcmp.eq.s32.totalorder %v6232, 0
        %vm6265 = vcmp.eq.s32.totalorder %v6233, 0
        %vm6266 = vcmp.eq.s32.totalorder %v6234, 0
        %vm6267 = vcmp.eq.s32.totalorder %v6235, 0
        %vm6268 = vcmp.eq.s32.totalorder %v6236, 0
        %v6269 = vsel %vm6237, 1, 0
        %v6270 = vsel %vm6238, 1, 0
        %v6271 = vsel %vm6239, 1, 0
        %v6272 = vsel %vm6240, 1, 0
        %v6273 = vsel %vm6241, 1, 0
        %v6274 = vsel %vm6242, 1, 0
        %v6275 = vsel %vm6243, 1, 0
        %v6276 = vsel %vm6244, 1, 0
        %v6277 = vsel %vm6245, 1, 0
        %v6278 = vsel %vm6246, 1, 0
        %v6279 = vsel %vm6247, 1, 0
        %v6280 = vsel %vm6248, 1, 0
        %v6281 = vsel %vm6249, 1, 0
        %v6282 = vsel %vm6250, 1, 0
        %v6283 = vsel %vm6251, 1, 0
        %v6284 = vsel %vm6252, 1, 0
        %v6285 = vsel %vm6253, 1, 0
        %v6286 = vsel %vm6254, 1, 0
        %v6287 = vsel %vm6255, 1, 0
        %v6288 = vsel %vm6256, 1, 0
        %v6289 = vsel %vm6257, 1, 0
        %v6290 = vsel %vm6258, 1, 0
        %v6291 = vsel %vm6259, 1, 0
        %v6292 = vsel %vm6260, 1, 0
        %v6293 = vsel %vm6261, 1, 0
        %v6294 = vsel %vm6262, 1, 0
        %v6295 = vsel %vm6263, 1, 0
        %v6296 = vsel %vm6264, 1, 0
        %v6297 = vsel %vm6265, 1, 0
        %v6298 = vsel %vm6266, 1, 0
        %v6299 = vsel %vm6267, 1, 0
        %v6300 = vsel %vm6268, 1, 0
        %v6301 = vcvt.s32.f32 %v6269
        %v6302 = vcvt.s32.f32 %v6270
        %v6303 = vcvt.s32.f32 %v6271
        %v6304 = vcvt.s32.f32 %v6272
        %v6305 = vcvt.s32.f32 %v6273
        %v6306 = vcvt.s32.f32 %v6274
        %v6307 = vcvt.s32.f32 %v6275
        %v6308 = vcvt.s32.f32 %v6276
        %v6309 = vcvt.s32.f32 %v6277
        %v6310 = vcvt.s32.f32 %v6278
        %v6311 = vcvt.s32.f32 %v6279
        %v6312 = vcvt.s32.f32 %v6280
        %v6313 = vcvt.s32.f32 %v6281
        %v6314 = vcvt.s32.f32 %v6282
        %v6315 = vcvt.s32.f32 %v6283
        %v6316 = vcvt.s32.f32 %v6284
        %v6317 = vcvt.s32.f32 %v6285
        %v6318 = vcvt.s32.f32 %v6286
        %v6319 = vcvt.s32.f32 %v6287
        %v6320 = vcvt.s32.f32 %v6288
        %v6321 = vcvt.s32.f32 %v6289
        %v6322 = vcvt.s32.f32 %v6290
        %v6323 = vcvt.s32.f32 %v6291
        %v6324 = vcvt.s32.f32 %v6292
        %v6325 = vcvt.s32.f32 %v6293
        %v6326 = vcvt.s32.f32 %v6294
        %v6327 = vcvt.s32.f32 %v6295
        %v6328 = vcvt.s32.f32 %v6296
        %v6329 = vcvt.s32.f32 %v6297
        %v6330 = vcvt.s32.f32 %v6298
        %v6331 = vcvt.s32.f32 %v6299
        %v6332 = vcvt.s32.f32 %v6300
        %v6366 = vrot.slane %v6136, 4
        %v6367 = vrot.slane %v6137, 4
        %v6368 = vsel %vm2359, %v6366, %v6367
        %v6369 = vrot.slane %v6138, 4
        %v6370 = vsel %vm2359, %v6367, %v6369
        %v6371 = vrot.slane %v6139, 4
        %v6372 = vsel %vm2359, %v6369, %v6371
        %v6373 = vrot.slane %v6140, 4
        %v6374 = vsel %vm2359, %v6371, %v6373
        %v6375 = vrot.slane %v6141, 4
        %v6376 = vsel %vm2359, %v6373, %v6375
        %v6377 = vrot.slane %v6142, 4
        %v6378 = vsel %vm2359, %v6375, %v6377
        %v6379 = vrot.slane %v6143, 4
        %v6380 = vsel %vm2359, %v6377, %v6379
        %v6381 = vrot.slane %v6144, 4
        %v6382 = vsel %vm2359, %v6379, %v6381
        %v6383 = vrot.slane %v6145, 4
        %v6384 = vsel %vm2359, %v6381, %v6383
        %v6385 = vrot.slane %v6146, 4
        %v6386 = vsel %vm2359, %v6383, %v6385
        %v6387 = vrot.slane %v6147, 4
        %v6388 = vsel %vm2359, %v6385, %v6387
        %v6389 = vrot.slane %v6148, 4
        %v6390 = vsel %vm2359, %v6387, %v6389
        %v6391 = vrot.slane %v6149, 4
        %v6392 = vsel %vm2359, %v6389, %v6391
        %v6393 = vrot.slane %v6150, 4
        %v6394 = vsel %vm2359, %v6391, %v6393
        %v6395 = vrot.slane %v6151, 4
        %v6396 = vsel %vm2359, %v6393, %v6395
        %v6397 = vrot.slane %v6152, 4
        %v6398 = vsel %vm2359, %v6395, %v6397
        %v6399 = vrot.slane %v6153, 4
        %v6400 = vsel %vm2359, %v6397, %v6399
        %v6401 = vrot.slane %v6154, 4
        %v6402 = vsel %vm2359, %v6399, %v6401
        %v6403 = vrot.slane %v6155, 4
        %v6404 = vsel %vm2359, %v6401, %v6403
        %v6405 = vrot.slane %v6156, 4
        %v6406 = vsel %vm2359, %v6403, %v6405
        %v6407 = vrot.slane %v6157, 4
        %v6408 = vsel %vm2359, %v6405, %v6407
        %v6409 = vrot.slane %v6158, 4
        %v6410 = vsel %vm2359, %v6407, %v6409
        %v6411 = vrot.slane %v6159, 4
        %v6412 = vsel %vm2359, %v6409, %v6411
        %v6413 = vrot.slane %v6160, 4
        %v6414 = vsel %vm2359, %v6411, %v6413
        %v6415 = vrot.slane %v6161, 4
        %v6416 = vsel %vm2359, %v6413, %v6415
        %v6417 = vrot.slane %v6162, 4
        %v6418 = vsel %vm2359, %v6415, %v6417
        %v6419 = vrot.slane %v6163, 4
        %v6420 = vsel %vm2359, %v6417, %v6419
        %v6421 = vrot.slane %v6164, 4
        %v6422 = vsel %vm2359, %v6419, %v6421
        %v6423 = vrot.slane %v6165, 4
        %v6424 = vsel %vm2359, %v6421, %v6423
        %v6425 = vrot.slane %v6166, 4
        %v6426 = vsel %vm2359, %v6423, %v6425
        %v6427 = vrot.slane %v6167, 4
        %v6428 = vsel %vm2359, %v6425, %v6427
        %v6429 = vrot.slane %v6168, 4
        %v6430 = vsel %vm2359, %v6427, %v6429
        %6463 = vmatprep.subr.mxu0 0.0
        %6464 = vmatpush1.msra.mxu0 %v6398
        %6465 = vmatprep.subr.mxu0 0.0
        %6466 = vmatpush1.msra.mxu0 %v6396
        %6467 = vmatprep.subr.mxu0 0.0
        %6468 = vmatpush1.msra.mxu0 %v6394
        %6469 = vmatprep.subr.mxu0 0.0
        %6470 = vmatpush1.msra.mxu0 %v6392
        %6471 = vmatprep.subr.mxu0 0.0
        %6472 = vmatpush1.msra.mxu0 %v6390
        %6473 = vmatprep.subr.mxu0 0.0
        %6474 = vmatpush1.msra.mxu0 %v6388
        %6475 = vmatprep.subr.mxu0 0.0
        %6476 = vmatpush1.msra.mxu0 %v6386
        %6477 = vmatprep.subr.mxu0 0.0
        %6478 = vmatpush1.msra.mxu0 %v6384
        %6479 = vmatprep.subr.mxu0 0.0
        %6480 = vmatpush1.msra.mxu0 %v6382
        %6481 = vmatprep.subr.mxu0 0.0
        %6482 = vmatpush1.msra.mxu0 %v6380
        %6483 = vmatprep.subr.mxu0 0.0
        %6484 = vmatpush1.msra.mxu0 %v6378
        %6485 = vmatprep.subr.mxu0 0.0
        %6486 = vmatpush1.msra.mxu0 %v6376
        %6487 = vmatprep.subr.mxu0 0.0
        %6488 = vmatpush1.msra.mxu0 %v6374
        %6489 = vmatprep.subr.mxu0 0.0
        %6490 = vmatpush1.msra.mxu0 %v6372
        %6491 = vmatprep.subr.mxu0 0.0
        %6492 = vmatpush1.msra.mxu0 %v6370
        %6493 = vmatprep.subr.mxu0 0.0
        %6494 = vmatpush1.msra.mxu0 %v6368
        %6495 = vmatprep.subr.mxu0 0.0
        %6496 = vmatpush2.msra.mxu0 %v6430
        %6497 = vmatprep.subr.mxu0 0.0
        %6498 = vmatpush2.msra.mxu0 %v6428
        %6499 = vmatprep.subr.mxu0 0.0
        %6500 = vmatpush2.msra.mxu0 %v6426
        %6501 = vmatprep.subr.mxu0 0.0
        %6502 = vmatpush2.msra.mxu0 %v6424
        %6503 = vmatprep.subr.mxu0 0.0
        %6504 = vmatpush2.msra.mxu0 %v6422
        %6505 = vmatprep.subr.mxu0 0.0
        %6506 = vmatpush2.msra.mxu0 %v6420
        %6507 = vmatprep.subr.mxu0 0.0
        %6508 = vmatpush2.msra.mxu0 %v6418
        %6509 = vmatprep.subr.mxu0 0.0
        %6510 = vmatpush2.msra.mxu0 %v6416
        %6511 = vmatprep.subr.mxu0 0.0
        %6512 = vmatpush2.msra.mxu0 %v6414
        %6513 = vmatprep.subr.mxu0 0.0
        %6514 = vmatpush2.msra.mxu0 %v6412
        %6515 = vmatprep.subr.mxu0 0.0
        %6516 = vmatpush2.msra.mxu0 %v6410
        %6517 = vmatprep.subr.mxu0 0.0
        %6518 = vmatpush2.msra.mxu0 %v6408
        %6519 = vmatprep.subr.mxu0 0.0
        %6520 = vmatpush2.msra.mxu0 %v6406
        %6521 = vmatprep.subr.mxu0 0.0
        %6522 = vmatpush2.msra.mxu0 %v6404
        %6523 = vmatprep.subr.mxu0 0.0
        %6524 = vmatpush2.msra.mxu0 %v6402
        %6525 = vmatprep.subr.mxu0 0.0
        %6526 = vmatpush2.msra.mxu0 %v6400
        %6527 = vmatprep.mubr.f32.mxu0 %v6302
        %6528 = vmatmul.mubr.f32.gmra.mxu0 %v6301
        %v6529 = vpop.f32.mrf.mxu0
        %v6530 = vadd.f32 0.0, %v6529
        %v6531 = vpop.f32.mrf.mxu0
        %6532 = vmatprep.mubr.f32.mxu0 %v6304
        %6533 = vmatmul.mubr.f32.gmra.mxu0 %v6303
        %v6534 = vpop.f32.mrf.mxu0
        %v6535 = vadd.f32 0.0, %v6534
        %v6536 = vpop.f32.mrf.mxu0
        %6537 = vmatprep.mubr.f32.mxu0 %v6306
        %6538 = vmatmul.mubr.f32.gmra.mxu0 %v6305
        %v6539 = vpop.f32.mrf.mxu0
        %v6540 = vadd.f32 0.0, %v6539
        %v6541 = vpop.f32.mrf.mxu0
        %6542 = vmatprep.mubr.f32.mxu0 %v6308
        %6543 = vmatmul.mubr.f32.gmra.mxu0 %v6307
        %v6544 = vpop.f32.mrf.mxu0
        %v6545 = vadd.f32 0.0, %v6544
        %v6546 = vpop.f32.mrf.mxu0
        %6547 = vmatprep.mubr.f32.mxu0 %v6310
        %6548 = vmatmul.mubr.f32.gmra.mxu0 %v6309
        %v6549 = vpop.f32.mrf.mxu0
        %v6550 = vadd.f32 0.0, %v6549
        %v6551 = vpop.f32.mrf.mxu0
        %6552 = vmatprep.mubr.f32.mxu0 %v6312
        %6553 = vmatmul.mubr.f32.gmra.mxu0 %v6311
        %v6554 = vpop.f32.mrf.mxu0
        %v6555 = vadd.f32 0.0, %v6554
        %v6556 = vpop.f32.mrf.mxu0
        %6557 = vmatprep.mubr.f32.mxu0 %v6314
        %6558 = vmatmul.mubr.f32.gmra.mxu0 %v6313
        %v6559 = vpop.f32.mrf.mxu0
        %v6560 = vadd.f32 0.0, %v6559
        %v6561 = vpop.f32.mrf.mxu0
        %6562 = vmatprep.mubr.f32.mxu0 %v6316
        %6563 = vmatmul.mubr.f32.gmra.mxu0 %v6315
        %v6564 = vpop.f32.mrf.mxu0
        %v6565 = vadd.f32 0.0, %v6564
        %v6566 = vpop.f32.mrf.mxu0
        %6567 = vmatprep.mubr.f32.mxu0 %v6318
        %6568 = vmatmul.mubr.f32.gmra.mxu0 %v6317
        %v6569 = vpop.f32.mrf.mxu0
        %v6570 = vadd.f32 0.0, %v6569
        %v6571 = vpop.f32.mrf.mxu0
        %6572 = vmatprep.mubr.f32.mxu0 %v6320
        %6573 = vmatmul.mubr.f32.gmra.mxu0 %v6319
        %v6574 = vpop.f32.mrf.mxu0
        %v6575 = vadd.f32 0.0, %v6574
        %v6576 = vpop.f32.mrf.mxu0
        %6577 = vmatprep.mubr.f32.mxu0 %v6322
        %6578 = vmatmul.mubr.f32.gmra.mxu0 %v6321
        %v6579 = vpop.f32.mrf.mxu0
        %v6580 = vadd.f32 0.0, %v6579
        %v6581 = vpop.f32.mrf.mxu0
        %6582 = vmatprep.mubr.f32.mxu0 %v6324
        %6583 = vmatmul.mubr.f32.gmra.mxu0 %v6323
        %v6584 = vpop.f32.mrf.mxu0
        %v6585 = vadd.f32 0.0, %v6584
        %v6586 = vpop.f32.mrf.mxu0
        %6587 = vmatprep.mubr.f32.mxu0 %v6326
        %6588 = vmatmul.mubr.f32.gmra.mxu0 %v6325
        %v6589 = vpop.f32.mrf.mxu0
        %v6590 = vadd.f32 0.0, %v6589
        %v6591 = vpop.f32.mrf.mxu0
        %6592 = vmatprep.mubr.f32.mxu0 %v6328
        %6593 = vmatmul.mubr.f32.gmra.mxu0 %v6327
        %v6594 = vpop.f32.mrf.mxu0
        %v6595 = vadd.f32 0.0, %v6594
        %v6596 = vpop.f32.mrf.mxu0
        %6597 = vmatprep.mubr.f32.mxu0 %v6330
        %6598 = vmatmul.mubr.f32.gmra.mxu0 %v6329
        %v6599 = vpop.f32.mrf.mxu0
        %v6600 = vadd.f32 0.0, %v6599
        %v6601 = vpop.f32.mrf.mxu0
        %6602 = vmatprep.mubr.f32.mxu0 %v6332
        %6603 = vmatmul.mubr.f32.gmra.mxu0 %v6331
        %v6604 = vpop.f32.mrf.mxu0
        %v6605 = vadd.f32 0.0, %v6604
        %v6606 = vpop.f32.mrf.mxu0
        %6607 = vdwg.mxu0
        %v6608 = vld [vmem:[%s13] sm:$0x1]
        %v6610 = vlaneseq
        %v6611 = vshrl.u32 %v6610, 7
        %v6612 = vsub.s32 0, %v6611
        %v6613 = vrot.slane %v6608, %v6612
        %v6615 = vmul.f32 %v6530, %v6613
        %v6616 = vmul.f32 %v6535, %v6613
        %v6617 = vmul.f32 %v6540, %v6613
        %v6618 = vmul.f32 %v6545, %v6613
        %v6619 = vmul.f32 %v6550, %v6613
        %v6620 = vmul.f32 %v6555, %v6613
        %v6621 = vmul.f32 %v6560, %v6613
        %v6622 = vmul.f32 %v6565, %v6613
        %v6623 = vmul.f32 %v6570, %v6613
        %v6624 = vmul.f32 %v6575, %v6613
        %v6625 = vmul.f32 %v6580, %v6613
        %v6626 = vmul.f32 %v6585, %v6613
        %v6627 = vmul.f32 %v6590, %v6613
        %v6628 = vmul.f32 %v6595, %v6613
        %v6629 = vmul.f32 %v6600, %v6613
        %v6630 = vmul.f32 %v6605, %v6613
        %v6631 = vld [vmem:[%s15] sm:$0x1]
        %v6633 = vlaneseq
        %v6634 = vshrl.u32 %v6633, 7
        %v6635 = vsub.s32 0, %v6634
        %v6636 = vrot.slane %v6631, %v6635
        %v6638 = vadd.f32 %v6615, %v6636
        %v6639 = vadd.f32 %v6616, %v6636
        %v6640 = vadd.f32 %v6617, %v6636
        %v6641 = vadd.f32 %v6618, %v6636
        %v6642 = vadd.f32 %v6619, %v6636
        %v6643 = vadd.f32 %v6620, %v6636
        %v6644 = vadd.f32 %v6621, %v6636
        %v6645 = vadd.f32 %v6622, %v6636
        %v6646 = vadd.f32 %v6623, %v6636
        %v6647 = vadd.f32 %v6624, %v6636
        %v6648 = vadd.f32 %v6625, %v6636
        %v6649 = vadd.f32 %v6626, %v6636
        %v6650 = vadd.f32 %v6627, %v6636
        %v6651 = vadd.f32 %v6628, %v6636
        %v6652 = vadd.f32 %v6629, %v6636
        %v6653 = vadd.f32 %v6630, %v6636
        %v6654 = vld [vmem:[%s11] sm:$0xff]
        %v6655 = vld [vmem:[%s11 + $0x8] sm:$0xff]
        %v6656 = vld [vmem:[%s11 + $0x10] sm:$0xff]
        %v6657 = vld [vmem:[%s11 + $0x18] sm:$0xff]
        %v6658 = vld [vmem:[%s11 + $0x20] sm:$0xff]
        %v6659 = vld [vmem:[%s11 + $0x28] sm:$0xff]
        %v6660 = vld [vmem:[%s11 + $0x30] sm:$0xff]
        %v6661 = vld [vmem:[%s11 + $0x38] sm:$0xff]
        %v6662 = vld [vmem:[%s11 + $0x40] sm:$0xff]
        %v6663 = vld [vmem:[%s11 + $0x48] sm:$0xff]
        %v6664 = vld [vmem:[%s11 + $0x50] sm:$0xff]
        %v6665 = vld [vmem:[%s11 + $0x58] sm:$0xff]
        %v6666 = vld [vmem:[%s11 + $0x60] sm:$0xff]
        %v6667 = vld [vmem:[%s11 + $0x68] sm:$0xff]
        %v6668 = vld [vmem:[%s11 + $0x70] sm:$0xff]
        %v6669 = vld [vmem:[%s11 + $0x78] sm:$0xff]
        %v6670 = vld [vmem:[%s11 + $0x80] sm:$0xff]
        %v6671 = vld [vmem:[%s11 + $0x88] sm:$0xff]
        %v6672 = vld [vmem:[%s11 + $0x90] sm:$0xff]
        %v6673 = vld [vmem:[%s11 + $0x98] sm:$0xff]
        %v6674 = vld [vmem:[%s11 + $0xa0] sm:$0xff]
        %v6675 = vld [vmem:[%s11 + $0xa8] sm:$0xff]
        %v6676 = vld [vmem:[%s11 + $0xb0] sm:$0xff]
        %v6677 = vld [vmem:[%s11 + $0xb8] sm:$0xff]
        %v6678 = vld [vmem:[%s11 + $0xc0] sm:$0xff]
        %v6679 = vld [vmem:[%s11 + $0xc8] sm:$0xff]
        %v6680 = vld [vmem:[%s11 + $0xd0] sm:$0xff]
        %v6681 = vld [vmem:[%s11 + $0xd8] sm:$0xff]
        %v6682 = vld [vmem:[%s11 + $0xe0] sm:$0xff]
        %v6683 = vld [vmem:[%s11 + $0xe8] sm:$0xff]
        %v6684 = vld [vmem:[%s11 + $0xf0] sm:$0xff]
        %v6685 = vld [vmem:[%s11 + $0xf8] sm:$0xff]
        %6686 = vmatprep.subr.mxu0 %v6685
        %6687 = vmatpush1.msra.mxu0 %v6684
        %6688 = vmatprep.subr.mxu0 %v6683
        %6689 = vmatpush1.msra.mxu0 %v6682
        %6690 = vmatprep.subr.mxu0 %v6681
        %6691 = vmatpush1.msra.mxu0 %v6680
        %6692 = vmatprep.subr.mxu0 %v6679
        %6693 = vmatpush1.msra.mxu0 %v6678
        %6694 = vmatprep.subr.mxu0 %v6677
        %6695 = vmatpush1.msra.mxu0 %v6676
        %6696 = vmatprep.subr.mxu0 %v6675
        %6697 = vmatpush1.msra.mxu0 %v6674
        %6698 = vmatprep.subr.mxu0 %v6673
        %6699 = vmatpush1.msra.mxu0 %v6672
        %6700 = vmatprep.subr.mxu0 %v6671
        %6701 = vmatpush1.msra.mxu0 %v6670
        %6702 = vmatprep.subr.mxu0 %v6669
        %6703 = vmatpush1.msra.mxu0 %v6668
        %6704 = vmatprep.subr.mxu0 %v6667
        %6705 = vmatpush1.msra.mxu0 %v6666
        %6706 = vmatprep.subr.mxu0 %v6665
        %6707 = vmatpush1.msra.mxu0 %v6664
        %6708 = vmatprep.subr.mxu0 %v6663
        %6709 = vmatpush1.msra.mxu0 %v6662
        %6710 = vmatprep.subr.mxu0 %v6661
        %6711 = vmatpush1.msra.mxu0 %v6660
        %6712 = vmatprep.subr.mxu0 %v6659
        %6713 = vmatpush1.msra.mxu0 %v6658
        %6714 = vmatprep.subr.mxu0 %v6657
        %6715 = vmatpush1.msra.mxu0 %v6656
        %6716 = vmatprep.subr.mxu0 %v6655
        %6717 = vmatpush1.msra.mxu0 %v6654
        %6718 = vmatprep.subr.mxu0 0.0
        %6719 = vmatpush2.msra.mxu0 0.0
        %6720 = vmatprep.subr.mxu0 0.0
        %6721 = vmatpush2.msra.mxu0 0.0
        %6722 = vmatprep.subr.mxu0 0.0
        %6723 = vmatpush2.msra.mxu0 0.0
        %6724 = vmatprep.subr.mxu0 0.0
        %6725 = vmatpush2.msra.mxu0 0.0
        %6726 = vmatprep.subr.mxu0 0.0
        %6727 = vmatpush2.msra.mxu0 0.0
        %6728 = vmatprep.subr.mxu0 0.0
        %6729 = vmatpush2.msra.mxu0 0.0
        %6730 = vmatprep.subr.mxu0 0.0
        %6731 = vmatpush2.msra.mxu0 0.0
        %6732 = vmatprep.subr.mxu0 0.0
        %6733 = vmatpush2.msra.mxu0 0.0
        %6734 = vmatprep.subr.mxu0 0.0
        %6735 = vmatpush2.msra.mxu0 0.0
        %6736 = vmatprep.subr.mxu0 0.0
        %6737 = vmatpush2.msra.mxu0 0.0
        %6738 = vmatprep.subr.mxu0 0.0
        %6739 = vmatpush2.msra.mxu0 0.0
        %6740 = vmatprep.subr.mxu0 0.0
        %6741 = vmatpush2.msra.mxu0 0.0
        %6742 = vmatprep.subr.mxu0 0.0
        %6743 = vmatpush2.msra.mxu0 0.0
        %6744 = vmatprep.subr.mxu0 0.0
        %6745 = vmatpush2.msra.mxu0 0.0
        %6746 = vmatprep.subr.mxu0 0.0
        %6747 = vmatpush2.msra.mxu0 0.0
        %6748 = vmatprep.subr.mxu0 0.0
        %6749 = vmatpush2.msra.mxu0 0.0
        %6750 = vmatprep.mubr.f32.mxu0 0.0
        %6751 = vmatmul.mubr.f32.gmra.mxu0 %v6638
        %v6752 = vpop.f32.mrf.mxu0
        %v6753 = vadd.f32 0.0, %v6752
        %v6754 = vpop.f32.mrf.mxu0
        %v6755 = vadd.f32 0.0, %v6754
        %6756 = vmatprep.mubr.f32.mxu0 0.0
        %6757 = vmatmul.mubr.f32.gmra.mxu0 %v6639
        %v6758 = vpop.f32.mrf.mxu0
        %v6759 = vadd.f32 0.0, %v6758
        %v6760 = vpop.f32.mrf.mxu0
        %v6761 = vadd.f32 0.0, %v6760
        %6762 = vmatprep.mubr.f32.mxu0 0.0
        %6763 = vmatmul.mubr.f32.gmra.mxu0 %v6640
        %v6764 = vpop.f32.mrf.mxu0
        %v6765 = vadd.f32 0.0, %v6764
        %v6766 = vpop.f32.mrf.mxu0
        %v6767 = vadd.f32 0.0, %v6766
        %6768 = vmatprep.mubr.f32.mxu0 0.0
        %6769 = vmatmul.mubr.f32.gmra.mxu0 %v6641
        %v6770 = vpop.f32.mrf.mxu0
        %v6771 = vadd.f32 0.0, %v6770
        %v6772 = vpop.f32.mrf.mxu0
        %v6773 = vadd.f32 0.0, %v6772
        %6774 = vmatprep.mubr.f32.mxu0 0.0
        %6775 = vmatmul.mubr.f32.gmra.mxu0 %v6642
        %v6776 = vpop.f32.mrf.mxu0
        %v6777 = vadd.f32 0.0, %v6776
        %v6778 = vpop.f32.mrf.mxu0
        %v6779 = vadd.f32 0.0, %v6778
        %6780 = vmatprep.mubr.f32.mxu0 0.0
        %6781 = vmatmul.mubr.f32.gmra.mxu0 %v6643
        %v6782 = vpop.f32.mrf.mxu0
        %v6783 = vadd.f32 0.0, %v6782
        %v6784 = vpop.f32.mrf.mxu0
        %v6785 = vadd.f32 0.0, %v6784
        %6786 = vmatprep.mubr.f32.mxu0 0.0
        %6787 = vmatmul.mubr.f32.gmra.mxu0 %v6644
        %v6788 = vpop.f32.mrf.mxu0
        %v6789 = vadd.f32 0.0, %v6788
        %v6790 = vpop.f32.mrf.mxu0
        %v6791 = vadd.f32 0.0, %v6790
        %6792 = vmatprep.mubr.f32.mxu0 0.0
        %6793 = vmatmul.mubr.f32.gmra.mxu0 %v6645
        %v6794 = vpop.f32.mrf.mxu0
        %v6795 = vadd.f32 0.0, %v6794
        %v6796 = vpop.f32.mrf.mxu0
        %v6797 = vadd.f32 0.0, %v6796
        %6798 = vmatprep.mubr.f32.mxu0 0.0
        %6799 = vmatmul.mubr.f32.gmra.mxu0 %v6646
        %v6800 = vpop.f32.mrf.mxu0
        %v6801 = vadd.f32 0.0, %v6800
        %v6802 = vpop.f32.mrf.mxu0
        %v6803 = vadd.f32 0.0, %v6802
        %6804 = vmatprep.mubr.f32.mxu0 0.0
        %6805 = vmatmul.mubr.f32.gmra.mxu0 %v6647
        %v6806 = vpop.f32.mrf.mxu0
        %v6807 = vadd.f32 0.0, %v6806
        %v6808 = vpop.f32.mrf.mxu0
        %v6809 = vadd.f32 0.0, %v6808
        %6810 = vmatprep.mubr.f32.mxu0 0.0
        %6811 = vmatmul.mubr.f32.gmra.mxu0 %v6648
        %v6812 = vpop.f32.mrf.mxu0
        %v6813 = vadd.f32 0.0, %v6812
        %v6814 = vpop.f32.mrf.mxu0
        %v6815 = vadd.f32 0.0, %v6814
        %6816 = vmatprep.mubr.f32.mxu0 0.0
        %6817 = vmatmul.mubr.f32.gmra.mxu0 %v6649
        %v6818 = vpop.f32.mrf.mxu0
        %v6819 = vadd.f32 0.0, %v6818
        %v6820 = vpop.f32.mrf.mxu0
        %v6821 = vadd.f32 0.0, %v6820
        %6822 = vmatprep.mubr.f32.mxu0 0.0
        %6823 = vmatmul.mubr.f32.gmra.mxu0 %v6650
        %v6824 = vpop.f32.mrf.mxu0
        %v6825 = vadd.f32 0.0, %v6824
        %v6826 = vpop.f32.mrf.mxu0
        %v6827 = vadd.f32 0.0, %v6826
        %6828 = vmatprep.mubr.f32.mxu0 0.0
        %6829 = vmatmul.mubr.f32.gmra.mxu0 %v6651
        %v6830 = vpop.f32.mrf.mxu0
        %v6831 = vadd.f32 0.0, %v6830
        %v6832 = vpop.f32.mrf.mxu0
        %v6833 = vadd.f32 0.0, %v6832
        %6834 = vmatprep.mubr.f32.mxu0 0.0
        %6835 = vmatmul.mubr.f32.gmra.mxu0 %v6652
        %v6836 = vpop.f32.mrf.mxu0
        %v6837 = vadd.f32 0.0, %v6836
        %v6838 = vpop.f32.mrf.mxu0
        %v6839 = vadd.f32 0.0, %v6838
        %6840 = vmatprep.mubr.f32.mxu0 0.0
        %6841 = vmatmul.mubr.f32.gmra.mxu0 %v6653
        %v6842 = vpop.f32.mrf.mxu0
        %v6843 = vadd.f32 0.0, %v6842
        %v6844 = vpop.f32.mrf.mxu0
        %v6845 = vadd.f32 0.0, %v6844
        %6846 = vdwg.mxu0
        %v6847 = vld [vmem:[%s17] sm:$0x3]
        %v6849 = vlaneseq
        %v6850 = vshrl.u32 %v6849, 7
        %v6851 = vsub.s32 0, %v6850
        %v6852 = vrot.slane %v6847, %v6851
        %v6853 = vlaneseq
        %v6854 = vshrl.u32 %v6853, 7
        %v6855 = vsub.s32 1, %v6854
        %v6856 = vrot.slane %v6847, %v6855
        %v6859 = vmul.f32 %v6753, %v6852
        %v6860 = vmul.f32 %v6755, %v6856
        %v6861 = vmul.f32 %v6759, %v6852
        %v6862 = vmul.f32 %v6761, %v6856
        %v6863 = vmul.f32 %v6765, %v6852
        %v6864 = vmul.f32 %v6767, %v6856
        %v6865 = vmul.f32 %v6771, %v6852
        %v6866 = vmul.f32 %v6773, %v6856
        %v6867 = vmul.f32 %v6777, %v6852
        %v6868 = vmul.f32 %v6779, %v6856
        %v6869 = vmul.f32 %v6783, %v6852
        %v6870 = vmul.f32 %v6785, %v6856
        %v6871 = vmul.f32 %v6789, %v6852
        %v6872 = vmul.f32 %v6791, %v6856
        %v6873 = vmul.f32 %v6795, %v6852
        %v6874 = vmul.f32 %v6797, %v6856
        %v6875 = vmul.f32 %v6801, %v6852
        %v6876 = vmul.f32 %v6803, %v6856
        %v6877 = vmul.f32 %v6807, %v6852
        %v6878 = vmul.f32 %v6809, %v6856
        %v6879 = vmul.f32 %v6813, %v6852
        %v6880 = vmul.f32 %v6815, %v6856
        %v6881 = vmul.f32 %v6819, %v6852
        %v6882 = vmul.f32 %v6821, %v6856
        %v6883 = vmul.f32 %v6825, %v6852
        %v6884 = vmul.f32 %v6827, %v6856
        %v6885 = vmul.f32 %v6831, %v6852
        %v6886 = vmul.f32 %v6833, %v6856
        %v6887 = vmul.f32 %v6837, %v6852
        %v6888 = vmul.f32 %v6839, %v6856
        %v6889 = vmul.f32 %v6843, %v6852
        %v6890 = vmul.f32 %v6845, %v6856
        %v6891 = vld [vmem:[%s19] sm:$0x3]
        %v6893 = vlaneseq
        %v6894 = vshrl.u32 %v6893, 7
        %v6895 = vsub.s32 0, %v6894
        %v6896 = vrot.slane %v6891, %v6895
        %v6897 = vlaneseq
        %v6898 = vshrl.u32 %v6897, 7
        %v6899 = vsub.s32 1, %v6898
        %v6900 = vrot.slane %v6891, %v6899
        %v6903 = vadd.f32 %v6859, %v6896
        %v6904 = vadd.f32 %v6860, %v6900
        %v6905 = vadd.f32 %v6861, %v6896
        %v6906 = vadd.f32 %v6862, %v6900
        %v6907 = vadd.f32 %v6863, %v6896
        %v6908 = vadd.f32 %v6864, %v6900
        %v6909 = vadd.f32 %v6865, %v6896
        %v6910 = vadd.f32 %v6866, %v6900
        %v6911 = vadd.f32 %v6867, %v6896
        %v6912 = vadd.f32 %v6868, %v6900
        %v6913 = vadd.f32 %v6869, %v6896
        %v6914 = vadd.f32 %v6870, %v6900
        %v6915 = vadd.f32 %v6871, %v6896
        %v6916 = vadd.f32 %v6872, %v6900
        %v6917 = vadd.f32 %v6873, %v6896
        %v6918 = vadd.f32 %v6874, %v6900
        %v6919 = vadd.f32 %v6875, %v6896
        %v6920 = vadd.f32 %v6876, %v6900
        %v6921 = vadd.f32 %v6877, %v6896
        %v6922 = vadd.f32 %v6878, %v6900
        %v6923 = vadd.f32 %v6879, %v6896
        %v6924 = vadd.f32 %v6880, %v6900
        %v6925 = vadd.f32 %v6881, %v6896
        %v6926 = vadd.f32 %v6882, %v6900
        %v6927 = vadd.f32 %v6883, %v6896
        %v6928 = vadd.f32 %v6884, %v6900
        %v6929 = vadd.f32 %v6885, %v6896
        %v6930 = vadd.f32 %v6886, %v6900
        %v6931 = vadd.f32 %v6887, %v6896
        %v6932 = vadd.f32 %v6888, %v6900
        %v6933 = vadd.f32 %v6889, %v6896
        %v6934 = vadd.f32 %v6890, %v6900
        %vm6935 = vcmp.ge.f32.partialorder %v6903, 0.0
        %vm6936 = vcmp.ge.f32.partialorder %v6904, 0.0
        %vm6937 = vcmp.ge.f32.partialorder %v6905, 0.0
        %vm6938 = vcmp.ge.f32.partialorder %v6906, 0.0
        %vm6939 = vcmp.ge.f32.partialorder %v6907, 0.0
        %vm6940 = vcmp.ge.f32.partialorder %v6908, 0.0
        %vm6941 = vcmp.ge.f32.partialorder %v6909, 0.0
        %vm6942 = vcmp.ge.f32.partialorder %v6910, 0.0
        %vm6943 = vcmp.ge.f32.partialorder %v6911, 0.0
        %vm6944 = vcmp.ge.f32.partialorder %v6912, 0.0
        %vm6945 = vcmp.ge.f32.partialorder %v6913, 0.0
        %vm6946 = vcmp.ge.f32.partialorder %v6914, 0.0
        %vm6947 = vcmp.ge.f32.partialorder %v6915, 0.0
        %vm6948 = vcmp.ge.f32.partialorder %v6916, 0.0
        %vm6949 = vcmp.ge.f32.partialorder %v6917, 0.0
        %vm6950 = vcmp.ge.f32.partialorder %v6918, 0.0
        %vm6951 = vcmp.ge.f32.partialorder %v6919, 0.0
        %vm6952 = vcmp.ge.f32.partialorder %v6920, 0.0
        %vm6953 = vcmp.ge.f32.partialorder %v6921, 0.0
        %vm6954 = vcmp.ge.f32.partialorder %v6922, 0.0
        %vm6955 = vcmp.ge.f32.partialorder %v6923, 0.0
        %vm6956 = vcmp.ge.f32.partialorder %v6924, 0.0
        %vm6957 = vcmp.ge.f32.partialorder %v6925, 0.0
        %vm6958 = vcmp.ge.f32.partialorder %v6926, 0.0
        %vm6959 = vcmp.ge.f32.partialorder %v6927, 0.0
        %vm6960 = vcmp.ge.f32.partialorder %v6928, 0.0
        %vm6961 = vcmp.ge.f32.partialorder %v6929, 0.0
        %vm6962 = vcmp.ge.f32.partialorder %v6930, 0.0
        %vm6963 = vcmp.ge.f32.partialorder %v6931, 0.0
        %vm6964 = vcmp.ge.f32.partialorder %v6932, 0.0
        %vm6965 = vcmp.ge.f32.partialorder %v6933, 0.0
        %vm6966 = vcmp.ge.f32.partialorder %v6934, 0.0
        %v6967 = vmul.f32 %v6903, 0.2
        %v6968 = vmul.f32 %v6904, 0.2
        %v6969 = vmul.f32 %v6905, 0.2
        %v6970 = vmul.f32 %v6906, 0.2
        %v6971 = vmul.f32 %v6907, 0.2
        %v6972 = vmul.f32 %v6908, 0.2
        %v6973 = vmul.f32 %v6909, 0.2
        %v6974 = vmul.f32 %v6910, 0.2
        %v6975 = vmul.f32 %v6911, 0.2
        %v6976 = vmul.f32 %v6912, 0.2
        %v6977 = vmul.f32 %v6913, 0.2
        %v6978 = vmul.f32 %v6914, 0.2
        %v6979 = vmul.f32 %v6915, 0.2
        %v6980 = vmul.f32 %v6916, 0.2
        %v6981 = vmul.f32 %v6917, 0.2
        %v6982 = vmul.f32 %v6918, 0.2
        %v6983 = vmul.f32 %v6919, 0.2
        %v6984 = vmul.f32 %v6920, 0.2
        %v6985 = vmul.f32 %v6921, 0.2
        %v6986 = vmul.f32 %v6922, 0.2
        %v6987 = vmul.f32 %v6923, 0.2
        %v6988 = vmul.f32 %v6924, 0.2
        %v6989 = vmul.f32 %v6925, 0.2
        %v6990 = vmul.f32 %v6926, 0.2
        %v6991 = vmul.f32 %v6927, 0.2
        %v6992 = vmul.f32 %v6928, 0.2
        %v6993 = vmul.f32 %v6929, 0.2
        %v6994 = vmul.f32 %v6930, 0.2
        %v6995 = vmul.f32 %v6931, 0.2
        %v6996 = vmul.f32 %v6932, 0.2
        %v6997 = vmul.f32 %v6933, 0.2
        %v6998 = vmul.f32 %v6934, 0.2
        %v6999 = vsel %vm6935, %v6903, %v6967
        %v7000 = vsel %vm6936, %v6904, %v6968
        %v7001 = vsel %vm6937, %v6905, %v6969
        %v7002 = vsel %vm6938, %v6906, %v6970
        %v7003 = vsel %vm6939, %v6907, %v6971
        %v7004 = vsel %vm6940, %v6908, %v6972
        %v7005 = vsel %vm6941, %v6909, %v6973
        %v7006 = vsel %vm6942, %v6910, %v6974
        %v7007 = vsel %vm6943, %v6911, %v6975
        %v7008 = vsel %vm6944, %v6912, %v6976
        %v7009 = vsel %vm6945, %v6913, %v6977
        %v7010 = vsel %vm6946, %v6914, %v6978
        %v7011 = vsel %vm6947, %v6915, %v6979
        %v7012 = vsel %vm6948, %v6916, %v6980
        %v7013 = vsel %vm6949, %v6917, %v6981
        %v7014 = vsel %vm6950, %v6918, %v6982
        %v7015 = vsel %vm6951, %v6919, %v6983
        %v7016 = vsel %vm6952, %v6920, %v6984
        %v7017 = vsel %vm6953, %v6921, %v6985
        %v7018 = vsel %vm6954, %v6922, %v6986
        %v7019 = vsel %vm6955, %v6923, %v6987
        %v7020 = vsel %vm6956, %v6924, %v6988
        %v7021 = vsel %vm6957, %v6925, %v6989
        %v7022 = vsel %vm6958, %v6926, %v6990
        %v7023 = vsel %vm6959, %v6927, %v6991
        %v7024 = vsel %vm6960, %v6928, %v6992
        %v7025 = vsel %vm6961, %v6929, %v6993
        %v7026 = vsel %vm6962, %v6930, %v6994
        %v7027 = vsel %vm6963, %v6931, %v6995
        %v7028 = vsel %vm6964, %v6932, %v6996
        %v7029 = vsel %vm6965, %v6933, %v6997
        %v7030 = vsel %vm6966, %v6934, %v6998
        %vm7031 = vcmp.ge.s32.totalorder %v6205, 4294967295
        %vm7032 = vcmp.ge.s32.totalorder %v6207, 4294967295
        %vm7033 = vcmp.ge.s32.totalorder %v6209, 4294967295
        %vm7034 = vcmp.ge.s32.totalorder %v6211, 4294967295
        %vm7035 = vcmp.ge.s32.totalorder %v6213, 4294967295
        %vm7036 = vcmp.ge.s32.totalorder %v6215, 4294967295
        %vm7037 = vcmp.ge.s32.totalorder %v6217, 4294967295
        %vm7038 = vcmp.ge.s32.totalorder %v6219, 4294967295
        %vm7039 = vcmp.le.s32.totalorder %v6205, 1
        %vm7040 = vcmp.le.s32.totalorder %v6207, 1
        %vm7041 = vcmp.le.s32.totalorder %v6209, 1
        %vm7042 = vcmp.le.s32.totalorder %v6211, 1
        %vm7043 = vcmp.le.s32.totalorder %v6213, 1
        %vm7044 = vcmp.le.s32.totalorder %v6215, 1
        %vm7045 = vcmp.le.s32.totalorder %v6217, 1
        %vm7046 = vcmp.le.s32.totalorder %v6219, 1
        %vm7047 = vmand %vm7031, %vm7039
        %vm7048 = vmand %vm7032, %vm7040
        %vm7049 = vmand %vm7033, %vm7041
        %vm7050 = vmand %vm7034, %vm7042
        %vm7051 = vmand %vm7035, %vm7043
        %vm7052 = vmand %vm7036, %vm7044
        %vm7053 = vmand %vm7037, %vm7045
        %vm7054 = vmand %vm7038, %vm7046
        %v7055 = vsel %vm7047, 0.33333334, 0.0
        %v7056 = vsel %vm7048, 0.33333334, 0.0
        %v7057 = vsel %vm7049, 0.33333334, 0.0
        %v7058 = vsel %vm7050, 0.33333334, 0.0
        %v7059 = vsel %vm7051, 0.33333334, 0.0
        %v7060 = vsel %vm7052, 0.33333334, 0.0
        %v7061 = vsel %vm7053, 0.33333334, 0.0
        %v7062 = vsel %vm7054, 0.33333334, 0.0
        %7063 = vmatprep.subr.mxu0 %v7030
        %7064 = vmatpush1.msra.mxu0 %v7029
        %7065 = vmatprep.subr.mxu0 %v7028
        %7066 = vmatpush1.msra.mxu0 %v7027
        %7067 = vmatprep.subr.mxu0 %v7026
        %7068 = vmatpush1.msra.mxu0 %v7025
        %7069 = vmatprep.subr.mxu0 %v7024
        %7070 = vmatpush1.msra.mxu0 %v7023
        %7071 = vmatprep.subr.mxu0 %v7022
        %7072 = vmatpush1.msra.mxu0 %v7021
        %7073 = vmatprep.subr.mxu0 %v7020
        %7074 = vmatpush1.msra.mxu0 %v7019
        %7075 = vmatprep.subr.mxu0 %v7018
        %7076 = vmatpush1.msra.mxu0 %v7017
        %7077 = vmatprep.subr.mxu0 %v7016
        %7078 = vmatpush1.msra.mxu0 %v7015
        %7079 = vmatprep.subr.mxu0 %v7014
        %7080 = vmatpush1.msra.mxu0 %v7013
        %7081 = vmatprep.subr.mxu0 %v7012
        %7082 = vmatpush1.msra.mxu0 %v7011
        %7083 = vmatprep.subr.mxu0 %v7010
        %7084 = vmatpush1.msra.mxu0 %v7009
        %7085 = vmatprep.subr.mxu0 %v7008
        %7086 = vmatpush1.msra.mxu0 %v7007
        %7087 = vmatprep.subr.mxu0 %v7006
        %7088 = vmatpush1.msra.mxu0 %v7005
        %7089 = vmatprep.subr.mxu0 %v7004
        %7090 = vmatpush1.msra.mxu0 %v7003
        %7091 = vmatprep.subr.mxu0 %v7002
        %7092 = vmatpush1.msra.mxu0 %v7001
        %7093 = vmatprep.subr.mxu0 %v7000
        %7094 = vmatpush1.msra.mxu0 %v6999
        %7095 = vmatprep.subr.mxu0 0.0
        %7096 = vmatpush2.msra.mxu0 0.0
        %7097 = vmatprep.subr.mxu0 0.0
        %7098 = vmatpush2.msra.mxu0 0.0
        %7099 = vmatprep.subr.mxu0 0.0
        %7100 = vmatpush2.msra.mxu0 0.0
        %7101 = vmatprep.subr.mxu0 0.0
        %7102 = vmatpush2.msra.mxu0 0.0
        %7103 = vmatprep.subr.mxu0 0.0
        %7104 = vmatpush2.msra.mxu0 0.0
        %7105 = vmatprep.subr.mxu0 0.0
        %7106 = vmatpush2.msra.mxu0 0.0
        %7107 = vmatprep.subr.mxu0 0.0
        %7108 = vmatpush2.msra.mxu0 0.0
        %7109 = vmatprep.subr.mxu0 0.0
        %7110 = vmatpush2.msra.mxu0 0.0
        %7111 = vmatprep.subr.mxu0 0.0
        %7112 = vmatpush2.msra.mxu0 0.0
        %7113 = vmatprep.subr.mxu0 0.0
        %7114 = vmatpush2.msra.mxu0 0.0
        %7115 = vmatprep.subr.mxu0 0.0
        %7116 = vmatpush2.msra.mxu0 0.0
        %7117 = vmatprep.subr.mxu0 0.0
        %7118 = vmatpush2.msra.mxu0 0.0
        %7119 = vmatprep.subr.mxu0 0.0
        %7120 = vmatpush2.msra.mxu0 0.0
        %7121 = vmatprep.subr.mxu0 0.0
        %7122 = vmatpush2.msra.mxu0 0.0
        %7123 = vmatprep.subr.mxu0 0.0
        %7124 = vmatpush2.msra.mxu0 0.0
        %7125 = vmatprep.subr.mxu0 0.0
        %7126 = vmatpush2.msra.mxu0 0.0
        %7127 = vmatprep.mubr.f32.mxu0 0.0
        %7128 = vmatmul.mubr.f32.gmra.mxu0 %v7055
        %v7129 = vpop.f32.mrf.mxu0
        %v7130 = vadd.f32 0.0, %v7129
        %v7131 = vpop.f32.mrf.mxu0
        %v7132 = vadd.f32 0.0, %v7131
        %7133 = vmatprep.mubr.f32.mxu0 0.0
        %7134 = vmatmul.mubr.f32.gmra.mxu0 %v7056
        %v7135 = vpop.f32.mrf.mxu0
        %v7136 = vadd.f32 0.0, %v7135
        %v7137 = vpop.f32.mrf.mxu0
        %v7138 = vadd.f32 0.0, %v7137
        %7139 = vmatprep.mubr.f32.mxu0 0.0
        %7140 = vmatmul.mubr.f32.gmra.mxu0 %v7057
        %v7141 = vpop.f32.mrf.mxu0
        %v7142 = vadd.f32 0.0, %v7141
        %v7143 = vpop.f32.mrf.mxu0
        %v7144 = vadd.f32 0.0, %v7143
        %7145 = vmatprep.mubr.f32.mxu0 0.0
        %7146 = vmatmul.mubr.f32.gmra.mxu0 %v7058
        %v7147 = vpop.f32.mrf.mxu0
        %v7148 = vadd.f32 0.0, %v7147
        %v7149 = vpop.f32.mrf.mxu0
        %v7150 = vadd.f32 0.0, %v7149
        %7151 = vmatprep.mubr.f32.mxu0 0.0
        %7152 = vmatmul.mubr.f32.gmra.mxu0 %v7059
        %v7153 = vpop.f32.mrf.mxu0
        %v7154 = vadd.f32 0.0, %v7153
        %v7155 = vpop.f32.mrf.mxu0
        %v7156 = vadd.f32 0.0, %v7155
        %7157 = vmatprep.mubr.f32.mxu0 0.0
        %7158 = vmatmul.mubr.f32.gmra.mxu0 %v7060
        %v7159 = vpop.f32.mrf.mxu0
        %v7160 = vadd.f32 0.0, %v7159
        %v7161 = vpop.f32.mrf.mxu0
        %v7162 = vadd.f32 0.0, %v7161
        %7163 = vmatprep.mubr.f32.mxu0 0.0
        %7164 = vmatmul.mubr.f32.gmra.mxu0 %v7061
        %v7165 = vpop.f32.mrf.mxu0
        %v7166 = vadd.f32 0.0, %v7165
        %v7167 = vpop.f32.mrf.mxu0
        %v7168 = vadd.f32 0.0, %v7167
        %7169 = vmatprep.mubr.f32.mxu0 0.0
        %7170 = vmatmul.mubr.f32.gmra.mxu0 %v7062
        %v7171 = vpop.f32.mrf.mxu0
        %v7172 = vadd.f32 0.0, %v7171
        %v7173 = vpop.f32.mrf.mxu0
        %v7174 = vadd.f32 0.0, %v7173
        %7175 = vdwg.mxu0
        %7176 = vst [vmem:[#allocation2] sm:$0xff] 0.0
        %7177 = vst [vmem:[#allocation2 + $0x8] sm:$0xff] 0.0
        %7178 = vst [vmem:[#allocation2 + $0x10] sm:$0xff] 0.0
        %7179 = vst [vmem:[#allocation2 + $0x18] sm:$0xff] 0.0
        %7180 = vst [vmem:[#allocation2 + $0xa0] sm:$0xff] 0.0
        %7181 = vst [vmem:[#allocation2 + $0xa8] sm:$0xff] 0.0
        %7182 = vst [vmem:[#allocation2 + $0xb0] sm:$0xff] 0.0
        %7183 = vst [vmem:[#allocation2 + $0xb8] sm:$0xff] 0.0
        %7184 = vst [vmem:[#allocation2 + $0x20] sm:$0xff] %v7130
        %7185 = vst [vmem:[#allocation2 + $0x28] sm:$0xff] %v7132
        %7186 = vst [vmem:[#allocation2 + $0x30] sm:$0xff] %v7136
        %7187 = vst [vmem:[#allocation2 + $0x38] sm:$0xff] %v7138
        %7188 = vst [vmem:[#allocation2 + $0x40] sm:$0xff] %v7142
        %7189 = vst [vmem:[#allocation2 + $0x48] sm:$0xff] %v7144
        %7190 = vst [vmem:[#allocation2 + $0x50] sm:$0xff] %v7148
        %7191 = vst [vmem:[#allocation2 + $0x58] sm:$0xff] %v7150
        %7192 = vst [vmem:[#allocation2 + $0x60] sm:$0xff] %v7154
        %7193 = vst [vmem:[#allocation2 + $0x68] sm:$0xff] %v7156
        %7194 = vst [vmem:[#allocation2 + $0x70] sm:$0xff] %v7160
        %7195 = vst [vmem:[#allocation2 + $0x78] sm:$0xff] %v7162
        %7196 = vst [vmem:[#allocation2 + $0x80] sm:$0xff] %v7166
        %7197 = vst [vmem:[#allocation2 + $0x88] sm:$0xff] %v7168
        %7198 = vst [vmem:[#allocation2 + $0x90] sm:$0xff] %v7172
        %7199 = vst [vmem:[#allocation2 + $0x98] sm:$0xff] %v7174
        %v7200 = vld [vmem:[#allocation2 + $0x10] sm:$0xf0]
        %v7201 = vld [vmem:[#allocation2 + $0x18] sm:$0xf0]
        %v7202 = vld [vmem:[#allocation2 + $0x20] sm:$0xff]
        %v7203 = vld [vmem:[#allocation2 + $0x28] sm:$0xff]
        %v7204 = vld [vmem:[#allocation2 + $0x30] sm:$0xff]
        %v7205 = vld [vmem:[#allocation2 + $0x38] sm:$0xff]
        %v7206 = vld [vmem:[#allocation2 + $0x40] sm:$0xff]
        %v7207 = vld [vmem:[#allocation2 + $0x48] sm:$0xff]
        %v7208 = vld [vmem:[#allocation2 + $0x50] sm:$0xff]
        %v7209 = vld [vmem:[#allocation2 + $0x58] sm:$0xff]
        %v7210 = vld [vmem:[#allocation2 + $0x60] sm:$0xff]
        %v7211 = vld [vmem:[#allocation2 + $0x68] sm:$0xff]
        %v7212 = vld [vmem:[#allocation2 + $0x70] sm:$0xff]
        %v7213 = vld [vmem:[#allocation2 + $0x78] sm:$0xff]
        %v7214 = vld [vmem:[#allocation2 + $0x80] sm:$0xff]
        %v7215 = vld [vmem:[#allocation2 + $0x88] sm:$0xff]
        %v7216 = vld [vmem:[#allocation2 + $0x90] sm:$0xf]
        %v7217 = vld [vmem:[#allocation2 + $0x98] sm:$0xf]
        %v7218 = vld [vmem:[%s21] ss:$8 sm:$0x3]
        %v7220 = vlaneseq
        %v7221 = vshrl.u32 %v7220, 7
        %v7222 = vsub.s32 0, %v7221
        %v7223 = vrot.slane %v7218, %v7222
        %v7224 = vlaneseq
        %v7225 = vshrl.u32 %v7224, 7
        %v7226 = vsub.s32 1, %v7225
        %v7227 = vrot.slane %v7218, %v7226
        %v7230 = vmul.f32 %v7200, %v7223
        %v7231 = vmul.f32 %v7201, %v7227
        %v7232 = vmul.f32 %v7202, %v7223
        %v7233 = vmul.f32 %v7203, %v7227
        %v7234 = vmul.f32 %v7204, %v7223
        %v7235 = vmul.f32 %v7205, %v7227
        %v7236 = vmul.f32 %v7206, %v7223
        %v7237 = vmul.f32 %v7207, %v7227
        %v7238 = vmul.f32 %v7208, %v7223
        %v7239 = vmul.f32 %v7209, %v7227
        %v7240 = vmul.f32 %v7210, %v7223
        %v7241 = vmul.f32 %v7211, %v7227
        %v7242 = vmul.f32 %v7212, %v7223
        %v7243 = vmul.f32 %v7213, %v7227
        %v7244 = vmul.f32 %v7214, %v7223
        %v7245 = vmul.f32 %v7215, %v7227
        %v7246 = vmul.f32 %v7216, %v7223
        %v7247 = vmul.f32 %v7217, %v7227
        %v7248 = vld [vmem:[#allocation2 + $0x10] sm:$0xe0]
        %v7249 = vld [vmem:[#allocation2 + $0x18] sm:$0xe0]
        %v7250 = vld [vmem:[#allocation2 + $0x90] sm:$0x1f]
        %v7251 = vld [vmem:[#allocation2 + $0x98] sm:$0x1f]
        %s7252 = scalar_lea.vmem %s21, 1
        %v7253 = vld [vmem:[%s7252] ss:$8 sm:$0x3]
        %v7255 = vlaneseq
        %v7256 = vshrl.u32 %v7255, 7
        %v7257 = vsub.s32 0, %v7256
        %v7258 = vrot.slane %v7253, %v7257
        %v7259 = vlaneseq
        %v7260 = vshrl.u32 %v7259, 7
        %v7261 = vsub.s32 1, %v7260
        %v7262 = vrot.slane %v7253, %v7261
        %v7265 = vmul.f32 %v7248, %v7258
        %v7266 = vmul.f32 %v7249, %v7262
        %v7267 = vmul.f32 %v7202, %v7258
        %v7268 = vmul.f32 %v7203, %v7262
        %v7269 = vmul.f32 %v7204, %v7258
        %v7270 = vmul.f32 %v7205, %v7262
        %v7271 = vmul.f32 %v7206, %v7258
        %v7272 = vmul.f32 %v7207, %v7262
        %v7273 = vmul.f32 %v7208, %v7258
        %v7274 = vmul.f32 %v7209, %v7262
        %v7275 = vmul.f32 %v7210, %v7258
        %v7276 = vmul.f32 %v7211, %v7262
        %v7277 = vmul.f32 %v7212, %v7258
        %v7278 = vmul.f32 %v7213, %v7262
        %v7279 = vmul.f32 %v7214, %v7258
        %v7280 = vmul.f32 %v7215, %v7262
        %v7281 = vmul.f32 %v7250, %v7258
        %v7282 = vmul.f32 %v7251, %v7262
        %v7301 = vrot.slane %v7265, 1
        %v7302 = vrot.slane %v7267, 1
        %v7303 = vsel %vm1747, %v7301, %v7302
        %v7304 = vrot.slane %v7266, 1
        %v7305 = vrot.slane %v7268, 1
        %v7306 = vsel %vm1747, %v7304, %v7305
        %v7307 = vrot.slane %v7269, 1
        %v7308 = vsel %vm1747, %v7302, %v7307
        %v7309 = vrot.slane %v7270, 1
        %v7310 = vsel %vm1747, %v7305, %v7309
        %v7311 = vrot.slane %v7271, 1
        %v7312 = vsel %vm1747, %v7307, %v7311
        %v7313 = vrot.slane %v7272, 1
        %v7314 = vsel %vm1747, %v7309, %v7313
        %v7315 = vrot.slane %v7273, 1
        %v7316 = vsel %vm1747, %v7311, %v7315
        %v7317 = vrot.slane %v7274, 1
        %v7318 = vsel %vm1747, %v7313, %v7317
        %v7319 = vrot.slane %v7275, 1
        %v7320 = vsel %vm1747, %v7315, %v7319
        %v7321 = vrot.slane %v7276, 1
        %v7322 = vsel %vm1747, %v7317, %v7321
        %v7323 = vrot.slane %v7277, 1
        %v7324 = vsel %vm1747, %v7319, %v7323
        %v7325 = vrot.slane %v7278, 1
        %v7326 = vsel %vm1747, %v7321, %v7325
        %v7327 = vrot.slane %v7279, 1
        %v7328 = vsel %vm1747, %v7323, %v7327
        %v7329 = vrot.slane %v7280, 1
        %v7330 = vsel %vm1747, %v7325, %v7329
        %v7331 = vrot.slane %v7281, 1
        %v7332 = vsel %vm1747, %v7327, %v7331
        %v7333 = vrot.slane %v7282, 1
        %v7334 = vsel %vm1747, %v7329, %v7333
        %v7353 = vadd.f32 %v7230, %v7303
        %v7354 = vadd.f32 %v7231, %v7306
        %v7355 = vadd.f32 %v7232, %v7308
        %v7356 = vadd.f32 %v7233, %v7310
        %v7357 = vadd.f32 %v7234, %v7312
        %v7358 = vadd.f32 %v7235, %v7314
        %v7359 = vadd.f32 %v7236, %v7316
        %v7360 = vadd.f32 %v7237, %v7318
        %v7361 = vadd.f32 %v7238, %v7320
        %v7362 = vadd.f32 %v7239, %v7322
        %v7363 = vadd.f32 %v7240, %v7324
        %v7364 = vadd.f32 %v7241, %v7326
        %v7365 = vadd.f32 %v7242, %v7328
        %v7366 = vadd.f32 %v7243, %v7330
        %v7367 = vadd.f32 %v7244, %v7332
        %v7368 = vadd.f32 %v7245, %v7334
        %v7369 = vadd.f32 %v7246, %v7331
        %v7370 = vadd.f32 %v7247, %v7333
        %v7371 = vld [vmem:[#allocation2 + $0x10] sm:$0xc0]
        %v7372 = vld [vmem:[#allocation2 + $0x18] sm:$0xc0]
        %v7373 = vld [vmem:[#allocation2 + $0x90] sm:$0x3f]
        %v7374 = vld [vmem:[#allocation2 + $0x98] sm:$0x3f]
        %s7375 = scalar_lea.vmem %s21, 2
        %v7376 = vld [vmem:[%s7375] ss:$8 sm:$0x3]
        %v7378 = vlaneseq
        %v7379 = vshrl.u32 %v7378, 7
        %v7380 = vsub.s32 0, %v7379
        %v7381 = vrot.slane %v7376, %v7380
        %v7382 = vlaneseq
        %v7383 = vshrl.u32 %v7382, 7
        %v7384 = vsub.s32 1, %v7383
        %v7385 = vrot.slane %v7376, %v7384
        %v7388 = vmul.f32 %v7371, %v7381
        %v7389 = vmul.f32 %v7372, %v7385
        %v7390 = vmul.f32 %v7202, %v7381
        %v7391 = vmul.f32 %v7203, %v7385
        %v7392 = vmul.f32 %v7204, %v7381
        %v7393 = vmul.f32 %v7205, %v7385
        %v7394 = vmul.f32 %v7206, %v7381
        %v7395 = vmul.f32 %v7207, %v7385
        %v7396 = vmul.f32 %v7208, %v7381
        %v7397 = vmul.f32 %v7209, %v7385
        %v7398 = vmul.f32 %v7210, %v7381
        %v7399 = vmul.f32 %v7211, %v7385
        %v7400 = vmul.f32 %v7212, %v7381
        %v7401 = vmul.f32 %v7213, %v7385
        %v7402 = vmul.f32 %v7214, %v7381
        %v7403 = vmul.f32 %v7215, %v7385
        %v7404 = vmul.f32 %v7373, %v7381
        %v7405 = vmul.f32 %v7374, %v7385
        %v7424 = vrot.slane %v7388, 2
        %v7425 = vrot.slane %v7390, 2
        %v7426 = vsel %vm1952, %v7424, %v7425
        %v7427 = vrot.slane %v7389, 2
        %v7428 = vrot.slane %v7391, 2
        %v7429 = vsel %vm1952, %v7427, %v7428
        %v7430 = vrot.slane %v7392, 2
        %v7431 = vsel %vm1952, %v7425, %v7430
        %v7432 = vrot.slane %v7393, 2
        %v7433 = vsel %vm1952, %v7428, %v7432
        %v7434 = vrot.slane %v7394, 2
        %v7435 = vsel %vm1952, %v7430, %v7434
        %v7436 = vrot.slane %v7395, 2
        %v7437 = vsel %vm1952, %v7432, %v7436
        %v7438 = vrot.slane %v7396, 2
        %v7439 = vsel %vm1952, %v7434, %v7438
        %v7440 = vrot.slane %v7397, 2
        %v7441 = vsel %vm1952, %v7436, %v7440
        %v7442 = vrot.slane %v7398, 2
        %v7443 = vsel %vm1952, %v7438, %v7442
        %v7444 = vrot.slane %v7399, 2
        %v7445 = vsel %vm1952, %v7440, %v7444
        %v7446 = vrot.slane %v7400, 2
        %v7447 = vsel %vm1952, %v7442, %v7446
        %v7448 = vrot.slane %v7401, 2
        %v7449 = vsel %vm1952, %v7444, %v7448
        %v7450 = vrot.slane %v7402, 2
        %v7451 = vsel %vm1952, %v7446, %v7450
        %v7452 = vrot.slane %v7403, 2
        %v7453 = vsel %vm1952, %v7448, %v7452
        %v7454 = vrot.slane %v7404, 2
        %v7455 = vsel %vm1952, %v7450, %v7454
        %v7456 = vrot.slane %v7405, 2
        %v7457 = vsel %vm1952, %v7452, %v7456
        %v7476 = vadd.f32 %v7353, %v7426
        %v7477 = vadd.f32 %v7354, %v7429
        %v7478 = vadd.f32 %v7355, %v7431
        %v7479 = vadd.f32 %v7356, %v7433
        %v7480 = vadd.f32 %v7357, %v7435
        %v7481 = vadd.f32 %v7358, %v7437
        %v7482 = vadd.f32 %v7359, %v7439
        %v7483 = vadd.f32 %v7360, %v7441
        %v7484 = vadd.f32 %v7361, %v7443
        %v7485 = vadd.f32 %v7362, %v7445
        %v7486 = vadd.f32 %v7363, %v7447
        %v7487 = vadd.f32 %v7364, %v7449
        %v7488 = vadd.f32 %v7365, %v7451
        %v7489 = vadd.f32 %v7366, %v7453
        %v7490 = vadd.f32 %v7367, %v7455
        %v7491 = vadd.f32 %v7368, %v7457
        %v7492 = vadd.f32 %v7369, %v7454
        %v7493 = vadd.f32 %v7370, %v7456
        %v7494 = vld [vmem:[#allocation2 + $0x10] sm:$0x80]
        %v7495 = vld [vmem:[#allocation2 + $0x18] sm:$0x80]
        %v7496 = vld [vmem:[#allocation2 + $0x90] sm:$0x7f]
        %v7497 = vld [vmem:[#allocation2 + $0x98] sm:$0x7f]
        %s7498 = scalar_lea.vmem %s21, 3
        %v7499 = vld [vmem:[%s7498] ss:$8 sm:$0x3]
        %v7501 = vlaneseq
        %v7502 = vshrl.u32 %v7501, 7
        %v7503 = vsub.s32 0, %v7502
        %v7504 = vrot.slane %v7499, %v7503
        %v7505 = vlaneseq
        %v7506 = vshrl.u32 %v7505, 7
        %v7507 = vsub.s32 1, %v7506
        %v7508 = vrot.slane %v7499, %v7507
        %v7511 = vmul.f32 %v7494, %v7504
        %v7512 = vmul.f32 %v7495, %v7508
        %v7513 = vmul.f32 %v7202, %v7504
        %v7514 = vmul.f32 %v7203, %v7508
        %v7515 = vmul.f32 %v7204, %v7504
        %v7516 = vmul.f32 %v7205, %v7508
        %v7517 = vmul.f32 %v7206, %v7504
        %v7518 = vmul.f32 %v7207, %v7508
        %v7519 = vmul.f32 %v7208, %v7504
        %v7520 = vmul.f32 %v7209, %v7508
        %v7521 = vmul.f32 %v7210, %v7504
        %v7522 = vmul.f32 %v7211, %v7508
        %v7523 = vmul.f32 %v7212, %v7504
        %v7524 = vmul.f32 %v7213, %v7508
        %v7525 = vmul.f32 %v7214, %v7504
        %v7526 = vmul.f32 %v7215, %v7508
        %v7527 = vmul.f32 %v7496, %v7504
        %v7528 = vmul.f32 %v7497, %v7508
        %v7547 = vrot.slane %v7511, 3
        %v7548 = vrot.slane %v7513, 3
        %v7549 = vsel %vm2157, %v7547, %v7548
        %v7550 = vrot.slane %v7512, 3
        %v7551 = vrot.slane %v7514, 3
        %v7552 = vsel %vm2157, %v7550, %v7551
        %v7553 = vrot.slane %v7515, 3
        %v7554 = vsel %vm2157, %v7548, %v7553
        %v7555 = vrot.slane %v7516, 3
        %v7556 = vsel %vm2157, %v7551, %v7555
        %v7557 = vrot.slane %v7517, 3
        %v7558 = vsel %vm2157, %v7553, %v7557
        %v7559 = vrot.slane %v7518, 3
        %v7560 = vsel %vm2157, %v7555, %v7559
        %v7561 = vrot.slane %v7519, 3
        %v7562 = vsel %vm2157, %v7557, %v7561
        %v7563 = vrot.slane %v7520, 3
        %v7564 = vsel %vm2157, %v7559, %v7563
        %v7565 = vrot.slane %v7521, 3
        %v7566 = vsel %vm2157, %v7561, %v7565
        %v7567 = vrot.slane %v7522, 3
        %v7568 = vsel %vm2157, %v7563, %v7567
        %v7569 = vrot.slane %v7523, 3
        %v7570 = vsel %vm2157, %v7565, %v7569
        %v7571 = vrot.slane %v7524, 3
        %v7572 = vsel %vm2157, %v7567, %v7571
        %v7573 = vrot.slane %v7525, 3
        %v7574 = vsel %vm2157, %v7569, %v7573
        %v7575 = vrot.slane %v7526, 3
        %v7576 = vsel %vm2157, %v7571, %v7575
        %v7577 = vrot.slane %v7527, 3
        %v7578 = vsel %vm2157, %v7573, %v7577
        %v7579 = vrot.slane %v7528, 3
        %v7580 = vsel %vm2157, %v7575, %v7579
        %v7599 = vadd.f32 %v7476, %v7549
        %v7600 = vadd.f32 %v7477, %v7552
        %v7601 = vadd.f32 %v7478, %v7554
        %v7602 = vadd.f32 %v7479, %v7556
        %v7603 = vadd.f32 %v7480, %v7558
        %v7604 = vadd.f32 %v7481, %v7560
        %v7605 = vadd.f32 %v7482, %v7562
        %v7606 = vadd.f32 %v7483, %v7564
        %v7607 = vadd.f32 %v7484, %v7566
        %v7608 = vadd.f32 %v7485, %v7568
        %v7609 = vadd.f32 %v7486, %v7570
        %v7610 = vadd.f32 %v7487, %v7572
        %v7611 = vadd.f32 %v7488, %v7574
        %v7612 = vadd.f32 %v7489, %v7576
        %v7613 = vadd.f32 %v7490, %v7578
        %v7614 = vadd.f32 %v7491, %v7580
        %v7615 = vadd.f32 %v7492, %v7577
        %v7616 = vadd.f32 %v7493, %v7579
        %v7617 = vld [vmem:[#allocation2 + $0x90] sm:$0xff]
        %v7618 = vld [vmem:[#allocation2 + $0x98] sm:$0xff]
        %s7619 = scalar_lea.vmem %s21, 4
        %v7620 = vld [vmem:[%s7619] ss:$8 sm:$0x3]
        %v7622 = vlaneseq
        %v7623 = vshrl.u32 %v7622, 7
        %v7624 = vsub.s32 0, %v7623
        %v7625 = vrot.slane %v7620, %v7624
        %v7626 = vlaneseq
        %v7627 = vshrl.u32 %v7626, 7
        %v7628 = vsub.s32 1, %v7627
        %v7629 = vrot.slane %v7620, %v7628
        %v7632 = vmul.f32 %v7202, %v7625
        %v7633 = vmul.f32 %v7203, %v7629
        %v7634 = vmul.f32 %v7204, %v7625
        %v7635 = vmul.f32 %v7205, %v7629
        %v7636 = vmul.f32 %v7206, %v7625
        %v7637 = vmul.f32 %v7207, %v7629
        %v7638 = vmul.f32 %v7208, %v7625
        %v7639 = vmul.f32 %v7209, %v7629
        %v7640 = vmul.f32 %v7210, %v7625
        %v7641 = vmul.f32 %v7211, %v7629
        %v7642 = vmul.f32 %v7212, %v7625
        %v7643 = vmul.f32 %v7213, %v7629
        %v7644 = vmul.f32 %v7214, %v7625
        %v7645 = vmul.f32 %v7215, %v7629
        %v7646 = vmul.f32 %v7617, %v7625
        %v7647 = vmul.f32 %v7618, %v7629
        %v7664 = vrot.slane %v7632, 4
        %v7665 = vrot.slane %v7633, 4
        %v7666 = vrot.slane %v7634, 4
        %v7667 = vsel %vm2359, %v7664, %v7666
        %v7668 = vrot.slane %v7635, 4
        %v7669 = vsel %vm2359, %v7665, %v7668
        %v7670 = vrot.slane %v7636, 4
        %v7671 = vsel %vm2359, %v7666, %v7670
        %v7672 = vrot.slane %v7637, 4
        %v7673 = vsel %vm2359, %v7668, %v7672
        %v7674 = vrot.slane %v7638, 4
        %v7675 = vsel %vm2359, %v7670, %v7674
        %v7676 = vrot.slane %v7639, 4
        %v7677 = vsel %vm2359, %v7672, %v7676
        %v7678 = vrot.slane %v7640, 4
        %v7679 = vsel %vm2359, %v7674, %v7678
        %v7680 = vrot.slane %v7641, 4
        %v7681 = vsel %vm2359, %v7676, %v7680
        %v7682 = vrot.slane %v7642, 4
        %v7683 = vsel %vm2359, %v7678, %v7682
        %v7684 = vrot.slane %v7643, 4
        %v7685 = vsel %vm2359, %v7680, %v7684
        %v7686 = vrot.slane %v7644, 4
        %v7687 = vsel %vm2359, %v7682, %v7686
        %v7688 = vrot.slane %v7645, 4
        %v7689 = vsel %vm2359, %v7684, %v7688
        %v7690 = vrot.slane %v7646, 4
        %v7691 = vsel %vm2359, %v7686, %v7690
        %v7692 = vrot.slane %v7647, 4
        %v7693 = vsel %vm2359, %v7688, %v7692
        %v7712 = vadd.f32 %v7599, %v7664
        %v7713 = vadd.f32 %v7600, %v7665
        %v7714 = vadd.f32 %v7601, %v7667
        %v7715 = vadd.f32 %v7602, %v7669
        %v7716 = vadd.f32 %v7603, %v7671
        %v7717 = vadd.f32 %v7604, %v7673
        %v7718 = vadd.f32 %v7605, %v7675
        %v7719 = vadd.f32 %v7606, %v7677
        %v7720 = vadd.f32 %v7607, %v7679
        %v7721 = vadd.f32 %v7608, %v7681
        %v7722 = vadd.f32 %v7609, %v7683
        %v7723 = vadd.f32 %v7610, %v7685
        %v7724 = vadd.f32 %v7611, %v7687
        %v7725 = vadd.f32 %v7612, %v7689
        %v7726 = vadd.f32 %v7613, %v7691
        %v7727 = vadd.f32 %v7614, %v7693
        %v7728 = vadd.f32 %v7615, %v7690
        %v7729 = vadd.f32 %v7616, %v7692
        %v7730 = vld [vmem:[#allocation2 + $0x20] sm:$0xfe]
        %v7731 = vld [vmem:[#allocation2 + $0x28] sm:$0xfe]
        %v7732 = vld [vmem:[#allocation2 + $0xa0] sm:$0x1]
        %v7733 = vld [vmem:[#allocation2 + $0xa8] sm:$0x1]
        %s7734 = scalar_lea.vmem %s21, 5
        %v7735 = vld [vmem:[%s7734] ss:$8 sm:$0x3]
        %v7737 = vlaneseq
        %v7738 = vshrl.u32 %v7737, 7
        %v7739 = vsub.s32 0, %v7738
        %v7740 = vrot.slane %v7735, %v7739
        %v7741 = vlaneseq
        %v7742 = vshrl.u32 %v7741, 7
        %v7743 = vsub.s32 1, %v7742
        %v7744 = vrot.slane %v7735, %v7743
        %v7747 = vmul.f32 %v7730, %v7740
        %v7748 = vmul.f32 %v7731, %v7744
        %v7749 = vmul.f32 %v7204, %v7740
        %v7750 = vmul.f32 %v7205, %v7744
        %v7751 = vmul.f32 %v7206, %v7740
        %v7752 = vmul.f32 %v7207, %v7744
        %v7753 = vmul.f32 %v7208, %v7740
        %v7754 = vmul.f32 %v7209, %v7744
        %v7755 = vmul.f32 %v7210, %v7740
        %v7756 = vmul.f32 %v7211, %v7744
        %v7757 = vmul.f32 %v7212, %v7740
        %v7758 = vmul.f32 %v7213, %v7744
        %v7759 = vmul.f32 %v7214, %v7740
        %v7760 = vmul.f32 %v7215, %v7744
        %v7761 = vmul.f32 %v7617, %v7740
        %v7762 = vmul.f32 %v7618, %v7744
        %v7763 = vmul.f32 %v7732, %v7740
        %v7764 = vmul.f32 %v7733, %v7744
        %v7783 = vrot.slane %v7747, 5
        %v7784 = vrot.slane %v7748, 5
        %v7785 = vrot.slane %v7749, 5
        %v7786 = vsel %vm2562, %v7783, %v7785
        %v7787 = vrot.slane %v7750, 5
        %v7788 = vsel %vm2562, %v7784, %v7787
        %v7789 = vrot.slane %v7751, 5
        %v7790 = vsel %vm2562, %v7785, %v7789
        %v7791 = vrot.slane %v7752, 5
        %v7792 = vsel %vm2562, %v7787, %v7791
        %v7793 = vrot.slane %v7753, 5
        %v7794 = vsel %vm2562, %v7789, %v7793
        %v7795 = vrot.slane %v7754, 5
        %v7796 = vsel %vm2562, %v7791, %v7795
        %v7797 = vrot.slane %v7755, 5
        %v7798 = vsel %vm2562, %v7793, %v7797
        %v7799 = vrot.slane %v7756, 5
        %v7800 = vsel %vm2562, %v7795, %v7799
        %v7801 = vrot.slane %v7757, 5
        %v7802 = vsel %vm2562, %v7797, %v7801
        %v7803 = vrot.slane %v7758, 5
        %v7804 = vsel %vm2562, %v7799, %v7803
        %v7805 = vrot.slane %v7759, 5
        %v7806 = vsel %vm2562, %v7801, %v7805
        %v7807 = vrot.slane %v7760, 5
        %v7808 = vsel %vm2562, %v7803, %v7807
        %v7809 = vrot.slane %v7761, 5
        %v7810 = vsel %vm2562, %v7805, %v7809
        %v7811 = vrot.slane %v7762, 5
        %v7812 = vsel %vm2562, %v7807, %v7811
        %v7813 = vrot.slane %v7763, 5
        %v7814 = vsel %vm2562, %v7809, %v7813
        %v7815 = vrot.slane %v7764, 5
        %v7816 = vsel %vm2562, %v7811, %v7815
        %v7835 = vadd.f32 %v7712, %v7783
        %v7836 = vadd.f32 %v7713, %v7784
        %v7837 = vadd.f32 %v7714, %v7786
        %v7838 = vadd.f32 %v7715, %v7788
        %v7839 = vadd.f32 %v7716, %v7790
        %v7840 = vadd.f32 %v7717, %v7792
        %v7841 = vadd.f32 %v7718, %v7794
        %v7842 = vadd.f32 %v7719, %v7796
        %v7843 = vadd.f32 %v7720, %v7798
        %v7844 = vadd.f32 %v7721, %v7800
        %v7845 = vadd.f32 %v7722, %v7802
        %v7846 = vadd.f32 %v7723, %v7804
        %v7847 = vadd.f32 %v7724, %v7806
        %v7848 = vadd.f32 %v7725, %v7808
        %v7849 = vadd.f32 %v7726, %v7810
        %v7850 = vadd.f32 %v7727, %v7812
        %v7851 = vadd.f32 %v7728, %v7814
        %v7852 = vadd.f32 %v7729, %v7816
        %v7853 = vld [vmem:[#allocation2 + $0x20] sm:$0xfc]
        %v7854 = vld [vmem:[#allocation2 + $0x28] sm:$0xfc]
        %v7855 = vld [vmem:[#allocation2 + $0xa0] sm:$0x3]
        %v7856 = vld [vmem:[#allocation2 + $0xa8] sm:$0x3]
        %s7857 = scalar_lea.vmem %s21, 6
        %v7858 = vld [vmem:[%s7857] ss:$8 sm:$0x3]
        %v7860 = vlaneseq
        %v7861 = vshrl.u32 %v7860, 7
        %v7862 = vsub.s32 0, %v7861
        %v7863 = vrot.slane %v7858, %v7862
        %v7864 = vlaneseq
        %v7865 = vshrl.u32 %v7864, 7
        %v7866 = vsub.s32 1, %v7865
        %v7867 = vrot.slane %v7858, %v7866
        %v7870 = vmul.f32 %v7853, %v7863
        %v7871 = vmul.f32 %v7854, %v7867
        %v7872 = vmul.f32 %v7204, %v7863
        %v7873 = vmul.f32 %v7205, %v7867
        %v7874 = vmul.f32 %v7206, %v7863
        %v7875 = vmul.f32 %v7207, %v7867
        %v7876 = vmul.f32 %v7208, %v7863
        %v7877 = vmul.f32 %v7209, %v7867
        %v7878 = vmul.f32 %v7210, %v7863
        %v7879 = vmul.f32 %v7211, %v7867
        %v7880 = vmul.f32 %v7212, %v7863
        %v7881 = vmul.f32 %v7213, %v7867
        %v7882 = vmul.f32 %v7214, %v7863
        %v7883 = vmul.f32 %v7215, %v7867
        %v7884 = vmul.f32 %v7617, %v7863
        %v7885 = vmul.f32 %v7618, %v7867
        %v7886 = vmul.f32 %v7855, %v7863
        %v7887 = vmul.f32 %v7856, %v7867
        %v7906 = vrot.slane %v7870, 6
        %v7907 = vrot.slane %v7871, 6
        %v7908 = vrot.slane %v7872, 6
        %v7909 = vsel %vm2767, %v7906, %v7908
        %v7910 = vrot.slane %v7873, 6
        %v7911 = vsel %vm2767, %v7907, %v7910
        %v7912 = vrot.slane %v7874, 6
        %v7913 = vsel %vm2767, %v7908, %v7912
        %v7914 = vrot.slane %v7875, 6
        %v7915 = vsel %vm2767, %v7910, %v7914
        %v7916 = vrot.slane %v7876, 6
        %v7917 = vsel %vm2767, %v7912, %v7916
        %v7918 = vrot.slane %v7877, 6
        %v7919 = vsel %vm2767, %v7914, %v7918
        %v7920 = vrot.slane %v7878, 6
        %v7921 = vsel %vm2767, %v7916, %v7920
        %v7922 = vrot.slane %v7879, 6
        %v7923 = vsel %vm2767, %v7918, %v7922
        %v7924 = vrot.slane %v7880, 6
        %v7925 = vsel %vm2767, %v7920, %v7924
        %v7926 = vrot.slane %v7881, 6
        %v7927 = vsel %vm2767, %v7922, %v7926
        %v7928 = vrot.slane %v7882, 6
        %v7929 = vsel %vm2767, %v7924, %v7928
        %v7930 = vrot.slane %v7883, 6
        %v7931 = vsel %vm2767, %v7926, %v7930
        %v7932 = vrot.slane %v7884, 6
        %v7933 = vsel %vm2767, %v7928, %v7932
        %v7934 = vrot.slane %v7885, 6
        %v7935 = vsel %vm2767, %v7930, %v7934
        %v7936 = vrot.slane %v7886, 6
        %v7937 = vsel %vm2767, %v7932, %v7936
        %v7938 = vrot.slane %v7887, 6
        %v7939 = vsel %vm2767, %v7934, %v7938
        %v7958 = vadd.f32 %v7835, %v7906
        %v7959 = vadd.f32 %v7836, %v7907
        %v7960 = vadd.f32 %v7837, %v7909
        %v7961 = vadd.f32 %v7838, %v7911
        %v7962 = vadd.f32 %v7839, %v7913
        %v7963 = vadd.f32 %v7840, %v7915
        %v7964 = vadd.f32 %v7841, %v7917
        %v7965 = vadd.f32 %v7842, %v7919
        %v7966 = vadd.f32 %v7843, %v7921
        %v7967 = vadd.f32 %v7844, %v7923
        %v7968 = vadd.f32 %v7845, %v7925
        %v7969 = vadd.f32 %v7846, %v7927
        %v7970 = vadd.f32 %v7847, %v7929
        %v7971 = vadd.f32 %v7848, %v7931
        %v7972 = vadd.f32 %v7849, %v7933
        %v7973 = vadd.f32 %v7850, %v7935
        %v7974 = vadd.f32 %v7851, %v7937
        %v7975 = vadd.f32 %v7852, %v7939
        %v7976 = vld [vmem:[#allocation2 + $0x20] sm:$0xf8]
        %v7977 = vld [vmem:[#allocation2 + $0x28] sm:$0xf8]
        %v7978 = vld [vmem:[#allocation2 + $0xa0] sm:$0x7]
        %v7979 = vld [vmem:[#allocation2 + $0xa8] sm:$0x7]
        %s7980 = scalar_lea.vmem %s21, 7
        %v7981 = vld [vmem:[%s7980] ss:$8 sm:$0x3]
        %v7983 = vlaneseq
        %v7984 = vshrl.u32 %v7983, 7
        %v7985 = vsub.s32 0, %v7984
        %v7986 = vrot.slane %v7981, %v7985
        %v7987 = vlaneseq
        %v7988 = vshrl.u32 %v7987, 7
        %v7989 = vsub.s32 1, %v7988
        %v7990 = vrot.slane %v7981, %v7989
        %v7993 = vmul.f32 %v7976, %v7986
        %v7994 = vmul.f32 %v7977, %v7990
        %v7995 = vmul.f32 %v7204, %v7986
        %v7996 = vmul.f32 %v7205, %v7990
        %v7997 = vmul.f32 %v7206, %v7986
        %v7998 = vmul.f32 %v7207, %v7990
        %v7999 = vmul.f32 %v7208, %v7986
        %v8000 = vmul.f32 %v7209, %v7990
        %v8001 = vmul.f32 %v7210, %v7986
        %v8002 = vmul.f32 %v7211, %v7990
        %v8003 = vmul.f32 %v7212, %v7986
        %v8004 = vmul.f32 %v7213, %v7990
        %v8005 = vmul.f32 %v7214, %v7986
        %v8006 = vmul.f32 %v7215, %v7990
        %v8007 = vmul.f32 %v7617, %v7986
        %v8008 = vmul.f32 %v7618, %v7990
        %v8009 = vmul.f32 %v7978, %v7986
        %v8010 = vmul.f32 %v7979, %v7990
        %v8029 = vrot.slane %v7993, 7
        %v8030 = vrot.slane %v7994, 7
        %v8031 = vrot.slane %v7995, 7
        %v8032 = vsel %vm2972, %v8029, %v8031
        %v8033 = vrot.slane %v7996, 7
        %v8034 = vsel %vm2972, %v8030, %v8033
        %v8035 = vrot.slane %v7997, 7
        %v8036 = vsel %vm2972, %v8031, %v8035
        %v8037 = vrot.slane %v7998, 7
        %v8038 = vsel %vm2972, %v8033, %v8037
        %v8039 = vrot.slane %v7999, 7
        %v8040 = vsel %vm2972, %v8035, %v8039
        %v8041 = vrot.slane %v8000, 7
        %v8042 = vsel %vm2972, %v8037, %v8041
        %v8043 = vrot.slane %v8001, 7
        %v8044 = vsel %vm2972, %v8039, %v8043
        %v8045 = vrot.slane %v8002, 7
        %v8046 = vsel %vm2972, %v8041, %v8045
        %v8047 = vrot.slane %v8003, 7
        %v8048 = vsel %vm2972, %v8043, %v8047
        %v8049 = vrot.slane %v8004, 7
        %v8050 = vsel %vm2972, %v8045, %v8049
        %v8051 = vrot.slane %v8005, 7
        %v8052 = vsel %vm2972, %v8047, %v8051
        %v8053 = vrot.slane %v8006, 7
        %v8054 = vsel %vm2972, %v8049, %v8053
        %v8055 = vrot.slane %v8007, 7
        %v8056 = vsel %vm2972, %v8051, %v8055
        %v8057 = vrot.slane %v8008, 7
        %v8058 = vsel %vm2972, %v8053, %v8057
        %v8059 = vrot.slane %v8009, 7
        %v8060 = vsel %vm2972, %v8055, %v8059
        %v8061 = vrot.slane %v8010, 7
        %v8062 = vsel %vm2972, %v8057, %v8061
        %v8081 = vadd.f32 %v7958, %v8029
        %v8082 = vadd.f32 %v7959, %v8030
        %v8083 = vadd.f32 %v7960, %v8032
        %v8084 = vadd.f32 %v7961, %v8034
        %v8085 = vadd.f32 %v7962, %v8036
        %v8086 = vadd.f32 %v7963, %v8038
        %v8087 = vadd.f32 %v7964, %v8040
        %v8088 = vadd.f32 %v7965, %v8042
        %v8089 = vadd.f32 %v7966, %v8044
        %v8090 = vadd.f32 %v7967, %v8046
        %v8091 = vadd.f32 %v7968, %v8048
        %v8092 = vadd.f32 %v7969, %v8050
        %v8093 = vadd.f32 %v7970, %v8052
        %v8094 = vadd.f32 %v7971, %v8054
        %v8095 = vadd.f32 %v7972, %v8056
        %v8096 = vadd.f32 %v7973, %v8058
        %v8097 = vadd.f32 %v7974, %v8060
        %v8098 = vadd.f32 %v7975, %v8062
        %v8099 = vld [vmem:[#allocation2 + $0x20] sm:$0xf0]
        %v8100 = vld [vmem:[#allocation2 + $0x28] sm:$0xf0]
        %v8101 = vld [vmem:[#allocation2 + $0xa0] sm:$0xf]
        %v8102 = vld [vmem:[#allocation2 + $0xa8] sm:$0xf]
        %s8103 = scalar_lea.vmem %s21, 16
        %v8104 = vld [vmem:[%s8103] ss:$8 sm:$0x3]
        %v8106 = vlaneseq
        %v8107 = vshrl.u32 %v8106, 7
        %v8108 = vsub.s32 0, %v8107
        %v8109 = vrot.slane %v8104, %v8108
        %v8110 = vlaneseq
        %v8111 = vshrl.u32 %v8110, 7
        %v8112 = vsub.s32 1, %v8111
        %v8113 = vrot.slane %v8104, %v8112
        %v8116 = vmul.f32 %v8099, %v8109
        %v8117 = vmul.f32 %v8100, %v8113
        %v8118 = vmul.f32 %v7204, %v8109
        %v8119 = vmul.f32 %v7205, %v8113
        %v8120 = vmul.f32 %v7206, %v8109
        %v8121 = vmul.f32 %v7207, %v8113
        %v8122 = vmul.f32 %v7208, %v8109
        %v8123 = vmul.f32 %v7209, %v8113
        %v8124 = vmul.f32 %v7210, %v8109
        %v8125 = vmul.f32 %v7211, %v8113
        %v8126 = vmul.f32 %v7212, %v8109
        %v8127 = vmul.f32 %v7213, %v8113
        %v8128 = vmul.f32 %v7214, %v8109
        %v8129 = vmul.f32 %v7215, %v8113
        %v8130 = vmul.f32 %v7617, %v8109
        %v8131 = vmul.f32 %v7618, %v8113
        %v8132 = vmul.f32 %v8101, %v8109
        %v8133 = vmul.f32 %v8102, %v8113
        %v8134 = vadd.f32 %v8081, %v8116
        %v8135 = vadd.f32 %v8082, %v8117
        %v8136 = vadd.f32 %v8083, %v8118
        %v8137 = vadd.f32 %v8084, %v8119
        %v8138 = vadd.f32 %v8085, %v8120
        %v8139 = vadd.f32 %v8086, %v8121
        %v8140 = vadd.f32 %v8087, %v8122
        %v8141 = vadd.f32 %v8088, %v8123
        %v8142 = vadd.f32 %v8089, %v8124
        %v8143 = vadd.f32 %v8090, %v8125
        %v8144 = vadd.f32 %v8091, %v8126
        %v8145 = vadd.f32 %v8092, %v8127
        %v8146 = vadd.f32 %v8093, %v8128
        %v8147 = vadd.f32 %v8094, %v8129
        %v8148 = vadd.f32 %v8095, %v8130
        %v8149 = vadd.f32 %v8096, %v8131
        %v8150 = vadd.f32 %v8097, %v8132
        %v8151 = vadd.f32 %v8098, %v8133
        %v8152 = vld [vmem:[%s25] sm:$0x3]
        %v8154 = vlaneseq
        %v8155 = vshrl.u32 %v8154, 7
        %v8156 = vsub.s32 0, %v8155
        %v8157 = vrot.slane %v8152, %v8156
        %v8158 = vlaneseq
        %v8159 = vshrl.u32 %v8158, 7
        %v8160 = vsub.s32 1, %v8159
        %v8161 = vrot.slane %v8152, %v8160
        %v8164 = vmul.f32 %v8134, %v8157
        %v8165 = vmul.f32 %v8135, %v8161
        %v8166 = vmul.f32 %v8136, %v8157
        %v8167 = vmul.f32 %v8137, %v8161
        %v8168 = vmul.f32 %v8138, %v8157
        %v8169 = vmul.f32 %v8139, %v8161
        %v8170 = vmul.f32 %v8140, %v8157
        %v8171 = vmul.f32 %v8141, %v8161
        %v8172 = vmul.f32 %v8142, %v8157
        %v8173 = vmul.f32 %v8143, %v8161
        %v8174 = vmul.f32 %v8144, %v8157
        %v8175 = vmul.f32 %v8145, %v8161
        %v8176 = vmul.f32 %v8146, %v8157
        %v8177 = vmul.f32 %v8147, %v8161
        %v8178 = vmul.f32 %v8148, %v8157
        %v8179 = vmul.f32 %v8149, %v8161
        %v8180 = vmul.f32 %v8150, %v8157
        %v8181 = vmul.f32 %v8151, %v8161
        %v8182 = vld [vmem:[%s27] sm:$0x3]
        %v8184 = vlaneseq
        %v8185 = vshrl.u32 %v8184, 7
        %v8186 = vsub.s32 0, %v8185
        %v8187 = vrot.slane %v8182, %v8186
        %v8188 = vlaneseq
        %v8189 = vshrl.u32 %v8188, 7
        %v8190 = vsub.s32 1, %v8189
        %v8191 = vrot.slane %v8182, %v8190
        %v8194 = vadd.f32 %v8164, %v8187
        %v8195 = vadd.f32 %v8165, %v8191
        %v8196 = vadd.f32 %v8166, %v8187
        %v8197 = vadd.f32 %v8167, %v8191
        %v8198 = vadd.f32 %v8168, %v8187
        %v8199 = vadd.f32 %v8169, %v8191
        %v8200 = vadd.f32 %v8170, %v8187
        %v8201 = vadd.f32 %v8171, %v8191
        %v8202 = vadd.f32 %v8172, %v8187
        %v8203 = vadd.f32 %v8173, %v8191
        %v8204 = vadd.f32 %v8174, %v8187
        %v8205 = vadd.f32 %v8175, %v8191
        %v8206 = vadd.f32 %v8176, %v8187
        %v8207 = vadd.f32 %v8177, %v8191
        %v8208 = vadd.f32 %v8178, %v8187
        %v8209 = vadd.f32 %v8179, %v8191
        %v8210 = vadd.f32 %v8180, %v8187
        %v8211 = vadd.f32 %v8181, %v8191
        %v8212 = vld [vmem:[%s23] sm:$0xff]
        %v8213 = vld [vmem:[%s23 + $0x8] sm:$0xff]
        %v8214 = vld [vmem:[%s23 + $0x10] sm:$0xff]
        %v8215 = vld [vmem:[%s23 + $0x18] sm:$0xff]
        %v8216 = vld [vmem:[%s23 + $0x20] sm:$0xff]
        %v8217 = vld [vmem:[%s23 + $0x28] sm:$0xff]
        %v8218 = vld [vmem:[%s23 + $0x30] sm:$0xff]
        %v8219 = vld [vmem:[%s23 + $0x38] sm:$0xff]
        %v8220 = vld [vmem:[%s23 + $0x40] sm:$0xff]
        %v8221 = vld [vmem:[%s23 + $0x48] sm:$0xff]
        %v8222 = vld [vmem:[%s23 + $0x50] sm:$0xff]
        %v8223 = vld [vmem:[%s23 + $0x58] sm:$0xff]
        %v8224 = vld [vmem:[%s23 + $0x60] sm:$0xff]
        %v8225 = vld [vmem:[%s23 + $0x68] sm:$0xff]
        %v8226 = vld [vmem:[%s23 + $0x70] sm:$0xff]
        %v8227 = vld [vmem:[%s23 + $0x78] sm:$0xff]
        %v8228 = vld [vmem:[%s23 + $0x80] sm:$0xff]
        %v8229 = vld [vmem:[%s23 + $0x88] sm:$0xff]
        %v8230 = vld [vmem:[%s23 + $0x90] sm:$0xff]
        %v8231 = vld [vmem:[%s23 + $0x98] sm:$0xff]
        %v8232 = vld [vmem:[%s23 + $0xa0] sm:$0xff]
        %v8233 = vld [vmem:[%s23 + $0xa8] sm:$0xff]
        %v8234 = vld [vmem:[%s23 + $0xb0] sm:$0xff]
        %v8235 = vld [vmem:[%s23 + $0xb8] sm:$0xff]
        %v8236 = vld [vmem:[%s23 + $0xc0] sm:$0xff]
        %v8237 = vld [vmem:[%s23 + $0xc8] sm:$0xff]
        %v8238 = vld [vmem:[%s23 + $0xd0] sm:$0xff]
        %v8239 = vld [vmem:[%s23 + $0xd8] sm:$0xff]
        %v8240 = vld [vmem:[%s23 + $0xe0] sm:$0xff]
        %v8241 = vld [vmem:[%s23 + $0xe8] sm:$0xff]
        %v8242 = vld [vmem:[%s23 + $0xf0] sm:$0xff]
        %v8243 = vld [vmem:[%s23 + $0xf8] sm:$0xff]
        %v8244 = vld [vmem:[%s23 + $0x100] sm:$0xff]
        %v8245 = vld [vmem:[%s23 + $0x108] sm:$0xff]
        %v8246 = vld [vmem:[%s23 + $0x110] sm:$0xff]
        %v8247 = vld [vmem:[%s23 + $0x118] sm:$0xff]
        %v8248 = vld [vmem:[%s23 + $0x120] sm:$0xff]
        %v8249 = vld [vmem:[%s23 + $0x128] sm:$0xff]
        %v8250 = vld [vmem:[%s23 + $0x130] sm:$0xff]
        %v8251 = vld [vmem:[%s23 + $0x138] sm:$0xff]
        %v8252 = vld [vmem:[%s23 + $0x140] sm:$0xff]
        %v8253 = vld [vmem:[%s23 + $0x148] sm:$0xff]
        %v8254 = vld [vmem:[%s23 + $0x150] sm:$0xff]
        %v8255 = vld [vmem:[%s23 + $0x158] sm:$0xff]
        %v8256 = vld [vmem:[%s23 + $0x160] sm:$0xff]
        %v8257 = vld [vmem:[%s23 + $0x168] sm:$0xff]
        %v8258 = vld [vmem:[%s23 + $0x170] sm:$0xff]
        %v8259 = vld [vmem:[%s23 + $0x178] sm:$0xff]
        %v8260 = vld [vmem:[%s23 + $0x180] sm:$0xff]
        %v8261 = vld [vmem:[%s23 + $0x188] sm:$0xff]
        %v8262 = vld [vmem:[%s23 + $0x190] sm:$0xff]
        %v8263 = vld [vmem:[%s23 + $0x198] sm:$0xff]
        %v8264 = vld [vmem:[%s23 + $0x1a0] sm:$0xff]
        %v8265 = vld [vmem:[%s23 + $0x1a8] sm:$0xff]
        %v8266 = vld [vmem:[%s23 + $0x1b0] sm:$0xff]
        %v8267 = vld [vmem:[%s23 + $0x1b8] sm:$0xff]
        %v8268 = vld [vmem:[%s23 + $0x1c0] sm:$0xff]
        %v8269 = vld [vmem:[%s23 + $0x1c8] sm:$0xff]
        %v8270 = vld [vmem:[%s23 + $0x1d0] sm:$0xff]
        %v8271 = vld [vmem:[%s23 + $0x1d8] sm:$0xff]
        %v8272 = vld [vmem:[%s23 + $0x1e0] sm:$0xff]
        %v8273 = vld [vmem:[%s23 + $0x1e8] sm:$0xff]
        %v8274 = vld [vmem:[%s23 + $0x1f0] sm:$0xff]
        %v8275 = vld [vmem:[%s23 + $0x1f8] sm:$0xff]
        %v8294 = vrot.slane %v8194, 4
        %v8295 = vrot.slane %v8196, 4
        %v8296 = vsel %vm2359, %v8294, %v8295
        %v8297 = vrot.slane %v8195, 4
        %v8298 = vrot.slane %v8197, 4
        %v8299 = vsel %vm2359, %v8297, %v8298
        %v8300 = vrot.slane %v8198, 4
        %v8301 = vsel %vm2359, %v8295, %v8300
        %v8302 = vrot.slane %v8199, 4
        %v8303 = vsel %vm2359, %v8298, %v8302
        %v8304 = vrot.slane %v8200, 4
        %v8305 = vsel %vm2359, %v8300, %v8304
        %v8306 = vrot.slane %v8201, 4
        %v8307 = vsel %vm2359, %v8302, %v8306
        %v8308 = vrot.slane %v8202, 4
        %v8309 = vsel %vm2359, %v8304, %v8308
        %v8310 = vrot.slane %v8203, 4
        %v8311 = vsel %vm2359, %v8306, %v8310
        %v8312 = vrot.slane %v8204, 4
        %v8313 = vsel %vm2359, %v8308, %v8312
        %v8314 = vrot.slane %v8205, 4
        %v8315 = vsel %vm2359, %v8310, %v8314
        %v8316 = vrot.slane %v8206, 4
        %v8317 = vsel %vm2359, %v8312, %v8316
        %v8318 = vrot.slane %v8207, 4
        %v8319 = vsel %vm2359, %v8314, %v8318
        %v8320 = vrot.slane %v8208, 4
        %v8321 = vsel %vm2359, %v8316, %v8320
        %v8322 = vrot.slane %v8209, 4
        %v8323 = vsel %vm2359, %v8318, %v8322
        %v8324 = vrot.slane %v8210, 4
        %v8325 = vsel %vm2359, %v8320, %v8324
        %v8326 = vrot.slane %v8211, 4
        %v8327 = vsel %vm2359, %v8322, %v8326
        %8344 = vmatprep.subr.mxu0 %v8243
        %8345 = vmatpush1.msra.mxu0 %v8242
        %8346 = vmatprep.subr.mxu0 %v8241
        %8347 = vmatpush1.msra.mxu0 %v8240
        %8348 = vmatprep.subr.mxu0 %v8239
        %8349 = vmatpush1.msra.mxu0 %v8238
        %8350 = vmatprep.subr.mxu0 %v8237
        %8351 = vmatpush1.msra.mxu0 %v8236
        %8352 = vmatprep.subr.mxu0 %v8235
        %8353 = vmatpush1.msra.mxu0 %v8234
        %8354 = vmatprep.subr.mxu0 %v8233
        %8355 = vmatpush1.msra.mxu0 %v8232
        %8356 = vmatprep.subr.mxu0 %v8231
        %8357 = vmatpush1.msra.mxu0 %v8230
        %8358 = vmatprep.subr.mxu0 %v8229
        %8359 = vmatpush1.msra.mxu0 %v8228
        %8360 = vmatprep.subr.mxu0 %v8227
        %8361 = vmatpush1.msra.mxu0 %v8226
        %8362 = vmatprep.subr.mxu0 %v8225
        %8363 = vmatpush1.msra.mxu0 %v8224
        %8364 = vmatprep.subr.mxu0 %v8223
        %8365 = vmatpush1.msra.mxu0 %v8222
        %8366 = vmatprep.subr.mxu0 %v8221
        %8367 = vmatpush1.msra.mxu0 %v8220
        %8368 = vmatprep.subr.mxu0 %v8219
        %8369 = vmatpush1.msra.mxu0 %v8218
        %8370 = vmatprep.subr.mxu0 %v8217
        %8371 = vmatpush1.msra.mxu0 %v8216
        %8372 = vmatprep.subr.mxu0 %v8215
        %8373 = vmatpush1.msra.mxu0 %v8214
        %8374 = vmatprep.subr.mxu0 %v8213
        %8375 = vmatpush1.msra.mxu0 %v8212
        %8376 = vmatprep.subr.mxu0 %v8275
        %8377 = vmatpush2.msra.mxu0 %v8274
        %8378 = vmatprep.subr.mxu0 %v8273
        %8379 = vmatpush2.msra.mxu0 %v8272
        %8380 = vmatprep.subr.mxu0 %v8271
        %8381 = vmatpush2.msra.mxu0 %v8270
        %8382 = vmatprep.subr.mxu0 %v8269
        %8383 = vmatpush2.msra.mxu0 %v8268
        %8384 = vmatprep.subr.mxu0 %v8267
        %8385 = vmatpush2.msra.mxu0 %v8266
        %8386 = vmatprep.subr.mxu0 %v8265
        %8387 = vmatpush2.msra.mxu0 %v8264
        %8388 = vmatprep.subr.mxu0 %v8263
        %8389 = vmatpush2.msra.mxu0 %v8262
        %8390 = vmatprep.subr.mxu0 %v8261
        %8391 = vmatpush2.msra.mxu0 %v8260
        %8392 = vmatprep.subr.mxu0 %v8259
        %8393 = vmatpush2.msra.mxu0 %v8258
        %8394 = vmatprep.subr.mxu0 %v8257
        %8395 = vmatpush2.msra.mxu0 %v8256
        %8396 = vmatprep.subr.mxu0 %v8255
        %8397 = vmatpush2.msra.mxu0 %v8254
        %8398 = vmatprep.subr.mxu0 %v8253
        %8399 = vmatpush2.msra.mxu0 %v8252
        %8400 = vmatprep.subr.mxu0 %v8251
        %8401 = vmatpush2.msra.mxu0 %v8250
        %8402 = vmatprep.subr.mxu0 %v8249
        %8403 = vmatpush2.msra.mxu0 %v8248
        %8404 = vmatprep.subr.mxu0 %v8247
        %8405 = vmatpush2.msra.mxu0 %v8246
        %8406 = vmatprep.subr.mxu0 %v8245
        %8407 = vmatpush2.msra.mxu0 %v8244
        %8408 = vmatprep.mubr.f32.mxu0 %v8299
        %8409 = vmatmul.mubr.f32.gmra.mxu0 %v8296
        %v8410 = vpop.f32.mrf.mxu0
        %v8411 = vadd.f32 0.0, %v8410
        %v8412 = vpop.f32.mrf.mxu0
        %v8413 = vadd.f32 0.0, %v8412
        %8414 = vmatprep.mubr.f32.mxu0 %v8303
        %8415 = vmatmul.mubr.f32.gmra.mxu0 %v8301
        %v8416 = vpop.f32.mrf.mxu0
        %v8417 = vadd.f32 0.0, %v8416
        %v8418 = vpop.f32.mrf.mxu0
        %v8419 = vadd.f32 0.0, %v8418
        %8420 = vmatprep.mubr.f32.mxu0 %v8307
        %8421 = vmatmul.mubr.f32.gmra.mxu0 %v8305
        %v8422 = vpop.f32.mrf.mxu0
        %v8423 = vadd.f32 0.0, %v8422
        %v8424 = vpop.f32.mrf.mxu0
        %v8425 = vadd.f32 0.0, %v8424
        %8426 = vmatprep.mubr.f32.mxu0 %v8311
        %8427 = vmatmul.mubr.f32.gmra.mxu0 %v8309
        %v8428 = vpop.f32.mrf.mxu0
        %v8429 = vadd.f32 0.0, %v8428
        %v8430 = vpop.f32.mrf.mxu0
        %v8431 = vadd.f32 0.0, %v8430
        %8432 = vmatprep.mubr.f32.mxu0 %v8315
        %8433 = vmatmul.mubr.f32.gmra.mxu0 %v8313
        %v8434 = vpop.f32.mrf.mxu0
        %v8435 = vadd.f32 0.0, %v8434
        %v8436 = vpop.f32.mrf.mxu0
        %v8437 = vadd.f32 0.0, %v8436
        %8438 = vmatprep.mubr.f32.mxu0 %v8319
        %8439 = vmatmul.mubr.f32.gmra.mxu0 %v8317
        %v8440 = vpop.f32.mrf.mxu0
        %v8441 = vadd.f32 0.0, %v8440
        %v8442 = vpop.f32.mrf.mxu0
        %v8443 = vadd.f32 0.0, %v8442
        %8444 = vmatprep.mubr.f32.mxu0 %v8323
        %8445 = vmatmul.mubr.f32.gmra.mxu0 %v8321
        %v8446 = vpop.f32.mrf.mxu0
        %v8447 = vadd.f32 0.0, %v8446
        %v8448 = vpop.f32.mrf.mxu0
        %v8449 = vadd.f32 0.0, %v8448
        %8450 = vmatprep.mubr.f32.mxu0 %v8327
        %8451 = vmatmul.mubr.f32.gmra.mxu0 %v8325
        %v8452 = vpop.f32.mrf.mxu0
        %v8453 = vadd.f32 0.0, %v8452
        %v8454 = vpop.f32.mrf.mxu0
        %v8455 = vadd.f32 0.0, %v8454
        %8456 = vdwg.mxu0
        %v8457 = vld [vmem:[%s29] sm:$0x3]
        %v8459 = vlaneseq
        %v8460 = vshrl.u32 %v8459, 7
        %v8461 = vsub.s32 0, %v8460
        %v8462 = vrot.slane %v8457, %v8461
        %v8463 = vlaneseq
        %v8464 = vshrl.u32 %v8463, 7
        %v8465 = vsub.s32 1, %v8464
        %v8466 = vrot.slane %v8457, %v8465
        %v8469 = vmul.f32 %v8411, %v8462
        %v8470 = vmul.f32 %v8413, %v8466
        %v8471 = vmul.f32 %v8417, %v8462
        %v8472 = vmul.f32 %v8419, %v8466
        %v8473 = vmul.f32 %v8423, %v8462
        %v8474 = vmul.f32 %v8425, %v8466
        %v8475 = vmul.f32 %v8429, %v8462
        %v8476 = vmul.f32 %v8431, %v8466
        %v8477 = vmul.f32 %v8435, %v8462
        %v8478 = vmul.f32 %v8437, %v8466
        %v8479 = vmul.f32 %v8441, %v8462
        %v8480 = vmul.f32 %v8443, %v8466
        %v8481 = vmul.f32 %v8447, %v8462
        %v8482 = vmul.f32 %v8449, %v8466
        %v8483 = vmul.f32 %v8453, %v8462
        %v8484 = vmul.f32 %v8455, %v8466
        %v8485 = vld [vmem:[%s31] sm:$0x3]
        %v8487 = vlaneseq
        %v8488 = vshrl.u32 %v8487, 7
        %v8489 = vsub.s32 0, %v8488
        %v8490 = vrot.slane %v8485, %v8489
        %v8491 = vlaneseq
        %v8492 = vshrl.u32 %v8491, 7
        %v8493 = vsub.s32 1, %v8492
        %v8494 = vrot.slane %v8485, %v8493
        %v8497 = vadd.f32 %v8469, %v8490
        %v8498 = vadd.f32 %v8470, %v8494
        %v8499 = vadd.f32 %v8471, %v8490
        %v8500 = vadd.f32 %v8472, %v8494
        %v8501 = vadd.f32 %v8473, %v8490
        %v8502 = vadd.f32 %v8474, %v8494
        %v8503 = vadd.f32 %v8475, %v8490
        %v8504 = vadd.f32 %v8476, %v8494
        %v8505 = vadd.f32 %v8477, %v8490
        %v8506 = vadd.f32 %v8478, %v8494
        %v8507 = vadd.f32 %v8479, %v8490
        %v8508 = vadd.f32 %v8480, %v8494
        %v8509 = vadd.f32 %v8481, %v8490
        %v8510 = vadd.f32 %v8482, %v8494
        %v8511 = vadd.f32 %v8483, %v8490
        %v8512 = vadd.f32 %v8484, %v8494
        %vm8513 = vcmp.ge.f32.partialorder %v8497, 0.0
        %vm8514 = vcmp.ge.f32.partialorder %v8498, 0.0
        %vm8515 = vcmp.ge.f32.partialorder %v8499, 0.0
        %vm8516 = vcmp.ge.f32.partialorder %v8500, 0.0
        %vm8517 = vcmp.ge.f32.partialorder %v8501, 0.0
        %vm8518 = vcmp.ge.f32.partialorder %v8502, 0.0
        %vm8519 = vcmp.ge.f32.partialorder %v8503, 0.0
        %vm8520 = vcmp.ge.f32.partialorder %v8504, 0.0
        %vm8521 = vcmp.ge.f32.partialorder %v8505, 0.0
        %vm8522 = vcmp.ge.f32.partialorder %v8506, 0.0
        %vm8523 = vcmp.ge.f32.partialorder %v8507, 0.0
        %vm8524 = vcmp.ge.f32.partialorder %v8508, 0.0
        %vm8525 = vcmp.ge.f32.partialorder %v8509, 0.0
        %vm8526 = vcmp.ge.f32.partialorder %v8510, 0.0
        %vm8527 = vcmp.ge.f32.partialorder %v8511, 0.0
        %vm8528 = vcmp.ge.f32.partialorder %v8512, 0.0
        %v8529 = vmul.f32 %v8497, 0.2
        %v8530 = vmul.f32 %v8498, 0.2
        %v8531 = vmul.f32 %v8499, 0.2
        %v8532 = vmul.f32 %v8500, 0.2
        %v8533 = vmul.f32 %v8501, 0.2
        %v8534 = vmul.f32 %v8502, 0.2
        %v8535 = vmul.f32 %v8503, 0.2
        %v8536 = vmul.f32 %v8504, 0.2
        %v8537 = vmul.f32 %v8505, 0.2
        %v8538 = vmul.f32 %v8506, 0.2
        %v8539 = vmul.f32 %v8507, 0.2
        %v8540 = vmul.f32 %v8508, 0.2
        %v8541 = vmul.f32 %v8509, 0.2
        %v8542 = vmul.f32 %v8510, 0.2
        %v8543 = vmul.f32 %v8511, 0.2
        %v8544 = vmul.f32 %v8512, 0.2
        %v8545 = vsel %vm8513, %v8497, %v8529
        %v8546 = vsel %vm8514, %v8498, %v8530
        %v8547 = vsel %vm8515, %v8499, %v8531
        %v8548 = vsel %vm8516, %v8500, %v8532
        %v8549 = vsel %vm8517, %v8501, %v8533
        %v8550 = vsel %vm8518, %v8502, %v8534
        %v8551 = vsel %vm8519, %v8503, %v8535
        %v8552 = vsel %vm8520, %v8504, %v8536
        %v8553 = vsel %vm8521, %v8505, %v8537
        %v8554 = vsel %vm8522, %v8506, %v8538
        %v8555 = vsel %vm8523, %v8507, %v8539
        %v8556 = vsel %vm8524, %v8508, %v8540
        %v8557 = vsel %vm8525, %v8509, %v8541
        %v8558 = vsel %vm8526, %v8510, %v8542
        %v8559 = vsel %vm8527, %v8511, %v8543
        %v8560 = vsel %vm8528, %v8512, %v8544
        %vm8561 = vcmask 523264
        %v8563 = vsel %vm8561, %v7055, 0
        %v8566 = vsel %vm8561, %v7056, 0
        %v8569 = vsel %vm8561, %v7057, 0
        %v8572 = vsel %vm8561, %v7058, 0
        %8574 = vmatprep.subr.mxu0 0.0
        %8575 = vmatpush1.msra.mxu0 0.0
        %8576 = vmatprep.subr.mxu0 0.0
        %8577 = vmatpush1.msra.mxu0 0.0
        %8578 = vmatprep.subr.mxu0 0.0
        %8579 = vmatpush1.msra.mxu0 0.0
        %8580 = vmatprep.subr.mxu0 0.0
        %8581 = vmatpush1.msra.mxu0 0.0
        %8582 = vmatprep.subr.mxu0 0.0
        %8583 = vmatpush1.msra.mxu0 0.0
        %8584 = vmatprep.subr.mxu0 0.0
        %8585 = vmatpush1.msra.mxu0 0.0
        %8586 = vmatprep.subr.mxu0 0.0
        %8587 = vmatpush1.msra.mxu0 0.0
        %8588 = vmatprep.subr.mxu0 0.0
        %8589 = vmatpush1.msra.mxu0 0.0
        %8590 = vmatprep.subr.mxu0 %v8560
        %8591 = vmatpush1.msra.mxu0 %v8559
        %8592 = vmatprep.subr.mxu0 %v8558
        %8593 = vmatpush1.msra.mxu0 %v8557
        %8594 = vmatprep.subr.mxu0 %v8556
        %8595 = vmatpush1.msra.mxu0 %v8555
        %8596 = vmatprep.subr.mxu0 %v8554
        %8597 = vmatpush1.msra.mxu0 %v8553
        %8598 = vmatprep.subr.mxu0 %v8552
        %8599 = vmatpush1.msra.mxu0 %v8551
        %8600 = vmatprep.subr.mxu0 %v8550
        %8601 = vmatpush1.msra.mxu0 %v8549
        %8602 = vmatprep.subr.mxu0 %v8548
        %8603 = vmatpush1.msra.mxu0 %v8547
        %8604 = vmatprep.subr.mxu0 %v8546
        %8605 = vmatpush1.msra.mxu0 %v8545
        %8606 = vmatprep.subr.mxu0 0.0
        %8607 = vmatpush2.msra.mxu0 0.0
        %8608 = vmatprep.subr.mxu0 0.0
        %8609 = vmatpush2.msra.mxu0 0.0
        %8610 = vmatprep.subr.mxu0 0.0
        %8611 = vmatpush2.msra.mxu0 0.0
        %8612 = vmatprep.subr.mxu0 0.0
        %8613 = vmatpush2.msra.mxu0 0.0
        %8614 = vmatprep.subr.mxu0 0.0
        %8615 = vmatpush2.msra.mxu0 0.0
        %8616 = vmatprep.subr.mxu0 0.0
        %8617 = vmatpush2.msra.mxu0 0.0
        %8618 = vmatprep.subr.mxu0 0.0
        %8619 = vmatpush2.msra.mxu0 0.0
        %8620 = vmatprep.subr.mxu0 0.0
        %8621 = vmatpush2.msra.mxu0 0.0
        %8622 = vmatprep.subr.mxu0 0.0
        %8623 = vmatpush2.msra.mxu0 0.0
        %8624 = vmatprep.subr.mxu0 0.0
        %8625 = vmatpush2.msra.mxu0 0.0
        %8626 = vmatprep.subr.mxu0 0.0
        %8627 = vmatpush2.msra.mxu0 0.0
        %8628 = vmatprep.subr.mxu0 0.0
        %8629 = vmatpush2.msra.mxu0 0.0
        %8630 = vmatprep.subr.mxu0 0.0
        %8631 = vmatpush2.msra.mxu0 0.0
        %8632 = vmatprep.subr.mxu0 0.0
        %8633 = vmatpush2.msra.mxu0 0.0
        %8634 = vmatprep.subr.mxu0 0.0
        %8635 = vmatpush2.msra.mxu0 0.0
        %8636 = vmatprep.subr.mxu0 0.0
        %8637 = vmatpush2.msra.mxu0 0.0
        %8638 = vmatprep.mubr.f32.mxu0 0.0
        %8639 = vmatmul.mubr.f32.gmra.mxu0 %v8563
        %v8640 = vpop.f32.mrf.mxu0
        %v8641 = vadd.f32 0.0, %v8640
        %v8642 = vpop.f32.mrf.mxu0
        %v8643 = vadd.f32 0.0, %v8642
        %8644 = vmatprep.mubr.f32.mxu0 0.0
        %8645 = vmatmul.mubr.f32.gmra.mxu0 %v8566
        %v8646 = vpop.f32.mrf.mxu0
        %v8647 = vadd.f32 0.0, %v8646
        %v8648 = vpop.f32.mrf.mxu0
        %v8649 = vadd.f32 0.0, %v8648
        %8650 = vmatprep.mubr.f32.mxu0 0.0
        %8651 = vmatmul.mubr.f32.gmra.mxu0 %v8569
        %v8652 = vpop.f32.mrf.mxu0
        %v8653 = vadd.f32 0.0, %v8652
        %v8654 = vpop.f32.mrf.mxu0
        %v8655 = vadd.f32 0.0, %v8654
        %8656 = vmatprep.mubr.f32.mxu0 0.0
        %8657 = vmatmul.mubr.f32.gmra.mxu0 %v8572
        %v8658 = vpop.f32.mrf.mxu0
        %v8659 = vadd.f32 0.0, %v8658
        %v8660 = vpop.f32.mrf.mxu0
        %v8661 = vadd.f32 0.0, %v8660
        %8662 = vdwg.mxu0
        %8663 = vst [vmem:[#allocation2] sm:$0xff] 0.0
        %8664 = vst [vmem:[#allocation2 + $0x8] sm:$0xff] 0.0
        %8665 = vst [vmem:[#allocation2 + $0x10] sm:$0xff] 0.0
        %8666 = vst [vmem:[#allocation2 + $0x18] sm:$0xff] 0.0
        %8667 = vst [vmem:[#allocation2 + $0x60] sm:$0xff] 0.0
        %8668 = vst [vmem:[#allocation2 + $0x68] sm:$0xff] 0.0
        %8669 = vst [vmem:[#allocation2 + $0x70] sm:$0xff] 0.0
        %8670 = vst [vmem:[#allocation2 + $0x78] sm:$0xff] 0.0
        %8671 = vst [vmem:[#allocation2 + $0x20] sm:$0xff] %v8641
        %8672 = vst [vmem:[#allocation2 + $0x28] sm:$0xff] %v8643
        %8673 = vst [vmem:[#allocation2 + $0x30] sm:$0xff] %v8647
        %8674 = vst [vmem:[#allocation2 + $0x38] sm:$0xff] %v8649
        %8675 = vst [vmem:[#allocation2 + $0x40] sm:$0xff] %v8653
        %8676 = vst [vmem:[#allocation2 + $0x48] sm:$0xff] %v8655
        %8677 = vst [vmem:[#allocation2 + $0x50] sm:$0xff] %v8659
        %8678 = vst [vmem:[#allocation2 + $0x58] sm:$0xff] %v8661
        %v8679 = vld [vmem:[#allocation2 + $0x10] sm:$0xf0]
        %v8680 = vld [vmem:[#allocation2 + $0x18] sm:$0xf0]
        %v8681 = vld [vmem:[#allocation2 + $0x20] sm:$0xff]
        %v8682 = vld [vmem:[#allocation2 + $0x28] sm:$0xff]
        %v8683 = vld [vmem:[#allocation2 + $0x30] sm:$0xff]
        %v8684 = vld [vmem:[#allocation2 + $0x38] sm:$0xff]
        %v8685 = vld [vmem:[#allocation2 + $0x40] sm:$0xff]
        %v8686 = vld [vmem:[#allocation2 + $0x48] sm:$0xff]
        %v8687 = vld [vmem:[#allocation2 + $0x50] sm:$0xf]
        %v8688 = vld [vmem:[#allocation2 + $0x58] sm:$0xf]
        %v8689 = vld [vmem:[%s33] ss:$8 sm:$0x3]
        %v8691 = vlaneseq
        %v8692 = vshrl.u32 %v8691, 7
        %v8693 = vsub.s32 0, %v8692
        %v8694 = vrot.slane %v8689, %v8693
        %v8695 = vlaneseq
        %v8696 = vshrl.u32 %v8695, 7
        %v8697 = vsub.s32 1, %v8696
        %v8698 = vrot.slane %v8689, %v8697
        %v8701 = vmul.f32 %v8679, %v8694
        %v8702 = vmul.f32 %v8680, %v8698
        %v8703 = vmul.f32 %v8681, %v8694
        %v8704 = vmul.f32 %v8682, %v8698
        %v8705 = vmul.f32 %v8683, %v8694
        %v8706 = vmul.f32 %v8684, %v8698
        %v8707 = vmul.f32 %v8685, %v8694
        %v8708 = vmul.f32 %v8686, %v8698
        %v8709 = vmul.f32 %v8687, %v8694
        %v8710 = vmul.f32 %v8688, %v8698
        %v8711 = vld [vmem:[#allocation2 + $0x10] sm:$0xe0]
        %v8712 = vld [vmem:[#allocation2 + $0x18] sm:$0xe0]
        %v8713 = vld [vmem:[#allocation2 + $0x50] sm:$0x1f]
        %v8714 = vld [vmem:[#allocation2 + $0x58] sm:$0x1f]
        %s8715 = scalar_lea.vmem %s33, 1
        %v8716 = vld [vmem:[%s8715] ss:$8 sm:$0x3]
        %v8718 = vlaneseq
        %v8719 = vshrl.u32 %v8718, 7
        %v8720 = vsub.s32 0, %v8719
        %v8721 = vrot.slane %v8716, %v8720
        %v8722 = vlaneseq
        %v8723 = vshrl.u32 %v8722, 7
        %v8724 = vsub.s32 1, %v8723
        %v8725 = vrot.slane %v8716, %v8724
        %v8728 = vmul.f32 %v8711, %v8721
        %v8729 = vmul.f32 %v8712, %v8725
        %v8730 = vmul.f32 %v8681, %v8721
        %v8731 = vmul.f32 %v8682, %v8725
        %v8732 = vmul.f32 %v8683, %v8721
        %v8733 = vmul.f32 %v8684, %v8725
        %v8734 = vmul.f32 %v8685, %v8721
        %v8735 = vmul.f32 %v8686, %v8725
        %v8736 = vmul.f32 %v8713, %v8721
        %v8737 = vmul.f32 %v8714, %v8725
        %v8748 = vrot.slane %v8728, 1
        %v8749 = vrot.slane %v8730, 1
        %v8750 = vsel %vm1747, %v8748, %v8749
        %v8751 = vrot.slane %v8729, 1
        %v8752 = vrot.slane %v8731, 1
        %v8753 = vsel %vm1747, %v8751, %v8752
        %v8754 = vrot.slane %v8732, 1
        %v8755 = vsel %vm1747, %v8749, %v8754
        %v8756 = vrot.slane %v8733, 1
        %v8757 = vsel %vm1747, %v8752, %v8756
        %v8758 = vrot.slane %v8734, 1
        %v8759 = vsel %vm1747, %v8754, %v8758
        %v8760 = vrot.slane %v8735, 1
        %v8761 = vsel %vm1747, %v8756, %v8760
        %v8762 = vrot.slane %v8736, 1
        %v8763 = vsel %vm1747, %v8758, %v8762
        %v8764 = vrot.slane %v8737, 1
        %v8765 = vsel %vm1747, %v8760, %v8764
        %v8776 = vadd.f32 %v8701, %v8750
        %v8777 = vadd.f32 %v8702, %v8753
        %v8778 = vadd.f32 %v8703, %v8755
        %v8779 = vadd.f32 %v8704, %v8757
        %v8780 = vadd.f32 %v8705, %v8759
        %v8781 = vadd.f32 %v8706, %v8761
        %v8782 = vadd.f32 %v8707, %v8763
        %v8783 = vadd.f32 %v8708, %v8765
        %v8784 = vadd.f32 %v8709, %v8762
        %v8785 = vadd.f32 %v8710, %v8764
        %v8786 = vld [vmem:[#allocation2 + $0x10] sm:$0xc0]
        %v8787 = vld [vmem:[#allocation2 + $0x18] sm:$0xc0]
        %v8788 = vld [vmem:[#allocation2 + $0x50] sm:$0x3f]
        %v8789 = vld [vmem:[#allocation2 + $0x58] sm:$0x3f]
        %s8790 = scalar_lea.vmem %s33, 2
        %v8791 = vld [vmem:[%s8790] ss:$8 sm:$0x3]
        %v8793 = vlaneseq
        %v8794 = vshrl.u32 %v8793, 7
        %v8795 = vsub.s32 0, %v8794
        %v8796 = vrot.slane %v8791, %v8795
        %v8797 = vlaneseq
        %v8798 = vshrl.u32 %v8797, 7
        %v8799 = vsub.s32 1, %v8798
        %v8800 = vrot.slane %v8791, %v8799
        %v8803 = vmul.f32 %v8786, %v8796
        %v8804 = vmul.f32 %v8787, %v8800
        %v8805 = vmul.f32 %v8681, %v8796
        %v8806 = vmul.f32 %v8682, %v8800
        %v8807 = vmul.f32 %v8683, %v8796
        %v8808 = vmul.f32 %v8684, %v8800
        %v8809 = vmul.f32 %v8685, %v8796
        %v8810 = vmul.f32 %v8686, %v8800
        %v8811 = vmul.f32 %v8788, %v8796
        %v8812 = vmul.f32 %v8789, %v8800
        %v8823 = vrot.slane %v8803, 2
        %v8824 = vrot.slane %v8805, 2
        %v8825 = vsel %vm1952, %v8823, %v8824
        %v8826 = vrot.slane %v8804, 2
        %v8827 = vrot.slane %v8806, 2
        %v8828 = vsel %vm1952, %v8826, %v8827
        %v8829 = vrot.slane %v8807, 2
        %v8830 = vsel %vm1952, %v8824, %v8829
        %v8831 = vrot.slane %v8808, 2
        %v8832 = vsel %vm1952, %v8827, %v8831
        %v8833 = vrot.slane %v8809, 2
        %v8834 = vsel %vm1952, %v8829, %v8833
        %v8835 = vrot.slane %v8810, 2
        %v8836 = vsel %vm1952, %v8831, %v8835
        %v8837 = vrot.slane %v8811, 2
        %v8838 = vsel %vm1952, %v8833, %v8837
        %v8839 = vrot.slane %v8812, 2
        %v8840 = vsel %vm1952, %v8835, %v8839
        %v8851 = vadd.f32 %v8776, %v8825
        %v8852 = vadd.f32 %v8777, %v8828
        %v8853 = vadd.f32 %v8778, %v8830
        %v8854 = vadd.f32 %v8779, %v8832
        %v8855 = vadd.f32 %v8780, %v8834
        %v8856 = vadd.f32 %v8781, %v8836
        %v8857 = vadd.f32 %v8782, %v8838
        %v8858 = vadd.f32 %v8783, %v8840
        %v8859 = vadd.f32 %v8784, %v8837
        %v8860 = vadd.f32 %v8785, %v8839
        %v8861 = vld [vmem:[#allocation2 + $0x10] sm:$0x80]
        %v8862 = vld [vmem:[#allocation2 + $0x18] sm:$0x80]
        %v8863 = vld [vmem:[#allocation2 + $0x50] sm:$0x7f]
        %v8864 = vld [vmem:[#allocation2 + $0x58] sm:$0x7f]
        %s8865 = scalar_lea.vmem %s33, 3
        %v8866 = vld [vmem:[%s8865] ss:$8 sm:$0x3]
        %v8868 = vlaneseq
        %v8869 = vshrl.u32 %v8868, 7
        %v8870 = vsub.s32 0, %v8869
        %v8871 = vrot.slane %v8866, %v8870
        %v8872 = vlaneseq
        %v8873 = vshrl.u32 %v8872, 7
        %v8874 = vsub.s32 1, %v8873
        %v8875 = vrot.slane %v8866, %v8874
        %v8878 = vmul.f32 %v8861, %v8871
        %v8879 = vmul.f32 %v8862, %v8875
        %v8880 = vmul.f32 %v8681, %v8871
        %v8881 = vmul.f32 %v8682, %v8875
        %v8882 = vmul.f32 %v8683, %v8871
        %v8883 = vmul.f32 %v8684, %v8875
        %v8884 = vmul.f32 %v8685, %v8871
        %v8885 = vmul.f32 %v8686, %v8875
        %v8886 = vmul.f32 %v8863, %v8871
        %v8887 = vmul.f32 %v8864, %v8875
        %v8898 = vrot.slane %v8878, 3
        %v8899 = vrot.slane %v8880, 3
        %v8900 = vsel %vm2157, %v8898, %v8899
        %v8901 = vrot.slane %v8879, 3
        %v8902 = vrot.slane %v8881, 3
        %v8903 = vsel %vm2157, %v8901, %v8902
        %v8904 = vrot.slane %v8882, 3
        %v8905 = vsel %vm2157, %v8899, %v8904
        %v8906 = vrot.slane %v8883, 3
        %v8907 = vsel %vm2157, %v8902, %v8906
        %v8908 = vrot.slane %v8884, 3
        %v8909 = vsel %vm2157, %v8904, %v8908
        %v8910 = vrot.slane %v8885, 3
        %v8911 = vsel %vm2157, %v8906, %v8910
        %v8912 = vrot.slane %v8886, 3
        %v8913 = vsel %vm2157, %v8908, %v8912
        %v8914 = vrot.slane %v8887, 3
        %v8915 = vsel %vm2157, %v8910, %v8914
        %v8926 = vadd.f32 %v8851, %v8900
        %v8927 = vadd.f32 %v8852, %v8903
        %v8928 = vadd.f32 %v8853, %v8905
        %v8929 = vadd.f32 %v8854, %v8907
        %v8930 = vadd.f32 %v8855, %v8909
        %v8931 = vadd.f32 %v8856, %v8911
        %v8932 = vadd.f32 %v8857, %v8913
        %v8933 = vadd.f32 %v8858, %v8915
        %v8934 = vadd.f32 %v8859, %v8912
        %v8935 = vadd.f32 %v8860, %v8914
        %v8936 = vld [vmem:[#allocation2 + $0x50] sm:$0xff]
        %v8937 = vld [vmem:[#allocation2 + $0x58] sm:$0xff]
        %s8938 = scalar_lea.vmem %s33, 4
        %v8939 = vld [vmem:[%s8938] ss:$8 sm:$0x3]
        %v8941 = vlaneseq
        %v8942 = vshrl.u32 %v8941, 7
        %v8943 = vsub.s32 0, %v8942
        %v8944 = vrot.slane %v8939, %v8943
        %v8945 = vlaneseq
        %v8946 = vshrl.u32 %v8945, 7
        %v8947 = vsub.s32 1, %v8946
        %v8948 = vrot.slane %v8939, %v8947
        %v8951 = vmul.f32 %v8681, %v8944
        %v8952 = vmul.f32 %v8682, %v8948
        %v8953 = vmul.f32 %v8683, %v8944
        %v8954 = vmul.f32 %v8684, %v8948
        %v8955 = vmul.f32 %v8685, %v8944
        %v8956 = vmul.f32 %v8686, %v8948
        %v8957 = vmul.f32 %v8936, %v8944
        %v8958 = vmul.f32 %v8937, %v8948
        %v8967 = vrot.slane %v8951, 4
        %v8968 = vrot.slane %v8952, 4
        %v8969 = vrot.slane %v8953, 4
        %v8970 = vsel %vm2359, %v8967, %v8969
        %v8971 = vrot.slane %v8954, 4
        %v8972 = vsel %vm2359, %v8968, %v8971
        %v8973 = vrot.slane %v8955, 4
        %v8974 = vsel %vm2359, %v8969, %v8973
        %v8975 = vrot.slane %v8956, 4
        %v8976 = vsel %vm2359, %v8971, %v8975
        %v8977 = vrot.slane %v8957, 4
        %v8978 = vsel %vm2359, %v8973, %v8977
        %v8979 = vrot.slane %v8958, 4
        %v8980 = vsel %vm2359, %v8975, %v8979
        %v8991 = vadd.f32 %v8926, %v8967
        %v8992 = vadd.f32 %v8927, %v8968
        %v8993 = vadd.f32 %v8928, %v8970
        %v8994 = vadd.f32 %v8929, %v8972
        %v8995 = vadd.f32 %v8930, %v8974
        %v8996 = vadd.f32 %v8931, %v8976
        %v8997 = vadd.f32 %v8932, %v8978
        %v8998 = vadd.f32 %v8933, %v8980
        %v8999 = vadd.f32 %v8934, %v8977
        %v9000 = vadd.f32 %v8935, %v8979
        %v9001 = vld [vmem:[#allocation2 + $0x20] sm:$0xfe]
        %v9002 = vld [vmem:[#allocation2 + $0x28] sm:$0xfe]
        %v9003 = vld [vmem:[#allocation2 + $0x60] sm:$0x1]
        %v9004 = vld [vmem:[#allocation2 + $0x68] sm:$0x1]
        %s9005 = scalar_lea.vmem %s33, 5
        %v9006 = vld [vmem:[%s9005] ss:$8 sm:$0x3]
        %v9008 = vlaneseq
        %v9009 = vshrl.u32 %v9008, 7
        %v9010 = vsub.s32 0, %v9009
        %v9011 = vrot.slane %v9006, %v9010
        %v9012 = vlaneseq
        %v9013 = vshrl.u32 %v9012, 7
        %v9014 = vsub.s32 1, %v9013
        %v9015 = vrot.slane %v9006, %v9014
        %v9018 = vmul.f32 %v9001, %v9011
        %v9019 = vmul.f32 %v9002, %v9015
        %v9020 = vmul.f32 %v8683, %v9011
        %v9021 = vmul.f32 %v8684, %v9015
        %v9022 = vmul.f32 %v8685, %v9011
        %v9023 = vmul.f32 %v8686, %v9015
        %v9024 = vmul.f32 %v8936, %v9011
        %v9025 = vmul.f32 %v8937, %v9015
        %v9026 = vmul.f32 %v9003, %v9011
        %v9027 = vmul.f32 %v9004, %v9015
        %v9038 = vrot.slane %v9018, 5
        %v9039 = vrot.slane %v9019, 5
        %v9040 = vrot.slane %v9020, 5
        %v9041 = vsel %vm2562, %v9038, %v9040
        %v9042 = vrot.slane %v9021, 5
        %v9043 = vsel %vm2562, %v9039, %v9042
        %v9044 = vrot.slane %v9022, 5
        %v9045 = vsel %vm2562, %v9040, %v9044
        %v9046 = vrot.slane %v9023, 5
        %v9047 = vsel %vm2562, %v9042, %v9046
        %v9048 = vrot.slane %v9024, 5
        %v9049 = vsel %vm2562, %v9044, %v9048
        %v9050 = vrot.slane %v9025, 5
        %v9051 = vsel %vm2562, %v9046, %v9050
        %v9052 = vrot.slane %v9026, 5
        %v9053 = vsel %vm2562, %v9048, %v9052
        %v9054 = vrot.slane %v9027, 5
        %v9055 = vsel %vm2562, %v9050, %v9054
        %v9066 = vadd.f32 %v8991, %v9038
        %v9067 = vadd.f32 %v8992, %v9039
        %v9068 = vadd.f32 %v8993, %v9041
        %v9069 = vadd.f32 %v8994, %v9043
        %v9070 = vadd.f32 %v8995, %v9045
        %v9071 = vadd.f32 %v8996, %v9047
        %v9072 = vadd.f32 %v8997, %v9049
        %v9073 = vadd.f32 %v8998, %v9051
        %v9074 = vadd.f32 %v8999, %v9053
        %v9075 = vadd.f32 %v9000, %v9055
        %v9076 = vld [vmem:[#allocation2 + $0x20] sm:$0xfc]
        %v9077 = vld [vmem:[#allocation2 + $0x28] sm:$0xfc]
        %v9078 = vld [vmem:[#allocation2 + $0x60] sm:$0x3]
        %v9079 = vld [vmem:[#allocation2 + $0x68] sm:$0x3]
        %s9080 = scalar_lea.vmem %s33, 6
        %v9081 = vld [vmem:[%s9080] ss:$8 sm:$0x3]
        %v9083 = vlaneseq
        %v9084 = vshrl.u32 %v9083, 7
        %v9085 = vsub.s32 0, %v9084
        %v9086 = vrot.slane %v9081, %v9085
        %v9087 = vlaneseq
        %v9088 = vshrl.u32 %v9087, 7
        %v9089 = vsub.s32 1, %v9088
        %v9090 = vrot.slane %v9081, %v9089
        %v9093 = vmul.f32 %v9076, %v9086
        %v9094 = vmul.f32 %v9077, %v9090
        %v9095 = vmul.f32 %v8683, %v9086
        %v9096 = vmul.f32 %v8684, %v9090
        %v9097 = vmul.f32 %v8685, %v9086
        %v9098 = vmul.f32 %v8686, %v9090
        %v9099 = vmul.f32 %v8936, %v9086
        %v9100 = vmul.f32 %v8937, %v9090
        %v9101 = vmul.f32 %v9078, %v9086
        %v9102 = vmul.f32 %v9079, %v9090
        %v9113 = vrot.slane %v9093, 6
        %v9114 = vrot.slane %v9094, 6
        %v9115 = vrot.slane %v9095, 6
        %v9116 = vsel %vm2767, %v9113, %v9115
        %v9117 = vrot.slane %v9096, 6
        %v9118 = vsel %vm2767, %v9114, %v9117
        %v9119 = vrot.slane %v9097, 6
        %v9120 = vsel %vm2767, %v9115, %v9119
        %v9121 = vrot.slane %v9098, 6
        %v9122 = vsel %vm2767, %v9117, %v9121
        %v9123 = vrot.slane %v9099, 6
        %v9124 = vsel %vm2767, %v9119, %v9123
        %v9125 = vrot.slane %v9100, 6
        %v9126 = vsel %vm2767, %v9121, %v9125
        %v9127 = vrot.slane %v9101, 6
        %v9128 = vsel %vm2767, %v9123, %v9127
        %v9129 = vrot.slane %v9102, 6
        %v9130 = vsel %vm2767, %v9125, %v9129
        %v9141 = vadd.f32 %v9066, %v9113
        %v9142 = vadd.f32 %v9067, %v9114
        %v9143 = vadd.f32 %v9068, %v9116
        %v9144 = vadd.f32 %v9069, %v9118
        %v9145 = vadd.f32 %v9070, %v9120
        %v9146 = vadd.f32 %v9071, %v9122
        %v9147 = vadd.f32 %v9072, %v9124
        %v9148 = vadd.f32 %v9073, %v9126
        %v9149 = vadd.f32 %v9074, %v9128
        %v9150 = vadd.f32 %v9075, %v9130
        %v9151 = vld [vmem:[#allocation2 + $0x20] sm:$0xf8]
        %v9152 = vld [vmem:[#allocation2 + $0x28] sm:$0xf8]
        %v9153 = vld [vmem:[#allocation2 + $0x60] sm:$0x7]
        %v9154 = vld [vmem:[#allocation2 + $0x68] sm:$0x7]
        %s9155 = scalar_lea.vmem %s33, 7
        %v9156 = vld [vmem:[%s9155] ss:$8 sm:$0x3]
        %v9158 = vlaneseq
        %v9159 = vshrl.u32 %v9158, 7
        %v9160 = vsub.s32 0, %v9159
        %v9161 = vrot.slane %v9156, %v9160
        %v9162 = vlaneseq
        %v9163 = vshrl.u32 %v9162, 7
        %v9164 = vsub.s32 1, %v9163
        %v9165 = vrot.slane %v9156, %v9164
        %v9168 = vmul.f32 %v9151, %v9161
        %v9169 = vmul.f32 %v9152, %v9165
        %v9170 = vmul.f32 %v8683, %v9161
        %v9171 = vmul.f32 %v8684, %v9165
        %v9172 = vmul.f32 %v8685, %v9161
        %v9173 = vmul.f32 %v8686, %v9165
        %v9174 = vmul.f32 %v8936, %v9161
        %v9175 = vmul.f32 %v8937, %v9165
        %v9176 = vmul.f32 %v9153, %v9161
        %v9177 = vmul.f32 %v9154, %v9165
        %v9188 = vrot.slane %v9168, 7
        %v9189 = vrot.slane %v9169, 7
        %v9190 = vrot.slane %v9170, 7
        %v9191 = vsel %vm2972, %v9188, %v9190
        %v9192 = vrot.slane %v9171, 7
        %v9193 = vsel %vm2972, %v9189, %v9192
        %v9194 = vrot.slane %v9172, 7
        %v9195 = vsel %vm2972, %v9190, %v9194
        %v9196 = vrot.slane %v9173, 7
        %v9197 = vsel %vm2972, %v9192, %v9196
        %v9198 = vrot.slane %v9174, 7
        %v9199 = vsel %vm2972, %v9194, %v9198
        %v9200 = vrot.slane %v9175, 7
        %v9201 = vsel %vm2972, %v9196, %v9200
        %v9202 = vrot.slane %v9176, 7
        %v9203 = vsel %vm2972, %v9198, %v9202
        %v9204 = vrot.slane %v9177, 7
        %v9205 = vsel %vm2972, %v9200, %v9204
        %v9216 = vadd.f32 %v9141, %v9188
        %v9217 = vadd.f32 %v9142, %v9189
        %v9218 = vadd.f32 %v9143, %v9191
        %v9219 = vadd.f32 %v9144, %v9193
        %v9220 = vadd.f32 %v9145, %v9195
        %v9221 = vadd.f32 %v9146, %v9197
        %v9222 = vadd.f32 %v9147, %v9199
        %v9223 = vadd.f32 %v9148, %v9201
        %v9224 = vadd.f32 %v9149, %v9203
        %v9225 = vadd.f32 %v9150, %v9205
        %v9226 = vld [vmem:[#allocation2 + $0x20] sm:$0xf0]
        %v9227 = vld [vmem:[#allocation2 + $0x28] sm:$0xf0]
        %v9228 = vld [vmem:[#allocation2 + $0x60] sm:$0xf]
        %v9229 = vld [vmem:[#allocation2 + $0x68] sm:$0xf]
        %s9230 = scalar_lea.vmem %s33, 16
        %v9231 = vld [vmem:[%s9230] ss:$8 sm:$0x3]
        %v9233 = vlaneseq
        %v9234 = vshrl.u32 %v9233, 7
        %v9235 = vsub.s32 0, %v9234
        %v9236 = vrot.slane %v9231, %v9235
        %v9237 = vlaneseq
        %v9238 = vshrl.u32 %v9237, 7
        %v9239 = vsub.s32 1, %v9238
        %v9240 = vrot.slane %v9231, %v9239
        %v9243 = vmul.f32 %v9226, %v9236
        %v9244 = vmul.f32 %v9227, %v9240
        %v9245 = vmul.f32 %v8683, %v9236
        %v9246 = vmul.f32 %v8684, %v9240
        %v9247 = vmul.f32 %v8685, %v9236
        %v9248 = vmul.f32 %v8686, %v9240
        %v9249 = vmul.f32 %v8936, %v9236
        %v9250 = vmul.f32 %v8937, %v9240
        %v9251 = vmul.f32 %v9228, %v9236
        %v9252 = vmul.f32 %v9229, %v9240
        %v9253 = vadd.f32 %v9216, %v9243
        %v9254 = vadd.f32 %v9217, %v9244
        %v9255 = vadd.f32 %v9218, %v9245
        %v9256 = vadd.f32 %v9219, %v9246
        %v9257 = vadd.f32 %v9220, %v9247
        %v9258 = vadd.f32 %v9221, %v9248
        %v9259 = vadd.f32 %v9222, %v9249
        %v9260 = vadd.f32 %v9223, %v9250
        %v9261 = vadd.f32 %v9224, %v9251
        %v9262 = vadd.f32 %v9225, %v9252
        %v9263 = vld [vmem:[%s37] sm:$0x3]
        %v9265 = vlaneseq
        %v9266 = vshrl.u32 %v9265, 7
        %v9267 = vsub.s32 0, %v9266
        %v9268 = vrot.slane %v9263, %v9267
        %v9269 = vlaneseq
        %v9270 = vshrl.u32 %v9269, 7
        %v9271 = vsub.s32 1, %v9270
        %v9272 = vrot.slane %v9263, %v9271
        %v9275 = vmul.f32 %v9253, %v9268
        %v9276 = vmul.f32 %v9254, %v9272
        %v9277 = vmul.f32 %v9255, %v9268
        %v9278 = vmul.f32 %v9256, %v9272
        %v9279 = vmul.f32 %v9257, %v9268
        %v9280 = vmul.f32 %v9258, %v9272
        %v9281 = vmul.f32 %v9259, %v9268
        %v9282 = vmul.f32 %v9260, %v9272
        %v9283 = vmul.f32 %v9261, %v9268
        %v9284 = vmul.f32 %v9262, %v9272
        %v9285 = vld [vmem:[%s39] sm:$0x3]
        %v9287 = vlaneseq
        %v9288 = vshrl.u32 %v9287, 7
        %v9289 = vsub.s32 0, %v9288
        %v9290 = vrot.slane %v9285, %v9289
        %v9291 = vlaneseq
        %v9292 = vshrl.u32 %v9291, 7
        %v9293 = vsub.s32 1, %v9292
        %v9294 = vrot.slane %v9285, %v9293
        %v9297 = vadd.f32 %v9275, %v9290
        %v9298 = vadd.f32 %v9276, %v9294
        %v9299 = vadd.f32 %v9277, %v9290
        %v9300 = vadd.f32 %v9278, %v9294
        %v9301 = vadd.f32 %v9279, %v9290
        %v9302 = vadd.f32 %v9280, %v9294
        %v9303 = vadd.f32 %v9281, %v9290
        %v9304 = vadd.f32 %v9282, %v9294
        %v9305 = vadd.f32 %v9283, %v9290
        %v9306 = vadd.f32 %v9284, %v9294
        %v9307 = vld [vmem:[%s35] sm:$0xff]
        %v9308 = vld [vmem:[%s35 + $0x8] sm:$0xff]
        %v9309 = vld [vmem:[%s35 + $0x10] sm:$0xff]
        %v9310 = vld [vmem:[%s35 + $0x18] sm:$0xff]
        %v9311 = vld [vmem:[%s35 + $0x20] sm:$0xff]
        %v9312 = vld [vmem:[%s35 + $0x28] sm:$0xff]
        %v9313 = vld [vmem:[%s35 + $0x30] sm:$0xff]
        %v9314 = vld [vmem:[%s35 + $0x38] sm:$0xff]
        %v9315 = vld [vmem:[%s35 + $0x40] sm:$0xff]
        %v9316 = vld [vmem:[%s35 + $0x48] sm:$0xff]
        %v9317 = vld [vmem:[%s35 + $0x50] sm:$0xff]
        %v9318 = vld [vmem:[%s35 + $0x58] sm:$0xff]
        %v9319 = vld [vmem:[%s35 + $0x60] sm:$0xff]
        %v9320 = vld [vmem:[%s35 + $0x68] sm:$0xff]
        %v9321 = vld [vmem:[%s35 + $0x70] sm:$0xff]
        %v9322 = vld [vmem:[%s35 + $0x78] sm:$0xff]
        %v9323 = vld [vmem:[%s35 + $0x80] sm:$0xff]
        %v9324 = vld [vmem:[%s35 + $0x88] sm:$0xff]
        %v9325 = vld [vmem:[%s35 + $0x90] sm:$0xff]
        %v9326 = vld [vmem:[%s35 + $0x98] sm:$0xff]
        %v9327 = vld [vmem:[%s35 + $0xa0] sm:$0xff]
        %v9328 = vld [vmem:[%s35 + $0xa8] sm:$0xff]
        %v9329 = vld [vmem:[%s35 + $0xb0] sm:$0xff]
        %v9330 = vld [vmem:[%s35 + $0xb8] sm:$0xff]
        %v9331 = vld [vmem:[%s35 + $0xc0] sm:$0xff]
        %v9332 = vld [vmem:[%s35 + $0xc8] sm:$0xff]
        %v9333 = vld [vmem:[%s35 + $0xd0] sm:$0xff]
        %v9334 = vld [vmem:[%s35 + $0xd8] sm:$0xff]
        %v9335 = vld [vmem:[%s35 + $0xe0] sm:$0xff]
        %v9336 = vld [vmem:[%s35 + $0xe8] sm:$0xff]
        %v9337 = vld [vmem:[%s35 + $0xf0] sm:$0xff]
        %v9338 = vld [vmem:[%s35 + $0xf8] sm:$0xff]
        %v9339 = vld [vmem:[%s35 + $0x100] sm:$0xff]
        %v9340 = vld [vmem:[%s35 + $0x108] sm:$0xff]
        %v9341 = vld [vmem:[%s35 + $0x110] sm:$0xff]
        %v9342 = vld [vmem:[%s35 + $0x118] sm:$0xff]
        %v9343 = vld [vmem:[%s35 + $0x120] sm:$0xff]
        %v9344 = vld [vmem:[%s35 + $0x128] sm:$0xff]
        %v9345 = vld [vmem:[%s35 + $0x130] sm:$0xff]
        %v9346 = vld [vmem:[%s35 + $0x138] sm:$0xff]
        %v9347 = vld [vmem:[%s35 + $0x140] sm:$0xff]
        %v9348 = vld [vmem:[%s35 + $0x148] sm:$0xff]
        %v9349 = vld [vmem:[%s35 + $0x150] sm:$0xff]
        %v9350 = vld [vmem:[%s35 + $0x158] sm:$0xff]
        %v9351 = vld [vmem:[%s35 + $0x160] sm:$0xff]
        %v9352 = vld [vmem:[%s35 + $0x168] sm:$0xff]
        %v9353 = vld [vmem:[%s35 + $0x170] sm:$0xff]
        %v9354 = vld [vmem:[%s35 + $0x178] sm:$0xff]
        %v9355 = vld [vmem:[%s35 + $0x180] sm:$0xff]
        %v9356 = vld [vmem:[%s35 + $0x188] sm:$0xff]
        %v9357 = vld [vmem:[%s35 + $0x190] sm:$0xff]
        %v9358 = vld [vmem:[%s35 + $0x198] sm:$0xff]
        %v9359 = vld [vmem:[%s35 + $0x1a0] sm:$0xff]
        %v9360 = vld [vmem:[%s35 + $0x1a8] sm:$0xff]
        %v9361 = vld [vmem:[%s35 + $0x1b0] sm:$0xff]
        %v9362 = vld [vmem:[%s35 + $0x1b8] sm:$0xff]
        %v9363 = vld [vmem:[%s35 + $0x1c0] sm:$0xff]
        %v9364 = vld [vmem:[%s35 + $0x1c8] sm:$0xff]
        %v9365 = vld [vmem:[%s35 + $0x1d0] sm:$0xff]
        %v9366 = vld [vmem:[%s35 + $0x1d8] sm:$0xff]
        %v9367 = vld [vmem:[%s35 + $0x1e0] sm:$0xff]
        %v9368 = vld [vmem:[%s35 + $0x1e8] sm:$0xff]
        %v9369 = vld [vmem:[%s35 + $0x1f0] sm:$0xff]
        %v9370 = vld [vmem:[%s35 + $0x1f8] sm:$0xff]
        %v9381 = vrot.slane %v9297, 4
        %v9382 = vrot.slane %v9299, 4
        %v9383 = vsel %vm2359, %v9381, %v9382
        %v9384 = vrot.slane %v9298, 4
        %v9385 = vrot.slane %v9300, 4
        %v9386 = vsel %vm2359, %v9384, %v9385
        %v9387 = vrot.slane %v9301, 4
        %v9388 = vsel %vm2359, %v9382, %v9387
        %v9389 = vrot.slane %v9302, 4
        %v9390 = vsel %vm2359, %v9385, %v9389
        %v9391 = vrot.slane %v9303, 4
        %v9392 = vsel %vm2359, %v9387, %v9391
        %v9393 = vrot.slane %v9304, 4
        %v9394 = vsel %vm2359, %v9389, %v9393
        %v9395 = vrot.slane %v9305, 4
        %v9396 = vsel %vm2359, %v9391, %v9395
        %v9397 = vrot.slane %v9306, 4
        %v9398 = vsel %vm2359, %v9393, %v9397
        %9407 = vmatprep.subr.mxu0 %v9338
        %9408 = vmatpush1.msra.mxu0 %v9337
        %9409 = vmatprep.subr.mxu0 %v9336
        %9410 = vmatpush1.msra.mxu0 %v9335
        %9411 = vmatprep.subr.mxu0 %v9334
        %9412 = vmatpush1.msra.mxu0 %v9333
        %9413 = vmatprep.subr.mxu0 %v9332
        %9414 = vmatpush1.msra.mxu0 %v9331
        %9415 = vmatprep.subr.mxu0 %v9330
        %9416 = vmatpush1.msra.mxu0 %v9329
        %9417 = vmatprep.subr.mxu0 %v9328
        %9418 = vmatpush1.msra.mxu0 %v9327
        %9419 = vmatprep.subr.mxu0 %v9326
        %9420 = vmatpush1.msra.mxu0 %v9325
        %9421 = vmatprep.subr.mxu0 %v9324
        %9422 = vmatpush1.msra.mxu0 %v9323
        %9423 = vmatprep.subr.mxu0 %v9322
        %9424 = vmatpush1.msra.mxu0 %v9321
        %9425 = vmatprep.subr.mxu0 %v9320
        %9426 = vmatpush1.msra.mxu0 %v9319
        %9427 = vmatprep.subr.mxu0 %v9318
        %9428 = vmatpush1.msra.mxu0 %v9317
        %9429 = vmatprep.subr.mxu0 %v9316
        %9430 = vmatpush1.msra.mxu0 %v9315
        %9431 = vmatprep.subr.mxu0 %v9314
        %9432 = vmatpush1.msra.mxu0 %v9313
        %9433 = vmatprep.subr.mxu0 %v9312
        %9434 = vmatpush1.msra.mxu0 %v9311
        %9435 = vmatprep.subr.mxu0 %v9310
        %9436 = vmatpush1.msra.mxu0 %v9309
        %9437 = vmatprep.subr.mxu0 %v9308
        %9438 = vmatpush1.msra.mxu0 %v9307
        %9439 = vmatprep.subr.mxu0 %v9370
        %9440 = vmatpush2.msra.mxu0 %v9369
        %9441 = vmatprep.subr.mxu0 %v9368
        %9442 = vmatpush2.msra.mxu0 %v9367
        %9443 = vmatprep.subr.mxu0 %v9366
        %9444 = vmatpush2.msra.mxu0 %v9365
        %9445 = vmatprep.subr.mxu0 %v9364
        %9446 = vmatpush2.msra.mxu0 %v9363
        %9447 = vmatprep.subr.mxu0 %v9362
        %9448 = vmatpush2.msra.mxu0 %v9361
        %9449 = vmatprep.subr.mxu0 %v9360
        %9450 = vmatpush2.msra.mxu0 %v9359
        %9451 = vmatprep.subr.mxu0 %v9358
        %9452 = vmatpush2.msra.mxu0 %v9357
        %9453 = vmatprep.subr.mxu0 %v9356
        %9454 = vmatpush2.msra.mxu0 %v9355
        %9455 = vmatprep.subr.mxu0 %v9354
        %9456 = vmatpush2.msra.mxu0 %v9353
        %9457 = vmatprep.subr.mxu0 %v9352
        %9458 = vmatpush2.msra.mxu0 %v9351
        %9459 = vmatprep.subr.mxu0 %v9350
        %9460 = vmatpush2.msra.mxu0 %v9349
        %9461 = vmatprep.subr.mxu0 %v9348
        %9462 = vmatpush2.msra.mxu0 %v9347
        %9463 = vmatprep.subr.mxu0 %v9346
        %9464 = vmatpush2.msra.mxu0 %v9345
        %9465 = vmatprep.subr.mxu0 %v9344
        %9466 = vmatpush2.msra.mxu0 %v9343
        %9467 = vmatprep.subr.mxu0 %v9342
        %9468 = vmatpush2.msra.mxu0 %v9341
        %9469 = vmatprep.subr.mxu0 %v9340
        %9470 = vmatpush2.msra.mxu0 %v9339
        %9471 = vmatprep.mubr.f32.mxu0 %v9386
        %9472 = vmatmul.mubr.f32.gmra.mxu0 %v9383
        %v9473 = vpop.f32.mrf.mxu0
        %v9474 = vadd.f32 0.0, %v9473
        %v9475 = vpop.f32.mrf.mxu0
        %v9476 = vadd.f32 0.0, %v9475
        %9477 = vmatprep.mubr.f32.mxu0 %v9390
        %9478 = vmatmul.mubr.f32.gmra.mxu0 %v9388
        %v9479 = vpop.f32.mrf.mxu0
        %v9480 = vadd.f32 0.0, %v9479
        %v9481 = vpop.f32.mrf.mxu0
        %v9482 = vadd.f32 0.0, %v9481
        %9483 = vmatprep.mubr.f32.mxu0 %v9394
        %9484 = vmatmul.mubr.f32.gmra.mxu0 %v9392
        %v9485 = vpop.f32.mrf.mxu0
        %v9486 = vadd.f32 0.0, %v9485
        %v9487 = vpop.f32.mrf.mxu0
        %v9488 = vadd.f32 0.0, %v9487
        %9489 = vmatprep.mubr.f32.mxu0 %v9398
        %9490 = vmatmul.mubr.f32.gmra.mxu0 %v9396
        %v9491 = vpop.f32.mrf.mxu0
        %v9492 = vadd.f32 0.0, %v9491
        %v9493 = vpop.f32.mrf.mxu0
        %v9494 = vadd.f32 0.0, %v9493
        %9495 = vdwg.mxu0
        %v9496 = vld [vmem:[%s41] sm:$0x3]
        %v9498 = vlaneseq
        %v9499 = vshrl.u32 %v9498, 7
        %v9500 = vsub.s32 0, %v9499
        %v9501 = vrot.slane %v9496, %v9500
        %v9502 = vlaneseq
        %v9503 = vshrl.u32 %v9502, 7
        %v9504 = vsub.s32 1, %v9503
        %v9505 = vrot.slane %v9496, %v9504
        %v9508 = vmul.f32 %v9474, %v9501
        %v9509 = vmul.f32 %v9476, %v9505
        %v9510 = vmul.f32 %v9480, %v9501
        %v9511 = vmul.f32 %v9482, %v9505
        %v9512 = vmul.f32 %v9486, %v9501
        %v9513 = vmul.f32 %v9488, %v9505
        %v9514 = vmul.f32 %v9492, %v9501
        %v9515 = vmul.f32 %v9494, %v9505
        %v9516 = vld [vmem:[%s43] sm:$0x3]
        %v9518 = vlaneseq
        %v9519 = vshrl.u32 %v9518, 7
        %v9520 = vsub.s32 0, %v9519
        %v9521 = vrot.slane %v9516, %v9520
        %v9522 = vlaneseq
        %v9523 = vshrl.u32 %v9522, 7
        %v9524 = vsub.s32 1, %v9523
        %v9525 = vrot.slane %v9516, %v9524
        %v9528 = vadd.f32 %v9508, %v9521
        %v9529 = vadd.f32 %v9509, %v9525
        %v9530 = vadd.f32 %v9510, %v9521
        %v9531 = vadd.f32 %v9511, %v9525
        %v9532 = vadd.f32 %v9512, %v9521
        %v9533 = vadd.f32 %v9513, %v9525
        %v9534 = vadd.f32 %v9514, %v9521
        %v9535 = vadd.f32 %v9515, %v9525
        %vm9536 = vcmp.ge.f32.partialorder %v9528, 0.0
        %vm9537 = vcmp.ge.f32.partialorder %v9529, 0.0
        %vm9538 = vcmp.ge.f32.partialorder %v9530, 0.0
        %vm9539 = vcmp.ge.f32.partialorder %v9531, 0.0
        %vm9540 = vcmp.ge.f32.partialorder %v9532, 0.0
        %vm9541 = vcmp.ge.f32.partialorder %v9533, 0.0
        %vm9542 = vcmp.ge.f32.partialorder %v9534, 0.0
        %vm9543 = vcmp.ge.f32.partialorder %v9535, 0.0
        %v9544 = vmul.f32 %v9528, 0.2
        %v9545 = vmul.f32 %v9529, 0.2
        %v9546 = vmul.f32 %v9530, 0.2
        %v9547 = vmul.f32 %v9531, 0.2
        %v9548 = vmul.f32 %v9532, 0.2
        %v9549 = vmul.f32 %v9533, 0.2
        %v9550 = vmul.f32 %v9534, 0.2
        %v9551 = vmul.f32 %v9535, 0.2
        %v9552 = vsel %vm9536, %v9528, %v9544
        %v9553 = vsel %vm9537, %v9529, %v9545
        %v9554 = vsel %vm9538, %v9530, %v9546
        %v9555 = vsel %vm9539, %v9531, %v9547
        %v9556 = vsel %vm9540, %v9532, %v9548
        %v9557 = vsel %vm9541, %v9533, %v9549
        %v9558 = vsel %vm9542, %v9534, %v9550
        %v9559 = vsel %vm9543, %v9535, %v9551
        %vm9560 = vcmask 261120
        %v9561 = vsel %vm9560, %v7055, 0
        %v9563 = vsel %vm9560, %v7056, 0
        %9565 = vmatprep.subr.mxu0 0.0
        %9566 = vmatpush1.msra.mxu0 0.0
        %9567 = vmatprep.subr.mxu0 0.0
        %9568 = vmatpush1.msra.mxu0 0.0
        %9569 = vmatprep.subr.mxu0 0.0
        %9570 = vmatpush1.msra.mxu0 0.0
        %9571 = vmatprep.subr.mxu0 0.0
        %9572 = vmatpush1.msra.mxu0 0.0
        %9573 = vmatprep.subr.mxu0 0.0
        %9574 = vmatpush1.msra.mxu0 0.0
        %9575 = vmatprep.subr.mxu0 0.0
        %9576 = vmatpush1.msra.mxu0 0.0
        %9577 = vmatprep.subr.mxu0 0.0
        %9578 = vmatpush1.msra.mxu0 0.0
        %9579 = vmatprep.subr.mxu0 0.0
        %9580 = vmatpush1.msra.mxu0 0.0
        %9581 = vmatprep.subr.mxu0 0.0
        %9582 = vmatpush1.msra.mxu0 0.0
        %9583 = vmatprep.subr.mxu0 0.0
        %9584 = vmatpush1.msra.mxu0 0.0
        %9585 = vmatprep.subr.mxu0 0.0
        %9586 = vmatpush1.msra.mxu0 0.0
        %9587 = vmatprep.subr.mxu0 0.0
        %9588 = vmatpush1.msra.mxu0 0.0
        %9589 = vmatprep.subr.mxu0 %v9559
        %9590 = vmatpush1.msra.mxu0 %v9558
        %9591 = vmatprep.subr.mxu0 %v9557
        %9592 = vmatpush1.msra.mxu0 %v9556
        %9593 = vmatprep.subr.mxu0 %v9555
        %9594 = vmatpush1.msra.mxu0 %v9554
        %9595 = vmatprep.subr.mxu0 %v9553
        %9596 = vmatpush1.msra.mxu0 %v9552
        %9597 = vmatprep.subr.mxu0 0.0
        %9598 = vmatpush2.msra.mxu0 0.0
        %9599 = vmatprep.subr.mxu0 0.0
        %9600 = vmatpush2.msra.mxu0 0.0
        %9601 = vmatprep.subr.mxu0 0.0
        %9602 = vmatpush2.msra.mxu0 0.0
        %9603 = vmatprep.subr.mxu0 0.0
        %9604 = vmatpush2.msra.mxu0 0.0
        %9605 = vmatprep.subr.mxu0 0.0
        %9606 = vmatpush2.msra.mxu0 0.0
        %9607 = vmatprep.subr.mxu0 0.0
        %9608 = vmatpush2.msra.mxu0 0.0
        %9609 = vmatprep.subr.mxu0 0.0
        %9610 = vmatpush2.msra.mxu0 0.0
        %9611 = vmatprep.subr.mxu0 0.0
        %9612 = vmatpush2.msra.mxu0 0.0
        %9613 = vmatprep.subr.mxu0 0.0
        %9614 = vmatpush2.msra.mxu0 0.0
        %9615 = vmatprep.subr.mxu0 0.0
        %9616 = vmatpush2.msra.mxu0 0.0
        %9617 = vmatprep.subr.mxu0 0.0
        %9618 = vmatpush2.msra.mxu0 0.0
        %9619 = vmatprep.subr.mxu0 0.0
        %9620 = vmatpush2.msra.mxu0 0.0
        %9621 = vmatprep.subr.mxu0 0.0
        %9622 = vmatpush2.msra.mxu0 0.0
        %9623 = vmatprep.subr.mxu0 0.0
        %9624 = vmatpush2.msra.mxu0 0.0
        %9625 = vmatprep.subr.mxu0 0.0
        %9626 = vmatpush2.msra.mxu0 0.0
        %9627 = vmatprep.subr.mxu0 0.0
        %9628 = vmatpush2.msra.mxu0 0.0
        %9629 = vmatprep.mubr.f32.mxu0 0.0
        %9630 = vmatmul.mubr.f32.gmra.mxu0 %v9561
        %v9631 = vpop.f32.mrf.mxu0
        %v9632 = vadd.f32 0.0, %v9631
        %v9633 = vpop.f32.mrf.mxu0
        %v9634 = vadd.f32 0.0, %v9633
        %9635 = vmatprep.mubr.f32.mxu0 0.0
        %9636 = vmatmul.mubr.f32.gmra.mxu0 %v9563
        %v9637 = vpop.f32.mrf.mxu0
        %v9638 = vadd.f32 0.0, %v9637
        %v9639 = vpop.f32.mrf.mxu0
        %v9640 = vadd.f32 0.0, %v9639
        %9641 = vdwg.mxu0
        %9642 = vst [vmem:[#allocation2] sm:$0xff] 0.0
        %9643 = vst [vmem:[#allocation2 + $0x8] sm:$0xff] 0.0
        %9644 = vst [vmem:[#allocation2 + $0x10] sm:$0xff] 0.0
        %9645 = vst [vmem:[#allocation2 + $0x18] sm:$0xff] 0.0
        %9646 = vst [vmem:[#allocation2 + $0x40] sm:$0xff] 0.0
        %9647 = vst [vmem:[#allocation2 + $0x48] sm:$0xff] 0.0
        %9648 = vst [vmem:[#allocation2 + $0x50] sm:$0xff] 0.0
        %9649 = vst [vmem:[#allocation2 + $0x58] sm:$0xff] 0.0
        %9650 = vst [vmem:[#allocation2 + $0x20] sm:$0xff] %v9632
        %9651 = vst [vmem:[#allocation2 + $0x28] sm:$0xff] %v9634
        %9652 = vst [vmem:[#allocation2 + $0x30] sm:$0xff] %v9638
        %9653 = vst [vmem:[#allocation2 + $0x38] sm:$0xff] %v9640
        %v9654 = vld [vmem:[#allocation2 + $0x10] sm:$0xf0]
        %v9655 = vld [vmem:[#allocation2 + $0x18] sm:$0xf0]
        %v9656 = vld [vmem:[#allocation2 + $0x20] sm:$0xff]
        %v9657 = vld [vmem:[#allocation2 + $0x28] sm:$0xff]
        %v9658 = vld [vmem:[#allocation2 + $0x30] sm:$0xf]
        %v9659 = vld [vmem:[#allocation2 + $0x38] sm:$0xf]
        %v9660 = vld [vmem:[%s45] ss:$8 sm:$0x3]
        %v9662 = vlaneseq
        %v9663 = vshrl.u32 %v9662, 7
        %v9664 = vsub.s32 0, %v9663
        %v9665 = vrot.slane %v9660, %v9664
        %v9666 = vlaneseq
        %v9667 = vshrl.u32 %v9666, 7
        %v9668 = vsub.s32 1, %v9667
        %v9669 = vrot.slane %v9660, %v9668
        %v9672 = vmul.f32 %v9654, %v9665
        %v9673 = vmul.f32 %v9655, %v9669
        %v9674 = vmul.f32 %v9656, %v9665
        %v9675 = vmul.f32 %v9657, %v9669
        %v9676 = vmul.f32 %v9658, %v9665
        %v9677 = vmul.f32 %v9659, %v9669
        %v9678 = vld [vmem:[#allocation2 + $0x10] sm:$0xe0]
        %v9679 = vld [vmem:[#allocation2 + $0x18] sm:$0xe0]
        %v9680 = vld [vmem:[#allocation2 + $0x30] sm:$0x1f]
        %v9681 = vld [vmem:[#allocation2 + $0x38] sm:$0x1f]
        %s9682 = scalar_lea.vmem %s45, 1
        %v9683 = vld [vmem:[%s9682] ss:$8 sm:$0x3]
        %v9685 = vlaneseq
        %v9686 = vshrl.u32 %v9685, 7
        %v9687 = vsub.s32 0, %v9686
        %v9688 = vrot.slane %v9683, %v9687
        %v9689 = vlaneseq
        %v9690 = vshrl.u32 %v9689, 7
        %v9691 = vsub.s32 1, %v9690
        %v9692 = vrot.slane %v9683, %v9691
        %v9695 = vmul.f32 %v9678, %v9688
        %v9696 = vmul.f32 %v9679, %v9692
        %v9697 = vmul.f32 %v9656, %v9688
        %v9698 = vmul.f32 %v9657, %v9692
        %v9699 = vmul.f32 %v9680, %v9688
        %v9700 = vmul.f32 %v9681, %v9692
        %v9707 = vrot.slane %v9695, 1
        %v9708 = vrot.slane %v9697, 1
        %v9709 = vsel %vm1747, %v9707, %v9708
        %v9710 = vrot.slane %v9696, 1
        %v9711 = vrot.slane %v9698, 1
        %v9712 = vsel %vm1747, %v9710, %v9711
        %v9713 = vrot.slane %v9699, 1
        %v9714 = vsel %vm1747, %v9708, %v9713
        %v9715 = vrot.slane %v9700, 1
        %v9716 = vsel %vm1747, %v9711, %v9715
        %v9723 = vadd.f32 %v9672, %v9709
        %v9724 = vadd.f32 %v9673, %v9712
        %v9725 = vadd.f32 %v9674, %v9714
        %v9726 = vadd.f32 %v9675, %v9716
        %v9727 = vadd.f32 %v9676, %v9713
        %v9728 = vadd.f32 %v9677, %v9715
        %v9729 = vld [vmem:[#allocation2 + $0x10] sm:$0xc0]
        %v9730 = vld [vmem:[#allocation2 + $0x18] sm:$0xc0]
        %v9731 = vld [vmem:[#allocation2 + $0x30] sm:$0x3f]
        %v9732 = vld [vmem:[#allocation2 + $0x38] sm:$0x3f]
        %s9733 = scalar_lea.vmem %s45, 2
        %v9734 = vld [vmem:[%s9733] ss:$8 sm:$0x3]
        %v9736 = vlaneseq
        %v9737 = vshrl.u32 %v9736, 7
        %v9738 = vsub.s32 0, %v9737
        %v9739 = vrot.slane %v9734, %v9738
        %v9740 = vlaneseq
        %v9741 = vshrl.u32 %v9740, 7
        %v9742 = vsub.s32 1, %v9741
        %v9743 = vrot.slane %v9734, %v9742
        %v9746 = vmul.f32 %v9729, %v9739
        %v9747 = vmul.f32 %v9730, %v9743
        %v9748 = vmul.f32 %v9656, %v9739
        %v9749 = vmul.f32 %v9657, %v9743
        %v9750 = vmul.f32 %v9731, %v9739
        %v9751 = vmul.f32 %v9732, %v9743
        %v9758 = vrot.slane %v9746, 2
        %v9759 = vrot.slane %v9748, 2
        %v9760 = vsel %vm1952, %v9758, %v9759
        %v9761 = vrot.slane %v9747, 2
        %v9762 = vrot.slane %v9749, 2
        %v9763 = vsel %vm1952, %v9761, %v9762
        %v9764 = vrot.slane %v9750, 2
        %v9765 = vsel %vm1952, %v9759, %v9764
        %v9766 = vrot.slane %v9751, 2
        %v9767 = vsel %vm1952, %v9762, %v9766
        %v9774 = vadd.f32 %v9723, %v9760
        %v9775 = vadd.f32 %v9724, %v9763
        %v9776 = vadd.f32 %v9725, %v9765
        %v9777 = vadd.f32 %v9726, %v9767
        %v9778 = vadd.f32 %v9727, %v9764
        %v9779 = vadd.f32 %v9728, %v9766
        %v9780 = vld [vmem:[#allocation2 + $0x10] sm:$0x80]
        %v9781 = vld [vmem:[#allocation2 + $0x18] sm:$0x80]
        %v9782 = vld [vmem:[#allocation2 + $0x30] sm:$0x7f]
        %v9783 = vld [vmem:[#allocation2 + $0x38] sm:$0x7f]
        %s9784 = scalar_lea.vmem %s45, 3
        %v9785 = vld [vmem:[%s9784] ss:$8 sm:$0x3]
        %v9787 = vlaneseq
        %v9788 = vshrl.u32 %v9787, 7
        %v9789 = vsub.s32 0, %v9788
        %v9790 = vrot.slane %v9785, %v9789
        %v9791 = vlaneseq
        %v9792 = vshrl.u32 %v9791, 7
        %v9793 = vsub.s32 1, %v9792
        %v9794 = vrot.slane %v9785, %v9793
        %v9797 = vmul.f32 %v9780, %v9790
        %v9798 = vmul.f32 %v9781, %v9794
        %v9799 = vmul.f32 %v9656, %v9790
        %v9800 = vmul.f32 %v9657, %v9794
        %v9801 = vmul.f32 %v9782, %v9790
        %v9802 = vmul.f32 %v9783, %v9794
        %v9809 = vrot.slane %v9797, 3
        %v9810 = vrot.slane %v9799, 3
        %v9811 = vsel %vm2157, %v9809, %v9810
        %v9812 = vrot.slane %v9798, 3
        %v9813 = vrot.slane %v9800, 3
        %v9814 = vsel %vm2157, %v9812, %v9813
        %v9815 = vrot.slane %v9801, 3
        %v9816 = vsel %vm2157, %v9810, %v9815
        %v9817 = vrot.slane %v9802, 3
        %v9818 = vsel %vm2157, %v9813, %v9817
        %v9825 = vadd.f32 %v9774, %v9811
        %v9826 = vadd.f32 %v9775, %v9814
        %v9827 = vadd.f32 %v9776, %v9816
        %v9828 = vadd.f32 %v9777, %v9818
        %v9829 = vadd.f32 %v9778, %v9815
        %v9830 = vadd.f32 %v9779, %v9817
        %v9831 = vld [vmem:[#allocation2 + $0x30] sm:$0xff]
        %v9832 = vld [vmem:[#allocation2 + $0x38] sm:$0xff]
        %s9833 = scalar_lea.vmem %s45, 4
        %v9834 = vld [vmem:[%s9833] ss:$8 sm:$0x3]
        %v9836 = vlaneseq
        %v9837 = vshrl.u32 %v9836, 7
        %v9838 = vsub.s32 0, %v9837
        %v9839 = vrot.slane %v9834, %v9838
        %v9840 = vlaneseq
        %v9841 = vshrl.u32 %v9840, 7
        %v9842 = vsub.s32 1, %v9841
        %v9843 = vrot.slane %v9834, %v9842
        %v9846 = vmul.f32 %v9656, %v9839
        %v9847 = vmul.f32 %v9657, %v9843
        %v9848 = vmul.f32 %v9831, %v9839
        %v9849 = vmul.f32 %v9832, %v9843
        %v9854 = vrot.slane %v9846, 4
        %v9855 = vrot.slane %v9847, 4
        %v9856 = vrot.slane %v9848, 4
        %v9857 = vsel %vm2359, %v9854, %v9856
        %v9858 = vrot.slane %v9849, 4
        %v9859 = vsel %vm2359, %v9855, %v9858
        %v9866 = vadd.f32 %v9825, %v9854
        %v9867 = vadd.f32 %v9826, %v9855
        %v9868 = vadd.f32 %v9827, %v9857
        %v9869 = vadd.f32 %v9828, %v9859
        %v9870 = vadd.f32 %v9829, %v9856
        %v9871 = vadd.f32 %v9830, %v9858
        %v9872 = vld [vmem:[#allocation2 + $0x20] sm:$0xfe]
        %v9873 = vld [vmem:[#allocation2 + $0x28] sm:$0xfe]
        %v9874 = vld [vmem:[#allocation2 + $0x40] sm:$0x1]
        %v9875 = vld [vmem:[#allocation2 + $0x48] sm:$0x1]
        %s9876 = scalar_lea.vmem %s45, 5
        %v9877 = vld [vmem:[%s9876] ss:$8 sm:$0x3]
        %v9879 = vlaneseq
        %v9880 = vshrl.u32 %v9879, 7
        %v9881 = vsub.s32 0, %v9880
        %v9882 = vrot.slane %v9877, %v9881
        %v9883 = vlaneseq
        %v9884 = vshrl.u32 %v9883, 7
        %v9885 = vsub.s32 1, %v9884
        %v9886 = vrot.slane %v9877, %v9885
        %v9889 = vmul.f32 %v9872, %v9882
        %v9890 = vmul.f32 %v9873, %v9886
        %v9891 = vmul.f32 %v9831, %v9882
        %v9892 = vmul.f32 %v9832, %v9886
        %v9893 = vmul.f32 %v9874, %v9882
        %v9894 = vmul.f32 %v9875, %v9886
        %v9901 = vrot.slane %v9889, 5
        %v9902 = vrot.slane %v9890, 5
        %v9903 = vrot.slane %v9891, 5
        %v9904 = vsel %vm2562, %v9901, %v9903
        %v9905 = vrot.slane %v9892, 5
        %v9906 = vsel %vm2562, %v9902, %v9905
        %v9907 = vrot.slane %v9893, 5
        %v9908 = vsel %vm2562, %v9903, %v9907
        %v9909 = vrot.slane %v9894, 5
        %v9910 = vsel %vm2562, %v9905, %v9909
        %v9917 = vadd.f32 %v9866, %v9901
        %v9918 = vadd.f32 %v9867, %v9902
        %v9919 = vadd.f32 %v9868, %v9904
        %v9920 = vadd.f32 %v9869, %v9906
        %v9921 = vadd.f32 %v9870, %v9908
        %v9922 = vadd.f32 %v9871, %v9910
        %v9923 = vld [vmem:[#allocation2 + $0x20] sm:$0xfc]
        %v9924 = vld [vmem:[#allocation2 + $0x28] sm:$0xfc]
        %v9925 = vld [vmem:[#allocation2 + $0x40] sm:$0x3]
        %v9926 = vld [vmem:[#allocation2 + $0x48] sm:$0x3]
        %s9927 = scalar_lea.vmem %s45, 6
        %v9928 = vld [vmem:[%s9927] ss:$8 sm:$0x3]
        %v9930 = vlaneseq
        %v9931 = vshrl.u32 %v9930, 7
        %v9932 = vsub.s32 0, %v9931
        %v9933 = vrot.slane %v9928, %v9932
        %v9934 = vlaneseq
        %v9935 = vshrl.u32 %v9934, 7
        %v9936 = vsub.s32 1, %v9935
        %v9937 = vrot.slane %v9928, %v9936
        %v9940 = vmul.f32 %v9923, %v9933
        %v9941 = vmul.f32 %v9924, %v9937
        %v9942 = vmul.f32 %v9831, %v9933
        %v9943 = vmul.f32 %v9832, %v9937
        %v9944 = vmul.f32 %v9925, %v9933
        %v9945 = vmul.f32 %v9926, %v9937
        %v9952 = vrot.slane %v9940, 6
        %v9953 = vrot.slane %v9941, 6
        %v9954 = vrot.slane %v9942, 6
        %v9955 = vsel %vm2767, %v9952, %v9954
        %v9956 = vrot.slane %v9943, 6
        %v9957 = vsel %vm2767, %v9953, %v9956
        %v9958 = vrot.slane %v9944, 6
        %v9959 = vsel %vm2767, %v9954, %v9958
        %v9960 = vrot.slane %v9945, 6
        %v9961 = vsel %vm2767, %v9956, %v9960
        %v9968 = vadd.f32 %v9917, %v9952
        %v9969 = vadd.f32 %v9918, %v9953
        %v9970 = vadd.f32 %v9919, %v9955
        %v9971 = vadd.f32 %v9920, %v9957
        %v9972 = vadd.f32 %v9921, %v9959
        %v9973 = vadd.f32 %v9922, %v9961
        %v9974 = vld [vmem:[#allocation2 + $0x20] sm:$0xf8]
        %v9975 = vld [vmem:[#allocation2 + $0x28] sm:$0xf8]
        %v9976 = vld [vmem:[#allocation2 + $0x40] sm:$0x7]
        %v9977 = vld [vmem:[#allocation2 + $0x48] sm:$0x7]
        %s9978 = scalar_lea.vmem %s45, 7
        %v9979 = vld [vmem:[%s9978] ss:$8 sm:$0x3]
        %v9981 = vlaneseq
        %v9982 = vshrl.u32 %v9981, 7
        %v9983 = vsub.s32 0, %v9982
        %v9984 = vrot.slane %v9979, %v9983
        %v9985 = vlaneseq
        %v9986 = vshrl.u32 %v9985, 7
        %v9987 = vsub.s32 1, %v9986
        %v9988 = vrot.slane %v9979, %v9987
        %v9991 = vmul.f32 %v9974, %v9984
        %v9992 = vmul.f32 %v9975, %v9988
        %v9993 = vmul.f32 %v9831, %v9984
        %v9994 = vmul.f32 %v9832, %v9988
        %v9995 = vmul.f32 %v9976, %v9984
        %v9996 = vmul.f32 %v9977, %v9988
        %v10003 = vrot.slane %v9991, 7
        %v10004 = vrot.slane %v9992, 7
        %v10005 = vrot.slane %v9993, 7
        %v10006 = vsel %vm2972, %v10003, %v10005
        %v10007 = vrot.slane %v9994, 7
        %v10008 = vsel %vm2972, %v10004, %v10007
        %v10009 = vrot.slane %v9995, 7
        %v10010 = vsel %vm2972, %v10005, %v10009
        %v10011 = vrot.slane %v9996, 7
        %v10012 = vsel %vm2972, %v10007, %v10011
        %v10019 = vadd.f32 %v9968, %v10003
        %v10020 = vadd.f32 %v9969, %v10004
        %v10021 = vadd.f32 %v9970, %v10006
        %v10022 = vadd.f32 %v9971, %v10008
        %v10023 = vadd.f32 %v9972, %v10010
        %v10024 = vadd.f32 %v9973, %v10012
        %v10025 = vld [vmem:[#allocation2 + $0x20] sm:$0xf0]
        %v10026 = vld [vmem:[#allocation2 + $0x28] sm:$0xf0]
        %v10027 = vld [vmem:[#allocation2 + $0x40] sm:$0xf]
        %v10028 = vld [vmem:[#allocation2 + $0x48] sm:$0xf]
        %s10029 = scalar_lea.vmem %s45, 16
        %v10030 = vld [vmem:[%s10029] ss:$8 sm:$0x3]
        %v10032 = vlaneseq
        %v10033 = vshrl.u32 %v10032, 7
        %v10034 = vsub.s32 0, %v10033
        %v10035 = vrot.slane %v10030, %v10034
        %v10036 = vlaneseq
        %v10037 = vshrl.u32 %v10036, 7
        %v10038 = vsub.s32 1, %v10037
        %v10039 = vrot.slane %v10030, %v10038
        %v10042 = vmul.f32 %v10025, %v10035
        %v10043 = vmul.f32 %v10026, %v10039
        %v10044 = vmul.f32 %v9831, %v10035
        %v10045 = vmul.f32 %v9832, %v10039
        %v10046 = vmul.f32 %v10027, %v10035
        %v10047 = vmul.f32 %v10028, %v10039
        %v10048 = vadd.f32 %v10019, %v10042
        %v10049 = vadd.f32 %v10020, %v10043
        %v10050 = vadd.f32 %v10021, %v10044
        %v10051 = vadd.f32 %v10022, %v10045
        %v10052 = vadd.f32 %v10023, %v10046
        %v10053 = vadd.f32 %v10024, %v10047
        %v10054 = vld [vmem:[%s49] sm:$0x3]
        %v10056 = vlaneseq
        %v10057 = vshrl.u32 %v10056, 7
        %v10058 = vsub.s32 0, %v10057
        %v10059 = vrot.slane %v10054, %v10058
        %v10060 = vlaneseq
        %v10061 = vshrl.u32 %v10060, 7
        %v10062 = vsub.s32 1, %v10061
        %v10063 = vrot.slane %v10054, %v10062
        %v10066 = vmul.f32 %v10048, %v10059
        %v10067 = vmul.f32 %v10049, %v10063
        %v10068 = vmul.f32 %v10050, %v10059
        %v10069 = vmul.f32 %v10051, %v10063
        %v10070 = vmul.f32 %v10052, %v10059
        %v10071 = vmul.f32 %v10053, %v10063
        %v10072 = vld [vmem:[%s51] sm:$0x3]
        %v10074 = vlaneseq
        %v10075 = vshrl.u32 %v10074, 7
        %v10076 = vsub.s32 0, %v10075
        %v10077 = vrot.slane %v10072, %v10076
        %v10078 = vlaneseq
        %v10079 = vshrl.u32 %v10078, 7
        %v10080 = vsub.s32 1, %v10079
        %v10081 = vrot.slane %v10072, %v10080
        %v10084 = vadd.f32 %v10066, %v10077
        %v10085 = vadd.f32 %v10067, %v10081
        %v10086 = vadd.f32 %v10068, %v10077
        %v10087 = vadd.f32 %v10069, %v10081
        %v10088 = vadd.f32 %v10070, %v10077
        %v10089 = vadd.f32 %v10071, %v10081
        %v10090 = vld [vmem:[%s47] sm:$0xff]
        %v10091 = vld [vmem:[%s47 + $0x8] sm:$0xff]
        %v10092 = vld [vmem:[%s47 + $0x10] sm:$0xff]
        %v10093 = vld [vmem:[%s47 + $0x18] sm:$0xff]
        %v10094 = vld [vmem:[%s47 + $0x20] sm:$0xff]
        %v10095 = vld [vmem:[%s47 + $0x28] sm:$0xff]
        %v10096 = vld [vmem:[%s47 + $0x30] sm:$0xff]
        %v10097 = vld [vmem:[%s47 + $0x38] sm:$0xff]
        %v10098 = vld [vmem:[%s47 + $0x40] sm:$0xff]
        %v10099 = vld [vmem:[%s47 + $0x48] sm:$0xff]
        %v10100 = vld [vmem:[%s47 + $0x50] sm:$0xff]
        %v10101 = vld [vmem:[%s47 + $0x58] sm:$0xff]
        %v10102 = vld [vmem:[%s47 + $0x60] sm:$0xff]
        %v10103 = vld [vmem:[%s47 + $0x68] sm:$0xff]
        %v10104 = vld [vmem:[%s47 + $0x70] sm:$0xff]
        %v10105 = vld [vmem:[%s47 + $0x78] sm:$0xff]
        %v10106 = vld [vmem:[%s47 + $0x80] sm:$0xff]
        %v10107 = vld [vmem:[%s47 + $0x88] sm:$0xff]
        %v10108 = vld [vmem:[%s47 + $0x90] sm:$0xff]
        %v10109 = vld [vmem:[%s47 + $0x98] sm:$0xff]
        %v10110 = vld [vmem:[%s47 + $0xa0] sm:$0xff]
        %v10111 = vld [vmem:[%s47 + $0xa8] sm:$0xff]
        %v10112 = vld [vmem:[%s47 + $0xb0] sm:$0xff]
        %v10113 = vld [vmem:[%s47 + $0xb8] sm:$0xff]
        %v10114 = vld [vmem:[%s47 + $0xc0] sm:$0xff]
        %v10115 = vld [vmem:[%s47 + $0xc8] sm:$0xff]
        %v10116 = vld [vmem:[%s47 + $0xd0] sm:$0xff]
        %v10117 = vld [vmem:[%s47 + $0xd8] sm:$0xff]
        %v10118 = vld [vmem:[%s47 + $0xe0] sm:$0xff]
        %v10119 = vld [vmem:[%s47 + $0xe8] sm:$0xff]
        %v10120 = vld [vmem:[%s47 + $0xf0] sm:$0xff]
        %v10121 = vld [vmem:[%s47 + $0xf8] sm:$0xff]
        %v10122 = vld [vmem:[%s47 + $0x100] sm:$0xff]
        %v10123 = vld [vmem:[%s47 + $0x108] sm:$0xff]
        %v10124 = vld [vmem:[%s47 + $0x110] sm:$0xff]
        %v10125 = vld [vmem:[%s47 + $0x118] sm:$0xff]
        %v10126 = vld [vmem:[%s47 + $0x120] sm:$0xff]
        %v10127 = vld [vmem:[%s47 + $0x128] sm:$0xff]
        %v10128 = vld [vmem:[%s47 + $0x130] sm:$0xff]
        %v10129 = vld [vmem:[%s47 + $0x138] sm:$0xff]
        %v10130 = vld [vmem:[%s47 + $0x140] sm:$0xff]
        %v10131 = vld [vmem:[%s47 + $0x148] sm:$0xff]
        %v10132 = vld [vmem:[%s47 + $0x150] sm:$0xff]
        %v10133 = vld [vmem:[%s47 + $0x158] sm:$0xff]
        %v10134 = vld [vmem:[%s47 + $0x160] sm:$0xff]
        %v10135 = vld [vmem:[%s47 + $0x168] sm:$0xff]
        %v10136 = vld [vmem:[%s47 + $0x170] sm:$0xff]
        %v10137 = vld [vmem:[%s47 + $0x178] sm:$0xff]
        %v10138 = vld [vmem:[%s47 + $0x180] sm:$0xff]
        %v10139 = vld [vmem:[%s47 + $0x188] sm:$0xff]
        %v10140 = vld [vmem:[%s47 + $0x190] sm:$0xff]
        %v10141 = vld [vmem:[%s47 + $0x198] sm:$0xff]
        %v10142 = vld [vmem:[%s47 + $0x1a0] sm:$0xff]
        %v10143 = vld [vmem:[%s47 + $0x1a8] sm:$0xff]
        %v10144 = vld [vmem:[%s47 + $0x1b0] sm:$0xff]
        %v10145 = vld [vmem:[%s47 + $0x1b8] sm:$0xff]
        %v10146 = vld [vmem:[%s47 + $0x1c0] sm:$0xff]
        %v10147 = vld [vmem:[%s47 + $0x1c8] sm:$0xff]
        %v10148 = vld [vmem:[%s47 + $0x1d0] sm:$0xff]
        %v10149 = vld [vmem:[%s47 + $0x1d8] sm:$0xff]
        %v10150 = vld [vmem:[%s47 + $0x1e0] sm:$0xff]
        %v10151 = vld [vmem:[%s47 + $0x1e8] sm:$0xff]
        %v10152 = vld [vmem:[%s47 + $0x1f0] sm:$0xff]
        %v10153 = vld [vmem:[%s47 + $0x1f8] sm:$0xff]
        %v10160 = vrot.slane %v10084, 4
        %v10161 = vrot.slane %v10086, 4
        %v10162 = vsel %vm2359, %v10160, %v10161
        %v10163 = vrot.slane %v10085, 4
        %v10164 = vrot.slane %v10087, 4
        %v10165 = vsel %vm2359, %v10163, %v10164
        %v10166 = vrot.slane %v10088, 4
        %v10167 = vsel %vm2359, %v10161, %v10166
        %v10168 = vrot.slane %v10089, 4
        %v10169 = vsel %vm2359, %v10164, %v10168
        %10174 = vmatprep.subr.mxu0 %v10121
        %10175 = vmatpush1.msra.mxu0 %v10120
        %10176 = vmatprep.subr.mxu0 %v10119
        %10177 = vmatpush1.msra.mxu0 %v10118
        %10178 = vmatprep.subr.mxu0 %v10117
        %10179 = vmatpush1.msra.mxu0 %v10116
        %10180 = vmatprep.subr.mxu0 %v10115
        %10181 = vmatpush1.msra.mxu0 %v10114
        %10182 = vmatprep.subr.mxu0 %v10113
        %10183 = vmatpush1.msra.mxu0 %v10112
        %10184 = vmatprep.subr.mxu0 %v10111
        %10185 = vmatpush1.msra.mxu0 %v10110
        %10186 = vmatprep.subr.mxu0 %v10109
        %10187 = vmatpush1.msra.mxu0 %v10108
        %10188 = vmatprep.subr.mxu0 %v10107
        %10189 = vmatpush1.msra.mxu0 %v10106
        %10190 = vmatprep.subr.mxu0 %v10105
        %10191 = vmatpush1.msra.mxu0 %v10104
        %10192 = vmatprep.subr.mxu0 %v10103
        %10193 = vmatpush1.msra.mxu0 %v10102
        %10194 = vmatprep.subr.mxu0 %v10101
        %10195 = vmatpush1.msra.mxu0 %v10100
        %10196 = vmatprep.subr.mxu0 %v10099
        %10197 = vmatpush1.msra.mxu0 %v10098
        %10198 = vmatprep.subr.mxu0 %v10097
        %10199 = vmatpush1.msra.mxu0 %v10096
        %10200 = vmatprep.subr.mxu0 %v10095
        %10201 = vmatpush1.msra.mxu0 %v10094
        %10202 = vmatprep.subr.mxu0 %v10093
        %10203 = vmatpush1.msra.mxu0 %v10092
        %10204 = vmatprep.subr.mxu0 %v10091
        %10205 = vmatpush1.msra.mxu0 %v10090
        %10206 = vmatprep.subr.mxu0 %v10153
        %10207 = vmatpush2.msra.mxu0 %v10152
        %10208 = vmatprep.subr.mxu0 %v10151
        %10209 = vmatpush2.msra.mxu0 %v10150
        %10210 = vmatprep.subr.mxu0 %v10149
        %10211 = vmatpush2.msra.mxu0 %v10148
        %10212 = vmatprep.subr.mxu0 %v10147
        %10213 = vmatpush2.msra.mxu0 %v10146
        %10214 = vmatprep.subr.mxu0 %v10145
        %10215 = vmatpush2.msra.mxu0 %v10144
        %10216 = vmatprep.subr.mxu0 %v10143
        %10217 = vmatpush2.msra.mxu0 %v10142
        %10218 = vmatprep.subr.mxu0 %v10141
        %10219 = vmatpush2.msra.mxu0 %v10140
        %10220 = vmatprep.subr.mxu0 %v10139
        %10221 = vmatpush2.msra.mxu0 %v10138
        %10222 = vmatprep.subr.mxu0 %v10137
        %10223 = vmatpush2.msra.mxu0 %v10136
        %10224 = vmatprep.subr.mxu0 %v10135
        %10225 = vmatpush2.msra.mxu0 %v10134
        %10226 = vmatprep.subr.mxu0 %v10133
        %10227 = vmatpush2.msra.mxu0 %v10132
        %10228 = vmatprep.subr.mxu0 %v10131
        %10229 = vmatpush2.msra.mxu0 %v10130
        %10230 = vmatprep.subr.mxu0 %v10129
        %10231 = vmatpush2.msra.mxu0 %v10128
        %10232 = vmatprep.subr.mxu0 %v10127
        %10233 = vmatpush2.msra.mxu0 %v10126
        %10234 = vmatprep.subr.mxu0 %v10125
        %10235 = vmatpush2.msra.mxu0 %v10124
        %10236 = vmatprep.subr.mxu0 %v10123
        %10237 = vmatpush2.msra.mxu0 %v10122
        %10238 = vmatprep.mubr.f32.mxu0 %v10165
        %10239 = vmatmul.mubr.f32.gmra.mxu0 %v10162
        %v10240 = vpop.f32.mrf.mxu0
        %v10241 = vadd.f32 0.0, %v10240
        %v10242 = vpop.f32.mrf.mxu0
        %v10243 = vadd.f32 0.0, %v10242
        %10244 = vmatprep.mubr.f32.mxu0 %v10169
        %10245 = vmatmul.mubr.f32.gmra.mxu0 %v10167
        %v10246 = vpop.f32.mrf.mxu0
        %v10247 = vadd.f32 0.0, %v10246
        %v10248 = vpop.f32.mrf.mxu0
        %v10249 = vadd.f32 0.0, %v10248
        %10250 = vdwg.mxu0
        %v10251 = vld [vmem:[%s53] sm:$0x3]
        %v10253 = vlaneseq
        %v10254 = vshrl.u32 %v10253, 7
        %v10255 = vsub.s32 0, %v10254
        %v10256 = vrot.slane %v10251, %v10255
        %v10257 = vlaneseq
        %v10258 = vshrl.u32 %v10257, 7
        %v10259 = vsub.s32 1, %v10258
        %v10260 = vrot.slane %v10251, %v10259
        %v10263 = vmul.f32 %v10241, %v10256
        %v10264 = vmul.f32 %v10243, %v10260
        %v10265 = vmul.f32 %v10247, %v10256
        %v10266 = vmul.f32 %v10249, %v10260
        %v10267 = vld [vmem:[%s55] sm:$0x3]
        %v10269 = vlaneseq
        %v10270 = vshrl.u32 %v10269, 7
        %v10271 = vsub.s32 0, %v10270
        %v10272 = vrot.slane %v10267, %v10271
        %v10273 = vlaneseq
        %v10274 = vshrl.u32 %v10273, 7
        %v10275 = vsub.s32 1, %v10274
        %v10276 = vrot.slane %v10267, %v10275
        %v10279 = vadd.f32 %v10263, %v10272
        %v10280 = vadd.f32 %v10264, %v10276
        %v10281 = vadd.f32 %v10265, %v10272
        %v10282 = vadd.f32 %v10266, %v10276
        %vm10283 = vcmp.ge.f32.partialorder %v10279, 0.0
        %vm10284 = vcmp.ge.f32.partialorder %v10280, 0.0
        %vm10285 = vcmp.ge.f32.partialorder %v10281, 0.0
        %vm10286 = vcmp.ge.f32.partialorder %v10282, 0.0
        %v10287 = vmul.f32 %v10279, 0.2
        %v10288 = vmul.f32 %v10280, 0.2
        %v10289 = vmul.f32 %v10281, 0.2
        %v10290 = vmul.f32 %v10282, 0.2
        %v10291 = vsel %vm10283, %v10279, %v10287
        %v10292 = vsel %vm10284, %v10280, %v10288
        %v10293 = vsel %vm10285, %v10281, %v10289
        %v10294 = vsel %vm10286, %v10282, %v10290
        %vm10295 = vcmask 130048
        %v10296 = vsel %vm10295, %v7055, 0
        %10298 = vmatprep.subr.mxu0 0.0
        %10299 = vmatpush1.msra.mxu0 0.0
        %10300 = vmatprep.subr.mxu0 0.0
        %10301 = vmatpush1.msra.mxu0 0.0
        %10302 = vmatprep.subr.mxu0 0.0
        %10303 = vmatpush1.msra.mxu0 0.0
        %10304 = vmatprep.subr.mxu0 0.0
        %10305 = vmatpush1.msra.mxu0 0.0
        %10306 = vmatprep.subr.mxu0 0.0
        %10307 = vmatpush1.msra.mxu0 0.0
        %10308 = vmatprep.subr.mxu0 0.0
        %10309 = vmatpush1.msra.mxu0 0.0
        %10310 = vmatprep.subr.mxu0 0.0
        %10311 = vmatpush1.msra.mxu0 0.0
        %10312 = vmatprep.subr.mxu0 0.0
        %10313 = vmatpush1.msra.mxu0 0.0
        %10314 = vmatprep.subr.mxu0 0.0
        %10315 = vmatpush1.msra.mxu0 0.0
        %10316 = vmatprep.subr.mxu0 0.0
        %10317 = vmatpush1.msra.mxu0 0.0
        %10318 = vmatprep.subr.mxu0 0.0
        %10319 = vmatpush1.msra.mxu0 0.0
        %10320 = vmatprep.subr.mxu0 0.0
        %10321 = vmatpush1.msra.mxu0 0.0
        %10322 = vmatprep.subr.mxu0 0.0
        %10323 = vmatpush1.msra.mxu0 0.0
        %10324 = vmatprep.subr.mxu0 0.0
        %10325 = vmatpush1.msra.mxu0 0.0
        %10326 = vmatprep.subr.mxu0 %v10294
        %10327 = vmatpush1.msra.mxu0 %v10293
        %10328 = vmatprep.subr.mxu0 %v10292
        %10329 = vmatpush1.msra.mxu0 %v10291
        %10330 = vmatprep.subr.mxu0 0.0
        %10331 = vmatpush2.msra.mxu0 0.0
        %10332 = vmatprep.subr.mxu0 0.0
        %10333 = vmatpush2.msra.mxu0 0.0
        %10334 = vmatprep.subr.mxu0 0.0
        %10335 = vmatpush2.msra.mxu0 0.0
        %10336 = vmatprep.subr.mxu0 0.0
        %10337 = vmatpush2.msra.mxu0 0.0
        %10338 = vmatprep.subr.mxu0 0.0
        %10339 = vmatpush2.msra.mxu0 0.0
        %10340 = vmatprep.subr.mxu0 0.0
        %10341 = vmatpush2.msra.mxu0 0.0
        %10342 = vmatprep.subr.mxu0 0.0
        %10343 = vmatpush2.msra.mxu0 0.0
        %10344 = vmatprep.subr.mxu0 0.0
        %10345 = vmatpush2.msra.mxu0 0.0
        %10346 = vmatprep.subr.mxu0 0.0
        %10347 = vmatpush2.msra.mxu0 0.0
        %10348 = vmatprep.subr.mxu0 0.0
        %10349 = vmatpush2.msra.mxu0 0.0
        %10350 = vmatprep.subr.mxu0 0.0
        %10351 = vmatpush2.msra.mxu0 0.0
        %10352 = vmatprep.subr.mxu0 0.0
        %10353 = vmatpush2.msra.mxu0 0.0
        %10354 = vmatprep.subr.mxu0 0.0
        %10355 = vmatpush2.msra.mxu0 0.0
        %10356 = vmatprep.subr.mxu0 0.0
        %10357 = vmatpush2.msra.mxu0 0.0
        %10358 = vmatprep.subr.mxu0 0.0
        %10359 = vmatpush2.msra.mxu0 0.0
        %10360 = vmatprep.subr.mxu0 0.0
        %10361 = vmatpush2.msra.mxu0 0.0
        %10362 = vmatprep.mubr.f32.mxu0 0.0
        %10363 = vmatmul.mubr.f32.gmra.mxu0 %v10296
        %v10364 = vpop.f32.mrf.mxu0
        %v10365 = vadd.f32 0.0, %v10364
        %v10366 = vpop.f32.mrf.mxu0
        %v10367 = vadd.f32 0.0, %v10366
        %10368 = vdwg.mxu0
        %10369 = vst [vmem:[#allocation2] sm:$0xff] 0.0
        %10370 = vst [vmem:[#allocation2 + $0x8] sm:$0xff] 0.0
        %10371 = vst [vmem:[#allocation2 + $0x10] sm:$0xff] 0.0
        %10372 = vst [vmem:[#allocation2 + $0x18] sm:$0xff] 0.0
        %10373 = vst [vmem:[#allocation2 + $0x30] sm:$0xff] 0.0
        %10374 = vst [vmem:[#allocation2 + $0x38] sm:$0xff] 0.0
        %10375 = vst [vmem:[#allocation2 + $0x40] sm:$0xff] 0.0
        %10376 = vst [vmem:[#allocation2 + $0x48] sm:$0xff] 0.0
        %10377 = vst [vmem:[#allocation2 + $0x20] sm:$0xff] %v10365
        %10378 = vst [vmem:[#allocation2 + $0x28] sm:$0xff] %v10367
        %v10379 = vld [vmem:[#allocation2 + $0x10] sm:$0xf0]
        %v10380 = vld [vmem:[#allocation2 + $0x18] sm:$0xf0]
        %v10381 = vld [vmem:[#allocation2 + $0x20] sm:$0xf]
        %v10382 = vld [vmem:[#allocation2 + $0x28] sm:$0xf]
        %v10383 = vld [vmem:[%s57] ss:$8 sm:$0x3]
        %v10385 = vlaneseq
        %v10386 = vshrl.u32 %v10385, 7
        %v10387 = vsub.s32 0, %v10386
        %v10388 = vrot.slane %v10383, %v10387
        %v10389 = vlaneseq
        %v10390 = vshrl.u32 %v10389, 7
        %v10391 = vsub.s32 1, %v10390
        %v10392 = vrot.slane %v10383, %v10391
        %v10395 = vmul.f32 %v10379, %v10388
        %v10396 = vmul.f32 %v10380, %v10392
        %v10397 = vmul.f32 %v10381, %v10388
        %v10398 = vmul.f32 %v10382, %v10392
        %v10399 = vld [vmem:[#allocation2 + $0x10] sm:$0xe0]
        %v10400 = vld [vmem:[#allocation2 + $0x18] sm:$0xe0]
        %v10401 = vld [vmem:[#allocation2 + $0x20] sm:$0x1f]
        %v10402 = vld [vmem:[#allocation2 + $0x28] sm:$0x1f]
        %s10403 = scalar_lea.vmem %s57, 1
        %v10404 = vld [vmem:[%s10403] ss:$8 sm:$0x3]
        %v10406 = vlaneseq
        %v10407 = vshrl.u32 %v10406, 7
        %v10408 = vsub.s32 0, %v10407
        %v10409 = vrot.slane %v10404, %v10408
        %v10410 = vlaneseq
        %v10411 = vshrl.u32 %v10410, 7
        %v10412 = vsub.s32 1, %v10411
        %v10413 = vrot.slane %v10404, %v10412
        %v10416 = vmul.f32 %v10399, %v10409
        %v10417 = vmul.f32 %v10400, %v10413
        %v10418 = vmul.f32 %v10401, %v10409
        %v10419 = vmul.f32 %v10402, %v10413
        %v10424 = vrot.slane %v10416, 1
        %v10425 = vrot.slane %v10418, 1
        %v10426 = vsel %vm1747, %v10424, %v10425
        %v10427 = vrot.slane %v10417, 1
        %v10428 = vrot.slane %v10419, 1
        %v10429 = vsel %vm1747, %v10427, %v10428
        %v10434 = vadd.f32 %v10395, %v10426
        %v10435 = vadd.f32 %v10396, %v10429
        %v10436 = vadd.f32 %v10397, %v10425
        %v10437 = vadd.f32 %v10398, %v10428
        %v10438 = vld [vmem:[#allocation2 + $0x10] sm:$0xc0]
        %v10439 = vld [vmem:[#allocation2 + $0x18] sm:$0xc0]
        %v10440 = vld [vmem:[#allocation2 + $0x20] sm:$0x3f]
        %v10441 = vld [vmem:[#allocation2 + $0x28] sm:$0x3f]
        %s10442 = scalar_lea.vmem %s57, 2
        %v10443 = vld [vmem:[%s10442] ss:$8 sm:$0x3]
        %v10445 = vlaneseq
        %v10446 = vshrl.u32 %v10445, 7
        %v10447 = vsub.s32 0, %v10446
        %v10448 = vrot.slane %v10443, %v10447
        %v10449 = vlaneseq
        %v10450 = vshrl.u32 %v10449, 7
        %v10451 = vsub.s32 1, %v10450
        %v10452 = vrot.slane %v10443, %v10451
        %v10455 = vmul.f32 %v10438, %v10448
        %v10456 = vmul.f32 %v10439, %v10452
        %v10457 = vmul.f32 %v10440, %v10448
        %v10458 = vmul.f32 %v10441, %v10452
        %v10463 = vrot.slane %v10455, 2
        %v10464 = vrot.slane %v10457, 2
        %v10465 = vsel %vm1952, %v10463, %v10464
        %v10466 = vrot.slane %v10456, 2
        %v10467 = vrot.slane %v10458, 2
        %v10468 = vsel %vm1952, %v10466, %v10467
        %v10473 = vadd.f32 %v10434, %v10465
        %v10474 = vadd.f32 %v10435, %v10468
        %v10475 = vadd.f32 %v10436, %v10464
        %v10476 = vadd.f32 %v10437, %v10467
        %v10477 = vld [vmem:[#allocation2 + $0x10] sm:$0x80]
        %v10478 = vld [vmem:[#allocation2 + $0x18] sm:$0x80]
        %v10479 = vld [vmem:[#allocation2 + $0x20] sm:$0x7f]
        %v10480 = vld [vmem:[#allocation2 + $0x28] sm:$0x7f]
        %s10481 = scalar_lea.vmem %s57, 3
        %v10482 = vld [vmem:[%s10481] ss:$8 sm:$0x3]
        %v10484 = vlaneseq
        %v10485 = vshrl.u32 %v10484, 7
        %v10486 = vsub.s32 0, %v10485
        %v10487 = vrot.slane %v10482, %v10486
        %v10488 = vlaneseq
        %v10489 = vshrl.u32 %v10488, 7
        %v10490 = vsub.s32 1, %v10489
        %v10491 = vrot.slane %v10482, %v10490
        %v10494 = vmul.f32 %v10477, %v10487
        %v10495 = vmul.f32 %v10478, %v10491
        %v10496 = vmul.f32 %v10479, %v10487
        %v10497 = vmul.f32 %v10480, %v10491
        %v10502 = vrot.slane %v10494, 3
        %v10503 = vrot.slane %v10496, 3
        %v10504 = vsel %vm2157, %v10502, %v10503
        %v10505 = vrot.slane %v10495, 3
        %v10506 = vrot.slane %v10497, 3
        %v10507 = vsel %vm2157, %v10505, %v10506
        %v10512 = vadd.f32 %v10473, %v10504
        %v10513 = vadd.f32 %v10474, %v10507
        %v10514 = vadd.f32 %v10475, %v10503
        %v10515 = vadd.f32 %v10476, %v10506
        %v10516 = vld [vmem:[#allocation2 + $0x20] sm:$0xff]
        %v10517 = vld [vmem:[#allocation2 + $0x28] sm:$0xff]
        %s10518 = scalar_lea.vmem %s57, 4
        %v10519 = vld [vmem:[%s10518] ss:$8 sm:$0x3]
        %v10521 = vlaneseq
        %v10522 = vshrl.u32 %v10521, 7
        %v10523 = vsub.s32 0, %v10522
        %v10524 = vrot.slane %v10519, %v10523
        %v10525 = vlaneseq
        %v10526 = vshrl.u32 %v10525, 7
        %v10527 = vsub.s32 1, %v10526
        %v10528 = vrot.slane %v10519, %v10527
        %v10531 = vmul.f32 %v10516, %v10524
        %v10532 = vmul.f32 %v10517, %v10528
        %v10535 = vrot.slane %v10531, 4
        %v10536 = vrot.slane %v10532, 4
        %v10539 = vadd.f32 %v10512, %v10535
        %v10540 = vadd.f32 %v10513, %v10536
        %v10541 = vadd.f32 %v10514, %v10535
        %v10542 = vadd.f32 %v10515, %v10536
        %v10543 = vld [vmem:[#allocation2 + $0x20] sm:$0xfe]
        %v10544 = vld [vmem:[#allocation2 + $0x28] sm:$0xfe]
        %v10545 = vld [vmem:[#allocation2 + $0x30] sm:$0x1]
        %v10546 = vld [vmem:[#allocation2 + $0x38] sm:$0x1]
        %s10547 = scalar_lea.vmem %s57, 5
        %v10548 = vld [vmem:[%s10547] ss:$8 sm:$0x3]
        %v10550 = vlaneseq
        %v10551 = vshrl.u32 %v10550, 7
        %v10552 = vsub.s32 0, %v10551
        %v10553 = vrot.slane %v10548, %v10552
        %v10554 = vlaneseq
        %v10555 = vshrl.u32 %v10554, 7
        %v10556 = vsub.s32 1, %v10555
        %v10557 = vrot.slane %v10548, %v10556
        %v10560 = vmul.f32 %v10543, %v10553
        %v10561 = vmul.f32 %v10544, %v10557
        %v10562 = vmul.f32 %v10545, %v10553
        %v10563 = vmul.f32 %v10546, %v10557
        %v10568 = vrot.slane %v10560, 5
        %v10569 = vrot.slane %v10561, 5
        %v10570 = vrot.slane %v10562, 5
        %v10571 = vsel %vm2562, %v10568, %v10570
        %v10572 = vrot.slane %v10563, 5
        %v10573 = vsel %vm2562, %v10569, %v10572
        %v10578 = vadd.f32 %v10539, %v10568
        %v10579 = vadd.f32 %v10540, %v10569
        %v10580 = vadd.f32 %v10541, %v10571
        %v10581 = vadd.f32 %v10542, %v10573
        %v10582 = vld [vmem:[#allocation2 + $0x20] sm:$0xfc]
        %v10583 = vld [vmem:[#allocation2 + $0x28] sm:$0xfc]
        %v10584 = vld [vmem:[#allocation2 + $0x30] sm:$0x3]
        %v10585 = vld [vmem:[#allocation2 + $0x38] sm:$0x3]
        %s10586 = scalar_lea.vmem %s57, 6
        %v10587 = vld [vmem:[%s10586] ss:$8 sm:$0x3]
        %v10589 = vlaneseq
        %v10590 = vshrl.u32 %v10589, 7
        %v10591 = vsub.s32 0, %v10590
        %v10592 = vrot.slane %v10587, %v10591
        %v10593 = vlaneseq
        %v10594 = vshrl.u32 %v10593, 7
        %v10595 = vsub.s32 1, %v10594
        %v10596 = vrot.slane %v10587, %v10595
        %v10599 = vmul.f32 %v10582, %v10592
        %v10600 = vmul.f32 %v10583, %v10596
        %v10601 = vmul.f32 %v10584, %v10592
        %v10602 = vmul.f32 %v10585, %v10596
        %v10607 = vrot.slane %v10599, 6
        %v10608 = vrot.slane %v10600, 6
        %v10609 = vrot.slane %v10601, 6
        %v10610 = vsel %vm2767, %v10607, %v10609
        %v10611 = vrot.slane %v10602, 6
        %v10612 = vsel %vm2767, %v10608, %v10611
        %v10617 = vadd.f32 %v10578, %v10607
        %v10618 = vadd.f32 %v10579, %v10608
        %v10619 = vadd.f32 %v10580, %v10610
        %v10620 = vadd.f32 %v10581, %v10612
        %v10621 = vld [vmem:[#allocation2 + $0x20] sm:$0xf8]
        %v10622 = vld [vmem:[#allocation2 + $0x28] sm:$0xf8]
        %v10623 = vld [vmem:[#allocation2 + $0x30] sm:$0x7]
        %v10624 = vld [vmem:[#allocation2 + $0x38] sm:$0x7]
        %s10625 = scalar_lea.vmem %s57, 7
        %v10626 = vld [vmem:[%s10625] ss:$8 sm:$0x3]
        %v10628 = vlaneseq
        %v10629 = vshrl.u32 %v10628, 7
        %v10630 = vsub.s32 0, %v10629
        %v10631 = vrot.slane %v10626, %v10630
        %v10632 = vlaneseq
        %v10633 = vshrl.u32 %v10632, 7
        %v10634 = vsub.s32 1, %v10633
        %v10635 = vrot.slane %v10626, %v10634
        %v10638 = vmul.f32 %v10621, %v10631
        %v10639 = vmul.f32 %v10622, %v10635
        %v10640 = vmul.f32 %v10623, %v10631
        %v10641 = vmul.f32 %v10624, %v10635
        %v10646 = vrot.slane %v10638, 7
        %v10647 = vrot.slane %v10639, 7
        %v10648 = vrot.slane %v10640, 7
        %v10649 = vsel %vm2972, %v10646, %v10648
        %v10650 = vrot.slane %v10641, 7
        %v10651 = vsel %vm2972, %v10647, %v10650
        %v10656 = vadd.f32 %v10617, %v10646
        %v10657 = vadd.f32 %v10618, %v10647
        %v10658 = vadd.f32 %v10619, %v10649
        %v10659 = vadd.f32 %v10620, %v10651
        %v10660 = vld [vmem:[#allocation2 + $0x20] sm:$0xf0]
        %v10661 = vld [vmem:[#allocation2 + $0x28] sm:$0xf0]
        %v10662 = vld [vmem:[#allocation2 + $0x30] sm:$0xf]
        %v10663 = vld [vmem:[#allocation2 + $0x38] sm:$0xf]
        %s10664 = scalar_lea.vmem %s57, 16
        %v10665 = vld [vmem:[%s10664] ss:$8 sm:$0x3]
        %v10667 = vlaneseq
        %v10668 = vshrl.u32 %v10667, 7
        %v10669 = vsub.s32 0, %v10668
        %v10670 = vrot.slane %v10665, %v10669
        %v10671 = vlaneseq
        %v10672 = vshrl.u32 %v10671, 7
        %v10673 = vsub.s32 1, %v10672
        %v10674 = vrot.slane %v10665, %v10673
        %v10677 = vmul.f32 %v10660, %v10670
        %v10678 = vmul.f32 %v10661, %v10674
        %v10679 = vmul.f32 %v10662, %v10670
        %v10680 = vmul.f32 %v10663, %v10674
        %v10681 = vadd.f32 %v10656, %v10677
        %v10682 = vadd.f32 %v10657, %v10678
        %v10683 = vadd.f32 %v10658, %v10679
        %v10684 = vadd.f32 %v10659, %v10680
        %v10685 = vld [vmem:[%s61] sm:$0x3]
        %v10687 = vlaneseq
        %v10688 = vshrl.u32 %v10687, 7
        %v10689 = vsub.s32 0, %v10688
        %v10690 = vrot.slane %v10685, %v10689
        %v10691 = vlaneseq
        %v10692 = vshrl.u32 %v10691, 7
        %v10693 = vsub.s32 1, %v10692
        %v10694 = vrot.slane %v10685, %v10693
        %v10697 = vmul.f32 %v10681, %v10690
        %v10698 = vmul.f32 %v10682, %v10694
        %v10699 = vmul.f32 %v10683, %v10690
        %v10700 = vmul.f32 %v10684, %v10694
        %v10701 = vld [vmem:[%s63] sm:$0x3]
        %v10703 = vlaneseq
        %v10704 = vshrl.u32 %v10703, 7
        %v10705 = vsub.s32 0, %v10704
        %v10706 = vrot.slane %v10701, %v10705
        %v10707 = vlaneseq
        %v10708 = vshrl.u32 %v10707, 7
        %v10709 = vsub.s32 1, %v10708
        %v10710 = vrot.slane %v10701, %v10709
        %v10713 = vadd.f32 %v10697, %v10706
        %v10714 = vadd.f32 %v10698, %v10710
        %v10715 = vadd.f32 %v10699, %v10706
        %v10716 = vadd.f32 %v10700, %v10710
        %v10717 = vld [vmem:[%s59] sm:$0xff]
        %v10718 = vld [vmem:[%s59 + $0x8] sm:$0xff]
        %v10719 = vld [vmem:[%s59 + $0x10] sm:$0xff]
        %v10720 = vld [vmem:[%s59 + $0x18] sm:$0xff]
        %v10721 = vld [vmem:[%s59 + $0x20] sm:$0xff]
        %v10722 = vld [vmem:[%s59 + $0x28] sm:$0xff]
        %v10723 = vld [vmem:[%s59 + $0x30] sm:$0xff]
        %v10724 = vld [vmem:[%s59 + $0x38] sm:$0xff]
        %v10725 = vld [vmem:[%s59 + $0x40] sm:$0xff]
        %v10726 = vld [vmem:[%s59 + $0x48] sm:$0xff]
        %v10727 = vld [vmem:[%s59 + $0x50] sm:$0xff]
        %v10728 = vld [vmem:[%s59 + $0x58] sm:$0xff]
        %v10729 = vld [vmem:[%s59 + $0x60] sm:$0xff]
        %v10730 = vld [vmem:[%s59 + $0x68] sm:$0xff]
        %v10731 = vld [vmem:[%s59 + $0x70] sm:$0xff]
        %v10732 = vld [vmem:[%s59 + $0x78] sm:$0xff]
        %v10733 = vld [vmem:[%s59 + $0x80] sm:$0xff]
        %v10734 = vld [vmem:[%s59 + $0x88] sm:$0xff]
        %v10735 = vld [vmem:[%s59 + $0x90] sm:$0xff]
        %v10736 = vld [vmem:[%s59 + $0x98] sm:$0xff]
        %v10737 = vld [vmem:[%s59 + $0xa0] sm:$0xff]
        %v10738 = vld [vmem:[%s59 + $0xa8] sm:$0xff]
        %v10739 = vld [vmem:[%s59 + $0xb0] sm:$0xff]
        %v10740 = vld [vmem:[%s59 + $0xb8] sm:$0xff]
        %v10741 = vld [vmem:[%s59 + $0xc0] sm:$0xff]
        %v10742 = vld [vmem:[%s59 + $0xc8] sm:$0xff]
        %v10743 = vld [vmem:[%s59 + $0xd0] sm:$0xff]
        %v10744 = vld [vmem:[%s59 + $0xd8] sm:$0xff]
        %v10745 = vld [vmem:[%s59 + $0xe0] sm:$0xff]
        %v10746 = vld [vmem:[%s59 + $0xe8] sm:$0xff]
        %v10747 = vld [vmem:[%s59 + $0xf0] sm:$0xff]
        %v10748 = vld [vmem:[%s59 + $0xf8] sm:$0xff]
        %v10753 = vrot.slane %v10713, 4
        %v10754 = vrot.slane %v10715, 4
        %v10755 = vsel %vm2359, %v10753, %v10754
        %v10756 = vrot.slane %v10714, 4
        %v10757 = vrot.slane %v10716, 4
        %v10758 = vsel %vm2359, %v10756, %v10757
        %10761 = vmatprep.subr.mxu0 0.0
        %10762 = vmatpush1.msra.mxu0 %v10732
        %10763 = vmatprep.subr.mxu0 0.0
        %10764 = vmatpush1.msra.mxu0 %v10731
        %10765 = vmatprep.subr.mxu0 0.0
        %10766 = vmatpush1.msra.mxu0 %v10730
        %10767 = vmatprep.subr.mxu0 0.0
        %10768 = vmatpush1.msra.mxu0 %v10729
        %10769 = vmatprep.subr.mxu0 0.0
        %10770 = vmatpush1.msra.mxu0 %v10728
        %10771 = vmatprep.subr.mxu0 0.0
        %10772 = vmatpush1.msra.mxu0 %v10727
        %10773 = vmatprep.subr.mxu0 0.0
        %10774 = vmatpush1.msra.mxu0 %v10726
        %10775 = vmatprep.subr.mxu0 0.0
        %10776 = vmatpush1.msra.mxu0 %v10725
        %10777 = vmatprep.subr.mxu0 0.0
        %10778 = vmatpush1.msra.mxu0 %v10724
        %10779 = vmatprep.subr.mxu0 0.0
        %10780 = vmatpush1.msra.mxu0 %v10723
        %10781 = vmatprep.subr.mxu0 0.0
        %10782 = vmatpush1.msra.mxu0 %v10722
        %10783 = vmatprep.subr.mxu0 0.0
        %10784 = vmatpush1.msra.mxu0 %v10721
        %10785 = vmatprep.subr.mxu0 0.0
        %10786 = vmatpush1.msra.mxu0 %v10720
        %10787 = vmatprep.subr.mxu0 0.0
        %10788 = vmatpush1.msra.mxu0 %v10719
        %10789 = vmatprep.subr.mxu0 0.0
        %10790 = vmatpush1.msra.mxu0 %v10718
        %10791 = vmatprep.subr.mxu0 0.0
        %10792 = vmatpush1.msra.mxu0 %v10717
        %10793 = vmatprep.subr.mxu0 0.0
        %10794 = vmatpush2.msra.mxu0 %v10748
        %10795 = vmatprep.subr.mxu0 0.0
        %10796 = vmatpush2.msra.mxu0 %v10747
        %10797 = vmatprep.subr.mxu0 0.0
        %10798 = vmatpush2.msra.mxu0 %v10746
        %10799 = vmatprep.subr.mxu0 0.0
        %10800 = vmatpush2.msra.mxu0 %v10745
        %10801 = vmatprep.subr.mxu0 0.0
        %10802 = vmatpush2.msra.mxu0 %v10744
        %10803 = vmatprep.subr.mxu0 0.0
        %10804 = vmatpush2.msra.mxu0 %v10743
        %10805 = vmatprep.subr.mxu0 0.0
        %10806 = vmatpush2.msra.mxu0 %v10742
        %10807 = vmatprep.subr.mxu0 0.0
        %10808 = vmatpush2.msra.mxu0 %v10741
        %10809 = vmatprep.subr.mxu0 0.0
        %10810 = vmatpush2.msra.mxu0 %v10740
        %10811 = vmatprep.subr.mxu0 0.0
        %10812 = vmatpush2.msra.mxu0 %v10739
        %10813 = vmatprep.subr.mxu0 0.0
        %10814 = vmatpush2.msra.mxu0 %v10738
        %10815 = vmatprep.subr.mxu0 0.0
        %10816 = vmatpush2.msra.mxu0 %v10737
        %10817 = vmatprep.subr.mxu0 0.0
        %10818 = vmatpush2.msra.mxu0 %v10736
        %10819 = vmatprep.subr.mxu0 0.0
        %10820 = vmatpush2.msra.mxu0 %v10735
        %10821 = vmatprep.subr.mxu0 0.0
        %10822 = vmatpush2.msra.mxu0 %v10734
        %10823 = vmatprep.subr.mxu0 0.0
        %10824 = vmatpush2.msra.mxu0 %v10733
        %10825 = vmatprep.mubr.f32.mxu0 %v10758
        %10826 = vmatmul.mubr.f32.gmra.mxu0 %v10755
        %v10827 = vpop.f32.mrf.mxu0
        %v10828 = vadd.f32 0.0, %v10827
        %v10829 = vpop.f32.mrf.mxu0
        %10830 = vdwg.mxu0
        %v10831 = vld [vmem:[%s65] sm:$0x1]
        %v10833 = vlaneseq
        %v10834 = vshrl.u32 %v10833, 7
        %v10835 = vsub.s32 0, %v10834
        %v10836 = vrot.slane %v10831, %v10835
        %v10838 = vmul.f32 %v10828, %v10836
        %v10839 = vld [vmem:[%s67] sm:$0x1]
        %v10841 = vlaneseq
        %v10842 = vshrl.u32 %v10841, 7
        %v10843 = vsub.s32 0, %v10842
        %v10844 = vrot.slane %v10839, %v10843
        %v10846 = vadd.f32 %v10838, %v10844
        %vm10847 = vcmp.ge.f32.partialorder %v10846, 0.0
        %v10848 = vmul.f32 %v10846, 0.2
        %v10849 = vsel %vm10847, %v10846, %v10848
        %vm10850 = vcmask 64512
        %v10851 = vsel %vm10850, %v7055, 0
        %10853 = vmatprep.subr.mxu0 0.0
        %10854 = vmatpush1.msra.mxu0 0.0
        %10855 = vmatprep.subr.mxu0 0.0
        %10856 = vmatpush1.msra.mxu0 0.0
        %10857 = vmatprep.subr.mxu0 0.0
        %10858 = vmatpush1.msra.mxu0 0.0
        %10859 = vmatprep.subr.mxu0 0.0
        %10860 = vmatpush1.msra.mxu0 0.0
        %10861 = vmatprep.subr.mxu0 0.0
        %10862 = vmatpush1.msra.mxu0 0.0
        %10863 = vmatprep.subr.mxu0 0.0
        %10864 = vmatpush1.msra.mxu0 0.0
        %10865 = vmatprep.subr.mxu0 0.0
        %10866 = vmatpush1.msra.mxu0 0.0
        %10867 = vmatprep.subr.mxu0 0.0
        %10868 = vmatpush1.msra.mxu0 0.0
        %10869 = vmatprep.subr.mxu0 0.0
        %10870 = vmatpush1.msra.mxu0 0.0
        %10871 = vmatprep.subr.mxu0 0.0
        %10872 = vmatpush1.msra.mxu0 0.0
        %10873 = vmatprep.subr.mxu0 0.0
        %10874 = vmatpush1.msra.mxu0 0.0
        %10875 = vmatprep.subr.mxu0 0.0
        %10876 = vmatpush1.msra.mxu0 0.0
        %10877 = vmatprep.subr.mxu0 0.0
        %10878 = vmatpush1.msra.mxu0 0.0
        %10879 = vmatprep.subr.mxu0 0.0
        %10880 = vmatpush1.msra.mxu0 0.0
        %10881 = vmatprep.subr.mxu0 0.0
        %10882 = vmatpush1.msra.mxu0 0.0
        %10883 = vmatprep.subr.mxu0 0.0
        %10884 = vmatpush1.msra.mxu0 %v10849
        %10885 = vmatprep.subr.mxu0 0.0
        %10886 = vmatpush2.msra.mxu0 0.0
        %10887 = vmatprep.subr.mxu0 0.0
        %10888 = vmatpush2.msra.mxu0 0.0
        %10889 = vmatprep.subr.mxu0 0.0
        %10890 = vmatpush2.msra.mxu0 0.0
        %10891 = vmatprep.subr.mxu0 0.0
        %10892 = vmatpush2.msra.mxu0 0.0
        %10893 = vmatprep.subr.mxu0 0.0
        %10894 = vmatpush2.msra.mxu0 0.0
        %10895 = vmatprep.subr.mxu0 0.0
        %10896 = vmatpush2.msra.mxu0 0.0
        %10897 = vmatprep.subr.mxu0 0.0
        %10898 = vmatpush2.msra.mxu0 0.0
        %10899 = vmatprep.subr.mxu0 0.0
        %10900 = vmatpush2.msra.mxu0 0.0
        %10901 = vmatprep.subr.mxu0 0.0
        %10902 = vmatpush2.msra.mxu0 0.0
        %10903 = vmatprep.subr.mxu0 0.0
        %10904 = vmatpush2.msra.mxu0 0.0
        %10905 = vmatprep.subr.mxu0 0.0
        %10906 = vmatpush2.msra.mxu0 0.0
        %10907 = vmatprep.subr.mxu0 0.0
        %10908 = vmatpush2.msra.mxu0 0.0
        %10909 = vmatprep.subr.mxu0 0.0
        %10910 = vmatpush2.msra.mxu0 0.0
        %10911 = vmatprep.subr.mxu0 0.0
        %10912 = vmatpush2.msra.mxu0 0.0
        %10913 = vmatprep.subr.mxu0 0.0
        %10914 = vmatpush2.msra.mxu0 0.0
        %10915 = vmatprep.subr.mxu0 0.0
        %10916 = vmatpush2.msra.mxu0 0.0
        %10917 = vmatprep.mubr.f32.mxu0 0.0
        %10918 = vmatmul.mubr.f32.gmra.mxu0 %v10851
        %v10919 = vpop.f32.mrf.mxu0
        %v10920 = vadd.f32 0.0, %v10919
        %v10921 = vpop.f32.mrf.mxu0
        %10922 = vdwg.mxu0
        %v10923 = vsel %vm2359, %v10920, 0.0
        %v10924 = vrot.slane %v10923, 4
        %v10925 = vadd.f32 %v10923, %v10924
        %v10926 = vrot.slane %v10925, 2
        %v10927 = vadd.f32 %v10925, %v10926
        %v10928 = vrot.slane %v10927, 1
        %v10929 = vadd.f32 %v10927, %v10928
        %v10930 = vrcp.pop 4.0
        %v10931 = vmul.f32 %v10929, %v10930
        %10932 = vst [vmem:[%s1034] sm:$0x1] %v10931
        %s10933 = sand.u32 %s810, 1
        %s10934 = scalar_lea.sflag [#allocation4], %s10933
        %s10935 = sand.u32 %s810, 1
        %s10936 = scalar_lea.vmem [#allocation3], %s10935
        // Predicated region
        $region157: #{sincdsnet_forward.1} parent=155 // pred_check
          %p10937 = pneg %p820
        $region158: #{sincdsnet_forward.1} parent=155 // pred_check_branch
          %10939 = sbr.rel (%p10937) target = $region160
        $region159: #{sincdsnet_forward.1} parent=155 // pred_region
          %s10941 = ssub.s32 16, 16
          %10942 = vsyncadd %s10934, %s10941
          %s10943 = smul.addr %s83, 16
          %s10944 = scalar_lea.hbm %s69, %s10943
          %s10946 = sshll.u32 %s10936, 4
          %s10947 = int_to_ptr.vmem [resolvable:$true] %s10946
          %10949 = dma.vmem_to_hbm [thread:$0]  %s10947, 16, %s10944, %s10934
        $region160: #{sincdsnet_forward.1} parent=155 // pred_fallthru
          _
      $region156: #{sincdsnet_forward.1} parent=5 // pred_fallthru
        _
      %p10950 = scmp.le.s32.totalorder 2, %s78
      // Predicated region
      $region161: #{sincdsnet_forward.1} parent=5 // pred_check
        %p10951 = pneg %p10950
      $region162: #{sincdsnet_forward.1} parent=5 // pred_check_branch
        %10953 = sbr.rel (%p10951) target = $region164
      $region163: #{sincdsnet_forward.1} parent=5 // pred_region
        %s10954 = ssub.s32 %s78, 2
        // Predicated region
        $region165: #{sincdsnet_forward.1} parent=163 // pred_check
          %p10955 = pneg %p826
        $region166: #{sincdsnet_forward.1} parent=163 // pred_check_branch
          %10957 = sbr.rel (%p10955) target = $region168
        $region167: #{sincdsnet_forward.1} parent=163 // pred_region
          %s10958 = sand.u32 %s811, 1
          %s10959 = scalar_lea.sflag [#allocation4], %s10958
          %s10960 = sand.u32 %s811, 1
          %s10961 = scalar_lea.vmem [#allocation3], %s10960
          %10962 = dma.done %s10959, 16
        $region168: #{sincdsnet_forward.1} parent=163 // pred_fallthru
          _
      $region164: #{sincdsnet_forward.1} parent=5 // pred_fallthru
        _
    $region6: #{sincdsnet_forward.1} parent=1 // loop_footer
      %s82 = sadd.s32 1, %s78
    $region7: #{sincdsnet_forward.1} parent=1 // loop_footer_branch
      %77 = sbr.rel target = $region3
    $region8: #{sincdsnet_forward.1} parent=1 // loop_exit
      _
    %10963 = vsyncpa [#allocation4], 1
    %s10964 = scalar_lea.sflag [#allocation4], 1
    %10965 = vsyncpa %s10964, 1

</llo_original>
